<compile_context>
chip_gen: v5e
topology: v5e:2x2
jax: 0.10.0
libtpu: 0.0.40
codegen_flags: <defaults>
</compile_context>

<pallas_src>
import functools

import jax
import jax.numpy as jnp
from jax.experimental import pallas as pl
from jax.experimental.pallas import tpu as pltpu


# ----------------------------------------------------------------------------
# helpers
# ----------------------------------------------------------------------------
def _round_up(x, m):
    return ((x + m - 1) // m) * m


def _pick_k_tile(kp):
    """kp is a multiple of 128; pick the largest lane-aligned tile dividing it.
    Up to 1024 we take the whole K in one tile (no accumulation loop)."""
    if kp <= 1024:
        return kp
    for cand in (512, 384, 256, 128):
        if kp % cand == 0:
            return cand
    return 128


def _pick_n_tile(np_):
    if np_ <= 256:
        return np_
    return 256 if np_ % 256 == 0 else 128


def _pick_m_tile(mp0):
    """mp0 is a multiple of 16; pick a tile (<=512, multiple of 16) that
    minimizes M-padding waste (prefers larger tiles on ties)."""
    if mp0 <= 512:
        return mp0
    best_t, best_waste = 512, _round_up(mp0, 512) - mp0
    for cand in (448, 384, 320, 256, 192, 128):
        waste = _round_up(mp0, cand) - mp0
        if waste < best_waste:
            best_t, best_waste = cand, waste
    return best_t


# ----------------------------------------------------------------------------
# Pallas kernels
# ----------------------------------------------------------------------------
def _gemm_bias_act_kernel(a_ref, w_ref, b_ref, o_ref, acc_ref, *, activation, nk):
    """Tiled GEMM with f32 accumulator; bias + activation fused on last K step."""
    k = pl.program_id(2)

    @pl.when(k == 0)
    def _():
        acc_ref[...] = jnp.zeros_like(acc_ref)

    acc_ref[...] += jnp.dot(a_ref[...], w_ref[...],
                            preferred_element_type=jnp.float32)

    @pl.when(k == nk - 1)
    def _():
        out = acc_ref[...] + b_ref[...]          # f32 epilogue
        if activation == "relu":
            out = jnp.maximum(out, 0.0)
        elif activation == "tanh":
            out = jnp.tanh(out)
        o_ref[...] = out.astype(o_ref.dtype)


def _gemm_bias_act_single_kernel(a_ref, w_ref, b_ref, o_ref, *, activation):
    """Single-K-tile fast path: no accumulator scratch, no K grid axis."""
    out = jnp.dot(a_ref[...], w_ref[...],
                  preferred_element_type=jnp.float32) + b_ref[...]
    if activation == "relu":
        out = jnp.maximum(out, 0.0)
    elif activation == "tanh":
        out = jnp.tanh(out)
    o_ref[...] = out.astype(o_ref.dtype)


def gemm_bias_act(a, w_p, b_p, activation="none"):
    """a: (M, K) f32/bf16.  w_p: (Kp, Np) bf16, pre-padded (Kp, Np multiples of
    128).  b_p: (1, Np) f32.  Returns (M, Np) f32 (caller slices N padding)."""
    M, K = a.shape
    Kp, Np = w_p.shape
    assert Kp % 128 == 0 and Np % 128 == 0 and Kp >= K

    # Tile sizes sized for the v7x 64 MiB VMEM / 32 MiB scoped budget; the same
    # tiles fit v5e/v6e (128 MiB) with even more headroom.
    tn = _pick_n_tile(Np)
    tk = _pick_k_tile(Kp)
    mp0 = _round_up(M, 16)                # bf16 sublane packing (16, 128)
    tm = _pick_m_tile(mp0)
    Mp = _round_up(mp0, tm)

    a_p = a
    if Mp != M or Kp != K:
        a_p = jnp.pad(a, ((0, Mp - M), (0, Kp - K)))
    a_p = a_p.astype(jnp.bfloat16)        # bf16 MXU inputs, f32 accumulation

    nk = Kp // tk
    if nk == 1:
        kern = functools.partial(_gemm_bias_act_single_kernel,
                                 activation=activation)
        out = pl.pallas_call(
            kern,
            out_shape=jax.ShapeDtypeStruct((Mp, Np), jnp.float32),
            grid_spec=pltpu.PrefetchScalarGridSpec(
                num_scalar_prefetch=0,
                grid=(Mp // tm, Np // tn),
                in_specs=[
                    pl.BlockSpec((tm, tk), lambda i, j: (i, 0)),
                    pl.BlockSpec((tk, tn), lambda i, j: (0, j)),
                    pl.BlockSpec((1, tn), lambda i, j: (0, j)),
                ],
                out_specs=pl.BlockSpec((tm, tn), lambda i, j: (i, j)),
            ),
            compiler_params=pltpu.CompilerParams(
                dimension_semantics=("parallel", "parallel"),
                vmem_limit_bytes=32 * 1024 * 1024,
            ),
        )(a_p, w_p, b_p)
    else:
        kern = functools.partial(_gemm_bias_act_kernel,
                                 activation=activation, nk=nk)
        out = pl.pallas_call(
            kern,
            out_shape=jax.ShapeDtypeStruct((Mp, Np), jnp.float32),
            grid_spec=pltpu.PrefetchScalarGridSpec(
                num_scalar_prefetch=0,
                grid=(Mp // tm, Np // tn, nk),
                in_specs=[
                    pl.BlockSpec((tm, tk), lambda i, j, k: (i, k)),
                    pl.BlockSpec((tk, tn), lambda i, j, k: (k, j)),
                    pl.BlockSpec((1, tn), lambda i, j, k: (0, j)),
                ],
                out_specs=pl.BlockSpec((tm, tn), lambda i, j, k: (i, j)),
                scratch_shapes=[pltpu.VMEM((tm, tn), jnp.float32)],
            ),
            compiler_params=pltpu.CompilerParams(
                dimension_semantics=("parallel", "parallel", "arbitrary"),
                vmem_limit_bytes=32 * 1024 * 1024,
            ),
        )(a_p, w_p, b_p)
    return out[:M]


def _reparam_kernel(mu_ref, lv_ref, eps_ref, z_ref):
    z_ref[...] = mu_ref[...] + eps_ref[...] * jnp.exp(0.5 * lv_ref[...])


def reparameterize(mu, logvar, eps):
    """z = mu + eps * exp(0.5*logvar) as a lane-dense (rows, 128) kernel."""
    shp = mu.shape
    total = mu.size
    tp = _round_up(total, 128)
    rows = tp // 128

    def prep(t):
        return jnp.pad(t.reshape(-1), (0, tp - total)).reshape(rows, 128)

    z = pl.pallas_call(
        _reparam_kernel,
        out_shape=jax.ShapeDtypeStruct((rows, 128), jnp.float32),
        in_specs=[pl.BlockSpec(memory_space=pltpu.MemorySpace.VMEM)] * 3,
        out_specs=pl.BlockSpec(memory_space=pltpu.MemorySpace.VMEM),
    )(prep(mu), prep(logvar), prep(eps))
    return z.reshape(-1)[:total].reshape(shp)


# ----------------------------------------------------------------------------
# Conv lowering (im2col glue in plain JAX, GEMM in Pallas)
# ----------------------------------------------------------------------------
def _conv2d_core(x_nhwc, w_mat, bias, kh, kw, cout, stride, pad4, activation):
    """Stride/pad-general conv via im2col + fused Pallas GEMM."""
    pt, pb, pleft, pr = pad4
    # bf16 im2col: halves the patch-buffer HBM round-trip, MXU inputs are bf16
    # anyway so numerics match the previous f32-patches version.
    xb = x_nhwc.astype(jnp.bfloat16)
    xp = jnp.pad(xb, ((0, 0), (pt, pb), (pleft, pr), (0, 0)))
    n, h, w, cin = xp.shape
    oh = (h - kh) // stride + 1
    ow = (w - kw) // stride + 1
    # TODO(synk): fuse im2col into the GEMM kernel (K-grid axis over kh*kw taps
    # with strided BlockSpec reads) to remove the patches HBM round-trip.
    cols = [
        xp[:, i:i + stride * (oh - 1) + 1:stride,
              j:j + stride * (ow - 1) + 1:stride, :]
        for i in range(kh) for j in range(kw)
    ]
    a = jnp.concatenate(cols, axis=-1).reshape(n * oh * ow, kh * kw * cin)
    out = gemm_bias_act(a, w_mat, bias, activation)
    return out[:, :cout].reshape(n, oh, ow, cout)


def conv2d_gemm(x_nhwc, wb, kh, kw, cout, stride, pad, activation):
    w_mat, bias = wb
    return _conv2d_core(x_nhwc, w_mat, bias, kh, kw, cout, stride,
                        (pad, pad, pad, pad), activation)


def conv_transpose2d_gemm(x_nhwc, phases, cout, kh, kw, stride, pad, activation):
    """ConvTranspose2d via sub-pixel decomposition: stride^2 stride-1 convs on
    the un-dilated input with sub-sampled flipped kernels, outputs interleaved.
    Matches PyTorch ConvTranspose2d semantics (output_padding=0)."""
    n, h, w, _ = x_nhwc.shape
    s = stride
    P_r = kh - 1 - pad
    P_c = kw - 1 - pad
    assert (kh - 2 * pad) % s == 0 and (kw - 2 * pad) % s == 0
    ohp = h - 1 + (kh - 2 * pad) // s      # per-phase output height
    owp = w - 1 + (kw - 2 * pad) // s

    row_blocks = []
    for r in range(s):
        a0 = (P_r - r) % s
        tr = len(range(a0, kh, s))
        dr = (r + a0 - P_r) // s
        col_blocks = []
        for c in range(s):
            b0 = (P_c - c) % s
            tc = len(range(b0, kw, s))
            dc = (c + b0 - P_c) // s
            pt, pleft = max(0, -dr), max(0, -dc)
            roff, coff = max(0, dr), max(0, dc)
            pb = ohp + tr - 1 - (h - roff) - pt
            pr_ = owp + tc - 1 - (w - coff) - pleft
            assert pb >= 0 and pr_ >= 0
            xin = x_nhwc[:, roff:, coff:, :] if (roff or coff) else x_nhwc
            w_mat, bias = phases[f"{r}{c}"]
            y = _conv2d_core(xin, w_mat, bias, tr, tc, cout, 1,
                             (pt, pb, pleft, pr_), activation)
            col_blocks.append(y)
        row_blocks.append(jnp.stack(col_blocks, axis=3))   # (n, ohp, owp, s, C)
    out = jnp.stack(row_blocks, axis=2)                    # (n, ohp, s, owp, s, C)
    return out.reshape(n, ohp * s, owp * s, cout)


# ----------------------------------------------------------------------------
# Parameter init (PyTorch-default-like uniform fan-in scaling) + one-time
# GEMM-layout preparation (transpose / flip / pad-to-128 / bf16 cast).
# ----------------------------------------------------------------------------
def _init_conv(key, cout, cin, k):
    kw_, kb = jax.random.split(key)
    bound = 1.0 / (cin * k * k) ** 0.5
    w = jax.random.uniform(kw_, (cout, cin, k, k), jnp.float32, -bound, bound)
    b = jax.random.uniform(kb, (cout,), jnp.float32, -bound, bound)
    return w, b


def _init_convT(key, cin, cout, k):
    kw_, kb = jax.random.split(key)
    bound = 1.0 / (cin * k * k) ** 0.5
    w = jax.random.uniform(kw_, (cin, cout, k, k), jnp.float32, -bound, bound)
    b = jax.random.uniform(kb, (cout,), jnp.float32, -bound, bound)
    return w, b


def init_vae_params(key, in_channels=3, latent_channels=4):
    ks = jax.random.split(key, 11)
    p = {}
    p["e1_w"], p["e1_b"] = _init_conv(ks[0], 64, in_channels, 4)
    p["e2_w"], p["e2_b"] = _init_conv(ks[1], 128, 64, 4)
    p["e3_w"], p["e3_b"] = _init_conv(ks[2], 256, 128, 4)
    p["e4_w"], p["e4_b"] = _init_conv(ks[3], 512, 256, 3)
    p["mu_w"], p["mu_b"] = _init_conv(ks[4], latent_channels, 512, 1)
    p["lv_w"], p["lv_b"] = _init_conv(ks[5], latent_channels, 512, 1)
    p["d1_w"], p["d1_b"] = _init_convT(ks[6], latent_channels, 512, 3)
    p["d2_w"], p["d2_b"] = _init_convT(ks[7], 512, 256, 4)
    p["d3_w"], p["d3_b"] = _init_convT(ks[8], 256, 128, 4)
    p["d4_w"], p["d4_b"] = _init_convT(ks[9], 128, 64, 4)
    p["o_w"], p["o_b"] = _init_conv(ks[10], in_channels, 64, 3)
    return p


def _prep_gemm_weight(w_oihw, b):
    """OIHW conv weight -> padded (Kp, Np) bf16 GEMM matrix + (1, Np) f32 bias."""
    cout, cin, kh, kw = w_oihw.shape
    K = kh * kw * cin
    Kp, Np = _round_up(K, 128), _round_up(cout, 128)
    w_mat = jnp.transpose(w_oihw, (2, 3, 1, 0)).reshape(K, cout)
    w_mat = jnp.pad(w_mat, ((0, Kp - K), (0, Np - cout))).astype(jnp.bfloat16)
    bias = jnp.pad(b.astype(jnp.float32), (0, Np - cout)).reshape(1, Np)
    return w_mat, bias


def _prep_convT_phases(w_iohw, b, stride, pad):
    """Sub-pixel decomposition: one GEMM weight matrix per output phase."""
    cin, cout, kh, kw = w_iohw.shape
    wf = jnp.flip(jnp.transpose(w_iohw, (1, 0, 2, 3)), axis=(2, 3))  # (Cout,Cin,kh,kw)
    P_r, P_c = kh - 1 - pad, kw - 1 - pad
    phases = {}
    for r in range(stride):
        taps_r = list(range((P_r - r) % stride, kh, stride))
        for c in range(stride):
            taps_c = list(range((P_c - c) % stride, kw, stride))
            sub = wf[:, :, taps_r, :][:, :, :, taps_c]
            phases[f"{r}{c}"] = _prep_gemm_weight(sub, b)
    return phases


def prepare_vae_params(p):
    """One-time layout prep (runs outside the hot forward path)."""
    g = {}
    g["e1"] = _prep_gemm_weight(p["e1_w"], p["e1_b"])
    g["e2"] = _prep_gemm_weight(p["e2_w"], p["e2_b"])
    g["e3"] = _prep_gemm_weight(p["e3_w"], p["e3_b"])
    g["e4"] = _prep_gemm_weight(p["e4_w"], p["e4_b"])
    # mu / logvar 1x1 convs fused into one GEMM (concat along Cout)
    g["ml"] = _prep_gemm_weight(
        jnp.concatenate([p["mu_w"], p["lv_w"]], axis=0),
        jnp.concatenate([p["mu_b"], p["lv_b"]], axis=0))
    g["d1"] = _prep_convT_phases(p["d1_w"], p["d1_b"], stride=1, pad=1)
    g["d2"] = _prep_convT_phases(p["d2_w"], p["d2_b"], stride=2, pad=1)
    g["d3"] = _prep_convT_phases(p["d3_w"], p["d3_b"], stride=2, pad=1)
    g["d4"] = _prep_convT_phases(p["d4_w"], p["d4_b"], stride=2, pad=1)
    g["o"] = _prep_gemm_weight(p["o_w"], p["o_b"])
    return g


# ----------------------------------------------------------------------------
# Full VAE forward
# ----------------------------------------------------------------------------
def vae_forward(gparams, x_nchw, eps_nhwc, in_channels=3, latent_channels=4):
    x = jnp.transpose(x_nchw, (0, 2, 3, 1))                      # NCHW -> NHWC
    # encoder
    h = conv2d_gemm(x, gparams["e1"], 4, 4, 64, 2, 1, "relu")
    h = conv2d_gemm(h, gparams["e2"], 4, 4, 128, 2, 1, "relu")
    h = conv2d_gemm(h, gparams["e3"], 4, 4, 256, 2, 1, "relu")
    h = conv2d_gemm(h, gparams["e4"], 3, 3, 512, 1, 1, "relu")
    # fused mu / logvar 1x1 conv
    ml = conv2d_gemm(h, gparams["ml"], 1, 1, 2 * latent_channels, 1, 0, "none")
    mu = ml[..., :latent_channels]
    logvar = ml[..., latent_channels:]
    # reparameterization trick (eps supplied externally for determinism)
    z = reparameterize(mu, logvar, eps_nhwc)
    # decoder (sub-pixel decomposed transposed convs)
    d = conv_transpose2d_gemm(z, gparams["d1"], 512, 3, 3, 1, 1, "relu")
    d = conv_transpose2d_gemm(d, gparams["d2"], 256, 4, 4, 2, 1, "relu")
    d = conv_transpose2d_gemm(d, gparams["d3"], 128, 4, 4, 2, 1, "relu")
    d = conv_transpose2d_gemm(d, gparams["d4"], 64, 4, 4, 2, 1, "relu")
    x_recon = conv2d_gemm(d, gparams["o"], 3, 3, in_channels, 1, 1, "tanh")
    # back to NCHW
    return (jnp.transpose(x_recon, (0, 3, 1, 2)),
            jnp.transpose(mu, (0, 3, 1, 2)),
            jnp.transpose(logvar, (0, 3, 1, 2)))


if __name__ == "__main__":
    in_channels = 3
    latent_channels = 4
    image_size = 16          # multiple of 8 -> latent_size = 2
    batch = 2
    latent_size = image_size // 8

    root = jax.random.PRNGKey(0)
    k_params, k_x, k_eps = jax.random.split(root, 3)

    raw_params = init_vae_params(k_params, in_channels, latent_channels)
    gparams = prepare_vae_params(raw_params)     # one-time GEMM-layout prep

    x = jax.random.normal(k_x, (batch, in_channels, image_size, image_size),
                          jnp.float32)
    eps = jax.random.normal(k_eps,
                            (batch, latent_size, latent_size, latent_channels),
                            jnp.float32)

    fwd = jax.jit(vae_forward)
    x_recon, mu, logvar = fwd(gparams, x, eps)
    jax.block_until_ready((x_recon, mu, logvar))

    assert x_recon.shape == (batch, in_channels, image_size, image_size)
    assert mu.shape == (batch, latent_channels, latent_size, latent_size)
    assert logvar.shape == (batch, latent_channels, latent_size, latent_size)
    assert bool(jnp.all(jnp.isfinite(x_recon)))
    assert bool(jnp.all(jnp.isfinite(mu)))
    assert bool(jnp.all(jnp.isfinite(logvar)))
    print("KERNEL_OK")
</pallas_src>

<mosaic_0001>
module attributes {stable_mosaic.version = 11 : i64} {
  func.func @_gemm_bias_act_single_kernel(%arg0: i32, %arg1: i32, %arg2: memref<128x128xbf16, #tpu.memory_space<vmem>>, %arg3: memref<128x128xbf16, #tpu.memory_space<vmem>>, %arg4: memref<1x128xf32, #tpu.memory_space<vmem>>, %arg5: memref<128x128xf32, #tpu.memory_space<vmem>>) attributes {dimension_semantics = [#tpu.dimension_semantics<parallel>, #tpu.dimension_semantics<parallel>], iteration_bounds = array<i64: 1, 1>, scalar_prefetch = 0 : i64, scratch_operands = 0 : i64, tpu.core_type = #tpu.core_type<tc>, window_params = [{transform_indices = @transform_0, window_bounds = array<i64: 128, 128>}, {transform_indices = @transform_1, window_bounds = array<i64: 128, 128>}, {transform_indices = @transform_2, window_bounds = array<i64: 1, 128>}, {transform_indices = @transform_3, window_bounds = array<i64: 128, 128>}]} {
    %c0 = arith.constant 0 : index
    %c0_0 = arith.constant 0 : index
    %0 = vector.load %arg2[%c0, %c0_0] : memref<128x128xbf16, #tpu.memory_space<vmem>>, vector<128x128xbf16>
    %c0_1 = arith.constant 0 : index
    %c0_2 = arith.constant 0 : index
    %1 = vector.load %arg3[%c0_1, %c0_2] : memref<128x128xbf16, #tpu.memory_space<vmem>>, vector<128x128xbf16>
    %cst = arith.constant dense<0.000000e+00> : vector<128x128xf32>
    %2 = tpu.matmul %0, %1, %cst {dimension_numbers = #tpu.dot_dimension_numbers<[1], [0], [0], [1], [0, 0, 1, 1], [], []>} : vector<128x128xbf16>, vector<128x128xbf16>, vector<128x128xf32> -> vector<128x128xf32>
    %c0_3 = arith.constant 0 : index
    %c0_4 = arith.constant 0 : index
    %3 = vector.load %arg4[%c0_3, %c0_4] : memref<1x128xf32, #tpu.memory_space<vmem>>, vector<1x128xf32>
    %4 = vector.broadcast %3 : vector<1x128xf32> to vector<128x128xf32>
    %5 = arith.addf %2, %4 : vector<128x128xf32>
    %cst_5 = arith.constant 0.000000e+00 : f32
    %6 = vector.broadcast %cst_5 : f32 to vector<128x128xf32>
    %7 = arith.maximumf %5, %6 : vector<128x128xf32>
    %c0_6 = arith.constant 0 : index
    %c0_7 = arith.constant 0 : index
    %8 = vector.load %arg5[%c0_6, %c0_7] : memref<128x128xf32, #tpu.memory_space<vmem>>, vector<128x128xf32>
    tpu.vector_store %arg5[%c0_6, %c0_7], %7 {strides = array<i32>} : memref<128x128xf32, #tpu.memory_space<vmem>>, vector<128x128xf32>,
    return
  }
  func.func @transform_0(%arg0: i32, %arg1: i32) -> (i32, i32) {
    %c0_i32 = arith.constant 0 : i32
    %c0_i32_0 = arith.constant 0 : i32
    return %arg0, %c0_i32 : i32, i32
  }
  func.func @transform_1(%arg0: i32, %arg1: i32) -> (i32, i32) {
    %c0_i32 = arith.constant 0 : i32
    %c0_i32_0 = arith.constant 0 : i32
    return %c0_i32, %arg1 : i32, i32
  }
  func.func @transform_2(%arg0: i32, %arg1: i32) -> (i32, i32) {
    %c0_i32 = arith.constant 0 : i32
    %c0_i32_0 = arith.constant 0 : i32
    return %c0_i32, %arg1 : i32, i32
  }
  func.func @transform_3(%arg0: i32, %arg1: i32) -> (i32, i32) {
    %c0_i32 = arith.constant 0 : i32
    return %arg0, %arg1 : i32, i32
  }
}

module attributes {stable_mosaic.version = 11 : i64} {
  func.func @_gemm_bias_act_single_kernel(%arg0: i32, %arg1: i32, %arg2: memref<32x1024xbf16, #tpu.memory_space<vmem>>, %arg3: memref<1024x128xbf16, #tpu.memory_space<vmem>>, %arg4: memref<1x128xf32, #tpu.memory_space<vmem>>, %arg5: memref<32x128xf32, #tpu.memory_space<vmem>>) attributes {dimension_semantics = [#tpu.dimension_semantics<parallel>, #tpu.dimension_semantics<parallel>], iteration_bounds = array<i64: 1, 1>, scalar_prefetch = 0 : i64, scratch_operands = 0 : i64, tpu.core_type = #tpu.core_type<tc>, window_params = [{transform_indices = @transform_0, window_bounds = array<i64: 32, 1024>}, {transform_indices = @transform_1, window_bounds = array<i64: 1024, 128>}, {transform_indices = @transform_2, window_bounds = array<i64: 1, 128>}, {transform_indices = @transform_3, window_bounds = array<i64: 32, 128>}]} {
    %c0 = arith.constant 0 : index
    %c0_0 = arith.constant 0 : index
    %0 = vector.load %arg2[%c0, %c0_0] : memref<32x1024xbf16, #tpu.memory_space<vmem>>, vector<32x1024xbf16>
    %c0_1 = arith.constant 0 : index
    %c0_2 = arith.constant 0 : index
    %1 = vector.load %arg3[%c0_1, %c0_2] : memref<1024x128xbf16, #tpu.memory_space<vmem>>, vector<1024x128xbf16>
    %cst = arith.constant dense<0.000000e+00> : vector<32x128xf32>
    %2 = tpu.matmul %0, %1, %cst {dimension_numbers = #tpu.dot_dimension_numbers<[1], [0], [0], [1], [0, 0, 1, 1], [], []>} : vector<32x1024xbf16>, vector<1024x128xbf16>, vector<32x128xf32> -> vector<32x128xf32>
    %c0_3 = arith.constant 0 : index
    %c0_4 = arith.constant 0 : index
    %3 = vector.load %arg4[%c0_3, %c0_4] : memref<1x128xf32, #tpu.memory_space<vmem>>, vector<1x128xf32>
    %4 = vector.broadcast %3 : vector<1x128xf32> to vector<32x128xf32>
    %5 = arith.addf %2, %4 : vector<32x128xf32>
    %cst_5 = arith.constant 0.000000e+00 : f32
    %6 = vector.broadcast %cst_5 : f32 to vector<32x128xf32>
    %7 = arith.maximumf %5, %6 : vector<32x128xf32>
    %c0_6 = arith.constant 0 : index
    %c0_7 = arith.constant 0 : index
    %8 = vector.load %arg5[%c0_6, %c0_7] : memref<32x128xf32, #tpu.memory_space<vmem>>, vector<32x128xf32>
    tpu.vector_store %arg5[%c0_6, %c0_7], %7 {strides = array<i32>} : memref<32x128xf32, #tpu.memory_space<vmem>>, vector<32x128xf32>,
    return
  }
  func.func @transform_0(%arg0: i32, %arg1: i32) -> (i32, i32) {
    %c0_i32 = arith.constant 0 : i32
    %c0_i32_0 = arith.constant 0 : i32
    return %arg0, %c0_i32 : i32, i32
  }
  func.func @transform_1(%arg0: i32, %arg1: i32) -> (i32, i32) {
    %c0_i32 = arith.constant 0 : i32
    %c0_i32_0 = arith.constant 0 : i32
    return %c0_i32, %arg1 : i32, i32
  }
  func.func @transform_2(%arg0: i32, %arg1: i32) -> (i32, i32) {
    %c0_i32 = arith.constant 0 : i32
    %c0_i32_0 = arith.constant 0 : i32
    return %c0_i32, %arg1 : i32, i32
  }
  func.func @transform_3(%arg0: i32, %arg1: i32) -> (i32, i32) {
    %c0_i32 = arith.constant 0 : i32
    return %arg0, %arg1 : i32, i32
  }
}

module attributes {stable_mosaic.version = 11 : i64} {
  func.func @_gemm_bias_act_kernel(%arg0: i32, %arg1: i32, %arg2: i32, %arg3: memref<16x512xbf16, #tpu.memory_space<vmem>>, %arg4: memref<512x256xbf16, #tpu.memory_space<vmem>>, %arg5: memref<1x256xf32, #tpu.memory_space<vmem>>, %arg6: memref<16x256xf32, #tpu.memory_space<vmem>>, %arg7: memref<16x256xf32, #tpu.memory_space<vmem>>) attributes {dimension_semantics = [#tpu.dimension_semantics<parallel>, #tpu.dimension_semantics<parallel>, #tpu.dimension_semantics<arbitrary>], iteration_bounds = array<i64: 1, 1, 4>, scalar_prefetch = 0 : i64, scratch_operands = 1 : i64, tpu.core_type = #tpu.core_type<tc>, window_params = [{transform_indices = @transform_0, window_bounds = array<i64: 16, 512>}, {transform_indices = @transform_1, window_bounds = array<i64: 512, 256>}, {transform_indices = @transform_2, window_bounds = array<i64: 1, 256>}, {transform_indices = @transform_3, window_bounds = array<i64: 16, 256>}]} {
    %c0_i32 = arith.constant 0 : i32
    %0 = arith.cmpi eq, %arg2, %c0_i32 : i32
    %1 = arith.extui %0 : i1 to i32
    %c0_i32_0 = arith.constant 0 : i32
    %2 = arith.cmpi ne, %1, %c0_i32_0 : i32
    scf.if %2 {
      %cst_9 = arith.constant 0.000000e+00 : f32
      %12 = vector.broadcast %cst_9 : f32 to vector<16x256xf32>
      %c0_10 = arith.constant 0 : index
      %c0_11 = arith.constant 0 : index
      %13 = vector.load %arg7[%c0_10, %c0_11] : memref<16x256xf32, #tpu.memory_space<vmem>>, vector<16x256xf32>
      tpu.vector_store %arg7[%c0_10, %c0_11], %12 {strides = array<i32>} : memref<16x256xf32, #tpu.memory_space<vmem>>, vector<16x256xf32>,
    } else {
    }
    %c0 = arith.constant 0 : index
    %c0_1 = arith.constant 0 : index
    %3 = vector.load %arg7[%c0, %c0_1] : memref<16x256xf32, #tpu.memory_space<vmem>>, vector<16x256xf32>
    %c0_2 = arith.constant 0 : index
    %c0_3 = arith.constant 0 : index
    %4 = vector.load %arg3[%c0_2, %c0_3] : memref<16x512xbf16, #tpu.memory_space<vmem>>, vector<16x512xbf16>
    %c0_4 = arith.constant 0 : index
    %c0_5 = arith.constant 0 : index
    %5 = vector.load %arg4[%c0_4, %c0_5] : memref<512x256xbf16, #tpu.memory_space<vmem>>, vector<512x256xbf16>
    %cst = arith.constant dense<0.000000e+00> : vector<16x256xf32>
    %6 = tpu.matmul %4, %5, %cst {dimension_numbers = #tpu.dot_dimension_numbers<[1], [0], [0], [1], [0, 0, 1, 1], [], []>} : vector<16x512xbf16>, vector<512x256xbf16>, vector<16x256xf32> -> vector<16x256xf32>
    %7 = arith.addf %3, %6 : vector<16x256xf32>
    %c0_6 = arith.constant 0 : index
    %c0_7 = arith.constant 0 : index
    %8 = vector.load %arg7[%c0_6, %c0_7] : memref<16x256xf32, #tpu.memory_space<vmem>>, vector<16x256xf32>
    tpu.vector_store %arg7[%c0_6, %c0_7], %7 {strides = array<i32>} : memref<16x256xf32, #tpu.memory_space<vmem>>, vector<16x256xf32>,
    %c3_i32 = arith.constant 3 : i32
    %9 = arith.cmpi eq, %arg2, %c3_i32 : i32
    %10 = arith.extui %9 : i1 to i32
    %c0_i32_8 = arith.constant 0 : i32
    %11 = arith.cmpi ne, %10, %c0_i32_8 : i32
    scf.if %11 {
      %c0_9 = arith.constant 0 : index
      %c0_10 = arith.constant 0 : index
      %12 = vector.load %arg7[%c0_9, %c0_10] : memref<16x256xf32, #tpu.memory_space<vmem>>, vector<16x256xf32>
      %c0_11 = arith.constant 0 : index
      %c0_12 = arith.constant 0 : index
      %13 = vector.load %arg5[%c0_11, %c0_12] : memref<1x256xf32, #tpu.memory_space<vmem>>, vector<1x256xf32>
      %14 = vector.broadcast %13 : vector<1x256xf32> to vector<16x256xf32>
      %15 = arith.addf %12, %14 : vector<16x256xf32>
      %cst_13 = arith.constant 0.000000e+00 : f32
      %16 = vector.broadcast %cst_13 : f32 to vector<16x256xf32>
      %17 = arith.maximumf %15, %16 : vector<16x256xf32>
      %c0_14 = arith.constant 0 : index
      %c0_15 = arith.constant 0 : index
      %18 = vector.load %arg6[%c0_14, %c0_15] : memref<16x256xf32, #tpu.memory_space<vmem>>, vector<16x256xf32>
      tpu.vector_store %arg6[%c0_14, %c0_15], %17 {strides = array<i32>} : memref<16x256xf32, #tpu.memory_space<vmem>>, vector<16x256xf32>,
    } else {
    }
    return
  }
  func.func @transform_0(%arg0: i32, %arg1: i32, %arg2: i32) -> (i32, i32) {
    %c0_i32 = arith.constant 0 : i32
    return %arg0, %arg2 : i32, i32
  }
  func.func @transform_1(%arg0: i32, %arg1: i32, %arg2: i32) -> (i32, i32) {
    %c0_i32 = arith.constant 0 : i32
    return %arg2, %arg1 : i32, i32
  }
  func.func @transform_2(%arg0: i32, %arg1: i32, %arg2: i32) -> (i32, i32) {
    %c0_i32 = arith.constant 0 : i32
    %c0_i32_0 = arith.constant 0 : i32
    return %c0_i32, %arg1 : i32, i32
  }
  func.func @transform_3(%arg0: i32, %arg1: i32, %arg2: i32) -> (i32, i32) {
    %c0_i32 = arith.constant 0 : i32
    return %arg0, %arg1 : i32, i32
  }
}

module attributes {stable_mosaic.version = 11 : i64} {
  func.func @_gemm_bias_act_kernel(%arg0: i32, %arg1: i32, %arg2: i32, %arg3: memref<16x384xbf16, #tpu.memory_space<vmem>>, %arg4: memref<384x256xbf16, #tpu.memory_space<vmem>>, %arg5: memref<1x256xf32, #tpu.memory_space<vmem>>, %arg6: memref<16x256xf32, #tpu.memory_space<vmem>>, %arg7: memref<16x256xf32, #tpu.memory_space<vmem>>) attributes {dimension_semantics = [#tpu.dimension_semantics<parallel>, #tpu.dimension_semantics<parallel>, #tpu.dimension_semantics<arbitrary>], iteration_bounds = array<i64: 1, 2, 6>, scalar_prefetch = 0 : i64, scratch_operands = 1 : i64, tpu.core_type = #tpu.core_type<tc>, window_params = [{transform_indices = @transform_0, window_bounds = array<i64: 16, 384>}, {transform_indices = @transform_1, window_bounds = array<i64: 384, 256>}, {transform_indices = @transform_2, window_bounds = array<i64: 1, 256>}, {transform_indices = @transform_3, window_bounds = array<i64: 16, 256>}]} {
    %c0_i32 = arith.constant 0 : i32
    %0 = arith.cmpi eq, %arg2, %c0_i32 : i32
    %1 = arith.extui %0 : i1 to i32
    %c0_i32_0 = arith.constant 0 : i32
    %2 = arith.cmpi ne, %1, %c0_i32_0 : i32
    scf.if %2 {
      %cst_9 = arith.constant 0.000000e+00 : f32
      %12 = vector.broadcast %cst_9 : f32 to vector<16x256xf32>
      %c0_10 = arith.constant 0 : index
      %c0_11 = arith.constant 0 : index
      %13 = vector.load %arg7[%c0_10, %c0_11] : memref<16x256xf32, #tpu.memory_space<vmem>>, vector<16x256xf32>
      tpu.vector_store %arg7[%c0_10, %c0_11], %12 {strides = array<i32>} : memref<16x256xf32, #tpu.memory_space<vmem>>, vector<16x256xf32>,
    } else {
    }
    %c0 = arith.constant 0 : index
    %c0_1 = arith.constant 0 : index
    %3 = vector.load %arg7[%c0, %c0_1] : memref<16x256xf32, #tpu.memory_space<vmem>>, vector<16x256xf32>
    %c0_2 = arith.constant 0 : index
    %c0_3 = arith.constant 0 : index
    %4 = vector.load %arg3[%c0_2, %c0_3] : memref<16x384xbf16, #tpu.memory_space<vmem>>, vector<16x384xbf16>
    %c0_4 = arith.constant 0 : index
    %c0_5 = arith.constant 0 : index
    %5 = vector.load %arg4[%c0_4, %c0_5] : memref<384x256xbf16, #tpu.memory_space<vmem>>, vector<384x256xbf16>
    %cst = arith.constant dense<0.000000e+00> : vector<16x256xf32>
    %6 = tpu.matmul %4, %5, %cst {dimension_numbers = #tpu.dot_dimension_numbers<[1], [0], [0], [1], [0, 0, 1, 1], [], []>} : vector<16x384xbf16>, vector<384x256xbf16>, vector<16x256xf32> -> vector<16x256xf32>
    %7 = arith.addf %3, %6 : vector<16x256xf32>
    %c0_6 = arith.constant 0 : index
    %c0_7 = arith.constant 0 : index
    %8 = vector.load %arg7[%c0_6, %c0_7] : memref<16x256xf32, #tpu.memory_space<vmem>>, vector<16x256xf32>
    tpu.vector_store %arg7[%c0_6, %c0_7], %7 {strides = array<i32>} : memref<16x256xf32, #tpu.memory_space<vmem>>, vector<16x256xf32>,
    %c5_i32 = arith.constant 5 : i32
    %9 = arith.cmpi eq, %arg2, %c5_i32 : i32
    %10 = arith.extui %9 : i1 to i32
    %c0_i32_8 = arith.constant 0 : i32
    %11 = arith.cmpi ne, %10, %c0_i32_8 : i32
    scf.if %11 {
      %c0_9 = arith.constant 0 : index
      %c0_10 = arith.constant 0 : index
      %12 = vector.load %arg7[%c0_9, %c0_10] : memref<16x256xf32, #tpu.memory_space<vmem>>, vector<16x256xf32>
      %c0_11 = arith.constant 0 : index
      %c0_12 = arith.constant 0 : index
      %13 = vector.load %arg5[%c0_11, %c0_12] : memref<1x256xf32, #tpu.memory_space<vmem>>, vector<1x256xf32>
      %14 = vector.broadcast %13 : vector<1x256xf32> to vector<16x256xf32>
      %15 = arith.addf %12, %14 : vector<16x256xf32>
      %cst_13 = arith.constant 0.000000e+00 : f32
      %16 = vector.broadcast %cst_13 : f32 to vector<16x256xf32>
      %17 = arith.maximumf %15, %16 : vector<16x256xf32>
      %c0_14 = arith.constant 0 : index
      %c0_15 = arith.constant 0 : index
      %18 = vector.load %arg6[%c0_14, %c0_15] : memref<16x256xf32, #tpu.memory_space<vmem>>, vector<16x256xf32>
      tpu.vector_store %arg6[%c0_14, %c0_15], %17 {strides = array<i32>} : memref<16x256xf32, #tpu.memory_space<vmem>>, vector<16x256xf32>,
    } else {
    }
    return
  }
  func.func @transform_0(%arg0: i32, %arg1: i32, %arg2: i32) -> (i32, i32) {
    %c0_i32 = arith.constant 0 : i32
    return %arg0, %arg2 : i32, i32
  }
  func.func @transform_1(%arg0: i32, %arg1: i32, %arg2: i32) -> (i32, i32) {
    %c0_i32 = arith.constant 0 : i32
    return %arg2, %arg1 : i32, i32
  }
  func.func @transform_2(%arg0: i32, %arg1: i32, %arg2: i32) -> (i32, i32) {
    %c0_i32 = arith.constant 0 : i32
    %c0_i32_0 = arith.constant 0 : i32
    return %c0_i32, %arg1 : i32, i32
  }
  func.func @transform_3(%arg0: i32, %arg1: i32, %arg2: i32) -> (i32, i32) {
    %c0_i32 = arith.constant 0 : i32
    return %arg0, %arg1 : i32, i32
  }
}

module attributes {stable_mosaic.version = 11 : i64} {
  func.func @_gemm_bias_act_single_kernel(%arg0: i32, %arg1: i32, %arg2: memref<16x512xbf16, #tpu.memory_space<vmem>>, %arg3: memref<512x128xbf16, #tpu.memory_space<vmem>>, %arg4: memref<1x128xf32, #tpu.memory_space<vmem>>, %arg5: memref<16x128xf32, #tpu.memory_space<vmem>>) attributes {dimension_semantics = [#tpu.dimension_semantics<parallel>, #tpu.dimension_semantics<parallel>], iteration_bounds = array<i64: 1, 1>, scalar_prefetch = 0 : i64, scratch_operands = 0 : i64, tpu.core_type = #tpu.core_type<tc>, window_params = [{transform_indices = @transform_0, window_bounds = array<i64: 16, 512>}, {transform_indices = @transform_1, window_bounds = array<i64: 512, 128>}, {transform_indices = @transform_2, window_bounds = array<i64: 1, 128>}, {transform_indices = @transform_3, window_bounds = array<i64: 16, 128>}]} {
    %c0 = arith.constant 0 : index
    %c0_0 = arith.constant 0 : index
    %0 = vector.load %arg2[%c0, %c0_0] : memref<16x512xbf16, #tpu.memory_space<vmem>>, vector<16x512xbf16>
    %c0_1 = arith.constant 0 : index
    %c0_2 = arith.constant 0 : index
    %1 = vector.load %arg3[%c0_1, %c0_2] : memref<512x128xbf16, #tpu.memory_space<vmem>>, vector<512x128xbf16>
    %cst = arith.constant dense<0.000000e+00> : vector<16x128xf32>
    %2 = tpu.matmul %0, %1, %cst {dimension_numbers = #tpu.dot_dimension_numbers<[1], [0], [0], [1], [0, 0, 1, 1], [], []>} : vector<16x512xbf16>, vector<512x128xbf16>, vector<16x128xf32> -> vector<16x128xf32>
    %c0_3 = arith.constant 0 : index
    %c0_4 = arith.constant 0 : index
    %3 = vector.load %arg4[%c0_3, %c0_4] : memref<1x128xf32, #tpu.memory_space<vmem>>, vector<1x128xf32>
    %4 = vector.broadcast %3 : vector<1x128xf32> to vector<16x128xf32>
    %5 = arith.addf %2, %4 : vector<16x128xf32>
    %c0_5 = arith.constant 0 : index
    %c0_6 = arith.constant 0 : index
    %6 = vector.load %arg5[%c0_5, %c0_6] : memref<16x128xf32, #tpu.memory_space<vmem>>, vector<16x128xf32>
    tpu.vector_store %arg5[%c0_5, %c0_6], %5 {strides = array<i32>} : memref<16x128xf32, #tpu.memory_space<vmem>>, vector<16x128xf32>,
    return
  }
  func.func @transform_0(%arg0: i32, %arg1: i32) -> (i32, i32) {
    %c0_i32 = arith.constant 0 : i32
    %c0_i32_0 = arith.constant 0 : i32
    return %arg0, %c0_i32 : i32, i32
  }
  func.func @transform_1(%arg0: i32, %arg1: i32) -> (i32, i32) {
    %c0_i32 = arith.constant 0 : i32
    %c0_i32_0 = arith.constant 0 : i32
    return %c0_i32, %arg1 : i32, i32
  }
  func.func @transform_2(%arg0: i32, %arg1: i32) -> (i32, i32) {
    %c0_i32 = arith.constant 0 : i32
    %c0_i32_0 = arith.constant 0 : i32
    return %c0_i32, %arg1 : i32, i32
  }
  func.func @transform_3(%arg0: i32, %arg1: i32) -> (i32, i32) {
    %c0_i32 = arith.constant 0 : i32
    return %arg0, %arg1 : i32, i32
  }
}

module attributes {stable_mosaic.version = 11 : i64} {
  func.func @_reparam_kernel(%arg0: memref<1x128xf32, #tpu.memory_space<vmem>>, %arg1: memref<1x128xf32, #tpu.memory_space<vmem>>, %arg2: memref<1x128xf32, #tpu.memory_space<vmem>>, %arg3: memref<1x128xf32, #tpu.memory_space<vmem>>) attributes {dimension_semantics = [], scalar_prefetch = 0 : i64, scratch_operands = 0 : i64, tpu.core_type = #tpu.core_type<tc>} {
    %c0 = arith.constant 0 : index
    %c0_0 = arith.constant 0 : index
    %0 = vector.load %arg0[%c0, %c0_0] : memref<1x128xf32, #tpu.memory_space<vmem>>, vector<1x128xf32>
    %c0_1 = arith.constant 0 : index
    %c0_2 = arith.constant 0 : index
    %1 = vector.load %arg2[%c0_1, %c0_2] : memref<1x128xf32, #tpu.memory_space<vmem>>, vector<1x128xf32>
    %c0_3 = arith.constant 0 : index
    %c0_4 = arith.constant 0 : index
    %2 = vector.load %arg1[%c0_3, %c0_4] : memref<1x128xf32, #tpu.memory_space<vmem>>, vector<1x128xf32>
    %cst = arith.constant 5.000000e-01 : f32
    %3 = vector.broadcast %cst : f32 to vector<1x128xf32>
    %4 = arith.mulf %3, %2 : vector<1x128xf32>
    %5 = math.exp %4 : vector<1x128xf32>
    %6 = arith.mulf %1, %5 : vector<1x128xf32>
    %7 = arith.addf %0, %6 : vector<1x128xf32>
    %c0_5 = arith.constant 0 : index
    %c0_6 = arith.constant 0 : index
    %8 = vector.load %arg3[%c0_5, %c0_6] : memref<1x128xf32, #tpu.memory_space<vmem>>, vector<1x128xf32>
    tpu.vector_store %arg3[%c0_5, %c0_6], %7 {strides = array<i32>} : memref<1x128xf32, #tpu.memory_space<vmem>>, vector<1x128xf32>,
    return
  }
}

module attributes {stable_mosaic.version = 11 : i64} {
  func.func @_gemm_bias_act_single_kernel(%arg0: i32, %arg1: i32, %arg2: memref<16x128xbf16, #tpu.memory_space<vmem>>, %arg3: memref<128x256xbf16, #tpu.memory_space<vmem>>, %arg4: memref<1x256xf32, #tpu.memory_space<vmem>>, %arg5: memref<16x256xf32, #tpu.memory_space<vmem>>) attributes {dimension_semantics = [#tpu.dimension_semantics<parallel>, #tpu.dimension_semantics<parallel>], iteration_bounds = array<i64: 1, 2>, scalar_prefetch = 0 : i64, scratch_operands = 0 : i64, tpu.core_type = #tpu.core_type<tc>, window_params = [{transform_indices = @transform_0, window_bounds = array<i64: 16, 128>}, {transform_indices = @transform_1, window_bounds = array<i64: 128, 256>}, {transform_indices = @transform_2, window_bounds = array<i64: 1, 256>}, {transform_indices = @transform_3, window_bounds = array<i64: 16, 256>}]} {
    %c0 = arith.constant 0 : index
    %c0_0 = arith.constant 0 : index
    %0 = vector.load %arg2[%c0, %c0_0] : memref<16x128xbf16, #tpu.memory_space<vmem>>, vector<16x128xbf16>
    %c0_1 = arith.constant 0 : index
    %c0_2 = arith.constant 0 : index
    %1 = vector.load %arg3[%c0_1, %c0_2] : memref<128x256xbf16, #tpu.memory_space<vmem>>, vector<128x256xbf16>
    %cst = arith.constant dense<0.000000e+00> : vector<16x256xf32>
    %2 = tpu.matmul %0, %1, %cst {dimension_numbers = #tpu.dot_dimension_numbers<[1], [0], [0], [1], [0, 0, 1, 1], [], []>} : vector<16x128xbf16>, vector<128x256xbf16>, vector<16x256xf32> -> vector<16x256xf32>
    %c0_3 = arith.constant 0 : index
    %c0_4 = arith.constant 0 : index
    %3 = vector.load %arg4[%c0_3, %c0_4] : memref<1x256xf32, #tpu.memory_space<vmem>>, vector<1x256xf32>
    %4 = vector.broadcast %3 : vector<1x256xf32> to vector<16x256xf32>
    %5 = arith.addf %2, %4 : vector<16x256xf32>
    %cst_5 = arith.constant 0.000000e+00 : f32
    %6 = vector.broadcast %cst_5 : f32 to vector<16x256xf32>
    %7 = arith.maximumf %5, %6 : vector<16x256xf32>
    %c0_6 = arith.constant 0 : index
    %c0_7 = arith.constant 0 : index
    %8 = vector.load %arg5[%c0_6, %c0_7] : memref<16x256xf32, #tpu.memory_space<vmem>>, vector<16x256xf32>
    tpu.vector_store %arg5[%c0_6, %c0_7], %7 {strides = array<i32>} : memref<16x256xf32, #tpu.memory_space<vmem>>, vector<16x256xf32>,
    return
  }
  func.func @transform_0(%arg0: i32, %arg1: i32) -> (i32, i32) {
    %c0_i32 = arith.constant 0 : i32
    %c0_i32_0 = arith.constant 0 : i32
    return %arg0, %c0_i32 : i32, i32
  }
  func.func @transform_1(%arg0: i32, %arg1: i32) -> (i32, i32) {
    %c0_i32 = arith.constant 0 : i32
    %c0_i32_0 = arith.constant 0 : i32
    return %c0_i32, %arg1 : i32, i32
  }
  func.func @transform_2(%arg0: i32, %arg1: i32) -> (i32, i32) {
    %c0_i32 = arith.constant 0 : i32
    %c0_i32_0 = arith.constant 0 : i32
    return %c0_i32, %arg1 : i32, i32
  }
  func.func @transform_3(%arg0: i32, %arg1: i32) -> (i32, i32) {
    %c0_i32 = arith.constant 0 : i32
    return %arg0, %arg1 : i32, i32
  }
}

module attributes {stable_mosaic.version = 11 : i64} {
  func.func @_gemm_bias_act_kernel(%arg0: i32, %arg1: i32, %arg2: i32, %arg3: memref<16x512xbf16, #tpu.memory_space<vmem>>, %arg4: memref<512x256xbf16, #tpu.memory_space<vmem>>, %arg5: memref<1x256xf32, #tpu.memory_space<vmem>>, %arg6: memref<16x256xf32, #tpu.memory_space<vmem>>, %arg7: memref<16x256xf32, #tpu.memory_space<vmem>>) attributes {dimension_semantics = [#tpu.dimension_semantics<parallel>, #tpu.dimension_semantics<parallel>, #tpu.dimension_semantics<arbitrary>], iteration_bounds = array<i64: 1, 1, 4>, scalar_prefetch = 0 : i64, scratch_operands = 1 : i64, tpu.core_type = #tpu.core_type<tc>, window_params = [{transform_indices = @transform_0, window_bounds = array<i64: 16, 512>}, {transform_indices = @transform_1, window_bounds = array<i64: 512, 256>}, {transform_indices = @transform_2, window_bounds = array<i64: 1, 256>}, {transform_indices = @transform_3, window_bounds = array<i64: 16, 256>}]} {
    %c0_i32 = arith.constant 0 : i32
    %0 = arith.cmpi eq, %arg2, %c0_i32 : i32
    %1 = arith.extui %0 : i1 to i32
    %c0_i32_0 = arith.constant 0 : i32
    %2 = arith.cmpi ne, %1, %c0_i32_0 : i32
    scf.if %2 {
      %cst_9 = arith.constant 0.000000e+00 : f32
      %12 = vector.broadcast %cst_9 : f32 to vector<16x256xf32>
      %c0_10 = arith.constant 0 : index
      %c0_11 = arith.constant 0 : index
      %13 = vector.load %arg7[%c0_10, %c0_11] : memref<16x256xf32, #tpu.memory_space<vmem>>, vector<16x256xf32>
      tpu.vector_store %arg7[%c0_10, %c0_11], %12 {strides = array<i32>} : memref<16x256xf32, #tpu.memory_space<vmem>>, vector<16x256xf32>,
    } else {
    }
    %c0 = arith.constant 0 : index
    %c0_1 = arith.constant 0 : index
    %3 = vector.load %arg7[%c0, %c0_1] : memref<16x256xf32, #tpu.memory_space<vmem>>, vector<16x256xf32>
    %c0_2 = arith.constant 0 : index
    %c0_3 = arith.constant 0 : index
    %4 = vector.load %arg3[%c0_2, %c0_3] : memref<16x512xbf16, #tpu.memory_space<vmem>>, vector<16x512xbf16>
    %c0_4 = arith.constant 0 : index
    %c0_5 = arith.constant 0 : index
    %5 = vector.load %arg4[%c0_4, %c0_5] : memref<512x256xbf16, #tpu.memory_space<vmem>>, vector<512x256xbf16>
    %cst = arith.constant dense<0.000000e+00> : vector<16x256xf32>
    %6 = tpu.matmul %4, %5, %cst {dimension_numbers = #tpu.dot_dimension_numbers<[1], [0], [0], [1], [0, 0, 1, 1], [], []>} : vector<16x512xbf16>, vector<512x256xbf16>, vector<16x256xf32> -> vector<16x256xf32>
    %7 = arith.addf %3, %6 : vector<16x256xf32>
    %c0_6 = arith.constant 0 : index
    %c0_7 = arith.constant 0 : index
    %8 = vector.load %arg7[%c0_6, %c0_7] : memref<16x256xf32, #tpu.memory_space<vmem>>, vector<16x256xf32>
    tpu.vector_store %arg7[%c0_6, %c0_7], %7 {strides = array<i32>} : memref<16x256xf32, #tpu.memory_space<vmem>>, vector<16x256xf32>,
    %c3_i32 = arith.constant 3 : i32
    %9 = arith.cmpi eq, %arg2, %c3_i32 : i32
    %10 = arith.extui %9 : i1 to i32
    %c0_i32_8 = arith.constant 0 : i32
    %11 = arith.cmpi ne, %10, %c0_i32_8 : i32
    scf.if %11 {
      %c0_9 = arith.constant 0 : index
      %c0_10 = arith.constant 0 : index
      %12 = vector.load %arg7[%c0_9, %c0_10] : memref<16x256xf32, #tpu.memory_space<vmem>>, vector<16x256xf32>
      %c0_11 = arith.constant 0 : index
      %c0_12 = arith.constant 0 : index
      %13 = vector.load %arg5[%c0_11, %c0_12] : memref<1x256xf32, #tpu.memory_space<vmem>>, vector<1x256xf32>
      %14 = vector.broadcast %13 : vector<1x256xf32> to vector<16x256xf32>
      %15 = arith.addf %12, %14 : vector<16x256xf32>
      %cst_13 = arith.constant 0.000000e+00 : f32
      %16 = vector.broadcast %cst_13 : f32 to vector<16x256xf32>
      %17 = arith.maximumf %15, %16 : vector<16x256xf32>
      %c0_14 = arith.constant 0 : index
      %c0_15 = arith.constant 0 : index
      %18 = vector.load %arg6[%c0_14, %c0_15] : memref<16x256xf32, #tpu.memory_space<vmem>>, vector<16x256xf32>
      tpu.vector_store %arg6[%c0_14, %c0_15], %17 {strides = array<i32>} : memref<16x256xf32, #tpu.memory_space<vmem>>, vector<16x256xf32>,
    } else {
    }
    return
  }
  func.func @transform_0(%arg0: i32, %arg1: i32, %arg2: i32) -> (i32, i32) {
    %c0_i32 = arith.constant 0 : i32
    return %arg0, %arg2 : i32, i32
  }
  func.func @transform_1(%arg0: i32, %arg1: i32, %arg2: i32) -> (i32, i32) {
    %c0_i32 = arith.constant 0 : i32
    return %arg2, %arg1 : i32, i32
  }
  func.func @transform_2(%arg0: i32, %arg1: i32, %arg2: i32) -> (i32, i32) {
    %c0_i32 = arith.constant 0 : i32
    %c0_i32_0 = arith.constant 0 : i32
    return %c0_i32, %arg1 : i32, i32
  }
  func.func @transform_3(%arg0: i32, %arg1: i32, %arg2: i32) -> (i32, i32) {
    %c0_i32 = arith.constant 0 : i32
    return %arg0, %arg1 : i32, i32
  }
}

module attributes {stable_mosaic.version = 11 : i64} {
  func.func @_gemm_bias_act_single_kernel(%arg0: i32, %arg1: i32, %arg2: memref<32x1024xbf16, #tpu.memory_space<vmem>>, %arg3: memref<1024x128xbf16, #tpu.memory_space<vmem>>, %arg4: memref<1x128xf32, #tpu.memory_space<vmem>>, %arg5: memref<32x128xf32, #tpu.memory_space<vmem>>) attributes {dimension_semantics = [#tpu.dimension_semantics<parallel>, #tpu.dimension_semantics<parallel>], iteration_bounds = array<i64: 1, 1>, scalar_prefetch = 0 : i64, scratch_operands = 0 : i64, tpu.core_type = #tpu.core_type<tc>, window_params = [{transform_indices = @transform_0, window_bounds = array<i64: 32, 1024>}, {transform_indices = @transform_1, window_bounds = array<i64: 1024, 128>}, {transform_indices = @transform_2, window_bounds = array<i64: 1, 128>}, {transform_indices = @transform_3, window_bounds = array<i64: 32, 128>}]} {
    %c0 = arith.constant 0 : index
    %c0_0 = arith.constant 0 : index
    %0 = vector.load %arg2[%c0, %c0_0] : memref<32x1024xbf16, #tpu.memory_space<vmem>>, vector<32x1024xbf16>
    %c0_1 = arith.constant 0 : index
    %c0_2 = arith.constant 0 : index
    %1 = vector.load %arg3[%c0_1, %c0_2] : memref<1024x128xbf16, #tpu.memory_space<vmem>>, vector<1024x128xbf16>
    %cst = arith.constant dense<0.000000e+00> : vector<32x128xf32>
    %2 = tpu.matmul %0, %1, %cst {dimension_numbers = #tpu.dot_dimension_numbers<[1], [0], [0], [1], [0, 0, 1, 1], [], []>} : vector<32x1024xbf16>, vector<1024x128xbf16>, vector<32x128xf32> -> vector<32x128xf32>
    %c0_3 = arith.constant 0 : index
    %c0_4 = arith.constant 0 : index
    %3 = vector.load %arg4[%c0_3, %c0_4] : memref<1x128xf32, #tpu.memory_space<vmem>>, vector<1x128xf32>
    %4 = vector.broadcast %3 : vector<1x128xf32> to vector<32x128xf32>
    %5 = arith.addf %2, %4 : vector<32x128xf32>
    %cst_5 = arith.constant 0.000000e+00 : f32
    %6 = vector.broadcast %cst_5 : f32 to vector<32x128xf32>
    %7 = arith.maximumf %5, %6 : vector<32x128xf32>
    %c0_6 = arith.constant 0 : index
    %c0_7 = arith.constant 0 : index
    %8 = vector.load %arg5[%c0_6, %c0_7] : memref<32x128xf32, #tpu.memory_space<vmem>>, vector<32x128xf32>
    tpu.vector_store %arg5[%c0_6, %c0_7], %7 {strides = array<i32>} : memref<32x128xf32, #tpu.memory_space<vmem>>, vector<32x128xf32>,
    return
  }
  func.func @transform_0(%arg0: i32, %arg1: i32) -> (i32, i32) {
    %c0_i32 = arith.constant 0 : i32
    %c0_i32_0 = arith.constant 0 : i32
    return %arg0, %c0_i32 : i32, i32
  }
  func.func @transform_1(%arg0: i32, %arg1: i32) -> (i32, i32) {
    %c0_i32 = arith.constant 0 : i32
    %c0_i32_0 = arith.constant 0 : i32
    return %c0_i32, %arg1 : i32, i32
  }
  func.func @transform_2(%arg0: i32, %arg1: i32) -> (i32, i32) {
    %c0_i32 = arith.constant 0 : i32
    %c0_i32_0 = arith.constant 0 : i32
    return %c0_i32, %arg1 : i32, i32
  }
  func.func @transform_3(%arg0: i32, %arg1: i32) -> (i32, i32) {
    %c0_i32 = arith.constant 0 : i32
    return %arg0, %arg1 : i32, i32
  }
}

module attributes {stable_mosaic.version = 11 : i64} {
  func.func @_gemm_bias_act_single_kernel(%arg0: i32, %arg1: i32, %arg2: memref<128x512xbf16, #tpu.memory_space<vmem>>, %arg3: memref<512x128xbf16, #tpu.memory_space<vmem>>, %arg4: memref<1x128xf32, #tpu.memory_space<vmem>>, %arg5: memref<128x128xf32, #tpu.memory_space<vmem>>) attributes {dimension_semantics = [#tpu.dimension_semantics<parallel>, #tpu.dimension_semantics<parallel>], iteration_bounds = array<i64: 1, 1>, scalar_prefetch = 0 : i64, scratch_operands = 0 : i64, tpu.core_type = #tpu.core_type<tc>, window_params = [{transform_indices = @transform_0, window_bounds = array<i64: 128, 512>}, {transform_indices = @transform_1, window_bounds = array<i64: 512, 128>}, {transform_indices = @transform_2, window_bounds = array<i64: 1, 128>}, {transform_indices = @transform_3, window_bounds = array<i64: 128, 128>}]} {
    %c0 = arith.constant 0 : index
    %c0_0 = arith.constant 0 : index
    %0 = vector.load %arg2[%c0, %c0_0] : memref<128x512xbf16, #tpu.memory_space<vmem>>, vector<128x512xbf16>
    %c0_1 = arith.constant 0 : index
    %c0_2 = arith.constant 0 : index
    %1 = vector.load %arg3[%c0_1, %c0_2] : memref<512x128xbf16, #tpu.memory_space<vmem>>, vector<512x128xbf16>
    %cst = arith.constant dense<0.000000e+00> : vector<128x128xf32>
    %2 = tpu.matmul %0, %1, %cst {dimension_numbers = #tpu.dot_dimension_numbers<[1], [0], [0], [1], [0, 0, 1, 1], [], []>} : vector<128x512xbf16>, vector<512x128xbf16>, vector<128x128xf32> -> vector<128x128xf32>
    %c0_3 = arith.constant 0 : index
    %c0_4 = arith.constant 0 : index
    %3 = vector.load %arg4[%c0_3, %c0_4] : memref<1x128xf32, #tpu.memory_space<vmem>>, vector<1x128xf32>
    %4 = vector.broadcast %3 : vector<1x128xf32> to vector<128x128xf32>
    %5 = arith.addf %2, %4 : vector<128x128xf32>
    %cst_5 = arith.constant 0.000000e+00 : f32
    %6 = vector.broadcast %cst_5 : f32 to vector<128x128xf32>
    %7 = arith.maximumf %5, %6 : vector<128x128xf32>
    %c0_6 = arith.constant 0 : index
    %c0_7 = arith.constant 0 : index
    %8 = vector.load %arg5[%c0_6, %c0_7] : memref<128x128xf32, #tpu.memory_space<vmem>>, vector<128x128xf32>
    tpu.vector_store %arg5[%c0_6, %c0_7], %7 {strides = array<i32>} : memref<128x128xf32, #tpu.memory_space<vmem>>, vector<128x128xf32>,
    return
  }
  func.func @transform_0(%arg0: i32, %arg1: i32) -> (i32, i32) {
    %c0_i32 = arith.constant 0 : i32
    %c0_i32_0 = arith.constant 0 : i32
    return %arg0, %c0_i32 : i32, i32
  }
  func.func @transform_1(%arg0: i32, %arg1: i32) -> (i32, i32) {
    %c0_i32 = arith.constant 0 : i32
    %c0_i32_0 = arith.constant 0 : i32
    return %c0_i32, %arg1 : i32, i32
  }
  func.func @transform_2(%arg0: i32, %arg1: i32) -> (i32, i32) {
    %c0_i32 = arith.constant 0 : i32
    %c0_i32_0 = arith.constant 0 : i32
    return %c0_i32, %arg1 : i32, i32
  }
  func.func @transform_3(%arg0: i32, %arg1: i32) -> (i32, i32) {
    %c0_i32 = arith.constant 0 : i32
    return %arg0, %arg1 : i32, i32
  }
}

module attributes {stable_mosaic.version = 11 : i64} {
  func.func @_gemm_bias_act_single_kernel(%arg0: i32, %arg1: i32, %arg2: memref<512x640xbf16, #tpu.memory_space<vmem>>, %arg3: memref<640x128xbf16, #tpu.memory_space<vmem>>, %arg4: memref<1x128xf32, #tpu.memory_space<vmem>>, %arg5: memref<512x128xf32, #tpu.memory_space<vmem>>) attributes {dimension_semantics = [#tpu.dimension_semantics<parallel>, #tpu.dimension_semantics<parallel>], iteration_bounds = array<i64: 1, 1>, scalar_prefetch = 0 : i64, scratch_operands = 0 : i64, tpu.core_type = #tpu.core_type<tc>, window_params = [{transform_indices = @transform_0, window_bounds = array<i64: 512, 640>}, {transform_indices = @transform_1, window_bounds = array<i64: 640, 128>}, {transform_indices = @transform_2, window_bounds = array<i64: 1, 128>}, {transform_indices = @transform_3, window_bounds = array<i64: 512, 128>}]} {
    %c0 = arith.constant 0 : index
    %c0_0 = arith.constant 0 : index
    %0 = vector.load %arg2[%c0, %c0_0] : memref<512x640xbf16, #tpu.memory_space<vmem>>, vector<512x640xbf16>
    %c0_1 = arith.constant 0 : index
    %c0_2 = arith.constant 0 : index
    %1 = vector.load %arg3[%c0_1, %c0_2] : memref<640x128xbf16, #tpu.memory_space<vmem>>, vector<640x128xbf16>
    %cst = arith.constant dense<0.000000e+00> : vector<512x128xf32>
    %2 = tpu.matmul %0, %1, %cst {dimension_numbers = #tpu.dot_dimension_numbers<[1], [0], [0], [1], [0, 0, 1, 1], [], []>} : vector<512x640xbf16>, vector<640x128xbf16>, vector<512x128xf32> -> vector<512x128xf32>
    %c0_3 = arith.constant 0 : index
    %c0_4 = arith.constant 0 : index
    %3 = vector.load %arg4[%c0_3, %c0_4] : memref<1x128xf32, #tpu.memory_space<vmem>>, vector<1x128xf32>
    %4 = vector.broadcast %3 : vector<1x128xf32> to vector<512x128xf32>
    %5 = arith.addf %2, %4 : vector<512x128xf32>
    %6 = math.tanh %5 : vector<512x128xf32>
    %c0_5 = arith.constant 0 : index
    %c0_6 = arith.constant 0 : index
    %7 = vector.load %arg5[%c0_5, %c0_6] : memref<512x128xf32, #tpu.memory_space<vmem>>, vector<512x128xf32>
    tpu.vector_store %arg5[%c0_5, %c0_6], %6 {strides = array<i32>} : memref<512x128xf32, #tpu.memory_space<vmem>>, vector<512x128xf32>,
    return
  }
  func.func @transform_0(%arg0: i32, %arg1: i32) -> (i32, i32) {
    %c0_i32 = arith.constant 0 : i32
    %c0_i32_0 = arith.constant 0 : i32
    return %arg0, %c0_i32 : i32, i32
  }
  func.func @transform_1(%arg0: i32, %arg1: i32) -> (i32, i32) {
    %c0_i32 = arith.constant 0 : i32
    %c0_i32_0 = arith.constant 0 : i32
    return %c0_i32, %arg1 : i32, i32
  }
  func.func @transform_2(%arg0: i32, %arg1: i32) -> (i32, i32) {
    %c0_i32 = arith.constant 0 : i32
    %c0_i32_0 = arith.constant 0 : i32
    return %c0_i32, %arg1 : i32, i32
  }
  func.func @transform_3(%arg0: i32, %arg1: i32) -> (i32, i32) {
    %c0_i32 = arith.constant 0 : i32
    return %arg0, %arg1 : i32, i32
  }
}

</mosaic_0001>

<llo_original>
// kernel: vae_forward.20
$region0: #{vae_forward.20}
  #allocation0 [shape = 'u32[]', space=smem, size = 0x4, offset = 0x4, fixed_abs, tag = 'smem constant byte address 0x4 - core index']
  #allocation1 [shape = 'u32[72,128]{1,0:T(1,128)}', space=vmem, size = 0x9000, scoped, tag = 'internal scratch']
  %s0 = inlined_call_operand.vmem [shape: bf16[128,128], index: 0, kind: input, shape index: {}]
  %s1 = inlined_call_operand.hbm [shape: bf16[128,128], index: 1, kind: input, shape index: {}]
  %s2 = inlined_call_operand.hbm [shape: f32[1,128], index: 2, kind: input, shape index: {}]
  %s3 = inlined_call_operand.vmem [shape: f32[128,128], index: 3, kind: output, shape index: {}]
  %s4 = sld [smem:[#allocation0]]
  $region30: #{vae_forward.20} parent=0
    _
  %s6 = ssub.s32 1, %s4
  %s7 = scalar_select 0, %s6, %s4
  $region1: #{vae_forward.20} parent=0
    #allocation2 [shape = 'u8[32768]{0}', space=vmem, size = 0x8000, scoped, tag = 'input window, operand 1, single buffered']
    #allocation3 [shape = 's32[1]{0}', space=sflag, size = 0x4, scoped, tag = 'scoped memory for vae_forward.20']
    #allocation4 [shape = 'u8[512]{0}', space=vmem, size = 0x400, scoped, tag = 'input window, operand 2, single buffered']
    #allocation5 [shape = 's32[1]{0}', space=sflag, size = 0x4, scoped, tag = 'scoped memory for vae_forward.20']
    %8 = vsyncpa [#allocation3], 0
    %9 = vsyncpa [#allocation5], 0
    // Predicated region
    $region2: #{vae_forward.20} parent=1 // pred_check
      _
    $region3: #{vae_forward.20} parent=1 // pred_check_branch
      %11 = sbr.rel (0) target = $region5
    $region4: #{vae_forward.20} parent=1 // pred_region
      _
    $region5: #{vae_forward.20} parent=1 // pred_fallthru
      _
    // Predicated region
    $region6: #{vae_forward.20} parent=1 // pred_check
      _
    $region7: #{vae_forward.20} parent=1 // pred_check_branch
      %13 = sbr.rel (0) target = $region9
    $region8: #{vae_forward.20} parent=1 // pred_region
      %15 = vsyncadd [#allocation3], 0
      %s16 = sshll.u32 %s1, 4
      %s17 = int_to_ptr.hbm [resolvable:$true] %s16
      %s18 = sshll.u32 [#allocation2], 4
      %s19 = int_to_ptr.vmem [resolvable:$true] %s18
      %24 = dma.hbm_to_vmem [thread:$0]  %s17, 1024, %s19, [#allocation3], 64, 64, 4
    $region9: #{vae_forward.20} parent=1 // pred_fallthru
      _
    // Predicated region
    $region10: #{vae_forward.20} parent=1 // pred_check
      _
    $region11: #{vae_forward.20} parent=1 // pred_check_branch
      %26 = sbr.rel (0) target = $region13
    $region12: #{vae_forward.20} parent=1 // pred_region
      %28 = vsyncadd [#allocation5], 0
      %s30 = sshll.u32 %s2, 4
      %s31 = int_to_ptr.hbm [resolvable:$true] %s30
      %s32 = sshll.u32 [#allocation4], 4
      %s33 = int_to_ptr.vmem [resolvable:$true] %s32
      %35 = dma.hbm_to_vmem [thread:$0]  %s31, 16, %s33, [#allocation5]
    $region13: #{vae_forward.20} parent=1 // pred_fallthru
      _
    // Predicated region
    $region14: #{vae_forward.20} parent=1 // pred_check
      _
    $region15: #{vae_forward.20} parent=1 // pred_check_branch
      %37 = sbr.rel (0) target = $region17
    $region16: #{vae_forward.20} parent=1 // pred_region
      %39 = dma.done [#allocation3], 1024
    $region17: #{vae_forward.20} parent=1 // pred_fallthru
      _
    // Predicated region
    $region18: #{vae_forward.20} parent=1 // pred_check
      _
    $region19: #{vae_forward.20} parent=1 // pred_check_branch
      %41 = sbr.rel (0) target = $region21
    $region20: #{vae_forward.20} parent=1 // pred_region
      %43 = dma.done [#allocation5], 16
    $region21: #{vae_forward.20} parent=1 // pred_fallthru
      _
    %v44 = vld [vmem:[%s0] sm:$0xf]
    %v45 = vld [vmem:[%s0 + $0x4] sm:$0xf]
    %v46 = vld [vmem:[%s0 + $0x8] sm:$0xf]
    %v47 = vld [vmem:[%s0 + $0xc] sm:$0xf]
    %v48 = vld [vmem:[%s0 + $0x10] sm:$0xf]
    %v49 = vld [vmem:[%s0 + $0x14] sm:$0xf]
    %v50 = vld [vmem:[%s0 + $0x18] sm:$0xf]
    %v51 = vld [vmem:[%s0 + $0x1c] sm:$0xf]
    %v52 = vld [vmem:[%s0 + $0x20] sm:$0xf]
    %v53 = vld [vmem:[%s0 + $0x24] sm:$0xf]
    %v54 = vld [vmem:[%s0 + $0x28] sm:$0xf]
    %v55 = vld [vmem:[%s0 + $0x2c] sm:$0xf]
    %v56 = vld [vmem:[%s0 + $0x30] sm:$0xf]
    %v57 = vld [vmem:[%s0 + $0x34] sm:$0xf]
    %v58 = vld [vmem:[%s0 + $0x38] sm:$0xf]
    %v59 = vld [vmem:[%s0 + $0x3c] sm:$0xf]
    %v60 = vld [vmem:[#allocation2] sm:$0xf]
    %v61 = vld [vmem:[#allocation2 + $0x4] sm:$0xf]
    %v62 = vld [vmem:[#allocation2 + $0x8] sm:$0xf]
    %v63 = vld [vmem:[#allocation2 + $0xc] sm:$0xf]
    %v64 = vld [vmem:[#allocation2 + $0x10] sm:$0xf]
    %v65 = vld [vmem:[#allocation2 + $0x14] sm:$0xf]
    %v66 = vld [vmem:[#allocation2 + $0x18] sm:$0xf]
    %v67 = vld [vmem:[#allocation2 + $0x1c] sm:$0xf]
    %v68 = vld [vmem:[#allocation2 + $0x20] sm:$0xf]
    %v69 = vld [vmem:[#allocation2 + $0x24] sm:$0xf]
    %v70 = vld [vmem:[#allocation2 + $0x28] sm:$0xf]
    %v71 = vld [vmem:[#allocation2 + $0x2c] sm:$0xf]
    %v72 = vld [vmem:[#allocation2 + $0x30] sm:$0xf]
    %v73 = vld [vmem:[#allocation2 + $0x34] sm:$0xf]
    %v74 = vld [vmem:[#allocation2 + $0x38] sm:$0xf]
    %v75 = vld [vmem:[#allocation2 + $0x3c] sm:$0xf]
    %v76 = vld [vmem:[#allocation4] sm:$0x1]
    %v78 = vperm.slane %v76, 0
    %v96 = vunpack.c.l.b16 %v44
    %v97 = vunpack.c.l.b16 %v45
    %v98 = vunpack.c.l.b16 %v46
    %v99 = vunpack.c.l.b16 %v47
    %v100 = vunpack.c.l.b16 %v48
    %v101 = vunpack.c.l.b16 %v49
    %v102 = vunpack.c.l.b16 %v50
    %v103 = vunpack.c.l.b16 %v51
    %v104 = vunpack.c.l.b16 %v52
    %v105 = vunpack.c.l.b16 %v53
    %v106 = vunpack.c.l.b16 %v54
    %v107 = vunpack.c.l.b16 %v55
    %v108 = vunpack.c.l.b16 %v56
    %v109 = vunpack.c.l.b16 %v57
    %v110 = vunpack.c.l.b16 %v58
    %v111 = vunpack.c.l.b16 %v59
    %v112 = vpack.c.b16 %v97, %v96
    %v113 = vpack.c.b16 %v99, %v98
    %v114 = vpack.c.b16 %v101, %v100
    %v115 = vpack.c.b16 %v103, %v102
    %v116 = vpack.c.b16 %v105, %v104
    %v117 = vpack.c.b16 %v107, %v106
    %v118 = vpack.c.b16 %v109, %v108
    %v119 = vpack.c.b16 %v111, %v110
    %v144 = vunpack.c.l.b16 %v60
    %v145 = vunpack.c.l.b16 %v61
    %v146 = vunpack.c.l.b16 %v62
    %v147 = vunpack.c.l.b16 %v63
    %v148 = vunpack.c.l.b16 %v64
    %v149 = vunpack.c.l.b16 %v65
    %v150 = vunpack.c.l.b16 %v66
    %v151 = vunpack.c.l.b16 %v67
    %v152 = vunpack.c.l.b16 %v68
    %v153 = vunpack.c.l.b16 %v69
    %v154 = vunpack.c.l.b16 %v70
    %v155 = vunpack.c.l.b16 %v71
    %v156 = vunpack.c.l.b16 %v72
    %v157 = vunpack.c.l.b16 %v73
    %v158 = vunpack.c.l.b16 %v74
    %v159 = vunpack.c.l.b16 %v75
    %v160 = vpack.c.b16 %v145, %v144
    %v161 = vpack.c.b16 %v147, %v146
    %v162 = vpack.c.b16 %v149, %v148
    %v163 = vpack.c.b16 %v151, %v150
    %v164 = vpack.c.b16 %v153, %v152
    %v165 = vpack.c.b16 %v155, %v154
    %v166 = vpack.c.b16 %v157, %v156
    %v167 = vpack.c.b16 %v159, %v158
    %176 = vmatpush.bf16.msra.mxu0 %v167
    %177 = vmatpush.bf16.msra.mxu0 %v166
    %178 = vmatpush.bf16.msra.mxu0 %v165
    %179 = vmatpush.bf16.msra.mxu0 %v164
    %180 = vmatpush.bf16.msra.mxu0 %v163
    %181 = vmatpush.bf16.msra.mxu0 %v162
    %182 = vmatpush.bf16.msra.mxu0 %v161
    %183 = vmatpush.bf16.msra.mxu0 %v160
    %184 = vmatmul.bf16.gmra.mxu0 %v112
    %v185 = vpop.f32.mrf.mxu0
    %v186 = vadd.f32 %v78, %v185
    %v187 = vpop.f32.mrf.mxu0
    %v188 = vadd.f32 %v78, %v187
    %189 = vmatmul.bf16.gmra.mxu0 %v113
    %v190 = vpop.f32.mrf.mxu0
    %v191 = vadd.f32 %v78, %v190
    %v192 = vpop.f32.mrf.mxu0
    %v193 = vadd.f32 %v78, %v192
    %194 = vmatmul.bf16.gmra.mxu0 %v114
    %v195 = vpop.f32.mrf.mxu0
    %v196 = vadd.f32 %v78, %v195
    %v197 = vpop.f32.mrf.mxu0
    %v198 = vadd.f32 %v78, %v197
    %199 = vmatmul.bf16.gmra.mxu0 %v115
    %v200 = vpop.f32.mrf.mxu0
    %v201 = vadd.f32 %v78, %v200
    %v202 = vpop.f32.mrf.mxu0
    %v203 = vadd.f32 %v78, %v202
    %204 = vmatmul.bf16.gmra.mxu0 %v116
    %v205 = vpop.f32.mrf.mxu0
    %v206 = vadd.f32 %v78, %v205
    %v207 = vpop.f32.mrf.mxu0
    %v208 = vadd.f32 %v78, %v207
    %209 = vmatmul.bf16.gmra.mxu0 %v117
    %v210 = vpop.f32.mrf.mxu0
    %v211 = vadd.f32 %v78, %v210
    %v212 = vpop.f32.mrf.mxu0
    %v213 = vadd.f32 %v78, %v212
    %214 = vmatmul.bf16.gmra.mxu0 %v118
    %v215 = vpop.f32.mrf.mxu0
    %v216 = vadd.f32 %v78, %v215
    %v217 = vpop.f32.mrf.mxu0
    %v218 = vadd.f32 %v78, %v217
    %219 = vmatmul.bf16.gmra.mxu0 %v119
    %v220 = vpop.f32.mrf.mxu0
    %v221 = vadd.f32 %v78, %v220
    %v222 = vpop.f32.mrf.mxu0
    %v223 = vadd.f32 %v78, %v222
    %224 = vdwg.mxu0
    %v225 = vmax.f32 %v186, 0.0
    %v226 = vmax.f32 %v188, 0.0
    %v227 = vmax.f32 %v191, 0.0
    %v228 = vmax.f32 %v193, 0.0
    %v229 = vmax.f32 %v196, 0.0
    %v230 = vmax.f32 %v198, 0.0
    %v231 = vmax.f32 %v201, 0.0
    %v232 = vmax.f32 %v203, 0.0
    %v233 = vmax.f32 %v206, 0.0
    %v234 = vmax.f32 %v208, 0.0
    %v235 = vmax.f32 %v211, 0.0
    %v236 = vmax.f32 %v213, 0.0
    %v237 = vmax.f32 %v216, 0.0
    %v238 = vmax.f32 %v218, 0.0
    %v239 = vmax.f32 %v221, 0.0
    %v240 = vmax.f32 %v223, 0.0
    %241 = vst [vmem:[%s3] sm:$0xff] %v225
    %242 = vst [vmem:[%s3 + $0x8] sm:$0xff] %v226
    %243 = vst [vmem:[%s3 + $0x10] sm:$0xff] %v227
    %244 = vst [vmem:[%s3 + $0x18] sm:$0xff] %v228
    %245 = vst [vmem:[%s3 + $0x20] sm:$0xff] %v229
    %246 = vst [vmem:[%s3 + $0x28] sm:$0xff] %v230
    %247 = vst [vmem:[%s3 + $0x30] sm:$0xff] %v231
    %248 = vst [vmem:[%s3 + $0x38] sm:$0xff] %v232
    %249 = vst [vmem:[%s3 + $0x40] sm:$0xff] %v233
    %250 = vst [vmem:[%s3 + $0x48] sm:$0xff] %v234
    %251 = vst [vmem:[%s3 + $0x50] sm:$0xff] %v235
    %252 = vst [vmem:[%s3 + $0x58] sm:$0xff] %v236
    %253 = vst [vmem:[%s3 + $0x60] sm:$0xff] %v237
    %254 = vst [vmem:[%s3 + $0x68] sm:$0xff] %v238
    %255 = vst [vmem:[%s3 + $0x70] sm:$0xff] %v239
    %256 = vst [vmem:[%s3 + $0x78] sm:$0xff] %v240
    // Predicated region
    $region22: #{vae_forward.20} parent=1 // pred_check
      _
    $region23: #{vae_forward.20} parent=1 // pred_check_branch
      %258 = sbr.rel (0) target = $region25
    $region24: #{vae_forward.20} parent=1 // pred_region
      _
    $region25: #{vae_forward.20} parent=1 // pred_fallthru
      _
    // Predicated region
    $region26: #{vae_forward.20} parent=1 // pred_check
      _
    $region27: #{vae_forward.20} parent=1 // pred_check_branch
      %260 = sbr.rel (0) target = $region29
    $region28: #{vae_forward.20} parent=1 // pred_region
      _
    $region29: #{vae_forward.20} parent=1 // pred_fallthru
      _
    %261 = vsyncpa [#allocation3], 1
    %262 = vsyncpa [#allocation5], 1

// kernel: vae_forward.21
$region0: #{vae_forward.21}
  #allocation0 [shape = 'u32[]', space=smem, size = 0x4, offset = 0x4, fixed_abs, tag = 'smem constant byte address 0x4 - core index']
  #allocation1 [shape = 'u32[72,128]{1,0:T(1,128)}', space=vmem, size = 0x9000, scoped, tag = 'internal scratch']
  %s0 = inlined_call_operand.vmem [shape: bf16[32,1024], index: 0, kind: input, shape index: {}]
  %s1 = inlined_call_operand.hbm [shape: bf16[1024,128], index: 1, kind: input, shape index: {}]
  %s2 = inlined_call_operand.vmem [shape: f32[1,128], index: 2, kind: input, shape index: {}]
  %s3 = inlined_call_operand.vmem [shape: f32[32,128], index: 3, kind: output, shape index: {}]
  %s4 = sld [smem:[#allocation0]]
  $region26: #{vae_forward.21} parent=0
    _
  %s6 = ssub.s32 1, %s4
  %s7 = scalar_select 0, %s6, %s4
  $region1: #{vae_forward.21} parent=0
    #allocation2 [shape = 'u8[262144]{0}', space=vmem, size = 0x40000, scoped, tag = 'input window, operand 1, single buffered']
    #allocation3 [shape = 's32[1]{0}', space=sflag, size = 0x4, scoped, tag = 'scoped memory for vae_forward.21']
    %8 = vsyncpa [#allocation3], 0
    // Predicated region
    $region2: #{vae_forward.21} parent=1 // pred_check
      _
    $region3: #{vae_forward.21} parent=1 // pred_check_branch
      %10 = sbr.rel (0) target = $region5
    $region4: #{vae_forward.21} parent=1 // pred_region
      _
    $region5: #{vae_forward.21} parent=1 // pred_fallthru
      _
    // Predicated region
    $region6: #{vae_forward.21} parent=1 // pred_check
      _
    $region7: #{vae_forward.21} parent=1 // pred_check_branch
      %12 = sbr.rel (0) target = $region9
    $region8: #{vae_forward.21} parent=1 // pred_region
      %14 = vsyncadd [#allocation3], 0
      %s15 = sshll.u32 %s1, 4
      %s16 = int_to_ptr.hbm [resolvable:$true] %s15
      %s17 = sshll.u32 [#allocation2], 4
      %s18 = int_to_ptr.vmem [resolvable:$true] %s17
      %23 = dma.hbm_to_vmem [thread:$0]  %s16, 8192, %s18, [#allocation3], 64, 64, 4
    $region9: #{vae_forward.21} parent=1 // pred_fallthru
      _
    // Predicated region
    $region10: #{vae_forward.21} parent=1 // pred_check
      _
    $region11: #{vae_forward.21} parent=1 // pred_check_branch
      %25 = sbr.rel (0) target = $region13
    $region12: #{vae_forward.21} parent=1 // pred_region
      _
    $region13: #{vae_forward.21} parent=1 // pred_fallthru
      _
    // Predicated region
    $region14: #{vae_forward.21} parent=1 // pred_check
      _
    $region15: #{vae_forward.21} parent=1 // pred_check_branch
      %27 = sbr.rel (0) target = $region17
    $region16: #{vae_forward.21} parent=1 // pred_region
      %29 = dma.done [#allocation3], 8192
    $region17: #{vae_forward.21} parent=1 // pred_fallthru
      _
    %v30 = vld [vmem:[%s0] sm:$0xff]
    %v31 = vld [vmem:[%s0 + $0x8] sm:$0xff]
    %v32 = vld [vmem:[%s0 + $0x10] sm:$0xff]
    %v33 = vld [vmem:[%s0 + $0x18] sm:$0xff]
    %v34 = vld [vmem:[%s0 + $0x20] sm:$0xff]
    %v35 = vld [vmem:[%s0 + $0x28] sm:$0xff]
    %v36 = vld [vmem:[%s0 + $0x30] sm:$0xff]
    %v37 = vld [vmem:[%s0 + $0x38] sm:$0xff]
    %v38 = vld [vmem:[%s0 + $0x40] sm:$0xff]
    %v39 = vld [vmem:[%s0 + $0x48] sm:$0xff]
    %v40 = vld [vmem:[%s0 + $0x50] sm:$0xff]
    %v41 = vld [vmem:[%s0 + $0x58] sm:$0xff]
    %v42 = vld [vmem:[%s0 + $0x60] sm:$0xff]
    %v43 = vld [vmem:[%s0 + $0x68] sm:$0xff]
    %v44 = vld [vmem:[%s0 + $0x70] sm:$0xff]
    %v45 = vld [vmem:[%s0 + $0x78] sm:$0xff]
    %v46 = vld [vmem:[#allocation2] sm:$0xf]
    %v47 = vld [vmem:[#allocation2 + $0x4] sm:$0xf]
    %v48 = vld [vmem:[#allocation2 + $0x8] sm:$0xf]
    %v49 = vld [vmem:[#allocation2 + $0xc] sm:$0xf]
    %v50 = vld [vmem:[#allocation2 + $0x10] sm:$0xf]
    %v51 = vld [vmem:[#allocation2 + $0x14] sm:$0xf]
    %v52 = vld [vmem:[#allocation2 + $0x18] sm:$0xf]
    %v53 = vld [vmem:[#allocation2 + $0x1c] sm:$0xf]
    %v54 = vld [vmem:[#allocation2 + $0x20] sm:$0xf]
    %v55 = vld [vmem:[#allocation2 + $0x24] sm:$0xf]
    %v56 = vld [vmem:[#allocation2 + $0x28] sm:$0xf]
    %v57 = vld [vmem:[#allocation2 + $0x2c] sm:$0xf]
    %v58 = vld [vmem:[#allocation2 + $0x30] sm:$0xf]
    %v59 = vld [vmem:[#allocation2 + $0x34] sm:$0xf]
    %v60 = vld [vmem:[#allocation2 + $0x38] sm:$0xf]
    %v61 = vld [vmem:[#allocation2 + $0x3c] sm:$0xf]
    %v62 = vld [vmem:[#allocation2 + $0x40] sm:$0xf]
    %v63 = vld [vmem:[#allocation2 + $0x44] sm:$0xf]
    %v64 = vld [vmem:[#allocation2 + $0x48] sm:$0xf]
    %v65 = vld [vmem:[#allocation2 + $0x4c] sm:$0xf]
    %v66 = vld [vmem:[#allocation2 + $0x50] sm:$0xf]
    %v67 = vld [vmem:[#allocation2 + $0x54] sm:$0xf]
    %v68 = vld [vmem:[#allocation2 + $0x58] sm:$0xf]
    %v69 = vld [vmem:[#allocation2 + $0x5c] sm:$0xf]
    %v70 = vld [vmem:[#allocation2 + $0x60] sm:$0xf]
    %v71 = vld [vmem:[#allocation2 + $0x64] sm:$0xf]
    %v72 = vld [vmem:[#allocation2 + $0x68] sm:$0xf]
    %v73 = vld [vmem:[#allocation2 + $0x6c] sm:$0xf]
    %v74 = vld [vmem:[#allocation2 + $0x70] sm:$0xf]
    %v75 = vld [vmem:[#allocation2 + $0x74] sm:$0xf]
    %v76 = vld [vmem:[#allocation2 + $0x78] sm:$0xf]
    %v77 = vld [vmem:[#allocation2 + $0x7c] sm:$0xf]
    %v78 = vld [vmem:[#allocation2 + $0x80] sm:$0xf]
    %v79 = vld [vmem:[#allocation2 + $0x84] sm:$0xf]
    %v80 = vld [vmem:[#allocation2 + $0x88] sm:$0xf]
    %v81 = vld [vmem:[#allocation2 + $0x8c] sm:$0xf]
    %v82 = vld [vmem:[#allocation2 + $0x90] sm:$0xf]
    %v83 = vld [vmem:[#allocation2 + $0x94] sm:$0xf]
    %v84 = vld [vmem:[#allocation2 + $0x98] sm:$0xf]
    %v85 = vld [vmem:[#allocation2 + $0x9c] sm:$0xf]
    %v86 = vld [vmem:[#allocation2 + $0xa0] sm:$0xf]
    %v87 = vld [vmem:[#allocation2 + $0xa4] sm:$0xf]
    %v88 = vld [vmem:[#allocation2 + $0xa8] sm:$0xf]
    %v89 = vld [vmem:[#allocation2 + $0xac] sm:$0xf]
    %v90 = vld [vmem:[#allocation2 + $0xb0] sm:$0xf]
    %v91 = vld [vmem:[#allocation2 + $0xb4] sm:$0xf]
    %v92 = vld [vmem:[#allocation2 + $0xb8] sm:$0xf]
    %v93 = vld [vmem:[#allocation2 + $0xbc] sm:$0xf]
    %v94 = vld [vmem:[#allocation2 + $0xc0] sm:$0xf]
    %v95 = vld [vmem:[#allocation2 + $0xc4] sm:$0xf]
    %v96 = vld [vmem:[#allocation2 + $0xc8] sm:$0xf]
    %v97 = vld [vmem:[#allocation2 + $0xcc] sm:$0xf]
    %v98 = vld [vmem:[#allocation2 + $0xd0] sm:$0xf]
    %v99 = vld [vmem:[#allocation2 + $0xd4] sm:$0xf]
    %v100 = vld [vmem:[#allocation2 + $0xd8] sm:$0xf]
    %v101 = vld [vmem:[#allocation2 + $0xdc] sm:$0xf]
    %v102 = vld [vmem:[#allocation2 + $0xe0] sm:$0xf]
    %v103 = vld [vmem:[#allocation2 + $0xe4] sm:$0xf]
    %v104 = vld [vmem:[#allocation2 + $0xe8] sm:$0xf]
    %v105 = vld [vmem:[#allocation2 + $0xec] sm:$0xf]
    %v106 = vld [vmem:[#allocation2 + $0xf0] sm:$0xf]
    %v107 = vld [vmem:[#allocation2 + $0xf4] sm:$0xf]
    %v108 = vld [vmem:[#allocation2 + $0xf8] sm:$0xf]
    %v109 = vld [vmem:[#allocation2 + $0xfc] sm:$0xf]
    %v110 = vld [vmem:[#allocation2 + $0x100] sm:$0xf]
    %v111 = vld [vmem:[#allocation2 + $0x104] sm:$0xf]
    %v112 = vld [vmem:[#allocation2 + $0x108] sm:$0xf]
    %v113 = vld [vmem:[#allocation2 + $0x10c] sm:$0xf]
    %v114 = vld [vmem:[#allocation2 + $0x110] sm:$0xf]
    %v115 = vld [vmem:[#allocation2 + $0x114] sm:$0xf]
    %v116 = vld [vmem:[#allocation2 + $0x118] sm:$0xf]
    %v117 = vld [vmem:[#allocation2 + $0x11c] sm:$0xf]
    %v118 = vld [vmem:[#allocation2 + $0x120] sm:$0xf]
    %v119 = vld [vmem:[#allocation2 + $0x124] sm:$0xf]
    %v120 = vld [vmem:[#allocation2 + $0x128] sm:$0xf]
    %v121 = vld [vmem:[#allocation2 + $0x12c] sm:$0xf]
    %v122 = vld [vmem:[#allocation2 + $0x130] sm:$0xf]
    %v123 = vld [vmem:[#allocation2 + $0x134] sm:$0xf]
    %v124 = vld [vmem:[#allocation2 + $0x138] sm:$0xf]
    %v125 = vld [vmem:[#allocation2 + $0x13c] sm:$0xf]
    %v126 = vld [vmem:[#allocation2 + $0x140] sm:$0xf]
    %v127 = vld [vmem:[#allocation2 + $0x144] sm:$0xf]
    %v128 = vld [vmem:[#allocation2 + $0x148] sm:$0xf]
    %v129 = vld [vmem:[#allocation2 + $0x14c] sm:$0xf]
    %v130 = vld [vmem:[#allocation2 + $0x150] sm:$0xf]
    %v131 = vld [vmem:[#allocation2 + $0x154] sm:$0xf]
    %v132 = vld [vmem:[#allocation2 + $0x158] sm:$0xf]
    %v133 = vld [vmem:[#allocation2 + $0x15c] sm:$0xf]
    %v134 = vld [vmem:[#allocation2 + $0x160] sm:$0xf]
    %v135 = vld [vmem:[#allocation2 + $0x164] sm:$0xf]
    %v136 = vld [vmem:[#allocation2 + $0x168] sm:$0xf]
    %v137 = vld [vmem:[#allocation2 + $0x16c] sm:$0xf]
    %v138 = vld [vmem:[#allocation2 + $0x170] sm:$0xf]
    %v139 = vld [vmem:[#allocation2 + $0x174] sm:$0xf]
    %v140 = vld [vmem:[#allocation2 + $0x178] sm:$0xf]
    %v141 = vld [vmem:[#allocation2 + $0x17c] sm:$0xf]
    %v142 = vld [vmem:[#allocation2 + $0x180] sm:$0xf]
    %v143 = vld [vmem:[#allocation2 + $0x184] sm:$0xf]
    %v144 = vld [vmem:[#allocation2 + $0x188] sm:$0xf]
    %v145 = vld [vmem:[#allocation2 + $0x18c] sm:$0xf]
    %v146 = vld [vmem:[#allocation2 + $0x190] sm:$0xf]
    %v147 = vld [vmem:[#allocation2 + $0x194] sm:$0xf]
    %v148 = vld [vmem:[#allocation2 + $0x198] sm:$0xf]
    %v149 = vld [vmem:[#allocation2 + $0x19c] sm:$0xf]
    %v150 = vld [vmem:[#allocation2 + $0x1a0] sm:$0xf]
    %v151 = vld [vmem:[#allocation2 + $0x1a4] sm:$0xf]
    %v152 = vld [vmem:[#allocation2 + $0x1a8] sm:$0xf]
    %v153 = vld [vmem:[#allocation2 + $0x1ac] sm:$0xf]
    %v154 = vld [vmem:[#allocation2 + $0x1b0] sm:$0xf]
    %v155 = vld [vmem:[#allocation2 + $0x1b4] sm:$0xf]
    %v156 = vld [vmem:[#allocation2 + $0x1b8] sm:$0xf]
    %v157 = vld [vmem:[#allocation2 + $0x1bc] sm:$0xf]
    %v158 = vld [vmem:[#allocation2 + $0x1c0] sm:$0xf]
    %v159 = vld [vmem:[#allocation2 + $0x1c4] sm:$0xf]
    %v160 = vld [vmem:[#allocation2 + $0x1c8] sm:$0xf]
    %v161 = vld [vmem:[#allocation2 + $0x1cc] sm:$0xf]
    %v162 = vld [vmem:[#allocation2 + $0x1d0] sm:$0xf]
    %v163 = vld [vmem:[#allocation2 + $0x1d4] sm:$0xf]
    %v164 = vld [vmem:[#allocation2 + $0x1d8] sm:$0xf]
    %v165 = vld [vmem:[#allocation2 + $0x1dc] sm:$0xf]
    %v166 = vld [vmem:[#allocation2 + $0x1e0] sm:$0xf]
    %v167 = vld [vmem:[#allocation2 + $0x1e4] sm:$0xf]
    %v168 = vld [vmem:[#allocation2 + $0x1e8] sm:$0xf]
    %v169 = vld [vmem:[#allocation2 + $0x1ec] sm:$0xf]
    %v170 = vld [vmem:[#allocation2 + $0x1f0] sm:$0xf]
    %v171 = vld [vmem:[#allocation2 + $0x1f4] sm:$0xf]
    %v172 = vld [vmem:[#allocation2 + $0x1f8] sm:$0xf]
    %v173 = vld [vmem:[#allocation2 + $0x1fc] sm:$0xf]
    %v174 = vld [vmem:[%s2] sm:$0x1]
    %v176 = vperm.slane %v174, 0
    %v194 = vunpack.c.l.b16 %v30
    %v195 = vunpack.c.h.b16 %v30
    %v196 = vunpack.c.l.b16 %v31
    %v197 = vunpack.c.h.b16 %v31
    %v198 = vunpack.c.l.b16 %v32
    %v199 = vunpack.c.h.b16 %v32
    %v200 = vunpack.c.l.b16 %v33
    %v201 = vunpack.c.h.b16 %v33
    %v202 = vunpack.c.l.b16 %v34
    %v203 = vunpack.c.h.b16 %v34
    %v204 = vunpack.c.l.b16 %v35
    %v205 = vunpack.c.h.b16 %v35
    %v206 = vunpack.c.l.b16 %v36
    %v207 = vunpack.c.h.b16 %v36
    %v208 = vunpack.c.l.b16 %v37
    %v209 = vunpack.c.h.b16 %v37
    %v210 = vunpack.c.l.b16 %v38
    %v211 = vunpack.c.h.b16 %v38
    %v212 = vunpack.c.l.b16 %v39
    %v213 = vunpack.c.h.b16 %v39
    %v214 = vunpack.c.l.b16 %v40
    %v215 = vunpack.c.h.b16 %v40
    %v216 = vunpack.c.l.b16 %v41
    %v217 = vunpack.c.h.b16 %v41
    %v218 = vunpack.c.l.b16 %v42
    %v219 = vunpack.c.h.b16 %v42
    %v220 = vunpack.c.l.b16 %v43
    %v221 = vunpack.c.h.b16 %v43
    %v222 = vunpack.c.l.b16 %v44
    %v223 = vunpack.c.h.b16 %v44
    %v224 = vunpack.c.l.b16 %v45
    %v225 = vunpack.c.h.b16 %v45
    %v226 = vpack.c.b16 %v202, %v194
    %v227 = vpack.c.b16 %v203, %v195
    %v228 = vpack.c.b16 %v204, %v196
    %v229 = vpack.c.b16 %v205, %v197
    %v230 = vpack.c.b16 %v206, %v198
    %v231 = vpack.c.b16 %v207, %v199
    %v232 = vpack.c.b16 %v208, %v200
    %v233 = vpack.c.b16 %v209, %v201
    %v234 = vpack.c.b16 %v218, %v210
    %v235 = vpack.c.b16 %v219, %v211
    %v236 = vpack.c.b16 %v220, %v212
    %v237 = vpack.c.b16 %v221, %v213
    %v238 = vpack.c.b16 %v222, %v214
    %v239 = vpack.c.b16 %v223, %v215
    %v240 = vpack.c.b16 %v224, %v216
    %v241 = vpack.c.b16 %v225, %v217
    %v386 = vunpack.c.l.b16 %v46
    %v387 = vunpack.c.l.b16 %v47
    %v388 = vunpack.c.l.b16 %v48
    %v389 = vunpack.c.l.b16 %v49
    %v390 = vunpack.c.l.b16 %v50
    %v391 = vunpack.c.l.b16 %v51
    %v392 = vunpack.c.l.b16 %v52
    %v393 = vunpack.c.l.b16 %v53
    %v394 = vunpack.c.l.b16 %v54
    %v395 = vunpack.c.l.b16 %v55
    %v396 = vunpack.c.l.b16 %v56
    %v397 = vunpack.c.l.b16 %v57
    %v398 = vunpack.c.l.b16 %v58
    %v399 = vunpack.c.l.b16 %v59
    %v400 = vunpack.c.l.b16 %v60
    %v401 = vunpack.c.l.b16 %v61
    %v402 = vunpack.c.l.b16 %v62
    %v403 = vunpack.c.l.b16 %v63
    %v404 = vunpack.c.l.b16 %v64
    %v405 = vunpack.c.l.b16 %v65
    %v406 = vunpack.c.l.b16 %v66
    %v407 = vunpack.c.l.b16 %v67
    %v408 = vunpack.c.l.b16 %v68
    %v409 = vunpack.c.l.b16 %v69
    %v410 = vunpack.c.l.b16 %v70
    %v411 = vunpack.c.l.b16 %v71
    %v412 = vunpack.c.l.b16 %v72
    %v413 = vunpack.c.l.b16 %v73
    %v414 = vunpack.c.l.b16 %v74
    %v415 = vunpack.c.l.b16 %v75
    %v416 = vunpack.c.l.b16 %v76
    %v417 = vunpack.c.l.b16 %v77
    %v418 = vunpack.c.l.b16 %v78
    %v419 = vunpack.c.l.b16 %v79
    %v420 = vunpack.c.l.b16 %v80
    %v421 = vunpack.c.l.b16 %v81
    %v422 = vunpack.c.l.b16 %v82
    %v423 = vunpack.c.l.b16 %v83
    %v424 = vunpack.c.l.b16 %v84
    %v425 = vunpack.c.l.b16 %v85
    %v426 = vunpack.c.l.b16 %v86
    %v427 = vunpack.c.l.b16 %v87
    %v428 = vunpack.c.l.b16 %v88
    %v429 = vunpack.c.l.b16 %v89
    %v430 = vunpack.c.l.b16 %v90
    %v431 = vunpack.c.l.b16 %v91
    %v432 = vunpack.c.l.b16 %v92
    %v433 = vunpack.c.l.b16 %v93
    %v434 = vunpack.c.l.b16 %v94
    %v435 = vunpack.c.l.b16 %v95
    %v436 = vunpack.c.l.b16 %v96
    %v437 = vunpack.c.l.b16 %v97
    %v438 = vunpack.c.l.b16 %v98
    %v439 = vunpack.c.l.b16 %v99
    %v440 = vunpack.c.l.b16 %v100
    %v441 = vunpack.c.l.b16 %v101
    %v442 = vunpack.c.l.b16 %v102
    %v443 = vunpack.c.l.b16 %v103
    %v444 = vunpack.c.l.b16 %v104
    %v445 = vunpack.c.l.b16 %v105
    %v446 = vunpack.c.l.b16 %v106
    %v447 = vunpack.c.l.b16 %v107
    %v448 = vunpack.c.l.b16 %v108
    %v449 = vunpack.c.l.b16 %v109
    %v450 = vunpack.c.l.b16 %v110
    %v451 = vunpack.c.l.b16 %v111
    %v452 = vunpack.c.l.b16 %v112
    %v453 = vunpack.c.l.b16 %v113
    %v454 = vunpack.c.l.b16 %v114
    %v455 = vunpack.c.l.b16 %v115
    %v456 = vunpack.c.l.b16 %v116
    %v457 = vunpack.c.l.b16 %v117
    %v458 = vunpack.c.l.b16 %v118
    %v459 = vunpack.c.l.b16 %v119
    %v460 = vunpack.c.l.b16 %v120
    %v461 = vunpack.c.l.b16 %v121
    %v462 = vunpack.c.l.b16 %v122
    %v463 = vunpack.c.l.b16 %v123
    %v464 = vunpack.c.l.b16 %v124
    %v465 = vunpack.c.l.b16 %v125
    %v466 = vunpack.c.l.b16 %v126
    %v467 = vunpack.c.l.b16 %v127
    %v468 = vunpack.c.l.b16 %v128
    %v469 = vunpack.c.l.b16 %v129
    %v470 = vunpack.c.l.b16 %v130
    %v471 = vunpack.c.l.b16 %v131
    %v472 = vunpack.c.l.b16 %v132
    %v473 = vunpack.c.l.b16 %v133
    %v474 = vunpack.c.l.b16 %v134
    %v475 = vunpack.c.l.b16 %v135
    %v476 = vunpack.c.l.b16 %v136
    %v477 = vunpack.c.l.b16 %v137
    %v478 = vunpack.c.l.b16 %v138
    %v479 = vunpack.c.l.b16 %v139
    %v480 = vunpack.c.l.b16 %v140
    %v481 = vunpack.c.l.b16 %v141
    %v482 = vunpack.c.l.b16 %v142
    %v483 = vunpack.c.l.b16 %v143
    %v484 = vunpack.c.l.b16 %v144
    %v485 = vunpack.c.l.b16 %v145
    %v486 = vunpack.c.l.b16 %v146
    %v487 = vunpack.c.l.b16 %v147
    %v488 = vunpack.c.l.b16 %v148
    %v489 = vunpack.c.l.b16 %v149
    %v490 = vunpack.c.l.b16 %v150
    %v491 = vunpack.c.l.b16 %v151
    %v492 = vunpack.c.l.b16 %v152
    %v493 = vunpack.c.l.b16 %v153
    %v494 = vunpack.c.l.b16 %v154
    %v495 = vunpack.c.l.b16 %v155
    %v496 = vunpack.c.l.b16 %v156
    %v497 = vunpack.c.l.b16 %v157
    %v498 = vunpack.c.l.b16 %v158
    %v499 = vunpack.c.l.b16 %v159
    %v500 = vunpack.c.l.b16 %v160
    %v501 = vunpack.c.l.b16 %v161
    %v502 = vunpack.c.l.b16 %v162
    %v503 = vunpack.c.l.b16 %v163
    %v504 = vunpack.c.l.b16 %v164
    %v505 = vunpack.c.l.b16 %v165
    %v506 = vunpack.c.l.b16 %v166
    %v507 = vunpack.c.l.b16 %v167
    %v508 = vunpack.c.l.b16 %v168
    %v509 = vunpack.c.l.b16 %v169
    %v510 = vunpack.c.l.b16 %v170
    %v511 = vunpack.c.l.b16 %v171
    %v512 = vunpack.c.l.b16 %v172
    %v513 = vunpack.c.l.b16 %v173
    %v514 = vpack.c.b16 %v387, %v386
    %v515 = vpack.c.b16 %v389, %v388
    %v516 = vpack.c.b16 %v391, %v390
    %v517 = vpack.c.b16 %v393, %v392
    %v518 = vpack.c.b16 %v395, %v394
    %v519 = vpack.c.b16 %v397, %v396
    %v520 = vpack.c.b16 %v399, %v398
    %v521 = vpack.c.b16 %v401, %v400
    %v522 = vpack.c.b16 %v403, %v402
    %v523 = vpack.c.b16 %v405, %v404
    %v524 = vpack.c.b16 %v407, %v406
    %v525 = vpack.c.b16 %v409, %v408
    %v526 = vpack.c.b16 %v411, %v410
    %v527 = vpack.c.b16 %v413, %v412
    %v528 = vpack.c.b16 %v415, %v414
    %v529 = vpack.c.b16 %v417, %v416
    %v530 = vpack.c.b16 %v419, %v418
    %v531 = vpack.c.b16 %v421, %v420
    %v532 = vpack.c.b16 %v423, %v422
    %v533 = vpack.c.b16 %v425, %v424
    %v534 = vpack.c.b16 %v427, %v426
    %v535 = vpack.c.b16 %v429, %v428
    %v536 = vpack.c.b16 %v431, %v430
    %v537 = vpack.c.b16 %v433, %v432
    %v538 = vpack.c.b16 %v435, %v434
    %v539 = vpack.c.b16 %v437, %v436
    %v540 = vpack.c.b16 %v439, %v438
    %v541 = vpack.c.b16 %v441, %v440
    %v542 = vpack.c.b16 %v443, %v442
    %v543 = vpack.c.b16 %v445, %v444
    %v544 = vpack.c.b16 %v447, %v446
    %v545 = vpack.c.b16 %v449, %v448
    %v546 = vpack.c.b16 %v451, %v450
    %v547 = vpack.c.b16 %v453, %v452
    %v548 = vpack.c.b16 %v455, %v454
    %v549 = vpack.c.b16 %v457, %v456
    %v550 = vpack.c.b16 %v459, %v458
    %v551 = vpack.c.b16 %v461, %v460
    %v552 = vpack.c.b16 %v463, %v462
    %v553 = vpack.c.b16 %v465, %v464
    %v554 = vpack.c.b16 %v467, %v466
    %v555 = vpack.c.b16 %v469, %v468
    %v556 = vpack.c.b16 %v471, %v470
    %v557 = vpack.c.b16 %v473, %v472
    %v558 = vpack.c.b16 %v475, %v474
    %v559 = vpack.c.b16 %v477, %v476
    %v560 = vpack.c.b16 %v479, %v478
    %v561 = vpack.c.b16 %v481, %v480
    %v562 = vpack.c.b16 %v483, %v482
    %v563 = vpack.c.b16 %v485, %v484
    %v564 = vpack.c.b16 %v487, %v486
    %v565 = vpack.c.b16 %v489, %v488
    %v566 = vpack.c.b16 %v491, %v490
    %v567 = vpack.c.b16 %v493, %v492
    %v568 = vpack.c.b16 %v495, %v494
    %v569 = vpack.c.b16 %v497, %v496
    %v570 = vpack.c.b16 %v499, %v498
    %v571 = vpack.c.b16 %v501, %v500
    %v572 = vpack.c.b16 %v503, %v502
    %v573 = vpack.c.b16 %v505, %v504
    %v574 = vpack.c.b16 %v507, %v506
    %v575 = vpack.c.b16 %v509, %v508
    %v576 = vpack.c.b16 %v511, %v510
    %v577 = vpack.c.b16 %v513, %v512
    %642 = vmatpush.bf16.msra.mxu0 %v521
    %643 = vmatpush.bf16.msra.mxu0 %v520
    %644 = vmatpush.bf16.msra.mxu0 %v519
    %645 = vmatpush.bf16.msra.mxu0 %v518
    %646 = vmatpush.bf16.msra.mxu0 %v517
    %647 = vmatpush.bf16.msra.mxu0 %v516
    %648 = vmatpush.bf16.msra.mxu0 %v515
    %649 = vmatpush.bf16.msra.mxu0 %v514
    %650 = vmatmul.bf16.gmra.mxu0 %v226
    %v651 = vpop.f32.mrf.mxu0
    %v652 = vadd.f32 %v176, %v651
    %v653 = vpop.f32.mrf.mxu0
    %v654 = vadd.f32 %v176, %v653
    %655 = vmatmul.bf16.gmra.mxu0 %v234
    %v656 = vpop.f32.mrf.mxu0
    %v657 = vadd.f32 %v176, %v656
    %v658 = vpop.f32.mrf.mxu0
    %v659 = vadd.f32 %v176, %v658
    %660 = vdwg.mxu0
    %661 = vmatpush.bf16.msra.mxu0 %v529
    %662 = vmatpush.bf16.msra.mxu0 %v528
    %663 = vmatpush.bf16.msra.mxu0 %v527
    %664 = vmatpush.bf16.msra.mxu0 %v526
    %665 = vmatpush.bf16.msra.mxu0 %v525
    %666 = vmatpush.bf16.msra.mxu0 %v524
    %667 = vmatpush.bf16.msra.mxu0 %v523
    %668 = vmatpush.bf16.msra.mxu0 %v522
    %669 = vmatmul.bf16.gmra.mxu0 %v227
    %v670 = vpop.f32.mrf.mxu0
    %v671 = vadd.f32 %v652, %v670
    %v672 = vpop.f32.mrf.mxu0
    %v673 = vadd.f32 %v654, %v672
    %674 = vmatmul.bf16.gmra.mxu0 %v235
    %v675 = vpop.f32.mrf.mxu0
    %v676 = vadd.f32 %v657, %v675
    %v677 = vpop.f32.mrf.mxu0
    %v678 = vadd.f32 %v659, %v677
    %679 = vdwg.mxu0
    %680 = vmatpush.bf16.msra.mxu0 %v537
    %681 = vmatpush.bf16.msra.mxu0 %v536
    %682 = vmatpush.bf16.msra.mxu0 %v535
    %683 = vmatpush.bf16.msra.mxu0 %v534
    %684 = vmatpush.bf16.msra.mxu0 %v533
    %685 = vmatpush.bf16.msra.mxu0 %v532
    %686 = vmatpush.bf16.msra.mxu0 %v531
    %687 = vmatpush.bf16.msra.mxu0 %v530
    %688 = vmatmul.bf16.gmra.mxu0 %v228
    %v689 = vpop.f32.mrf.mxu0
    %v690 = vadd.f32 %v671, %v689
    %v691 = vpop.f32.mrf.mxu0
    %v692 = vadd.f32 %v673, %v691
    %693 = vmatmul.bf16.gmra.mxu0 %v236
    %v694 = vpop.f32.mrf.mxu0
    %v695 = vadd.f32 %v676, %v694
    %v696 = vpop.f32.mrf.mxu0
    %v697 = vadd.f32 %v678, %v696
    %698 = vdwg.mxu0
    %699 = vmatpush.bf16.msra.mxu0 %v545
    %700 = vmatpush.bf16.msra.mxu0 %v544
    %701 = vmatpush.bf16.msra.mxu0 %v543
    %702 = vmatpush.bf16.msra.mxu0 %v542
    %703 = vmatpush.bf16.msra.mxu0 %v541
    %704 = vmatpush.bf16.msra.mxu0 %v540
    %705 = vmatpush.bf16.msra.mxu0 %v539
    %706 = vmatpush.bf16.msra.mxu0 %v538
    %707 = vmatmul.bf16.gmra.mxu0 %v229
    %v708 = vpop.f32.mrf.mxu0
    %v709 = vadd.f32 %v690, %v708
    %v710 = vpop.f32.mrf.mxu0
    %v711 = vadd.f32 %v692, %v710
    %712 = vmatmul.bf16.gmra.mxu0 %v237
    %v713 = vpop.f32.mrf.mxu0
    %v714 = vadd.f32 %v695, %v713
    %v715 = vpop.f32.mrf.mxu0
    %v716 = vadd.f32 %v697, %v715
    %717 = vdwg.mxu0
    %718 = vmatpush.bf16.msra.mxu0 %v553
    %719 = vmatpush.bf16.msra.mxu0 %v552
    %720 = vmatpush.bf16.msra.mxu0 %v551
    %721 = vmatpush.bf16.msra.mxu0 %v550
    %722 = vmatpush.bf16.msra.mxu0 %v549
    %723 = vmatpush.bf16.msra.mxu0 %v548
    %724 = vmatpush.bf16.msra.mxu0 %v547
    %725 = vmatpush.bf16.msra.mxu0 %v546
    %726 = vmatmul.bf16.gmra.mxu0 %v230
    %v727 = vpop.f32.mrf.mxu0
    %v728 = vadd.f32 %v709, %v727
    %v729 = vpop.f32.mrf.mxu0
    %v730 = vadd.f32 %v711, %v729
    %731 = vmatmul.bf16.gmra.mxu0 %v238
    %v732 = vpop.f32.mrf.mxu0
    %v733 = vadd.f32 %v714, %v732
    %v734 = vpop.f32.mrf.mxu0
    %v735 = vadd.f32 %v716, %v734
    %736 = vdwg.mxu0
    %737 = vmatpush.bf16.msra.mxu0 %v561
    %738 = vmatpush.bf16.msra.mxu0 %v560
    %739 = vmatpush.bf16.msra.mxu0 %v559
    %740 = vmatpush.bf16.msra.mxu0 %v558
    %741 = vmatpush.bf16.msra.mxu0 %v557
    %742 = vmatpush.bf16.msra.mxu0 %v556
    %743 = vmatpush.bf16.msra.mxu0 %v555
    %744 = vmatpush.bf16.msra.mxu0 %v554
    %745 = vmatmul.bf16.gmra.mxu0 %v231
    %v746 = vpop.f32.mrf.mxu0
    %v747 = vadd.f32 %v728, %v746
    %v748 = vpop.f32.mrf.mxu0
    %v749 = vadd.f32 %v730, %v748
    %750 = vmatmul.bf16.gmra.mxu0 %v239
    %v751 = vpop.f32.mrf.mxu0
    %v752 = vadd.f32 %v733, %v751
    %v753 = vpop.f32.mrf.mxu0
    %v754 = vadd.f32 %v735, %v753
    %755 = vdwg.mxu0
    %756 = vmatpush.bf16.msra.mxu0 %v569
    %757 = vmatpush.bf16.msra.mxu0 %v568
    %758 = vmatpush.bf16.msra.mxu0 %v567
    %759 = vmatpush.bf16.msra.mxu0 %v566
    %760 = vmatpush.bf16.msra.mxu0 %v565
    %761 = vmatpush.bf16.msra.mxu0 %v564
    %762 = vmatpush.bf16.msra.mxu0 %v563
    %763 = vmatpush.bf16.msra.mxu0 %v562
    %764 = vmatmul.bf16.gmra.mxu0 %v232
    %v765 = vpop.f32.mrf.mxu0
    %v766 = vadd.f32 %v747, %v765
    %v767 = vpop.f32.mrf.mxu0
    %v768 = vadd.f32 %v749, %v767
    %769 = vmatmul.bf16.gmra.mxu0 %v240
    %v770 = vpop.f32.mrf.mxu0
    %v771 = vadd.f32 %v752, %v770
    %v772 = vpop.f32.mrf.mxu0
    %v773 = vadd.f32 %v754, %v772
    %774 = vdwg.mxu0
    %775 = vmatpush.bf16.msra.mxu0 %v577
    %776 = vmatpush.bf16.msra.mxu0 %v576
    %777 = vmatpush.bf16.msra.mxu0 %v575
    %778 = vmatpush.bf16.msra.mxu0 %v574
    %779 = vmatpush.bf16.msra.mxu0 %v573
    %780 = vmatpush.bf16.msra.mxu0 %v572
    %781 = vmatpush.bf16.msra.mxu0 %v571
    %782 = vmatpush.bf16.msra.mxu0 %v570
    %783 = vmatmul.bf16.gmra.mxu0 %v233
    %v784 = vpop.f32.mrf.mxu0
    %v785 = vadd.f32 %v766, %v784
    %v786 = vpop.f32.mrf.mxu0
    %v787 = vadd.f32 %v768, %v786
    %788 = vmatmul.bf16.gmra.mxu0 %v241
    %v789 = vpop.f32.mrf.mxu0
    %v790 = vadd.f32 %v771, %v789
    %v791 = vpop.f32.mrf.mxu0
    %v792 = vadd.f32 %v773, %v791
    %793 = vdwg.mxu0
    %v794 = vmax.f32 %v785, 0.0
    %v795 = vmax.f32 %v787, 0.0
    %v796 = vmax.f32 %v790, 0.0
    %v797 = vmax.f32 %v792, 0.0
    %798 = vst [vmem:[%s3] sm:$0xff] %v794
    %799 = vst [vmem:[%s3 + $0x8] sm:$0xff] %v795
    %800 = vst [vmem:[%s3 + $0x10] sm:$0xff] %v796
    %801 = vst [vmem:[%s3 + $0x18] sm:$0xff] %v797
    // Predicated region
    $region18: #{vae_forward.21} parent=1 // pred_check
      _
    $region19: #{vae_forward.21} parent=1 // pred_check_branch
      %803 = sbr.rel (0) target = $region21
    $region20: #{vae_forward.21} parent=1 // pred_region
      _
    $region21: #{vae_forward.21} parent=1 // pred_fallthru
      _
    // Predicated region
    $region22: #{vae_forward.21} parent=1 // pred_check
      _
    $region23: #{vae_forward.21} parent=1 // pred_check_branch
      %805 = sbr.rel (0) target = $region25
    $region24: #{vae_forward.21} parent=1 // pred_region
      _
    $region25: #{vae_forward.21} parent=1 // pred_fallthru
      _
    %806 = vsyncpa [#allocation3], 1

// kernel: vae_forward.22
$region0: #{vae_forward.22}
  #allocation0 [shape = 'u32[]', space=smem, size = 0x4, offset = 0x4, fixed_abs, tag = 'smem constant byte address 0x4 - core index']
  #allocation1 [shape = 'u32[72,128]{1,0:T(1,128)}', space=vmem, size = 0x9000, scoped, tag = 'internal scratch']
  #allocation2 [shape = 'f32[16,256]{1,0:T(8,128)}', space=vmem, size = 0x4000, scoped, tag = 'scratch operand']
  %s0 = inlined_call_operand.vmem [shape: bf16[16,2048], index: 0, kind: input, shape index: {}]
  %s1 = inlined_call_operand.hbm [shape: bf16[2048,256], index: 1, kind: input, shape index: {}]
  %s2 = inlined_call_operand.vmem [shape: f32[1,256], index: 2, kind: input, shape index: {}]
  %s3 = inlined_call_operand.vmem [shape: f32[16,256], index: 3, kind: output, shape index: {}]
  %s4 = sld [smem:[#allocation0]]
  $region80: #{vae_forward.22} parent=0
    _
  %s6 = ssub.s32 1, %s4
  %s7 = scalar_select 0, %s6, %s4
  $region1: #{vae_forward.22} parent=0
    #allocation3 [shape = 'u8[32768]{0}', space=vmem, size = 0x8000, scoped, tag = 'input window, operand 0']
    #allocation4 [shape = 'u8[524288]{0}', space=vmem, size = 0x80000, scoped, tag = 'input window, operand 1']
    #allocation5 [shape = 's32[2]{0}', space=sflag, size = 0x8, scoped, tag = 'scoped memory for vae_forward.22']
    %8 = vsyncpa [#allocation5], 0
    %s9 = scalar_lea.sflag [#allocation5], 1
    %10 = vsyncpa %s9, 0
    loop: start=0, step=1, limit=6
    $region2: #{vae_forward.22} parent=1 // loop_pre_header
      _
    $region3: #{vae_forward.22} parent=1 // loop_header
      %s12 = sphi 0, %s16
      %p13 = scmp.ge.s32.totalorder %s12, 6
      %s19 = sphi 0, %s38
      %s20 = sphi 0, %s34
      %s21 = sphi 0, %s30
      %s22 = sphi 0, %s19
      %s23 = sphi 0, %s20
      %s24 = sphi 0, %s21
      %s25 = sphi 0, %s22
      %s26 = sphi 0, %s23
      %s27 = sphi 0, %s24
      %s43 = sphi 0, %s45
      %s46 = sphi 0, %s43
      %s47 = sphi 0, %s46
      %s63 = sphi 0, %s47
      %s71 = sphi 0, %s73
      %s74 = sphi 0, %s71
      %s75 = sphi 0, %s74
      %s91 = sphi 0, %s75
      %s97 = sphi 0, %s99
      %s100 = sphi 0, %s97
      %s101 = sphi 0, %s100
      %s117 = sphi 0, %s101
      %s125 = sphi 0, %s127
      %s128 = sphi 0, %s125
      %s129 = sphi 0, %s128
      %s145 = sphi 0, %s129
    $region4: #{vae_forward.22} parent=1 // loop_header_branch
      %15 = sbr.rel (%p13) target = $region8
    $region5: #{vae_forward.22} parent=1 // loop_body
      %s17 = ssub.s32 %s12, 1
      %s18 = ssub.s32 %s12, 2
      %s28 = sadd.s32 1, %s21
      %p29 = scmp.ge.s32.totalorder %s28, 4
      %s30 = scalar_select %p29, 0, %s28
      %s31 = sadd.s32 1, %s20
      %s32 = scalar_select %p29, %s31, %s20
      %p33 = scmp.ge.s32.totalorder %s32, 1
      %s34 = scalar_select %p33, 0, %s32
      %s35 = sadd.s32 1, %s19
      %s36 = scalar_select %p33, %s35, %s19
      %p37 = scmp.ge.s32.totalorder %s36, 1
      %s38 = scalar_select %p37, 0, %s36
      %s39 = ssub.s32 %s19, %s38
      %s40 = ssub.s32 %s21, %s30
      %s41 = sor.u32 %s39, %s40
      %p42 = scmp.eq.s32.totalorder %s41, 0
      %s44 = sadd.s32 %s43, 1
      %s45 = scalar_select %p42, %s43, %s44
      %p48 = pneg %p42
      %p49 = scmp.eq.s32.totalorder %s12, 3
      %p50 = por %p48, %p49
      %p51 = scmp.ne.s32.totalorder %s43, %s46
      %p52 = scmp.eq.s32.totalorder %s12, 0
      %p53 = por %p51, %p52
      %p54 = scmp.ne.s32.totalorder %s43, %s46
      %p55 = scmp.eq.s32.totalorder %s17, 3
      %p56 = por %p54, %p55
      %p57 = scmp.ne.s32.totalorder %s46, %s47
      %p58 = scmp.eq.s32.totalorder %s17, 0
      %p59 = por %p57, %p58
      %p60 = scmp.ne.s32.totalorder %s46, %s47
      %p61 = scmp.eq.s32.totalorder %s18, 3
      %p62 = por %p60, %p61
      %p64 = scmp.ne.s32.totalorder %s47, %s63
      %p65 = scmp.eq.s32.totalorder %s18, 0
      %p66 = por %p64, %p65
      %s67 = ssub.s32 %s21, %s30
      %s68 = ssub.s32 %s20, %s34
      %s69 = sor.u32 %s67, %s68
      %p70 = scmp.eq.s32.totalorder %s69, 0
      %s72 = sadd.s32 %s71, 1
      %s73 = scalar_select %p70, %s71, %s72
      %p76 = pneg %p70
      %p77 = scmp.eq.s32.totalorder %s12, 3
      %p78 = por %p76, %p77
      %p79 = scmp.ne.s32.totalorder %s71, %s74
      %p80 = scmp.eq.s32.totalorder %s12, 0
      %p81 = por %p79, %p80
      %p82 = scmp.ne.s32.totalorder %s71, %s74
      %p83 = scmp.eq.s32.totalorder %s17, 3
      %p84 = por %p82, %p83
      %p85 = scmp.ne.s32.totalorder %s74, %s75
      %p86 = scmp.eq.s32.totalorder %s17, 0
      %p87 = por %p85, %p86
      %p88 = scmp.ne.s32.totalorder %s74, %s75
      %p89 = scmp.eq.s32.totalorder %s18, 3
      %p90 = por %p88, %p89
      %p92 = scmp.ne.s32.totalorder %s75, %s91
      %p93 = scmp.eq.s32.totalorder %s18, 0
      %p94 = por %p92, %p93
      %s95 = ssub.s32 %s20, %s34
      %p96 = scmp.eq.s32.totalorder %s95, 0
      %s98 = sadd.s32 %s97, 1
      %s99 = scalar_select %p96, %s97, %s98
      %p102 = pneg %p96
      %p103 = scmp.eq.s32.totalorder %s12, 3
      %p104 = por %p102, %p103
      %p105 = scmp.ne.s32.totalorder %s97, %s100
      %p106 = scmp.eq.s32.totalorder %s12, 0
      %p107 = por %p105, %p106
      %p108 = scmp.ne.s32.totalorder %s97, %s100
      %p109 = scmp.eq.s32.totalorder %s17, 3
      %p110 = por %p108, %p109
      %p111 = scmp.ne.s32.totalorder %s100, %s101
      %p112 = scmp.eq.s32.totalorder %s17, 0
      %p113 = por %p111, %p112
      %p114 = scmp.ne.s32.totalorder %s100, %s101
      %p115 = scmp.eq.s32.totalorder %s18, 3
      %p116 = por %p114, %p115
      %p118 = scmp.ne.s32.totalorder %s101, %s117
      %p119 = scmp.eq.s32.totalorder %s18, 0
      %p120 = por %p118, %p119
      %s121 = ssub.s32 %s19, %s38
      %s122 = ssub.s32 %s20, %s34
      %s123 = sor.u32 %s121, %s122
      %p124 = scmp.eq.s32.totalorder %s123, 0
      %s126 = sadd.s32 %s125, 1
      %s127 = scalar_select %p124, %s125, %s126
      %p130 = pneg %p124
      %p131 = scmp.eq.s32.totalorder %s12, 3
      %p132 = por %p130, %p131
      %p133 = scmp.ne.s32.totalorder %s125, %s128
      %p134 = scmp.eq.s32.totalorder %s12, 0
      %p135 = por %p133, %p134
      %p136 = scmp.ne.s32.totalorder %s125, %s128
      %p137 = scmp.eq.s32.totalorder %s17, 3
      %p138 = por %p136, %p137
      %p139 = scmp.ne.s32.totalorder %s128, %s129
      %p140 = scmp.eq.s32.totalorder %s17, 0
      %p141 = por %p139, %p140
      %p142 = scmp.ne.s32.totalorder %s128, %s129
      %p143 = scmp.eq.s32.totalorder %s18, 3
      %p144 = por %p142, %p143
      %p146 = scmp.ne.s32.totalorder %s129, %s145
      %p147 = scmp.eq.s32.totalorder %s18, 0
      %p148 = por %p146, %p147
      %p149 = scmp.le.s32.totalorder 1, %s12
      %p150 = scmp.lt.s32.totalorder %s12, 5
      %p151 = pnand %p149, %p150
      %p152 = pneg %p151
      // Predicated region
      $region9: #{vae_forward.22} parent=5 // pred_check
        _
      $region10: #{vae_forward.22} parent=5 // pred_check_branch
        %154 = sbr.rel (%p151) target = $region12
      $region11: #{vae_forward.22} parent=5 // pred_region
        %s155 = ssub.s32 %s12, 1
        // Predicated region
        $region13: #{vae_forward.22} parent=11 // pred_check
          %p156 = pneg %p113
        $region14: #{vae_forward.22} parent=11 // pred_check_branch
          %158 = sbr.rel (%p156) target = $region16
        $region15: #{vae_forward.22} parent=11 // pred_region
          %s159 = smul.u32 2, %s23
          %p160 = scmp.lt.s32.totalorder %s159, 1
          %s161 = scalar_select %p160, %s159, 1
          %s162 = scalar_lea.vmem %s2, %s161
          %s163 = smul.u32 2, %s23
        $region16: #{vae_forward.22} parent=11 // pred_fallthru
          _
      $region12: #{vae_forward.22} parent=5 // pred_fallthru
        _
      %p164 = scmp.lt.s32.totalorder %s12, 4
      // Predicated region
      $region17: #{vae_forward.22} parent=5 // pred_check
        %p165 = pneg %p164
      $region18: #{vae_forward.22} parent=5 // pred_check_branch
        %167 = sbr.rel (%p165) target = $region20
      $region19: #{vae_forward.22} parent=5 // pred_region
        // Predicated region
        $region21: #{vae_forward.22} parent=19 // pred_check
          %p168 = pneg %p53
        $region22: #{vae_forward.22} parent=19 // pred_check_branch
          %170 = sbr.rel (%p168) target = $region24
        $region23: #{vae_forward.22} parent=19 // pred_region
          %s171 = sand.u32 %s43, 1
          %s172 = sand.u32 %s43, 1
          %s173 = smul.addr %s172, 32
          %s174 = scalar_lea.vmem [#allocation3], %s173
          %s175 = smul.u32 2, %s19
          %s176 = smul.u32 4, %s21
          %s177 = smul.addr %s175, 16
          %s178 = sadd.s32 %s176, %s177
          %s179 = smul.addr %s178, 4
          %s180 = scalar_lea.vmem %s0, %s179
          // Predicated region
          $region25: #{vae_forward.22} parent=23 // pred_check
            _
          $region26: #{vae_forward.22} parent=23 // pred_check_branch
            %182 = sbr.rel (0) target = $region28
          $region27: #{vae_forward.22} parent=23 // pred_region
            // Predicated region
            $region29: #{vae_forward.22} parent=27 // pred_check
              _
            $region30: #{vae_forward.22} parent=27 // pred_check_branch
              %184 = sbr.rel (0) target = $region32
            $region31: #{vae_forward.22} parent=27 // pred_region
              loop: start=0, step=1, limit=1
              $region33: #{vae_forward.22} parent=31 // loop_pre_header
                _
              $region34: #{vae_forward.22} parent=31 // loop_header
                %s186 = sphi 0, %s190
                %p187 = scmp.ge.s32.totalorder %s186, 1
                %s191 = sphi %s180, %s180
                %s192 = sphi %s174, %s174
              $region35: #{vae_forward.22} parent=31 // loop_header_branch
                %189 = sbr.rel (%p187) target = $region39
              $region36: #{vae_forward.22} parent=31 // loop_body
                %v193 = vld [vmem:[%s191] sm:$0xff]
                %194 = vst [vmem:[%s192] sm:$0xff] %v193
                %v195 = vld [vmem:[%s191 + $0x8] sm:$0xff]
                %196 = vst [vmem:[%s192 + $0x8] sm:$0xff] %v195
                %v197 = vld [vmem:[%s191 + $0x40] sm:$0xff]
                %198 = vst [vmem:[%s192 + $0x10] sm:$0xff] %v197
                %v199 = vld [vmem:[%s191 + $0x48] sm:$0xff]
                %200 = vst [vmem:[%s192 + $0x18] sm:$0xff] %v199
              $region37: #{vae_forward.22} parent=31 // loop_footer
                %s190 = sadd.s32 1, %s186
              $region38: #{vae_forward.22} parent=31 // loop_footer_branch
                %185 = sbr.rel target = $region34
              $region39: #{vae_forward.22} parent=31 // loop_exit
                _
            $region32: #{vae_forward.22} parent=27 // pred_fallthru
              _
            // Predicated region
            $region40: #{vae_forward.22} parent=27 // pred_check
              _
            $region41: #{vae_forward.22} parent=27 // pred_check_branch
              %202 = sbr.rel target = $region43
            $region42: #{vae_forward.22} parent=27 // pred_region
              _
            $region43: #{vae_forward.22} parent=27 // pred_fallthru
              _
          $region28: #{vae_forward.22} parent=23 // pred_fallthru
            _
          %203 = vnop
        $region24: #{vae_forward.22} parent=19 // pred_fallthru
          _
        // Predicated region
        $region44: #{vae_forward.22} parent=19 // pred_check
          %p204 = pneg %p81
        $region45: #{vae_forward.22} parent=19 // pred_check_branch
          %206 = sbr.rel (%p204) target = $region47
        $region46: #{vae_forward.22} parent=19 // pred_region
          %s207 = sand.u32 %s71, 1
          %s208 = scalar_lea.sflag [#allocation5], %s207
          %s209 = sand.u32 %s71, 1
          %s210 = smul.addr %s209, 512
          %s211 = scalar_lea.vmem [#allocation4], %s210
          %s212 = smul.u32 64, %s21
          %s213 = smul.u32 2, %s20
          %215 = vsyncadd %s208, 0
          %s216 = smul.addr %s212, 2
          %s217 = sadd.s32 %s213, %s216
          %s218 = smul.addr %s217, 4
          %s219 = scalar_lea.hbm %s1, %s218
          %s220 = sshll.u32 %s219, 4
          %s221 = int_to_ptr.hbm [resolvable:$true] %s220
          %s222 = sshll.u32 %s211, 4
          %s223 = int_to_ptr.vmem [resolvable:$true] %s222
          %228 = dma.hbm_to_vmem [thread:$0]  %s221, 8192, %s223, %s208, 128, 128, 8
        $region47: #{vae_forward.22} parent=19 // pred_fallthru
          _
      $region20: #{vae_forward.22} parent=5 // pred_fallthru
        _
      %p229 = scmp.le.s32.totalorder 1, %s12
      %p230 = scmp.lt.s32.totalorder %s12, 5
      %p231 = pnand %p229, %p230
      %p232 = pneg %p231
      // Predicated region
      $region48: #{vae_forward.22} parent=5 // pred_check
        _
      $region49: #{vae_forward.22} parent=5 // pred_check_branch
        %234 = sbr.rel (%p231) target = $region51
      $region50: #{vae_forward.22} parent=5 // pred_region
        %s235 = ssub.s32 %s12, 1
        %s236 = sand.u32 %s46, 1
        %s237 = sand.u32 %s46, 1
        %s238 = smul.addr %s237, 32
        %s239 = scalar_lea.vmem [#allocation3], %s238
        // Predicated region
        $region52: #{vae_forward.22} parent=50 // pred_check
          %p240 = pneg %p59
        $region53: #{vae_forward.22} parent=50 // pred_check_branch
          %242 = sbr.rel (%p240) target = $region55
        $region54: #{vae_forward.22} parent=50 // pred_region
          _
        $region55: #{vae_forward.22} parent=50 // pred_fallthru
          _
        %s243 = sand.u32 %s74, 1
        %s244 = scalar_lea.sflag [#allocation5], %s243
        %s245 = sand.u32 %s74, 1
        %s246 = smul.addr %s245, 512
        %s247 = scalar_lea.vmem [#allocation4], %s246
        // Predicated region
        $region56: #{vae_forward.22} parent=50 // pred_check
          %p248 = pneg %p87
        $region57: #{vae_forward.22} parent=50 // pred_check_branch
          %250 = sbr.rel (%p248) target = $region59
        $region58: #{vae_forward.22} parent=50 // pred_region
          %252 = dma.done %s244, 8192
        $region59: #{vae_forward.22} parent=50 // pred_fallthru
          _
        %s253 = sand.u32 %s46, 1
        %s254 = sand.u32 %s46, 1
        %s255 = smul.addr %s254, 32
        %s256 = scalar_lea.vmem [#allocation3], %s255
        %p257 = pneg %p59
        %p258 = pneg %p56
        %s259 = sand.u32 %s74, 1
        %s260 = scalar_lea.sflag [#allocation5], %s259
        %s261 = sand.u32 %s74, 1
        %s262 = smul.addr %s261, 512
        %s263 = scalar_lea.vmem [#allocation4], %s262
        %p264 = pneg %p87
        %p265 = pneg %p84
        %s266 = smul.u32 2, %s23
        %p267 = scmp.lt.s32.totalorder %s266, 1
        %s268 = scalar_select %p267, %s266, 1
        %s269 = scalar_lea.vmem %s2, %s268
        %p270 = pneg %p113
        %p271 = pneg %p110
        %p272 = pneg %p141
        %p273 = pneg %p138
        %s274 = smul.u32 2, %s22
        %s275 = smul.u32 2, %s23
        %p276 = scmp.lt.s32.totalorder %s274, 1
        %s277 = scalar_select %p276, %s274, 1
        %p278 = scmp.lt.s32.totalorder %s275, 1
        %s279 = scalar_select %p278, %s275, 1
        %s280 = smul.addr %s277, 2
        %s281 = sadd.s32 %s279, %s280
        %s282 = smul.addr %s281, 8
        %s283 = scalar_lea.vmem %s3, %s282
        %s284 = smul.u32 2, %s22
        %s285 = smul.u32 4, %s24
        %s286 = smul.u32 64, %s24
        %s287 = smul.u32 2, %s23
        %s288 = smul.u32 2, %s23
        %p289 = scmp.lt.s32.totalorder %s288, 1
        %s290 = scalar_select %p289, %s288, 1
        %s291 = scalar_lea.vmem %s2, %s290
        %s292 = smul.u32 2, %s23
        %s293 = smul.u32 2, %s22
        %s294 = smul.u32 2, %s23
        %p295 = scmp.lt.s32.totalorder %s293, 1
        %s296 = scalar_select %p295, %s293, 1
        %p297 = scmp.lt.s32.totalorder %s294, 1
        %s298 = scalar_select %p297, %s294, 1
        %s299 = smul.addr %s296, 2
        %s300 = sadd.s32 %s298, %s299
        %s301 = smul.addr %s300, 8
        %s302 = scalar_lea.vmem %s3, %s301
        %s303 = smul.u32 2, %s22
        %s304 = smul.u32 2, %s23
        %p305 = scmp.eq.s32.totalorder %s24, 0
        // Predicated region
        $region60: #{vae_forward.22} parent=50 // pred_check
          %p306 = pneg %p305
        $region61: #{vae_forward.22} parent=50 // pred_check_branch
          %308 = sbr.rel (%p306) target = $region63
        $region62: #{vae_forward.22} parent=50 // pred_region
          %309 = vst [vmem:[#allocation2] sm:$0xff] 0.0
          %310 = vst [vmem:[#allocation2 + $0x8] sm:$0xff] 0.0
          %311 = vst [vmem:[#allocation2 + $0x10] sm:$0xff] 0.0
          %312 = vst [vmem:[#allocation2 + $0x18] sm:$0xff] 0.0
        $region63: #{vae_forward.22} parent=50 // pred_fallthru
          _
        %v313 = vld [vmem:[#allocation2] sm:$0xff]
        %v314 = vld [vmem:[#allocation2 + $0x8] sm:$0xff]
        %v315 = vld [vmem:[#allocation2 + $0x10] sm:$0xff]
        %v316 = vld [vmem:[#allocation2 + $0x18] sm:$0xff]
        %v317 = vld [vmem:[%s239] sm:$0xff]
        %v318 = vld [vmem:[%s239 + $0x8] sm:$0xff]
        %v319 = vld [vmem:[%s239 + $0x10] sm:$0xff]
        %v320 = vld [vmem:[%s239 + $0x18] sm:$0xff]
        %v321 = vld [vmem:[%s247] sm:$0xff]
        %v322 = vld [vmem:[%s247 + $0x8] sm:$0xff]
        %v323 = vld [vmem:[%s247 + $0x10] sm:$0xff]
        %v324 = vld [vmem:[%s247 + $0x18] sm:$0xff]
        %v325 = vld [vmem:[%s247 + $0x20] sm:$0xff]
        %v326 = vld [vmem:[%s247 + $0x28] sm:$0xff]
        %v327 = vld [vmem:[%s247 + $0x30] sm:$0xff]
        %v328 = vld [vmem:[%s247 + $0x38] sm:$0xff]
        %v329 = vld [vmem:[%s247 + $0x40] sm:$0xff]
        %v330 = vld [vmem:[%s247 + $0x48] sm:$0xff]
        %v331 = vld [vmem:[%s247 + $0x50] sm:$0xff]
        %v332 = vld [vmem:[%s247 + $0x58] sm:$0xff]
        %v333 = vld [vmem:[%s247 + $0x60] sm:$0xff]
        %v334 = vld [vmem:[%s247 + $0x68] sm:$0xff]
        %v335 = vld [vmem:[%s247 + $0x70] sm:$0xff]
        %v336 = vld [vmem:[%s247 + $0x78] sm:$0xff]
        %v337 = vld [vmem:[%s247 + $0x80] sm:$0xff]
        %v338 = vld [vmem:[%s247 + $0x88] sm:$0xff]
        %v339 = vld [vmem:[%s247 + $0x90] sm:$0xff]
        %v340 = vld [vmem:[%s247 + $0x98] sm:$0xff]
        %v341 = vld [vmem:[%s247 + $0xa0] sm:$0xff]
        %v342 = vld [vmem:[%s247 + $0xa8] sm:$0xff]
        %v343 = vld [vmem:[%s247 + $0xb0] sm:$0xff]
        %v344 = vld [vmem:[%s247 + $0xb8] sm:$0xff]
        %v345 = vld [vmem:[%s247 + $0xc0] sm:$0xff]
        %v346 = vld [vmem:[%s247 + $0xc8] sm:$0xff]
        %v347 = vld [vmem:[%s247 + $0xd0] sm:$0xff]
        %v348 = vld [vmem:[%s247 + $0xd8] sm:$0xff]
        %v349 = vld [vmem:[%s247 + $0xe0] sm:$0xff]
        %v350 = vld [vmem:[%s247 + $0xe8] sm:$0xff]
        %v351 = vld [vmem:[%s247 + $0xf0] sm:$0xff]
        %v352 = vld [vmem:[%s247 + $0xf8] sm:$0xff]
        %v353 = vld [vmem:[%s247 + $0x100] sm:$0xff]
        %v354 = vld [vmem:[%s247 + $0x108] sm:$0xff]
        %v355 = vld [vmem:[%s247 + $0x110] sm:$0xff]
        %v356 = vld [vmem:[%s247 + $0x118] sm:$0xff]
        %v357 = vld [vmem:[%s247 + $0x120] sm:$0xff]
        %v358 = vld [vmem:[%s247 + $0x128] sm:$0xff]
        %v359 = vld [vmem:[%s247 + $0x130] sm:$0xff]
        %v360 = vld [vmem:[%s247 + $0x138] sm:$0xff]
        %v361 = vld [vmem:[%s247 + $0x140] sm:$0xff]
        %v362 = vld [vmem:[%s247 + $0x148] sm:$0xff]
        %v363 = vld [vmem:[%s247 + $0x150] sm:$0xff]
        %v364 = vld [vmem:[%s247 + $0x158] sm:$0xff]
        %v365 = vld [vmem:[%s247 + $0x160] sm:$0xff]
        %v366 = vld [vmem:[%s247 + $0x168] sm:$0xff]
        %v367 = vld [vmem:[%s247 + $0x170] sm:$0xff]
        %v368 = vld [vmem:[%s247 + $0x178] sm:$0xff]
        %v369 = vld [vmem:[%s247 + $0x180] sm:$0xff]
        %v370 = vld [vmem:[%s247 + $0x188] sm:$0xff]
        %v371 = vld [vmem:[%s247 + $0x190] sm:$0xff]
        %v372 = vld [vmem:[%s247 + $0x198] sm:$0xff]
        %v373 = vld [vmem:[%s247 + $0x1a0] sm:$0xff]
        %v374 = vld [vmem:[%s247 + $0x1a8] sm:$0xff]
        %v375 = vld [vmem:[%s247 + $0x1b0] sm:$0xff]
        %v376 = vld [vmem:[%s247 + $0x1b8] sm:$0xff]
        %v377 = vld [vmem:[%s247 + $0x1c0] sm:$0xff]
        %v378 = vld [vmem:[%s247 + $0x1c8] sm:$0xff]
        %v379 = vld [vmem:[%s247 + $0x1d0] sm:$0xff]
        %v380 = vld [vmem:[%s247 + $0x1d8] sm:$0xff]
        %v381 = vld [vmem:[%s247 + $0x1e0] sm:$0xff]
        %v382 = vld [vmem:[%s247 + $0x1e8] sm:$0xff]
        %v383 = vld [vmem:[%s247 + $0x1f0] sm:$0xff]
        %v384 = vld [vmem:[%s247 + $0x1f8] sm:$0xff]
        %v389 = vunpack.c.l.b16 %v317
        %v390 = vunpack.c.h.b16 %v317
        %v391 = vunpack.c.l.b16 %v318
        %v392 = vunpack.c.h.b16 %v318
        %v393 = vunpack.c.l.b16 %v319
        %v394 = vunpack.c.h.b16 %v319
        %v395 = vunpack.c.l.b16 %v320
        %v396 = vunpack.c.h.b16 %v320
        %v397 = vpack.c.b16 %v393, %v389
        %v398 = vpack.c.b16 %v394, %v390
        %v399 = vpack.c.b16 %v395, %v391
        %v400 = vpack.c.b16 %v396, %v392
        %v469 = vunpack.c.l.b16 %v321
        %v470 = vunpack.c.h.b16 %v321
        %v471 = vunpack.c.l.b16 %v322
        %v472 = vunpack.c.h.b16 %v322
        %v473 = vunpack.c.l.b16 %v323
        %v474 = vunpack.c.h.b16 %v323
        %v475 = vunpack.c.l.b16 %v324
        %v476 = vunpack.c.h.b16 %v324
        %v477 = vunpack.c.l.b16 %v325
        %v478 = vunpack.c.h.b16 %v325
        %v479 = vunpack.c.l.b16 %v326
        %v480 = vunpack.c.h.b16 %v326
        %v481 = vunpack.c.l.b16 %v327
        %v482 = vunpack.c.h.b16 %v327
        %v483 = vunpack.c.l.b16 %v328
        %v484 = vunpack.c.h.b16 %v328
        %v485 = vunpack.c.l.b16 %v329
        %v486 = vunpack.c.h.b16 %v329
        %v487 = vunpack.c.l.b16 %v330
        %v488 = vunpack.c.h.b16 %v330
        %v489 = vunpack.c.l.b16 %v331
        %v490 = vunpack.c.h.b16 %v331
        %v491 = vunpack.c.l.b16 %v332
        %v492 = vunpack.c.h.b16 %v332
        %v493 = vunpack.c.l.b16 %v333
        %v494 = vunpack.c.h.b16 %v333
        %v495 = vunpack.c.l.b16 %v334
        %v496 = vunpack.c.h.b16 %v334
        %v497 = vunpack.c.l.b16 %v335
        %v498 = vunpack.c.h.b16 %v335
        %v499 = vunpack.c.l.b16 %v336
        %v500 = vunpack.c.h.b16 %v336
        %v501 = vunpack.c.l.b16 %v337
        %v502 = vunpack.c.h.b16 %v337
        %v503 = vunpack.c.l.b16 %v338
        %v504 = vunpack.c.h.b16 %v338
        %v505 = vunpack.c.l.b16 %v339
        %v506 = vunpack.c.h.b16 %v339
        %v507 = vunpack.c.l.b16 %v340
        %v508 = vunpack.c.h.b16 %v340
        %v509 = vunpack.c.l.b16 %v341
        %v510 = vunpack.c.h.b16 %v341
        %v511 = vunpack.c.l.b16 %v342
        %v512 = vunpack.c.h.b16 %v342
        %v513 = vunpack.c.l.b16 %v343
        %v514 = vunpack.c.h.b16 %v343
        %v515 = vunpack.c.l.b16 %v344
        %v516 = vunpack.c.h.b16 %v344
        %v517 = vunpack.c.l.b16 %v345
        %v518 = vunpack.c.h.b16 %v345
        %v519 = vunpack.c.l.b16 %v346
        %v520 = vunpack.c.h.b16 %v346
        %v521 = vunpack.c.l.b16 %v347
        %v522 = vunpack.c.h.b16 %v347
        %v523 = vunpack.c.l.b16 %v348
        %v524 = vunpack.c.h.b16 %v348
        %v525 = vunpack.c.l.b16 %v349
        %v526 = vunpack.c.h.b16 %v349
        %v527 = vunpack.c.l.b16 %v350
        %v528 = vunpack.c.h.b16 %v350
        %v529 = vunpack.c.l.b16 %v351
        %v530 = vunpack.c.h.b16 %v351
        %v531 = vunpack.c.l.b16 %v352
        %v532 = vunpack.c.h.b16 %v352
        %v533 = vunpack.c.l.b16 %v353
        %v534 = vunpack.c.h.b16 %v353
        %v535 = vunpack.c.l.b16 %v354
        %v536 = vunpack.c.h.b16 %v354
        %v537 = vunpack.c.l.b16 %v355
        %v538 = vunpack.c.h.b16 %v355
        %v539 = vunpack.c.l.b16 %v356
        %v540 = vunpack.c.h.b16 %v356
        %v541 = vunpack.c.l.b16 %v357
        %v542 = vunpack.c.h.b16 %v357
        %v543 = vunpack.c.l.b16 %v358
        %v544 = vunpack.c.h.b16 %v358
        %v545 = vunpack.c.l.b16 %v359
        %v546 = vunpack.c.h.b16 %v359
        %v547 = vunpack.c.l.b16 %v360
        %v548 = vunpack.c.h.b16 %v360
        %v549 = vunpack.c.l.b16 %v361
        %v550 = vunpack.c.h.b16 %v361
        %v551 = vunpack.c.l.b16 %v362
        %v552 = vunpack.c.h.b16 %v362
        %v553 = vunpack.c.l.b16 %v363
        %v554 = vunpack.c.h.b16 %v363
        %v555 = vunpack.c.l.b16 %v364
        %v556 = vunpack.c.h.b16 %v364
        %v557 = vunpack.c.l.b16 %v365
        %v558 = vunpack.c.h.b16 %v365
        %v559 = vunpack.c.l.b16 %v366
        %v560 = vunpack.c.h.b16 %v366
        %v561 = vunpack.c.l.b16 %v367
        %v562 = vunpack.c.h.b16 %v367
        %v563 = vunpack.c.l.b16 %v368
        %v564 = vunpack.c.h.b16 %v368
        %v565 = vunpack.c.l.b16 %v369
        %v566 = vunpack.c.h.b16 %v369
        %v567 = vunpack.c.l.b16 %v370
        %v568 = vunpack.c.h.b16 %v370
        %v569 = vunpack.c.l.b16 %v371
        %v570 = vunpack.c.h.b16 %v371
        %v571 = vunpack.c.l.b16 %v372
        %v572 = vunpack.c.h.b16 %v372
        %v573 = vunpack.c.l.b16 %v373
        %v574 = vunpack.c.h.b16 %v373
        %v575 = vunpack.c.l.b16 %v374
        %v576 = vunpack.c.h.b16 %v374
        %v577 = vunpack.c.l.b16 %v375
        %v578 = vunpack.c.h.b16 %v375
        %v579 = vunpack.c.l.b16 %v376
        %v580 = vunpack.c.h.b16 %v376
        %v581 = vunpack.c.l.b16 %v377
        %v582 = vunpack.c.h.b16 %v377
        %v583 = vunpack.c.l.b16 %v378
        %v584 = vunpack.c.h.b16 %v378
        %v585 = vunpack.c.l.b16 %v379
        %v586 = vunpack.c.h.b16 %v379
        %v587 = vunpack.c.l.b16 %v380
        %v588 = vunpack.c.h.b16 %v380
        %v589 = vunpack.c.l.b16 %v381
        %v590 = vunpack.c.h.b16 %v381
        %v591 = vunpack.c.l.b16 %v382
        %v592 = vunpack.c.h.b16 %v382
        %v593 = vunpack.c.l.b16 %v383
        %v594 = vunpack.c.h.b16 %v383
        %v595 = vunpack.c.l.b16 %v384
        %v596 = vunpack.c.h.b16 %v384
        %v597 = vpack.c.b16 %v471, %v469
        %v598 = vpack.c.b16 %v472, %v470
        %v599 = vpack.c.b16 %v475, %v473
        %v600 = vpack.c.b16 %v476, %v474
        %v601 = vpack.c.b16 %v479, %v477
        %v602 = vpack.c.b16 %v480, %v478
        %v603 = vpack.c.b16 %v483, %v481
        %v604 = vpack.c.b16 %v484, %v482
        %v605 = vpack.c.b16 %v487, %v485
        %v606 = vpack.c.b16 %v488, %v486
        %v607 = vpack.c.b16 %v491, %v489
        %v608 = vpack.c.b16 %v492, %v490
        %v609 = vpack.c.b16 %v495, %v493
        %v610 = vpack.c.b16 %v496, %v494
        %v611 = vpack.c.b16 %v499, %v497
        %v612 = vpack.c.b16 %v500, %v498
        %v613 = vpack.c.b16 %v503, %v501
        %v614 = vpack.c.b16 %v504, %v502
        %v615 = vpack.c.b16 %v507, %v505
        %v616 = vpack.c.b16 %v508, %v506
        %v617 = vpack.c.b16 %v511, %v509
        %v618 = vpack.c.b16 %v512, %v510
        %v619 = vpack.c.b16 %v515, %v513
        %v620 = vpack.c.b16 %v516, %v514
        %v621 = vpack.c.b16 %v519, %v517
        %v622 = vpack.c.b16 %v520, %v518
        %v623 = vpack.c.b16 %v523, %v521
        %v624 = vpack.c.b16 %v524, %v522
        %v625 = vpack.c.b16 %v527, %v525
        %v626 = vpack.c.b16 %v528, %v526
        %v627 = vpack.c.b16 %v531, %v529
        %v628 = vpack.c.b16 %v532, %v530
        %v629 = vpack.c.b16 %v535, %v533
        %v630 = vpack.c.b16 %v536, %v534
        %v631 = vpack.c.b16 %v539, %v537
        %v632 = vpack.c.b16 %v540, %v538
        %v633 = vpack.c.b16 %v543, %v541
        %v634 = vpack.c.b16 %v544, %v542
        %v635 = vpack.c.b16 %v547, %v545
        %v636 = vpack.c.b16 %v548, %v546
        %v637 = vpack.c.b16 %v551, %v549
        %v638 = vpack.c.b16 %v552, %v550
        %v639 = vpack.c.b16 %v555, %v553
        %v640 = vpack.c.b16 %v556, %v554
        %v641 = vpack.c.b16 %v559, %v557
        %v642 = vpack.c.b16 %v560, %v558
        %v643 = vpack.c.b16 %v563, %v561
        %v644 = vpack.c.b16 %v564, %v562
        %v645 = vpack.c.b16 %v567, %v565
        %v646 = vpack.c.b16 %v568, %v566
        %v647 = vpack.c.b16 %v571, %v569
        %v648 = vpack.c.b16 %v572, %v570
        %v649 = vpack.c.b16 %v575, %v573
        %v650 = vpack.c.b16 %v576, %v574
        %v651 = vpack.c.b16 %v579, %v577
        %v652 = vpack.c.b16 %v580, %v578
        %v653 = vpack.c.b16 %v583, %v581
        %v654 = vpack.c.b16 %v584, %v582
        %v655 = vpack.c.b16 %v587, %v585
        %v656 = vpack.c.b16 %v588, %v586
        %v657 = vpack.c.b16 %v591, %v589
        %v658 = vpack.c.b16 %v592, %v590
        %v659 = vpack.c.b16 %v595, %v593
        %v660 = vpack.c.b16 %v596, %v594
        %725 = vmatpush.bf16.msra.mxu0 %v611
        %726 = vmatpush.bf16.msra.mxu0 %v609
        %727 = vmatpush.bf16.msra.mxu0 %v607
        %728 = vmatpush.bf16.msra.mxu0 %v605
        %729 = vmatpush.bf16.msra.mxu0 %v603
        %730 = vmatpush.bf16.msra.mxu0 %v601
        %731 = vmatpush.bf16.msra.mxu0 %v599
        %732 = vmatpush.bf16.msra.mxu0 %v597
        %733 = vmatmul.bf16.gmra.mxu0 %v397
        %v734 = vpop.f32.mrf.mxu0
        %v735 = vadd.f32 0.0, %v734
        %v736 = vpop.f32.mrf.mxu0
        %v737 = vadd.f32 0.0, %v736
        %738 = vdwg.mxu0
        %739 = vmatpush.bf16.msra.mxu0 %v627
        %740 = vmatpush.bf16.msra.mxu0 %v625
        %741 = vmatpush.bf16.msra.mxu0 %v623
        %742 = vmatpush.bf16.msra.mxu0 %v621
        %743 = vmatpush.bf16.msra.mxu0 %v619
        %744 = vmatpush.bf16.msra.mxu0 %v617
        %745 = vmatpush.bf16.msra.mxu0 %v615
        %746 = vmatpush.bf16.msra.mxu0 %v613
        %747 = vmatmul.bf16.gmra.mxu0 %v398
        %v748 = vpop.f32.mrf.mxu0
        %v749 = vadd.f32 %v735, %v748
        %v750 = vpop.f32.mrf.mxu0
        %v751 = vadd.f32 %v737, %v750
        %752 = vdwg.mxu0
        %753 = vmatpush.bf16.msra.mxu0 %v643
        %754 = vmatpush.bf16.msra.mxu0 %v641
        %755 = vmatpush.bf16.msra.mxu0 %v639
        %756 = vmatpush.bf16.msra.mxu0 %v637
        %757 = vmatpush.bf16.msra.mxu0 %v635
        %758 = vmatpush.bf16.msra.mxu0 %v633
        %759 = vmatpush.bf16.msra.mxu0 %v631
        %760 = vmatpush.bf16.msra.mxu0 %v629
        %761 = vmatmul.bf16.gmra.mxu0 %v399
        %v762 = vpop.f32.mrf.mxu0
        %v763 = vadd.f32 %v749, %v762
        %v764 = vpop.f32.mrf.mxu0
        %v765 = vadd.f32 %v751, %v764
        %766 = vdwg.mxu0
        %767 = vmatpush.bf16.msra.mxu0 %v659
        %768 = vmatpush.bf16.msra.mxu0 %v657
        %769 = vmatpush.bf16.msra.mxu0 %v655
        %770 = vmatpush.bf16.msra.mxu0 %v653
        %771 = vmatpush.bf16.msra.mxu0 %v651
        %772 = vmatpush.bf16.msra.mxu0 %v649
        %773 = vmatpush.bf16.msra.mxu0 %v647
        %774 = vmatpush.bf16.msra.mxu0 %v645
        %775 = vmatmul.bf16.gmra.mxu0 %v400
        %v776 = vpop.f32.mrf.mxu0
        %v777 = vadd.f32 %v763, %v776
        %v778 = vpop.f32.mrf.mxu0
        %v779 = vadd.f32 %v765, %v778
        %780 = vdwg.mxu0
        %781 = vmatpush.bf16.msra.mxu0 %v612
        %782 = vmatpush.bf16.msra.mxu0 %v610
        %783 = vmatpush.bf16.msra.mxu0 %v608
        %784 = vmatpush.bf16.msra.mxu0 %v606
        %785 = vmatpush.bf16.msra.mxu0 %v604
        %786 = vmatpush.bf16.msra.mxu0 %v602
        %787 = vmatpush.bf16.msra.mxu0 %v600
        %788 = vmatpush.bf16.msra.mxu0 %v598
        %789 = vmatmul.bf16.gmra.mxu0 %v397
        %v790 = vpop.f32.mrf.mxu0
        %v791 = vadd.f32 0.0, %v790
        %v792 = vpop.f32.mrf.mxu0
        %v793 = vadd.f32 0.0, %v792
        %794 = vdwg.mxu0
        %795 = vmatpush.bf16.msra.mxu0 %v628
        %796 = vmatpush.bf16.msra.mxu0 %v626
        %797 = vmatpush.bf16.msra.mxu0 %v624
        %798 = vmatpush.bf16.msra.mxu0 %v622
        %799 = vmatpush.bf16.msra.mxu0 %v620
        %800 = vmatpush.bf16.msra.mxu0 %v618
        %801 = vmatpush.bf16.msra.mxu0 %v616
        %802 = vmatpush.bf16.msra.mxu0 %v614
        %803 = vmatmul.bf16.gmra.mxu0 %v398
        %v804 = vpop.f32.mrf.mxu0
        %v805 = vadd.f32 %v791, %v804
        %v806 = vpop.f32.mrf.mxu0
        %v807 = vadd.f32 %v793, %v806
        %808 = vdwg.mxu0
        %809 = vmatpush.bf16.msra.mxu0 %v644
        %810 = vmatpush.bf16.msra.mxu0 %v642
        %811 = vmatpush.bf16.msra.mxu0 %v640
        %812 = vmatpush.bf16.msra.mxu0 %v638
        %813 = vmatpush.bf16.msra.mxu0 %v636
        %814 = vmatpush.bf16.msra.mxu0 %v634
        %815 = vmatpush.bf16.msra.mxu0 %v632
        %816 = vmatpush.bf16.msra.mxu0 %v630
        %817 = vmatmul.bf16.gmra.mxu0 %v399
        %v818 = vpop.f32.mrf.mxu0
        %v819 = vadd.f32 %v805, %v818
        %v820 = vpop.f32.mrf.mxu0
        %v821 = vadd.f32 %v807, %v820
        %822 = vdwg.mxu0
        %823 = vmatpush.bf16.msra.mxu0 %v660
        %824 = vmatpush.bf16.msra.mxu0 %v658
        %825 = vmatpush.bf16.msra.mxu0 %v656
        %826 = vmatpush.bf16.msra.mxu0 %v654
        %827 = vmatpush.bf16.msra.mxu0 %v652
        %828 = vmatpush.bf16.msra.mxu0 %v650
        %829 = vmatpush.bf16.msra.mxu0 %v648
        %830 = vmatpush.bf16.msra.mxu0 %v646
        %831 = vmatmul.bf16.gmra.mxu0 %v400
        %v832 = vpop.f32.mrf.mxu0
        %v833 = vadd.f32 %v819, %v832
        %v834 = vpop.f32.mrf.mxu0
        %v835 = vadd.f32 %v821, %v834
        %836 = vdwg.mxu0
        %v837 = vadd.f32 %v313, %v777
        %v838 = vadd.f32 %v314, %v833
        %v839 = vadd.f32 %v315, %v779
        %v840 = vadd.f32 %v316, %v835
        %841 = vst [vmem:[#allocation2] sm:$0xff] %v837
        %842 = vst [vmem:[#allocation2 + $0x8] sm:$0xff] %v838
        %843 = vst [vmem:[#allocation2 + $0x10] sm:$0xff] %v839
        %844 = vst [vmem:[#allocation2 + $0x18] sm:$0xff] %v840
        %p845 = scmp.eq.s32.totalorder %s24, 3
        // Predicated region
        $region64: #{vae_forward.22} parent=50 // pred_check
          %p846 = pneg %p845
        $region65: #{vae_forward.22} parent=50 // pred_check_branch
          %848 = sbr.rel (%p846) target = $region67
        $region66: #{vae_forward.22} parent=50 // pred_region
          %v849 = vld [vmem:[#allocation2] sm:$0xff]
          %v850 = vld [vmem:[#allocation2 + $0x8] sm:$0xff]
          %v851 = vld [vmem:[#allocation2 + $0x10] sm:$0xff]
          %v852 = vld [vmem:[#allocation2 + $0x18] sm:$0xff]
          %v853 = vld [vmem:[%s291] sm:$0x3]
          %v855 = vperm.slane %v853, 0
          %v856 = vperm.slane %v853, 1
          %v859 = vadd.f32 %v849, %v855
          %v860 = vadd.f32 %v850, %v856
          %v861 = vadd.f32 %v851, %v855
          %v862 = vadd.f32 %v852, %v856
          %v863 = vmax.f32 %v859, 0.0
          %v864 = vmax.f32 %v860, 0.0
          %v865 = vmax.f32 %v861, 0.0
          %v866 = vmax.f32 %v862, 0.0
          %867 = vst [vmem:[%s302] sm:$0xff] %v863
          %868 = vst [vmem:[%s302 + $0x8] sm:$0xff] %v864
          %869 = vst [vmem:[%s302 + $0x10] sm:$0xff] %v865
          %870 = vst [vmem:[%s302 + $0x18] sm:$0xff] %v866
        $region67: #{vae_forward.22} parent=50 // pred_fallthru
          _
        %s871 = smul.u32 2, %s22
        %s872 = smul.u32 2, %s23
        %p873 = scmp.lt.s32.totalorder %s871, 1
        %s874 = scalar_select %p873, %s871, 1
        %p875 = scmp.lt.s32.totalorder %s872, 1
        %s876 = scalar_select %p875, %s872, 1
        %s877 = smul.addr %s874, 2
        %s878 = sadd.s32 %s876, %s877
        %s879 = smul.addr %s878, 8
        %s880 = scalar_lea.vmem %s3, %s879
        // Predicated region
        $region68: #{vae_forward.22} parent=50 // pred_check
          %p881 = pneg %p138
        $region69: #{vae_forward.22} parent=50 // pred_check_branch
          %883 = sbr.rel (%p881) target = $region71
        $region70: #{vae_forward.22} parent=50 // pred_region
          %s884 = smul.u32 2, %s22
          %s885 = smul.u32 2, %s23
        $region71: #{vae_forward.22} parent=50 // pred_fallthru
          _
        // Predicated region
        $region72: #{vae_forward.22} parent=50 // pred_check
          %p886 = pneg %p138
        $region73: #{vae_forward.22} parent=50 // pred_check_branch
          %888 = sbr.rel (%p886) target = $region75
        $region74: #{vae_forward.22} parent=50 // pred_region
          %s889 = smul.u32 2, %s22
          %s890 = smul.u32 2, %s23
          %p891 = scmp.lt.s32.totalorder %s889, 1
          %s892 = scalar_select %p891, %s889, 1
          %p893 = scmp.lt.s32.totalorder %s890, 1
          %s894 = scalar_select %p893, %s890, 1
          %s895 = smul.addr %s892, 2
          %s896 = sadd.s32 %s894, %s895
          %s897 = smul.addr %s896, 8
          %s898 = scalar_lea.vmem %s3, %s897
        $region75: #{vae_forward.22} parent=50 // pred_fallthru
          _
      $region51: #{vae_forward.22} parent=5 // pred_fallthru
        _
      %p899 = scmp.le.s32.totalorder 2, %s12
      // Predicated region
      $region76: #{vae_forward.22} parent=5 // pred_check
        %p900 = pneg %p899
      $region77: #{vae_forward.22} parent=5 // pred_check_branch
        %902 = sbr.rel (%p900) target = $region79
      $region78: #{vae_forward.22} parent=5 // pred_region
        %s903 = ssub.s32 %s12, 2
      $region79: #{vae_forward.22} parent=5 // pred_fallthru
        _
    $region6: #{vae_forward.22} parent=1 // loop_footer
      %s16 = sadd.s32 1, %s12
    $region7: #{vae_forward.22} parent=1 // loop_footer_branch
      %11 = sbr.rel target = $region3
    $region8: #{vae_forward.22} parent=1 // loop_exit
      _
    %904 = vsyncpa [#allocation5], 1
    %s905 = scalar_lea.sflag [#allocation5], 1
    %906 = vsyncpa %s905, 1

// kernel: vae_forward.24
$region0: #{vae_forward.24}
  #allocation0 [shape = 'u32[]', space=smem, size = 0x4, offset = 0x4, fixed_abs, tag = 'smem constant byte address 0x4 - core index']
  #allocation1 [shape = 'u32[72,128]{1,0:T(1,128)}', space=vmem, size = 0x9000, scoped, tag = 'internal scratch']
  %s0 = inlined_call_operand.vmem [shape: bf16[16,512], index: 0, kind: input, shape index: {}]
  %s1 = inlined_call_operand.hbm [shape: bf16[512,128], index: 1, kind: input, shape index: {}]
  %s2 = inlined_call_operand.vmem [shape: f32[1,128], index: 2, kind: input, shape index: {}]
  %s3 = inlined_call_operand.vmem [shape: f32[16,128], index: 3, kind: output, shape index: {}]
  %s4 = sld [smem:[#allocation0]]
  $region26: #{vae_forward.24} parent=0
    _
  %s6 = ssub.s32 1, %s4
  %s7 = scalar_select 0, %s6, %s4
  $region1: #{vae_forward.24} parent=0
    #allocation2 [shape = 'u8[131072]{0}', space=vmem, size = 0x20000, scoped, tag = 'input window, operand 1, single buffered']
    #allocation3 [shape = 's32[1]{0}', space=sflag, size = 0x4, scoped, tag = 'scoped memory for vae_forward.24']
    %8 = vsyncpa [#allocation3], 0
    // Predicated region
    $region2: #{vae_forward.24} parent=1 // pred_check
      _
    $region3: #{vae_forward.24} parent=1 // pred_check_branch
      %10 = sbr.rel (0) target = $region5
    $region4: #{vae_forward.24} parent=1 // pred_region
      _
    $region5: #{vae_forward.24} parent=1 // pred_fallthru
      _
    // Predicated region
    $region6: #{vae_forward.24} parent=1 // pred_check
      _
    $region7: #{vae_forward.24} parent=1 // pred_check_branch
      %12 = sbr.rel (0) target = $region9
    $region8: #{vae_forward.24} parent=1 // pred_region
      %14 = vsyncadd [#allocation3], 0
      %s15 = sshll.u32 %s1, 4
      %s16 = int_to_ptr.hbm [resolvable:$true] %s15
      %s17 = sshll.u32 [#allocation2], 4
      %s18 = int_to_ptr.vmem [resolvable:$true] %s17
      %23 = dma.hbm_to_vmem [thread:$0]  %s16, 4096, %s18, [#allocation3], 64, 64, 4
    $region9: #{vae_forward.24} parent=1 // pred_fallthru
      _
    // Predicated region
    $region10: #{vae_forward.24} parent=1 // pred_check
      _
    $region11: #{vae_forward.24} parent=1 // pred_check_branch
      %25 = sbr.rel (0) target = $region13
    $region12: #{vae_forward.24} parent=1 // pred_region
      _
    $region13: #{vae_forward.24} parent=1 // pred_fallthru
      _
    // Predicated region
    $region14: #{vae_forward.24} parent=1 // pred_check
      _
    $region15: #{vae_forward.24} parent=1 // pred_check_branch
      %27 = sbr.rel (0) target = $region17
    $region16: #{vae_forward.24} parent=1 // pred_region
      %29 = dma.done [#allocation3], 4096
    $region17: #{vae_forward.24} parent=1 // pred_fallthru
      _
    %v30 = vld [vmem:[%s0] sm:$0xff]
    %v31 = vld [vmem:[%s0 + $0x8] sm:$0xff]
    %v32 = vld [vmem:[%s0 + $0x10] sm:$0xff]
    %v33 = vld [vmem:[%s0 + $0x18] sm:$0xff]
    %v34 = vld [vmem:[#allocation2] sm:$0xf]
    %v35 = vld [vmem:[#allocation2 + $0x4] sm:$0xf]
    %v36 = vld [vmem:[#allocation2 + $0x8] sm:$0xf]
    %v37 = vld [vmem:[#allocation2 + $0xc] sm:$0xf]
    %v38 = vld [vmem:[#allocation2 + $0x10] sm:$0xf]
    %v39 = vld [vmem:[#allocation2 + $0x14] sm:$0xf]
    %v40 = vld [vmem:[#allocation2 + $0x18] sm:$0xf]
    %v41 = vld [vmem:[#allocation2 + $0x1c] sm:$0xf]
    %v42 = vld [vmem:[#allocation2 + $0x20] sm:$0xf]
    %v43 = vld [vmem:[#allocation2 + $0x24] sm:$0xf]
    %v44 = vld [vmem:[#allocation2 + $0x28] sm:$0xf]
    %v45 = vld [vmem:[#allocation2 + $0x2c] sm:$0xf]
    %v46 = vld [vmem:[#allocation2 + $0x30] sm:$0xf]
    %v47 = vld [vmem:[#allocation2 + $0x34] sm:$0xf]
    %v48 = vld [vmem:[#allocation2 + $0x38] sm:$0xf]
    %v49 = vld [vmem:[#allocation2 + $0x3c] sm:$0xf]
    %v50 = vld [vmem:[#allocation2 + $0x40] sm:$0xf]
    %v51 = vld [vmem:[#allocation2 + $0x44] sm:$0xf]
    %v52 = vld [vmem:[#allocation2 + $0x48] sm:$0xf]
    %v53 = vld [vmem:[#allocation2 + $0x4c] sm:$0xf]
    %v54 = vld [vmem:[#allocation2 + $0x50] sm:$0xf]
    %v55 = vld [vmem:[#allocation2 + $0x54] sm:$0xf]
    %v56 = vld [vmem:[#allocation2 + $0x58] sm:$0xf]
    %v57 = vld [vmem:[#allocation2 + $0x5c] sm:$0xf]
    %v58 = vld [vmem:[#allocation2 + $0x60] sm:$0xf]
    %v59 = vld [vmem:[#allocation2 + $0x64] sm:$0xf]
    %v60 = vld [vmem:[#allocation2 + $0x68] sm:$0xf]
    %v61 = vld [vmem:[#allocation2 + $0x6c] sm:$0xf]
    %v62 = vld [vmem:[#allocation2 + $0x70] sm:$0xf]
    %v63 = vld [vmem:[#allocation2 + $0x74] sm:$0xf]
    %v64 = vld [vmem:[#allocation2 + $0x78] sm:$0xf]
    %v65 = vld [vmem:[#allocation2 + $0x7c] sm:$0xf]
    %v66 = vld [vmem:[#allocation2 + $0x80] sm:$0xf]
    %v67 = vld [vmem:[#allocation2 + $0x84] sm:$0xf]
    %v68 = vld [vmem:[#allocation2 + $0x88] sm:$0xf]
    %v69 = vld [vmem:[#allocation2 + $0x8c] sm:$0xf]
    %v70 = vld [vmem:[#allocation2 + $0x90] sm:$0xf]
    %v71 = vld [vmem:[#allocation2 + $0x94] sm:$0xf]
    %v72 = vld [vmem:[#allocation2 + $0x98] sm:$0xf]
    %v73 = vld [vmem:[#allocation2 + $0x9c] sm:$0xf]
    %v74 = vld [vmem:[#allocation2 + $0xa0] sm:$0xf]
    %v75 = vld [vmem:[#allocation2 + $0xa4] sm:$0xf]
    %v76 = vld [vmem:[#allocation2 + $0xa8] sm:$0xf]
    %v77 = vld [vmem:[#allocation2 + $0xac] sm:$0xf]
    %v78 = vld [vmem:[#allocation2 + $0xb0] sm:$0xf]
    %v79 = vld [vmem:[#allocation2 + $0xb4] sm:$0xf]
    %v80 = vld [vmem:[#allocation2 + $0xb8] sm:$0xf]
    %v81 = vld [vmem:[#allocation2 + $0xbc] sm:$0xf]
    %v82 = vld [vmem:[#allocation2 + $0xc0] sm:$0xf]
    %v83 = vld [vmem:[#allocation2 + $0xc4] sm:$0xf]
    %v84 = vld [vmem:[#allocation2 + $0xc8] sm:$0xf]
    %v85 = vld [vmem:[#allocation2 + $0xcc] sm:$0xf]
    %v86 = vld [vmem:[#allocation2 + $0xd0] sm:$0xf]
    %v87 = vld [vmem:[#allocation2 + $0xd4] sm:$0xf]
    %v88 = vld [vmem:[#allocation2 + $0xd8] sm:$0xf]
    %v89 = vld [vmem:[#allocation2 + $0xdc] sm:$0xf]
    %v90 = vld [vmem:[#allocation2 + $0xe0] sm:$0xf]
    %v91 = vld [vmem:[#allocation2 + $0xe4] sm:$0xf]
    %v92 = vld [vmem:[#allocation2 + $0xe8] sm:$0xf]
    %v93 = vld [vmem:[#allocation2 + $0xec] sm:$0xf]
    %v94 = vld [vmem:[#allocation2 + $0xf0] sm:$0xf]
    %v95 = vld [vmem:[#allocation2 + $0xf4] sm:$0xf]
    %v96 = vld [vmem:[#allocation2 + $0xf8] sm:$0xf]
    %v97 = vld [vmem:[#allocation2 + $0xfc] sm:$0xf]
    %v98 = vld [vmem:[%s2] sm:$0x1]
    %v100 = vperm.slane %v98, 0
    %v106 = vunpack.c.l.b16 %v30
    %v107 = vunpack.c.h.b16 %v30
    %v108 = vunpack.c.l.b16 %v31
    %v109 = vunpack.c.h.b16 %v31
    %v110 = vunpack.c.l.b16 %v32
    %v111 = vunpack.c.h.b16 %v32
    %v112 = vunpack.c.l.b16 %v33
    %v113 = vunpack.c.h.b16 %v33
    %v114 = vpack.c.b16 %v110, %v106
    %v115 = vpack.c.b16 %v111, %v107
    %v116 = vpack.c.b16 %v112, %v108
    %v117 = vpack.c.b16 %v113, %v109
    %v186 = vunpack.c.l.b16 %v34
    %v187 = vunpack.c.l.b16 %v35
    %v188 = vunpack.c.l.b16 %v36
    %v189 = vunpack.c.l.b16 %v37
    %v190 = vunpack.c.l.b16 %v38
    %v191 = vunpack.c.l.b16 %v39
    %v192 = vunpack.c.l.b16 %v40
    %v193 = vunpack.c.l.b16 %v41
    %v194 = vunpack.c.l.b16 %v42
    %v195 = vunpack.c.l.b16 %v43
    %v196 = vunpack.c.l.b16 %v44
    %v197 = vunpack.c.l.b16 %v45
    %v198 = vunpack.c.l.b16 %v46
    %v199 = vunpack.c.l.b16 %v47
    %v200 = vunpack.c.l.b16 %v48
    %v201 = vunpack.c.l.b16 %v49
    %v202 = vunpack.c.l.b16 %v50
    %v203 = vunpack.c.l.b16 %v51
    %v204 = vunpack.c.l.b16 %v52
    %v205 = vunpack.c.l.b16 %v53
    %v206 = vunpack.c.l.b16 %v54
    %v207 = vunpack.c.l.b16 %v55
    %v208 = vunpack.c.l.b16 %v56
    %v209 = vunpack.c.l.b16 %v57
    %v210 = vunpack.c.l.b16 %v58
    %v211 = vunpack.c.l.b16 %v59
    %v212 = vunpack.c.l.b16 %v60
    %v213 = vunpack.c.l.b16 %v61
    %v214 = vunpack.c.l.b16 %v62
    %v215 = vunpack.c.l.b16 %v63
    %v216 = vunpack.c.l.b16 %v64
    %v217 = vunpack.c.l.b16 %v65
    %v218 = vunpack.c.l.b16 %v66
    %v219 = vunpack.c.l.b16 %v67
    %v220 = vunpack.c.l.b16 %v68
    %v221 = vunpack.c.l.b16 %v69
    %v222 = vunpack.c.l.b16 %v70
    %v223 = vunpack.c.l.b16 %v71
    %v224 = vunpack.c.l.b16 %v72
    %v225 = vunpack.c.l.b16 %v73
    %v226 = vunpack.c.l.b16 %v74
    %v227 = vunpack.c.l.b16 %v75
    %v228 = vunpack.c.l.b16 %v76
    %v229 = vunpack.c.l.b16 %v77
    %v230 = vunpack.c.l.b16 %v78
    %v231 = vunpack.c.l.b16 %v79
    %v232 = vunpack.c.l.b16 %v80
    %v233 = vunpack.c.l.b16 %v81
    %v234 = vunpack.c.l.b16 %v82
    %v235 = vunpack.c.l.b16 %v83
    %v236 = vunpack.c.l.b16 %v84
    %v237 = vunpack.c.l.b16 %v85
    %v238 = vunpack.c.l.b16 %v86
    %v239 = vunpack.c.l.b16 %v87
    %v240 = vunpack.c.l.b16 %v88
    %v241 = vunpack.c.l.b16 %v89
    %v242 = vunpack.c.l.b16 %v90
    %v243 = vunpack.c.l.b16 %v91
    %v244 = vunpack.c.l.b16 %v92
    %v245 = vunpack.c.l.b16 %v93
    %v246 = vunpack.c.l.b16 %v94
    %v247 = vunpack.c.l.b16 %v95
    %v248 = vunpack.c.l.b16 %v96
    %v249 = vunpack.c.l.b16 %v97
    %v250 = vpack.c.b16 %v187, %v186
    %v251 = vpack.c.b16 %v189, %v188
    %v252 = vpack.c.b16 %v191, %v190
    %v253 = vpack.c.b16 %v193, %v192
    %v254 = vpack.c.b16 %v195, %v194
    %v255 = vpack.c.b16 %v197, %v196
    %v256 = vpack.c.b16 %v199, %v198
    %v257 = vpack.c.b16 %v201, %v200
    %v258 = vpack.c.b16 %v203, %v202
    %v259 = vpack.c.b16 %v205, %v204
    %v260 = vpack.c.b16 %v207, %v206
    %v261 = vpack.c.b16 %v209, %v208
    %v262 = vpack.c.b16 %v211, %v210
    %v263 = vpack.c.b16 %v213, %v212
    %v264 = vpack.c.b16 %v215, %v214
    %v265 = vpack.c.b16 %v217, %v216
    %v266 = vpack.c.b16 %v219, %v218
    %v267 = vpack.c.b16 %v221, %v220
    %v268 = vpack.c.b16 %v223, %v222
    %v269 = vpack.c.b16 %v225, %v224
    %v270 = vpack.c.b16 %v227, %v226
    %v271 = vpack.c.b16 %v229, %v228
    %v272 = vpack.c.b16 %v231, %v230
    %v273 = vpack.c.b16 %v233, %v232
    %v274 = vpack.c.b16 %v235, %v234
    %v275 = vpack.c.b16 %v237, %v236
    %v276 = vpack.c.b16 %v239, %v238
    %v277 = vpack.c.b16 %v241, %v240
    %v278 = vpack.c.b16 %v243, %v242
    %v279 = vpack.c.b16 %v245, %v244
    %v280 = vpack.c.b16 %v247, %v246
    %v281 = vpack.c.b16 %v249, %v248
    %314 = vmatpush.bf16.msra.mxu0 %v257
    %315 = vmatpush.bf16.msra.mxu0 %v256
    %316 = vmatpush.bf16.msra.mxu0 %v255
    %317 = vmatpush.bf16.msra.mxu0 %v254
    %318 = vmatpush.bf16.msra.mxu0 %v253
    %319 = vmatpush.bf16.msra.mxu0 %v252
    %320 = vmatpush.bf16.msra.mxu0 %v251
    %321 = vmatpush.bf16.msra.mxu0 %v250
    %322 = vmatmul.bf16.gmra.mxu0 %v114
    %v323 = vpop.f32.mrf.mxu0
    %v324 = vadd.f32 %v100, %v323
    %v325 = vpop.f32.mrf.mxu0
    %v326 = vadd.f32 %v100, %v325
    %327 = vdwg.mxu0
    %328 = vmatpush.bf16.msra.mxu0 %v265
    %329 = vmatpush.bf16.msra.mxu0 %v264
    %330 = vmatpush.bf16.msra.mxu0 %v263
    %331 = vmatpush.bf16.msra.mxu0 %v262
    %332 = vmatpush.bf16.msra.mxu0 %v261
    %333 = vmatpush.bf16.msra.mxu0 %v260
    %334 = vmatpush.bf16.msra.mxu0 %v259
    %335 = vmatpush.bf16.msra.mxu0 %v258
    %336 = vmatmul.bf16.gmra.mxu0 %v115
    %v337 = vpop.f32.mrf.mxu0
    %v338 = vadd.f32 %v324, %v337
    %v339 = vpop.f32.mrf.mxu0
    %v340 = vadd.f32 %v326, %v339
    %341 = vdwg.mxu0
    %342 = vmatpush.bf16.msra.mxu0 %v273
    %343 = vmatpush.bf16.msra.mxu0 %v272
    %344 = vmatpush.bf16.msra.mxu0 %v271
    %345 = vmatpush.bf16.msra.mxu0 %v270
    %346 = vmatpush.bf16.msra.mxu0 %v269
    %347 = vmatpush.bf16.msra.mxu0 %v268
    %348 = vmatpush.bf16.msra.mxu0 %v267
    %349 = vmatpush.bf16.msra.mxu0 %v266
    %350 = vmatmul.bf16.gmra.mxu0 %v116
    %v351 = vpop.f32.mrf.mxu0
    %v352 = vadd.f32 %v338, %v351
    %v353 = vpop.f32.mrf.mxu0
    %v354 = vadd.f32 %v340, %v353
    %355 = vdwg.mxu0
    %356 = vmatpush.bf16.msra.mxu0 %v281
    %357 = vmatpush.bf16.msra.mxu0 %v280
    %358 = vmatpush.bf16.msra.mxu0 %v279
    %359 = vmatpush.bf16.msra.mxu0 %v278
    %360 = vmatpush.bf16.msra.mxu0 %v277
    %361 = vmatpush.bf16.msra.mxu0 %v276
    %362 = vmatpush.bf16.msra.mxu0 %v275
    %363 = vmatpush.bf16.msra.mxu0 %v274
    %364 = vmatmul.bf16.gmra.mxu0 %v117
    %v365 = vpop.f32.mrf.mxu0
    %v366 = vadd.f32 %v352, %v365
    %v367 = vpop.f32.mrf.mxu0
    %v368 = vadd.f32 %v354, %v367
    %369 = vdwg.mxu0
    %370 = vst [vmem:[%s3] sm:$0xff] %v366
    %371 = vst [vmem:[%s3 + $0x8] sm:$0xff] %v368
    // Predicated region
    $region18: #{vae_forward.24} parent=1 // pred_check
      _
    $region19: #{vae_forward.24} parent=1 // pred_check_branch
      %373 = sbr.rel (0) target = $region21
    $region20: #{vae_forward.24} parent=1 // pred_region
      _
    $region21: #{vae_forward.24} parent=1 // pred_fallthru
      _
    // Predicated region
    $region22: #{vae_forward.24} parent=1 // pred_check
      _
    $region23: #{vae_forward.24} parent=1 // pred_check_branch
      %375 = sbr.rel (0) target = $region25
    $region24: #{vae_forward.24} parent=1 // pred_region
      _
    $region25: #{vae_forward.24} parent=1 // pred_fallthru
      _
    %376 = vsyncpa [#allocation3], 1

// kernel: vae_forward.23
$region0: #{vae_forward.23}
  #allocation0 [shape = 'u32[]', space=smem, size = 0x4, offset = 0x4, fixed_abs, tag = 'smem constant byte address 0x4 - core index']
  #allocation1 [shape = 'u32[72,128]{1,0:T(1,128)}', space=vmem, size = 0x9000, scoped, tag = 'internal scratch']
  #allocation2 [shape = 'f32[16,256]{1,0:T(8,128)}', space=vmem, size = 0x4000, scoped, tag = 'scratch operand']
  %s0 = inlined_call_operand.vmem [shape: bf16[16,2304], index: 0, kind: input, shape index: {}]
  %s1 = inlined_call_operand.vmem [shape: bf16[2304,512], index: 1, kind: input, shape index: {}]
  %s2 = inlined_call_operand.vmem [shape: f32[1,512], index: 2, kind: input, shape index: {}]
  %s3 = inlined_call_operand.vmem [shape: f32[16,512], index: 3, kind: output, shape index: {}]
  %s4 = sld [smem:[#allocation0]]
  $region136: #{vae_forward.23} parent=0
    _
  %s6 = ssub.s32 1, %s4
  %s7 = scalar_select 0, %s6, %s4
  $region1: #{vae_forward.23} parent=0
    #allocation3 [shape = 'u8[24576]{0}', space=vmem, size = 0x6000, scoped, tag = 'input window, operand 0']
    #allocation4 [shape = 'u8[393216]{0}', space=vmem, size = 0x60000, scoped, tag = 'input window, operand 1']
    #allocation5 [shape = 'u8[32768]{0}', space=vmem, size = 0x8000, scoped, tag = 'output window, operand 0']
    loop: start=0, step=1, limit=14
    $region2: #{vae_forward.23} parent=1 // loop_pre_header
      _
    $region3: #{vae_forward.23} parent=1 // loop_header
      %s9 = sphi 0, %s13
      %p10 = scmp.ge.s32.totalorder %s9, 14
      %s16 = sphi 0, %s35
      %s17 = sphi 0, %s31
      %s18 = sphi 0, %s27
      %s19 = sphi 0, %s16
      %s20 = sphi 0, %s17
      %s21 = sphi 0, %s18
      %s22 = sphi 0, %s19
      %s23 = sphi 0, %s20
      %s24 = sphi 0, %s21
      %s40 = sphi 0, %s42
      %s43 = sphi 0, %s40
      %s44 = sphi 0, %s43
      %s60 = sphi 0, %s44
      %s68 = sphi 0, %s70
      %s71 = sphi 0, %s68
      %s72 = sphi 0, %s71
      %s88 = sphi 0, %s72
      %s94 = sphi 0, %s96
      %s97 = sphi 0, %s94
      %s98 = sphi 0, %s97
      %s114 = sphi 0, %s98
      %s122 = sphi 0, %s124
      %s125 = sphi 0, %s122
      %s126 = sphi 0, %s125
      %s142 = sphi 0, %s126
    $region4: #{vae_forward.23} parent=1 // loop_header_branch
      %12 = sbr.rel (%p10) target = $region8
    $region5: #{vae_forward.23} parent=1 // loop_body
      %s14 = ssub.s32 %s9, 1
      %s15 = ssub.s32 %s9, 2
      %s25 = sadd.s32 1, %s18
      %p26 = scmp.ge.s32.totalorder %s25, 6
      %s27 = scalar_select %p26, 0, %s25
      %s28 = sadd.s32 1, %s17
      %s29 = scalar_select %p26, %s28, %s17
      %p30 = scmp.ge.s32.totalorder %s29, 2
      %s31 = scalar_select %p30, 0, %s29
      %s32 = sadd.s32 1, %s16
      %s33 = scalar_select %p30, %s32, %s16
      %p34 = scmp.ge.s32.totalorder %s33, 1
      %s35 = scalar_select %p34, 0, %s33
      %s36 = ssub.s32 %s16, %s35
      %s37 = ssub.s32 %s18, %s27
      %s38 = sor.u32 %s36, %s37
      %p39 = scmp.eq.s32.totalorder %s38, 0
      %s41 = sadd.s32 %s40, 1
      %s42 = scalar_select %p39, %s40, %s41
      %p45 = pneg %p39
      %p46 = scmp.eq.s32.totalorder %s9, 11
      %p47 = por %p45, %p46
      %p48 = scmp.ne.s32.totalorder %s40, %s43
      %p49 = scmp.eq.s32.totalorder %s9, 0
      %p50 = por %p48, %p49
      %p51 = scmp.ne.s32.totalorder %s40, %s43
      %p52 = scmp.eq.s32.totalorder %s14, 11
      %p53 = por %p51, %p52
      %p54 = scmp.ne.s32.totalorder %s43, %s44
      %p55 = scmp.eq.s32.totalorder %s14, 0
      %p56 = por %p54, %p55
      %p57 = scmp.ne.s32.totalorder %s43, %s44
      %p58 = scmp.eq.s32.totalorder %s15, 11
      %p59 = por %p57, %p58
      %p61 = scmp.ne.s32.totalorder %s44, %s60
      %p62 = scmp.eq.s32.totalorder %s15, 0
      %p63 = por %p61, %p62
      %s64 = ssub.s32 %s18, %s27
      %s65 = ssub.s32 %s17, %s31
      %s66 = sor.u32 %s64, %s65
      %p67 = scmp.eq.s32.totalorder %s66, 0
      %s69 = sadd.s32 %s68, 1
      %s70 = scalar_select %p67, %s68, %s69
      %p73 = pneg %p67
      %p74 = scmp.eq.s32.totalorder %s9, 11
      %p75 = por %p73, %p74
      %p76 = scmp.ne.s32.totalorder %s68, %s71
      %p77 = scmp.eq.s32.totalorder %s9, 0
      %p78 = por %p76, %p77
      %p79 = scmp.ne.s32.totalorder %s68, %s71
      %p80 = scmp.eq.s32.totalorder %s14, 11
      %p81 = por %p79, %p80
      %p82 = scmp.ne.s32.totalorder %s71, %s72
      %p83 = scmp.eq.s32.totalorder %s14, 0
      %p84 = por %p82, %p83
      %p85 = scmp.ne.s32.totalorder %s71, %s72
      %p86 = scmp.eq.s32.totalorder %s15, 11
      %p87 = por %p85, %p86
      %p89 = scmp.ne.s32.totalorder %s72, %s88
      %p90 = scmp.eq.s32.totalorder %s15, 0
      %p91 = por %p89, %p90
      %s92 = ssub.s32 %s17, %s31
      %p93 = scmp.eq.s32.totalorder %s92, 0
      %s95 = sadd.s32 %s94, 1
      %s96 = scalar_select %p93, %s94, %s95
      %p99 = pneg %p93
      %p100 = scmp.eq.s32.totalorder %s9, 11
      %p101 = por %p99, %p100
      %p102 = scmp.ne.s32.totalorder %s94, %s97
      %p103 = scmp.eq.s32.totalorder %s9, 0
      %p104 = por %p102, %p103
      %p105 = scmp.ne.s32.totalorder %s94, %s97
      %p106 = scmp.eq.s32.totalorder %s14, 11
      %p107 = por %p105, %p106
      %p108 = scmp.ne.s32.totalorder %s97, %s98
      %p109 = scmp.eq.s32.totalorder %s14, 0
      %p110 = por %p108, %p109
      %p111 = scmp.ne.s32.totalorder %s97, %s98
      %p112 = scmp.eq.s32.totalorder %s15, 11
      %p113 = por %p111, %p112
      %p115 = scmp.ne.s32.totalorder %s98, %s114
      %p116 = scmp.eq.s32.totalorder %s15, 0
      %p117 = por %p115, %p116
      %s118 = ssub.s32 %s16, %s35
      %s119 = ssub.s32 %s17, %s31
      %s120 = sor.u32 %s118, %s119
      %p121 = scmp.eq.s32.totalorder %s120, 0
      %s123 = sadd.s32 %s122, 1
      %s124 = scalar_select %p121, %s122, %s123
      %p127 = pneg %p121
      %p128 = scmp.eq.s32.totalorder %s9, 11
      %p129 = por %p127, %p128
      %p130 = scmp.ne.s32.totalorder %s122, %s125
      %p131 = scmp.eq.s32.totalorder %s9, 0
      %p132 = por %p130, %p131
      %p133 = scmp.ne.s32.totalorder %s122, %s125
      %p134 = scmp.eq.s32.totalorder %s14, 11
      %p135 = por %p133, %p134
      %p136 = scmp.ne.s32.totalorder %s125, %s126
      %p137 = scmp.eq.s32.totalorder %s14, 0
      %p138 = por %p136, %p137
      %p139 = scmp.ne.s32.totalorder %s125, %s126
      %p140 = scmp.eq.s32.totalorder %s15, 11
      %p141 = por %p139, %p140
      %p143 = scmp.ne.s32.totalorder %s126, %s142
      %p144 = scmp.eq.s32.totalorder %s15, 0
      %p145 = por %p143, %p144
      %p146 = scmp.le.s32.totalorder 1, %s9
      %p147 = scmp.lt.s32.totalorder %s9, 13
      %p148 = pnand %p146, %p147
      %p149 = pneg %p148
      // Predicated region
      $region9: #{vae_forward.23} parent=5 // pred_check
        _
      $region10: #{vae_forward.23} parent=5 // pred_check_branch
        %151 = sbr.rel (%p148) target = $region12
      $region11: #{vae_forward.23} parent=5 // pred_region
        %s152 = ssub.s32 %s9, 1
      $region12: #{vae_forward.23} parent=5 // pred_fallthru
        _
      %p153 = scmp.lt.s32.totalorder %s9, 12
      // Predicated region
      $region13: #{vae_forward.23} parent=5 // pred_check
        %p154 = pneg %p153
      $region14: #{vae_forward.23} parent=5 // pred_check_branch
        %156 = sbr.rel (%p154) target = $region16
      $region15: #{vae_forward.23} parent=5 // pred_region
        // Predicated region
        $region17: #{vae_forward.23} parent=15 // pred_check
          %p157 = pneg %p50
        $region18: #{vae_forward.23} parent=15 // pred_check_branch
          %159 = sbr.rel (%p157) target = $region20
        $region19: #{vae_forward.23} parent=15 // pred_region
          %s160 = sand.u32 %s40, 1
          %s161 = sand.u32 %s40, 1
          %s162 = smul.addr %s161, 24
          %s163 = scalar_lea.vmem [#allocation3], %s162
          %s164 = smul.u32 2, %s16
          %s165 = smul.u32 3, %s18
          %s166 = smul.addr %s164, 18
          %s167 = sadd.s32 %s165, %s166
          %s168 = smul.addr %s167, 4
          %s169 = scalar_lea.vmem %s0, %s168
          // Predicated region
          $region21: #{vae_forward.23} parent=19 // pred_check
            _
          $region22: #{vae_forward.23} parent=19 // pred_check_branch
            %171 = sbr.rel (0) target = $region24
          $region23: #{vae_forward.23} parent=19 // pred_region
            // Predicated region
            $region25: #{vae_forward.23} parent=23 // pred_check
              _
            $region26: #{vae_forward.23} parent=23 // pred_check_branch
              %173 = sbr.rel (0) target = $region28
            $region27: #{vae_forward.23} parent=23 // pred_region
              %s174 = scalar_lea.vmem %s169, 8
              %s175 = scalar_lea.vmem %s163, 8 [#allocation3]
              loop: start=0, step=1, limit=1
              $region29: #{vae_forward.23} parent=27 // loop_pre_header
                _
              $region30: #{vae_forward.23} parent=27 // loop_header
                %s177 = sphi 0, %s181
                %p178 = scmp.ge.s32.totalorder %s177, 1
                %s182 = sphi %s169, %s169
                %s183 = sphi %s163, %s163
              $region31: #{vae_forward.23} parent=27 // loop_header_branch
                %180 = sbr.rel (%p178) target = $region35
              $region32: #{vae_forward.23} parent=27 // loop_body
                %v184 = vld [vmem:[%s182] sm:$0xff]
                %185 = vst [vmem:[%s183] sm:$0xff] %v184
                %v186 = vld [vmem:[%s182 + $0x48] sm:$0xff]
                %187 = vst [vmem:[%s183 + $0xc] sm:$0xff] %v186
              $region33: #{vae_forward.23} parent=27 // loop_footer
                %s181 = sadd.s32 1, %s177
              $region34: #{vae_forward.23} parent=27 // loop_footer_branch
                %176 = sbr.rel target = $region30
              $region35: #{vae_forward.23} parent=27 // loop_exit
                _
              %s189 = ssub.s32 16, 1
              loop: start=0, step=1, limit=1
              $region36: #{vae_forward.23} parent=27 // loop_pre_header
                _
              $region37: #{vae_forward.23} parent=27 // loop_header
                %s191 = sphi 0, %s195
                %p192 = scmp.ge.s32.totalorder %s191, 1
                %s196 = sphi %s174, %s174
                %s197 = sphi %s175, %s175
              $region38: #{vae_forward.23} parent=27 // loop_header_branch
                %194 = sbr.rel (%p192) target = $region42
              $region39: #{vae_forward.23} parent=27 // loop_body
                %v198 = vld [vmem:[%s196] sm:%s189]
                %199 = vst [vmem:[%s197] sm:%s189] %v198
                %v200 = vld [vmem:[%s196 + $0x48] sm:%s189]
                %201 = vst [vmem:[%s197 + $0xc] sm:%s189] %v200
              $region40: #{vae_forward.23} parent=27 // loop_footer
                %s195 = sadd.s32 1, %s191
              $region41: #{vae_forward.23} parent=27 // loop_footer_branch
                %190 = sbr.rel target = $region37
              $region42: #{vae_forward.23} parent=27 // loop_exit
                _
            $region28: #{vae_forward.23} parent=23 // pred_fallthru
              _
          $region24: #{vae_forward.23} parent=19 // pred_fallthru
            _
          %202 = vnop
        $region20: #{vae_forward.23} parent=15 // pred_fallthru
          _
        // Predicated region
        $region43: #{vae_forward.23} parent=15 // pred_check
          %p203 = pneg %p78
        $region44: #{vae_forward.23} parent=15 // pred_check_branch
          %205 = sbr.rel (%p203) target = $region46
        $region45: #{vae_forward.23} parent=15 // pred_region
          %s206 = sand.u32 %s68, 1
          %s207 = sand.u32 %s68, 1
          %s208 = smul.addr %s207, 384
          %s209 = scalar_lea.vmem [#allocation4], %s208
          %s210 = smul.u32 48, %s18
          %s211 = smul.u32 2, %s17
          %s212 = smul.addr %s210, 4
          %s213 = sadd.s32 %s211, %s212
          %s214 = smul.addr %s213, 4
          %s215 = scalar_lea.vmem %s1, %s214
          // Predicated region
          $region47: #{vae_forward.23} parent=45 // pred_check
            _
          $region48: #{vae_forward.23} parent=45 // pred_check_branch
            %217 = sbr.rel (0) target = $region50
          $region49: #{vae_forward.23} parent=45 // pred_region
            // Predicated region
            $region51: #{vae_forward.23} parent=49 // pred_check
              _
            $region52: #{vae_forward.23} parent=49 // pred_check_branch
              %219 = sbr.rel (0) target = $region54
            $region53: #{vae_forward.23} parent=49 // pred_region
              // Predicated region
              $region66: #{vae_forward.23} parent=53 // pred_check
                _
              $region67: #{vae_forward.23} parent=53 // pred_check_branch
                %329 = sbr.rel (0) target = $region69
              $region68: #{vae_forward.23} parent=53 // pred_region
                loop: start=0, step=1, limit=1
                $region70: #{vae_forward.23} parent=68 // loop_pre_header
                  _
                $region71: #{vae_forward.23} parent=68 // loop_header
                  %s331 = sphi 0, %s335
                  %p332 = scmp.ge.s32.totalorder %s331, 1
                  %s336 = sphi %s215, %s215
                  %s337 = sphi %s209, %s209
                $region72: #{vae_forward.23} parent=68 // loop_header_branch
                  %334 = sbr.rel (%p332) target = $region76
                $region73: #{vae_forward.23} parent=68 // loop_body
                  %v338 = vld [vmem:[%s336] sm:$0xff]
                  %339 = vst [vmem:[%s337] sm:$0xff] %v338
                  %v340 = vld [vmem:[%s336 + $0x10] sm:$0xff]
                  %341 = vst [vmem:[%s337 + $0x8] sm:$0xff] %v340
                  %v342 = vld [vmem:[%s336 + $0x20] sm:$0xff]
                  %343 = vst [vmem:[%s337 + $0x10] sm:$0xff] %v342
                  %v344 = vld [vmem:[%s336 + $0x30] sm:$0xff]
                  %345 = vst [vmem:[%s337 + $0x18] sm:$0xff] %v344
                  %v346 = vld [vmem:[%s336 + $0x40] sm:$0xff]
                  %347 = vst [vmem:[%s337 + $0x20] sm:$0xff] %v346
                  %v348 = vld [vmem:[%s336 + $0x50] sm:$0xff]
                  %349 = vst [vmem:[%s337 + $0x28] sm:$0xff] %v348
                  %v350 = vld [vmem:[%s336 + $0x60] sm:$0xff]
                  %351 = vst [vmem:[%s337 + $0x30] sm:$0xff] %v350
                  %v352 = vld [vmem:[%s336 + $0x70] sm:$0xff]
                  %353 = vst [vmem:[%s337 + $0x38] sm:$0xff] %v352
                  %v354 = vld [vmem:[%s336 + $0x80] sm:$0xff]
                  %355 = vst [vmem:[%s337 + $0x40] sm:$0xff] %v354
                  %v356 = vld [vmem:[%s336 + $0x90] sm:$0xff]
                  %357 = vst [vmem:[%s337 + $0x48] sm:$0xff] %v356
                  %v358 = vld [vmem:[%s336 + $0xa0] sm:$0xff]
                  %359 = vst [vmem:[%s337 + $0x50] sm:$0xff] %v358
                  %v360 = vld [vmem:[%s336 + $0xb0] sm:$0xff]
                  %361 = vst [vmem:[%s337 + $0x58] sm:$0xff] %v360
                  %v362 = vld [vmem:[%s336 + $0xc0] sm:$0xff]
                  %363 = vst [vmem:[%s337 + $0x60] sm:$0xff] %v362
                  %v364 = vld [vmem:[%s336 + $0xd0] sm:$0xff]
                  %365 = vst [vmem:[%s337 + $0x68] sm:$0xff] %v364
                  %v366 = vld [vmem:[%s336 + $0xe0] sm:$0xff]
                  %367 = vst [vmem:[%s337 + $0x70] sm:$0xff] %v366
                  %v368 = vld [vmem:[%s336 + $0xf0] sm:$0xff]
                  %369 = vst [vmem:[%s337 + $0x78] sm:$0xff] %v368
                  %v370 = vld [vmem:[%s336 + $0x100] sm:$0xff]
                  %371 = vst [vmem:[%s337 + $0x80] sm:$0xff] %v370
                  %v372 = vld [vmem:[%s336 + $0x110] sm:$0xff]
                  %373 = vst [vmem:[%s337 + $0x88] sm:$0xff] %v372
                  %v374 = vld [vmem:[%s336 + $0x120] sm:$0xff]
                  %375 = vst [vmem:[%s337 + $0x90] sm:$0xff] %v374
                  %v376 = vld [vmem:[%s336 + $0x130] sm:$0xff]
                  %377 = vst [vmem:[%s337 + $0x98] sm:$0xff] %v376
                  %v378 = vld [vmem:[%s336 + $0x140] sm:$0xff]
                  %379 = vst [vmem:[%s337 + $0xa0] sm:$0xff] %v378
                  %v380 = vld [vmem:[%s336 + $0x150] sm:$0xff]
                  %381 = vst [vmem:[%s337 + $0xa8] sm:$0xff] %v380
                  %v382 = vld [vmem:[%s336 + $0x160] sm:$0xff]
                  %383 = vst [vmem:[%s337 + $0xb0] sm:$0xff] %v382
                  %v384 = vld [vmem:[%s336 + $0x170] sm:$0xff]
                  %385 = vst [vmem:[%s337 + $0xb8] sm:$0xff] %v384
                  %v386 = vld [vmem:[%s336 + $0x180] sm:$0xff]
                  %387 = vst [vmem:[%s337 + $0xc0] sm:$0xff] %v386
                  %v388 = vld [vmem:[%s336 + $0x190] sm:$0xff]
                  %389 = vst [vmem:[%s337 + $0xc8] sm:$0xff] %v388
                  %v390 = vld [vmem:[%s336 + $0x1a0] sm:$0xff]
                  %391 = vst [vmem:[%s337 + $0xd0] sm:$0xff] %v390
                  %v392 = vld [vmem:[%s336 + $0x1b0] sm:$0xff]
                  %393 = vst [vmem:[%s337 + $0xd8] sm:$0xff] %v392
                  %v394 = vld [vmem:[%s336 + $0x1c0] sm:$0xff]
                  %395 = vst [vmem:[%s337 + $0xe0] sm:$0xff] %v394
                  %v396 = vld [vmem:[%s336 + $0x1d0] sm:$0xff]
                  %397 = vst [vmem:[%s337 + $0xe8] sm:$0xff] %v396
                  %v398 = vld [vmem:[%s336 + $0x1e0] sm:$0xff]
                  %399 = vst [vmem:[%s337 + $0xf0] sm:$0xff] %v398
                  %v400 = vld [vmem:[%s336 + $0x1f0] sm:$0xff]
                  %401 = vst [vmem:[%s337 + $0xf8] sm:$0xff] %v400
                  %v402 = vld [vmem:[%s336 + $0x200] sm:$0xff]
                  %403 = vst [vmem:[%s337 + $0x100] sm:$0xff] %v402
                  %v404 = vld [vmem:[%s336 + $0x210] sm:$0xff]
                  %405 = vst [vmem:[%s337 + $0x108] sm:$0xff] %v404
                  %v406 = vld [vmem:[%s336 + $0x220] sm:$0xff]
                  %407 = vst [vmem:[%s337 + $0x110] sm:$0xff] %v406
                  %v408 = vld [vmem:[%s336 + $0x230] sm:$0xff]
                  %409 = vst [vmem:[%s337 + $0x118] sm:$0xff] %v408
                  %v410 = vld [vmem:[%s336 + $0x240] sm:$0xff]
                  %411 = vst [vmem:[%s337 + $0x120] sm:$0xff] %v410
                  %v412 = vld [vmem:[%s336 + $0x250] sm:$0xff]
                  %413 = vst [vmem:[%s337 + $0x128] sm:$0xff] %v412
                  %v414 = vld [vmem:[%s336 + $0x260] sm:$0xff]
                  %415 = vst [vmem:[%s337 + $0x130] sm:$0xff] %v414
                  %v416 = vld [vmem:[%s336 + $0x270] sm:$0xff]
                  %417 = vst [vmem:[%s337 + $0x138] sm:$0xff] %v416
                  %v418 = vld [vmem:[%s336 + $0x280] sm:$0xff]
                  %419 = vst [vmem:[%s337 + $0x140] sm:$0xff] %v418
                  %v420 = vld [vmem:[%s336 + $0x290] sm:$0xff]
                  %421 = vst [vmem:[%s337 + $0x148] sm:$0xff] %v420
                  %v422 = vld [vmem:[%s336 + $0x2a0] sm:$0xff]
                  %423 = vst [vmem:[%s337 + $0x150] sm:$0xff] %v422
                  %v424 = vld [vmem:[%s336 + $0x2b0] sm:$0xff]
                  %425 = vst [vmem:[%s337 + $0x158] sm:$0xff] %v424
                  %v426 = vld [vmem:[%s336 + $0x2c0] sm:$0xff]
                  %427 = vst [vmem:[%s337 + $0x160] sm:$0xff] %v426
                  %v428 = vld [vmem:[%s336 + $0x2d0] sm:$0xff]
                  %429 = vst [vmem:[%s337 + $0x168] sm:$0xff] %v428
                  %v430 = vld [vmem:[%s336 + $0x2e0] sm:$0xff]
                  %431 = vst [vmem:[%s337 + $0x170] sm:$0xff] %v430
                  %v432 = vld [vmem:[%s336 + $0x2f0] sm:$0xff]
                  %433 = vst [vmem:[%s337 + $0x178] sm:$0xff] %v432
                $region74: #{vae_forward.23} parent=68 // loop_footer
                  %s335 = sadd.s32 1, %s331
                $region75: #{vae_forward.23} parent=68 // loop_footer_branch
                  %330 = sbr.rel target = $region71
                $region76: #{vae_forward.23} parent=68 // loop_exit
                  _
              $region69: #{vae_forward.23} parent=53 // pred_fallthru
                _
              // Predicated region
              $region77: #{vae_forward.23} parent=53 // pred_check
                _
              $region78: #{vae_forward.23} parent=53 // pred_check_branch
                %435 = sbr.rel target = $region80
              $region79: #{vae_forward.23} parent=53 // pred_region
                _
              $region80: #{vae_forward.23} parent=53 // pred_fallthru
                _
            $region54: #{vae_forward.23} parent=49 // pred_fallthru
              _
            // Predicated region
            $region55: #{vae_forward.23} parent=49 // pred_check
              _
            $region56: #{vae_forward.23} parent=49 // pred_check_branch
              %221 = sbr.rel target = $region58
            $region57: #{vae_forward.23} parent=49 // pred_region
              %s223 = ssub.s32 256, 1
              loop: start=0, step=1, limit=1
              $region59: #{vae_forward.23} parent=57 // loop_pre_header
                _
              $region60: #{vae_forward.23} parent=57 // loop_header
                %s225 = sphi 0, %s229
                %p226 = scmp.ge.s32.totalorder %s225, 1
                %s230 = sphi %s215, %s215
                %s231 = sphi %s209, %s209
              $region61: #{vae_forward.23} parent=57 // loop_header_branch
                %228 = sbr.rel (%p226) target = $region65
              $region62: #{vae_forward.23} parent=57 // loop_body
                %v232 = vld [vmem:[%s230] sm:%s223]
                %233 = vst [vmem:[%s231] sm:%s223] %v232
                %v234 = vld [vmem:[%s230 + $0x10] sm:%s223]
                %235 = vst [vmem:[%s231 + $0x8] sm:%s223] %v234
                %v236 = vld [vmem:[%s230 + $0x20] sm:%s223]
                %237 = vst [vmem:[%s231 + $0x10] sm:%s223] %v236
                %v238 = vld [vmem:[%s230 + $0x30] sm:%s223]
                %239 = vst [vmem:[%s231 + $0x18] sm:%s223] %v238
                %v240 = vld [vmem:[%s230 + $0x40] sm:%s223]
                %241 = vst [vmem:[%s231 + $0x20] sm:%s223] %v240
                %v242 = vld [vmem:[%s230 + $0x50] sm:%s223]
                %243 = vst [vmem:[%s231 + $0x28] sm:%s223] %v242
                %v244 = vld [vmem:[%s230 + $0x60] sm:%s223]
                %245 = vst [vmem:[%s231 + $0x30] sm:%s223] %v244
                %v246 = vld [vmem:[%s230 + $0x70] sm:%s223]
                %247 = vst [vmem:[%s231 + $0x38] sm:%s223] %v246
                %v248 = vld [vmem:[%s230 + $0x80] sm:%s223]
                %249 = vst [vmem:[%s231 + $0x40] sm:%s223] %v248
                %v250 = vld [vmem:[%s230 + $0x90] sm:%s223]
                %251 = vst [vmem:[%s231 + $0x48] sm:%s223] %v250
                %v252 = vld [vmem:[%s230 + $0xa0] sm:%s223]
                %253 = vst [vmem:[%s231 + $0x50] sm:%s223] %v252
                %v254 = vld [vmem:[%s230 + $0xb0] sm:%s223]
                %255 = vst [vmem:[%s231 + $0x58] sm:%s223] %v254
                %v256 = vld [vmem:[%s230 + $0xc0] sm:%s223]
                %257 = vst [vmem:[%s231 + $0x60] sm:%s223] %v256
                %v258 = vld [vmem:[%s230 + $0xd0] sm:%s223]
                %259 = vst [vmem:[%s231 + $0x68] sm:%s223] %v258
                %v260 = vld [vmem:[%s230 + $0xe0] sm:%s223]
                %261 = vst [vmem:[%s231 + $0x70] sm:%s223] %v260
                %v262 = vld [vmem:[%s230 + $0xf0] sm:%s223]
                %263 = vst [vmem:[%s231 + $0x78] sm:%s223] %v262
                %v264 = vld [vmem:[%s230 + $0x100] sm:%s223]
                %265 = vst [vmem:[%s231 + $0x80] sm:%s223] %v264
                %v266 = vld [vmem:[%s230 + $0x110] sm:%s223]
                %267 = vst [vmem:[%s231 + $0x88] sm:%s223] %v266
                %v268 = vld [vmem:[%s230 + $0x120] sm:%s223]
                %269 = vst [vmem:[%s231 + $0x90] sm:%s223] %v268
                %v270 = vld [vmem:[%s230 + $0x130] sm:%s223]
                %271 = vst [vmem:[%s231 + $0x98] sm:%s223] %v270
                %v272 = vld [vmem:[%s230 + $0x140] sm:%s223]
                %273 = vst [vmem:[%s231 + $0xa0] sm:%s223] %v272
                %v274 = vld [vmem:[%s230 + $0x150] sm:%s223]
                %275 = vst [vmem:[%s231 + $0xa8] sm:%s223] %v274
                %v276 = vld [vmem:[%s230 + $0x160] sm:%s223]
                %277 = vst [vmem:[%s231 + $0xb0] sm:%s223] %v276
                %v278 = vld [vmem:[%s230 + $0x170] sm:%s223]
                %279 = vst [vmem:[%s231 + $0xb8] sm:%s223] %v278
                %v280 = vld [vmem:[%s230 + $0x180] sm:%s223]
                %281 = vst [vmem:[%s231 + $0xc0] sm:%s223] %v280
                %v282 = vld [vmem:[%s230 + $0x190] sm:%s223]
                %283 = vst [vmem:[%s231 + $0xc8] sm:%s223] %v282
                %v284 = vld [vmem:[%s230 + $0x1a0] sm:%s223]
                %285 = vst [vmem:[%s231 + $0xd0] sm:%s223] %v284
                %v286 = vld [vmem:[%s230 + $0x1b0] sm:%s223]
                %287 = vst [vmem:[%s231 + $0xd8] sm:%s223] %v286
                %v288 = vld [vmem:[%s230 + $0x1c0] sm:%s223]
                %289 = vst [vmem:[%s231 + $0xe0] sm:%s223] %v288
                %v290 = vld [vmem:[%s230 + $0x1d0] sm:%s223]
                %291 = vst [vmem:[%s231 + $0xe8] sm:%s223] %v290
                %v292 = vld [vmem:[%s230 + $0x1e0] sm:%s223]
                %293 = vst [vmem:[%s231 + $0xf0] sm:%s223] %v292
                %v294 = vld [vmem:[%s230 + $0x1f0] sm:%s223]
                %295 = vst [vmem:[%s231 + $0xf8] sm:%s223] %v294
                %v296 = vld [vmem:[%s230 + $0x200] sm:%s223]
                %297 = vst [vmem:[%s231 + $0x100] sm:%s223] %v296
                %v298 = vld [vmem:[%s230 + $0x210] sm:%s223]
                %299 = vst [vmem:[%s231 + $0x108] sm:%s223] %v298
                %v300 = vld [vmem:[%s230 + $0x220] sm:%s223]
                %301 = vst [vmem:[%s231 + $0x110] sm:%s223] %v300
                %v302 = vld [vmem:[%s230 + $0x230] sm:%s223]
                %303 = vst [vmem:[%s231 + $0x118] sm:%s223] %v302
                %v304 = vld [vmem:[%s230 + $0x240] sm:%s223]
                %305 = vst [vmem:[%s231 + $0x120] sm:%s223] %v304
                %v306 = vld [vmem:[%s230 + $0x250] sm:%s223]
                %307 = vst [vmem:[%s231 + $0x128] sm:%s223] %v306
                %v308 = vld [vmem:[%s230 + $0x260] sm:%s223]
                %309 = vst [vmem:[%s231 + $0x130] sm:%s223] %v308
                %v310 = vld [vmem:[%s230 + $0x270] sm:%s223]
                %311 = vst [vmem:[%s231 + $0x138] sm:%s223] %v310
                %v312 = vld [vmem:[%s230 + $0x280] sm:%s223]
                %313 = vst [vmem:[%s231 + $0x140] sm:%s223] %v312
                %v314 = vld [vmem:[%s230 + $0x290] sm:%s223]
                %315 = vst [vmem:[%s231 + $0x148] sm:%s223] %v314
                %v316 = vld [vmem:[%s230 + $0x2a0] sm:%s223]
                %317 = vst [vmem:[%s231 + $0x150] sm:%s223] %v316
                %v318 = vld [vmem:[%s230 + $0x2b0] sm:%s223]
                %319 = vst [vmem:[%s231 + $0x158] sm:%s223] %v318
                %v320 = vld [vmem:[%s230 + $0x2c0] sm:%s223]
                %321 = vst [vmem:[%s231 + $0x160] sm:%s223] %v320
                %v322 = vld [vmem:[%s230 + $0x2d0] sm:%s223]
                %323 = vst [vmem:[%s231 + $0x168] sm:%s223] %v322
                %v324 = vld [vmem:[%s230 + $0x2e0] sm:%s223]
                %325 = vst [vmem:[%s231 + $0x170] sm:%s223] %v324
                %v326 = vld [vmem:[%s230 + $0x2f0] sm:%s223]
                %327 = vst [vmem:[%s231 + $0x178] sm:%s223] %v326
              $region63: #{vae_forward.23} parent=57 // loop_footer
                %s229 = sadd.s32 1, %s225
              $region64: #{vae_forward.23} parent=57 // loop_footer_branch
                %224 = sbr.rel target = $region60
              $region65: #{vae_forward.23} parent=57 // loop_exit
                _
            $region58: #{vae_forward.23} parent=49 // pred_fallthru
              _
          $region50: #{vae_forward.23} parent=45 // pred_fallthru
            _
          %436 = vnop
        $region46: #{vae_forward.23} parent=15 // pred_fallthru
          _
        // Predicated region
        $region81: #{vae_forward.23} parent=15 // pred_check
          %p437 = pneg %p104
        $region82: #{vae_forward.23} parent=15 // pred_check_branch
          %439 = sbr.rel (%p437) target = $region84
        $region83: #{vae_forward.23} parent=15 // pred_region
          %s440 = smul.u32 2, %s17
          %p441 = scmp.lt.s32.totalorder %s440, 3
          %s442 = scalar_select %p441, %s440, 3
          %s443 = scalar_lea.vmem %s2, %s442
          %s444 = smul.u32 2, %s17
        $region84: #{vae_forward.23} parent=15 // pred_fallthru
          _
      $region16: #{vae_forward.23} parent=5 // pred_fallthru
        _
      %p445 = scmp.le.s32.totalorder 1, %s9
      %p446 = scmp.lt.s32.totalorder %s9, 13
      %p447 = pnand %p445, %p446
      %p448 = pneg %p447
      // Predicated region
      $region85: #{vae_forward.23} parent=5 // pred_check
        _
      $region86: #{vae_forward.23} parent=5 // pred_check_branch
        %450 = sbr.rel (%p447) target = $region88
      $region87: #{vae_forward.23} parent=5 // pred_region
        %s451 = ssub.s32 %s9, 1
        %s452 = sand.u32 %s43, 1
        %s453 = sand.u32 %s43, 1
        %s454 = smul.addr %s453, 24
        %s455 = scalar_lea.vmem [#allocation3], %s454
        // Predicated region
        $region89: #{vae_forward.23} parent=87 // pred_check
          %p456 = pneg %p56
        $region90: #{vae_forward.23} parent=87 // pred_check_branch
          %458 = sbr.rel (%p456) target = $region92
        $region91: #{vae_forward.23} parent=87 // pred_region
          _
        $region92: #{vae_forward.23} parent=87 // pred_fallthru
          _
        %s459 = sand.u32 %s71, 1
        %s460 = sand.u32 %s71, 1
        %s461 = smul.addr %s460, 384
        %s462 = scalar_lea.vmem [#allocation4], %s461
        // Predicated region
        $region93: #{vae_forward.23} parent=87 // pred_check
          %p463 = pneg %p84
        $region94: #{vae_forward.23} parent=87 // pred_check_branch
          %465 = sbr.rel (%p463) target = $region96
        $region95: #{vae_forward.23} parent=87 // pred_region
          _
        $region96: #{vae_forward.23} parent=87 // pred_fallthru
          _
        %s466 = sand.u32 %s43, 1
        %s467 = sand.u32 %s43, 1
        %s468 = smul.addr %s467, 24
        %s469 = scalar_lea.vmem [#allocation3], %s468
        %p470 = pneg %p56
        %p471 = pneg %p53
        %s472 = sand.u32 %s71, 1
        %s473 = sand.u32 %s71, 1
        %s474 = smul.addr %s473, 384
        %s475 = scalar_lea.vmem [#allocation4], %s474
        %p476 = pneg %p84
        %p477 = pneg %p81
        %s478 = smul.u32 2, %s20
        %p479 = scmp.lt.s32.totalorder %s478, 3
        %s480 = scalar_select %p479, %s478, 3
        %s481 = scalar_lea.vmem %s2, %s480
        %p482 = pneg %p110
        %p483 = pneg %p107
        %p484 = pneg %p138
        %p485 = pneg %p135
        %s486 = sand.u32 %s125, 1
        %s487 = sand.u32 %s125, 1
        %s488 = smul.addr %s487, 32
        %s489 = scalar_lea.vmem [#allocation5], %s488
        %s490 = smul.u32 2, %s19
        %s491 = smul.u32 3, %s21
        %s492 = smul.u32 48, %s21
        %s493 = smul.u32 2, %s20
        %s494 = smul.u32 2, %s20
        %p495 = scmp.lt.s32.totalorder %s494, 3
        %s496 = scalar_select %p495, %s494, 3
        %s497 = scalar_lea.vmem %s2, %s496
        %s498 = smul.u32 2, %s20
        %s499 = smul.u32 2, %s19
        %s500 = smul.u32 2, %s20
        %p501 = scmp.eq.s32.totalorder %s21, 0
        // Predicated region
        $region97: #{vae_forward.23} parent=87 // pred_check
          %p502 = pneg %p501
        $region98: #{vae_forward.23} parent=87 // pred_check_branch
          %504 = sbr.rel (%p502) target = $region100
        $region99: #{vae_forward.23} parent=87 // pred_region
          %505 = vst [vmem:[#allocation2] sm:$0xff] 0.0
          %506 = vst [vmem:[#allocation2 + $0x8] sm:$0xff] 0.0
          %507 = vst [vmem:[#allocation2 + $0x10] sm:$0xff] 0.0
          %508 = vst [vmem:[#allocation2 + $0x18] sm:$0xff] 0.0
        $region100: #{vae_forward.23} parent=87 // pred_fallthru
          _
        %v509 = vld [vmem:[#allocation2] sm:$0xff]
        %v510 = vld [vmem:[#allocation2 + $0x8] sm:$0xff]
        %v511 = vld [vmem:[#allocation2 + $0x10] sm:$0xff]
        %v512 = vld [vmem:[#allocation2 + $0x18] sm:$0xff]
        %v513 = vld [vmem:[%s455] sm:$0xff]
        %v514 = vld [vmem:[%s455 + $0x8] sm:$0xf]
        %v515 = vld [vmem:[%s455 + $0xc] sm:$0xff]
        %v516 = vld [vmem:[%s455 + $0x14] sm:$0xf]
        %v517 = vld [vmem:[%s462] sm:$0xff]
        %v518 = vld [vmem:[%s462 + $0x8] sm:$0xff]
        %v519 = vld [vmem:[%s462 + $0x10] sm:$0xff]
        %v520 = vld [vmem:[%s462 + $0x18] sm:$0xff]
        %v521 = vld [vmem:[%s462 + $0x20] sm:$0xff]
        %v522 = vld [vmem:[%s462 + $0x28] sm:$0xff]
        %v523 = vld [vmem:[%s462 + $0x30] sm:$0xff]
        %v524 = vld [vmem:[%s462 + $0x38] sm:$0xff]
        %v525 = vld [vmem:[%s462 + $0x40] sm:$0xff]
        %v526 = vld [vmem:[%s462 + $0x48] sm:$0xff]
        %v527 = vld [vmem:[%s462 + $0x50] sm:$0xff]
        %v528 = vld [vmem:[%s462 + $0x58] sm:$0xff]
        %v529 = vld [vmem:[%s462 + $0x60] sm:$0xff]
        %v530 = vld [vmem:[%s462 + $0x68] sm:$0xff]
        %v531 = vld [vmem:[%s462 + $0x70] sm:$0xff]
        %v532 = vld [vmem:[%s462 + $0x78] sm:$0xff]
        %v533 = vld [vmem:[%s462 + $0x80] sm:$0xff]
        %v534 = vld [vmem:[%s462 + $0x88] sm:$0xff]
        %v535 = vld [vmem:[%s462 + $0x90] sm:$0xff]
        %v536 = vld [vmem:[%s462 + $0x98] sm:$0xff]
        %v537 = vld [vmem:[%s462 + $0xa0] sm:$0xff]
        %v538 = vld [vmem:[%s462 + $0xa8] sm:$0xff]
        %v539 = vld [vmem:[%s462 + $0xb0] sm:$0xff]
        %v540 = vld [vmem:[%s462 + $0xb8] sm:$0xff]
        %v541 = vld [vmem:[%s462 + $0xc0] sm:$0xff]
        %v542 = vld [vmem:[%s462 + $0xc8] sm:$0xff]
        %v543 = vld [vmem:[%s462 + $0xd0] sm:$0xff]
        %v544 = vld [vmem:[%s462 + $0xd8] sm:$0xff]
        %v545 = vld [vmem:[%s462 + $0xe0] sm:$0xff]
        %v546 = vld [vmem:[%s462 + $0xe8] sm:$0xff]
        %v547 = vld [vmem:[%s462 + $0xf0] sm:$0xff]
        %v548 = vld [vmem:[%s462 + $0xf8] sm:$0xff]
        %v549 = vld [vmem:[%s462 + $0x100] sm:$0xff]
        %v550 = vld [vmem:[%s462 + $0x108] sm:$0xff]
        %v551 = vld [vmem:[%s462 + $0x110] sm:$0xff]
        %v552 = vld [vmem:[%s462 + $0x118] sm:$0xff]
        %v553 = vld [vmem:[%s462 + $0x120] sm:$0xff]
        %v554 = vld [vmem:[%s462 + $0x128] sm:$0xff]
        %v555 = vld [vmem:[%s462 + $0x130] sm:$0xff]
        %v556 = vld [vmem:[%s462 + $0x138] sm:$0xff]
        %v557 = vld [vmem:[%s462 + $0x140] sm:$0xff]
        %v558 = vld [vmem:[%s462 + $0x148] sm:$0xff]
        %v559 = vld [vmem:[%s462 + $0x150] sm:$0xff]
        %v560 = vld [vmem:[%s462 + $0x158] sm:$0xff]
        %v561 = vld [vmem:[%s462 + $0x160] sm:$0xff]
        %v562 = vld [vmem:[%s462 + $0x168] sm:$0xff]
        %v563 = vld [vmem:[%s462 + $0x170] sm:$0xff]
        %v564 = vld [vmem:[%s462 + $0x178] sm:$0xff]
        %v569 = vunpack.c.l.b16 %v513
        %v570 = vunpack.c.h.b16 %v513
        %v571 = vunpack.c.l.b16 %v514
        %v572 = vunpack.c.l.b16 %v515
        %v573 = vunpack.c.h.b16 %v515
        %v574 = vunpack.c.l.b16 %v516
        %v575 = vpack.c.b16 %v572, %v569
        %v576 = vpack.c.b16 %v573, %v570
        %v577 = vpack.c.b16 %v574, %v571
        %v629 = vunpack.c.l.b16 %v517
        %v630 = vunpack.c.h.b16 %v517
        %v631 = vunpack.c.l.b16 %v518
        %v632 = vunpack.c.h.b16 %v518
        %v633 = vunpack.c.l.b16 %v519
        %v634 = vunpack.c.h.b16 %v519
        %v635 = vunpack.c.l.b16 %v520
        %v636 = vunpack.c.h.b16 %v520
        %v637 = vunpack.c.l.b16 %v521
        %v638 = vunpack.c.h.b16 %v521
        %v639 = vunpack.c.l.b16 %v522
        %v640 = vunpack.c.h.b16 %v522
        %v641 = vunpack.c.l.b16 %v523
        %v642 = vunpack.c.h.b16 %v523
        %v643 = vunpack.c.l.b16 %v524
        %v644 = vunpack.c.h.b16 %v524
        %v645 = vunpack.c.l.b16 %v525
        %v646 = vunpack.c.h.b16 %v525
        %v647 = vunpack.c.l.b16 %v526
        %v648 = vunpack.c.h.b16 %v526
        %v649 = vunpack.c.l.b16 %v527
        %v650 = vunpack.c.h.b16 %v527
        %v651 = vunpack.c.l.b16 %v528
        %v652 = vunpack.c.h.b16 %v528
        %v653 = vunpack.c.l.b16 %v529
        %v654 = vunpack.c.h.b16 %v529
        %v655 = vunpack.c.l.b16 %v530
        %v656 = vunpack.c.h.b16 %v530
        %v657 = vunpack.c.l.b16 %v531
        %v658 = vunpack.c.h.b16 %v531
        %v659 = vunpack.c.l.b16 %v532
        %v660 = vunpack.c.h.b16 %v532
        %v661 = vunpack.c.l.b16 %v533
        %v662 = vunpack.c.h.b16 %v533
        %v663 = vunpack.c.l.b16 %v534
        %v664 = vunpack.c.h.b16 %v534
        %v665 = vunpack.c.l.b16 %v535
        %v666 = vunpack.c.h.b16 %v535
        %v667 = vunpack.c.l.b16 %v536
        %v668 = vunpack.c.h.b16 %v536
        %v669 = vunpack.c.l.b16 %v537
        %v670 = vunpack.c.h.b16 %v537
        %v671 = vunpack.c.l.b16 %v538
        %v672 = vunpack.c.h.b16 %v538
        %v673 = vunpack.c.l.b16 %v539
        %v674 = vunpack.c.h.b16 %v539
        %v675 = vunpack.c.l.b16 %v540
        %v676 = vunpack.c.h.b16 %v540
        %v677 = vunpack.c.l.b16 %v541
        %v678 = vunpack.c.h.b16 %v541
        %v679 = vunpack.c.l.b16 %v542
        %v680 = vunpack.c.h.b16 %v542
        %v681 = vunpack.c.l.b16 %v543
        %v682 = vunpack.c.h.b16 %v543
        %v683 = vunpack.c.l.b16 %v544
        %v684 = vunpack.c.h.b16 %v544
        %v685 = vunpack.c.l.b16 %v545
        %v686 = vunpack.c.h.b16 %v545
        %v687 = vunpack.c.l.b16 %v546
        %v688 = vunpack.c.h.b16 %v546
        %v689 = vunpack.c.l.b16 %v547
        %v690 = vunpack.c.h.b16 %v547
        %v691 = vunpack.c.l.b16 %v548
        %v692 = vunpack.c.h.b16 %v548
        %v693 = vunpack.c.l.b16 %v549
        %v694 = vunpack.c.h.b16 %v549
        %v695 = vunpack.c.l.b16 %v550
        %v696 = vunpack.c.h.b16 %v550
        %v697 = vunpack.c.l.b16 %v551
        %v698 = vunpack.c.h.b16 %v551
        %v699 = vunpack.c.l.b16 %v552
        %v700 = vunpack.c.h.b16 %v552
        %v701 = vunpack.c.l.b16 %v553
        %v702 = vunpack.c.h.b16 %v553
        %v703 = vunpack.c.l.b16 %v554
        %v704 = vunpack.c.h.b16 %v554
        %v705 = vunpack.c.l.b16 %v555
        %v706 = vunpack.c.h.b16 %v555
        %v707 = vunpack.c.l.b16 %v556
        %v708 = vunpack.c.h.b16 %v556
        %v709 = vunpack.c.l.b16 %v557
        %v710 = vunpack.c.h.b16 %v557
        %v711 = vunpack.c.l.b16 %v558
        %v712 = vunpack.c.h.b16 %v558
        %v713 = vunpack.c.l.b16 %v559
        %v714 = vunpack.c.h.b16 %v559
        %v715 = vunpack.c.l.b16 %v560
        %v716 = vunpack.c.h.b16 %v560
        %v717 = vunpack.c.l.b16 %v561
        %v718 = vunpack.c.h.b16 %v561
        %v719 = vunpack.c.l.b16 %v562
        %v720 = vunpack.c.h.b16 %v562
        %v721 = vunpack.c.l.b16 %v563
        %v722 = vunpack.c.h.b16 %v563
        %v723 = vunpack.c.l.b16 %v564
        %v724 = vunpack.c.h.b16 %v564
        %v725 = vpack.c.b16 %v631, %v629
        %v726 = vpack.c.b16 %v632, %v630
        %v727 = vpack.c.b16 %v635, %v633
        %v728 = vpack.c.b16 %v636, %v634
        %v729 = vpack.c.b16 %v639, %v637
        %v730 = vpack.c.b16 %v640, %v638
        %v731 = vpack.c.b16 %v643, %v641
        %v732 = vpack.c.b16 %v644, %v642
        %v733 = vpack.c.b16 %v647, %v645
        %v734 = vpack.c.b16 %v648, %v646
        %v735 = vpack.c.b16 %v651, %v649
        %v736 = vpack.c.b16 %v652, %v650
        %v737 = vpack.c.b16 %v655, %v653
        %v738 = vpack.c.b16 %v656, %v654
        %v739 = vpack.c.b16 %v659, %v657
        %v740 = vpack.c.b16 %v660, %v658
        %v741 = vpack.c.b16 %v663, %v661
        %v742 = vpack.c.b16 %v664, %v662
        %v743 = vpack.c.b16 %v667, %v665
        %v744 = vpack.c.b16 %v668, %v666
        %v745 = vpack.c.b16 %v671, %v669
        %v746 = vpack.c.b16 %v672, %v670
        %v747 = vpack.c.b16 %v675, %v673
        %v748 = vpack.c.b16 %v676, %v674
        %v749 = vpack.c.b16 %v679, %v677
        %v750 = vpack.c.b16 %v680, %v678
        %v751 = vpack.c.b16 %v683, %v681
        %v752 = vpack.c.b16 %v684, %v682
        %v753 = vpack.c.b16 %v687, %v685
        %v754 = vpack.c.b16 %v688, %v686
        %v755 = vpack.c.b16 %v691, %v689
        %v756 = vpack.c.b16 %v692, %v690
        %v757 = vpack.c.b16 %v695, %v693
        %v758 = vpack.c.b16 %v696, %v694
        %v759 = vpack.c.b16 %v699, %v697
        %v760 = vpack.c.b16 %v700, %v698
        %v761 = vpack.c.b16 %v703, %v701
        %v762 = vpack.c.b16 %v704, %v702
        %v763 = vpack.c.b16 %v707, %v705
        %v764 = vpack.c.b16 %v708, %v706
        %v765 = vpack.c.b16 %v711, %v709
        %v766 = vpack.c.b16 %v712, %v710
        %v767 = vpack.c.b16 %v715, %v713
        %v768 = vpack.c.b16 %v716, %v714
        %v769 = vpack.c.b16 %v719, %v717
        %v770 = vpack.c.b16 %v720, %v718
        %v771 = vpack.c.b16 %v723, %v721
        %v772 = vpack.c.b16 %v724, %v722
        %821 = vmatpush.bf16.msra.mxu0 %v739
        %822 = vmatpush.bf16.msra.mxu0 %v737
        %823 = vmatpush.bf16.msra.mxu0 %v735
        %824 = vmatpush.bf16.msra.mxu0 %v733
        %825 = vmatpush.bf16.msra.mxu0 %v731
        %826 = vmatpush.bf16.msra.mxu0 %v729
        %827 = vmatpush.bf16.msra.mxu0 %v727
        %828 = vmatpush.bf16.msra.mxu0 %v725
        %829 = vmatmul.bf16.gmra.mxu0 %v575
        %v830 = vpop.f32.mrf.mxu0
        %v831 = vadd.f32 0.0, %v830
        %v832 = vpop.f32.mrf.mxu0
        %v833 = vadd.f32 0.0, %v832
        %834 = vdwg.mxu0
        %835 = vmatpush.bf16.msra.mxu0 %v755
        %836 = vmatpush.bf16.msra.mxu0 %v753
        %837 = vmatpush.bf16.msra.mxu0 %v751
        %838 = vmatpush.bf16.msra.mxu0 %v749
        %839 = vmatpush.bf16.msra.mxu0 %v747
        %840 = vmatpush.bf16.msra.mxu0 %v745
        %841 = vmatpush.bf16.msra.mxu0 %v743
        %842 = vmatpush.bf16.msra.mxu0 %v741
        %843 = vmatmul.bf16.gmra.mxu0 %v576
        %v844 = vpop.f32.mrf.mxu0
        %v845 = vadd.f32 %v831, %v844
        %v846 = vpop.f32.mrf.mxu0
        %v847 = vadd.f32 %v833, %v846
        %848 = vdwg.mxu0
        %849 = vmatpush.bf16.msra.mxu0 %v771
        %850 = vmatpush.bf16.msra.mxu0 %v769
        %851 = vmatpush.bf16.msra.mxu0 %v767
        %852 = vmatpush.bf16.msra.mxu0 %v765
        %853 = vmatpush.bf16.msra.mxu0 %v763
        %854 = vmatpush.bf16.msra.mxu0 %v761
        %855 = vmatpush.bf16.msra.mxu0 %v759
        %856 = vmatpush.bf16.msra.mxu0 %v757
        %857 = vmatmul.bf16.gmra.mxu0 %v577
        %v858 = vpop.f32.mrf.mxu0
        %v859 = vadd.f32 %v845, %v858
        %v860 = vpop.f32.mrf.mxu0
        %v861 = vadd.f32 %v847, %v860
        %862 = vdwg.mxu0
        %863 = vmatpush.bf16.msra.mxu0 %v740
        %864 = vmatpush.bf16.msra.mxu0 %v738
        %865 = vmatpush.bf16.msra.mxu0 %v736
        %866 = vmatpush.bf16.msra.mxu0 %v734
        %867 = vmatpush.bf16.msra.mxu0 %v732
        %868 = vmatpush.bf16.msra.mxu0 %v730
        %869 = vmatpush.bf16.msra.mxu0 %v728
        %870 = vmatpush.bf16.msra.mxu0 %v726
        %871 = vmatmul.bf16.gmra.mxu0 %v575
        %v872 = vpop.f32.mrf.mxu0
        %v873 = vadd.f32 0.0, %v872
        %v874 = vpop.f32.mrf.mxu0
        %v875 = vadd.f32 0.0, %v874
        %876 = vdwg.mxu0
        %877 = vmatpush.bf16.msra.mxu0 %v756
        %878 = vmatpush.bf16.msra.mxu0 %v754
        %879 = vmatpush.bf16.msra.mxu0 %v752
        %880 = vmatpush.bf16.msra.mxu0 %v750
        %881 = vmatpush.bf16.msra.mxu0 %v748
        %882 = vmatpush.bf16.msra.mxu0 %v746
        %883 = vmatpush.bf16.msra.mxu0 %v744
        %884 = vmatpush.bf16.msra.mxu0 %v742
        %885 = vmatmul.bf16.gmra.mxu0 %v576
        %v886 = vpop.f32.mrf.mxu0
        %v887 = vadd.f32 %v873, %v886
        %v888 = vpop.f32.mrf.mxu0
        %v889 = vadd.f32 %v875, %v888
        %890 = vdwg.mxu0
        %891 = vmatpush.bf16.msra.mxu0 %v772
        %892 = vmatpush.bf16.msra.mxu0 %v770
        %893 = vmatpush.bf16.msra.mxu0 %v768
        %894 = vmatpush.bf16.msra.mxu0 %v766
        %895 = vmatpush.bf16.msra.mxu0 %v764
        %896 = vmatpush.bf16.msra.mxu0 %v762
        %897 = vmatpush.bf16.msra.mxu0 %v760
        %898 = vmatpush.bf16.msra.mxu0 %v758
        %899 = vmatmul.bf16.gmra.mxu0 %v577
        %v900 = vpop.f32.mrf.mxu0
        %v901 = vadd.f32 %v887, %v900
        %v902 = vpop.f32.mrf.mxu0
        %v903 = vadd.f32 %v889, %v902
        %904 = vdwg.mxu0
        %v905 = vadd.f32 %v509, %v859
        %v906 = vadd.f32 %v510, %v901
        %v907 = vadd.f32 %v511, %v861
        %v908 = vadd.f32 %v512, %v903
        %909 = vst [vmem:[#allocation2] sm:$0xff] %v905
        %910 = vst [vmem:[#allocation2 + $0x8] sm:$0xff] %v906
        %911 = vst [vmem:[#allocation2 + $0x10] sm:$0xff] %v907
        %912 = vst [vmem:[#allocation2 + $0x18] sm:$0xff] %v908
        %p913 = scmp.eq.s32.totalorder %s21, 5
        // Predicated region
        $region101: #{vae_forward.23} parent=87 // pred_check
          %p914 = pneg %p913
        $region102: #{vae_forward.23} parent=87 // pred_check_branch
          %916 = sbr.rel (%p914) target = $region104
        $region103: #{vae_forward.23} parent=87 // pred_region
          %v917 = vld [vmem:[#allocation2] sm:$0xff]
          %v918 = vld [vmem:[#allocation2 + $0x8] sm:$0xff]
          %v919 = vld [vmem:[#allocation2 + $0x10] sm:$0xff]
          %v920 = vld [vmem:[#allocation2 + $0x18] sm:$0xff]
          %v921 = vld [vmem:[%s497] sm:$0x3]
          %v923 = vperm.slane %v921, 0
          %v924 = vperm.slane %v921, 1
          %v927 = vadd.f32 %v917, %v923
          %v928 = vadd.f32 %v918, %v924
          %v929 = vadd.f32 %v919, %v923
          %v930 = vadd.f32 %v920, %v924
          %v931 = vmax.f32 %v927, 0.0
          %v932 = vmax.f32 %v928, 0.0
          %v933 = vmax.f32 %v929, 0.0
          %v934 = vmax.f32 %v930, 0.0
          %935 = vst [vmem:[%s489] sm:$0xff] %v931
          %936 = vst [vmem:[%s489 + $0x8] sm:$0xff] %v932
          %937 = vst [vmem:[%s489 + $0x10] sm:$0xff] %v933
          %938 = vst [vmem:[%s489 + $0x18] sm:$0xff] %v934
        $region104: #{vae_forward.23} parent=87 // pred_fallthru
          _
        %s939 = sand.u32 %s125, 1
        %s940 = sand.u32 %s125, 1
        %s941 = smul.addr %s940, 32
        %s942 = scalar_lea.vmem [#allocation5], %s941
        // Predicated region
        $region105: #{vae_forward.23} parent=87 // pred_check
          %p943 = pneg %p135
        $region106: #{vae_forward.23} parent=87 // pred_check_branch
          %945 = sbr.rel (%p943) target = $region108
        $region107: #{vae_forward.23} parent=87 // pred_region
          %s946 = smul.u32 2, %s19
          %s947 = smul.u32 2, %s20
          %s948 = smul.addr %s946, 4
          %s949 = sadd.s32 %s947, %s948
          %s950 = smul.addr %s949, 8
          %s951 = scalar_lea.vmem %s3, %s950
          // Predicated region
          $region109: #{vae_forward.23} parent=107 // pred_check
            _
          $region110: #{vae_forward.23} parent=107 // pred_check_branch
            %953 = sbr.rel (0) target = $region112
          $region111: #{vae_forward.23} parent=107 // pred_region
            // Predicated region
            $region113: #{vae_forward.23} parent=111 // pred_check
              _
            $region114: #{vae_forward.23} parent=111 // pred_check_branch
              %955 = sbr.rel (0) target = $region116
            $region115: #{vae_forward.23} parent=111 // pred_region
              loop: start=0, step=1, limit=1
              $region117: #{vae_forward.23} parent=115 // loop_pre_header
                _
              $region118: #{vae_forward.23} parent=115 // loop_header
                %s957 = sphi 0, %s961
                %p958 = scmp.ge.s32.totalorder %s957, 1
                %s962 = sphi %s942, %s942
                %s963 = sphi %s951, %s951
              $region119: #{vae_forward.23} parent=115 // loop_header_branch
                %960 = sbr.rel (%p958) target = $region123
              $region120: #{vae_forward.23} parent=115 // loop_body
                %v964 = vld [vmem:[%s962] sm:$0xff]
                %965 = vst [vmem:[%s963] sm:$0xff] %v964
                %v966 = vld [vmem:[%s962 + $0x8] sm:$0xff]
                %967 = vst [vmem:[%s963 + $0x8] sm:$0xff] %v966
                %v968 = vld [vmem:[%s962 + $0x10] sm:$0xff]
                %969 = vst [vmem:[%s963 + $0x20] sm:$0xff] %v968
                %v970 = vld [vmem:[%s962 + $0x18] sm:$0xff]
                %971 = vst [vmem:[%s963 + $0x28] sm:$0xff] %v970
              $region121: #{vae_forward.23} parent=115 // loop_footer
                %s961 = sadd.s32 1, %s957
              $region122: #{vae_forward.23} parent=115 // loop_footer_branch
                %956 = sbr.rel target = $region118
              $region123: #{vae_forward.23} parent=115 // loop_exit
                _
            $region116: #{vae_forward.23} parent=111 // pred_fallthru
              _
            // Predicated region
            $region124: #{vae_forward.23} parent=111 // pred_check
              _
            $region125: #{vae_forward.23} parent=111 // pred_check_branch
              %973 = sbr.rel target = $region127
            $region126: #{vae_forward.23} parent=111 // pred_region
              _
            $region127: #{vae_forward.23} parent=111 // pred_fallthru
              _
          $region112: #{vae_forward.23} parent=107 // pred_fallthru
            _
          %974 = vnop
        $region108: #{vae_forward.23} parent=87 // pred_fallthru
          _
      $region88: #{vae_forward.23} parent=5 // pred_fallthru
        _
      %p975 = scmp.le.s32.totalorder 2, %s9
      // Predicated region
      $region128: #{vae_forward.23} parent=5 // pred_check
        %p976 = pneg %p975
      $region129: #{vae_forward.23} parent=5 // pred_check_branch
        %978 = sbr.rel (%p976) target = $region131
      $region130: #{vae_forward.23} parent=5 // pred_region
        %s979 = ssub.s32 %s9, 2
        // Predicated region
        $region132: #{vae_forward.23} parent=130 // pred_check
          %p980 = pneg %p141
        $region133: #{vae_forward.23} parent=130 // pred_check_branch
          %982 = sbr.rel (%p980) target = $region135
        $region134: #{vae_forward.23} parent=130 // pred_region
          %s983 = sand.u32 %s126, 1
          %s984 = sand.u32 %s126, 1
          %s985 = smul.addr %s984, 32
          %s986 = scalar_lea.vmem [#allocation5], %s985
        $region135: #{vae_forward.23} parent=130 // pred_fallthru
          _
      $region131: #{vae_forward.23} parent=5 // pred_fallthru
        _
    $region6: #{vae_forward.23} parent=1 // loop_footer
      %s13 = sadd.s32 1, %s9
    $region7: #{vae_forward.23} parent=1 // loop_footer_branch
      %8 = sbr.rel target = $region3
    $region8: #{vae_forward.23} parent=1 // loop_exit
      _

// kernel: vae_forward.25
$region0: #{vae_forward.25}
  #allocation0 [shape = 'u32[]', space=smem, size = 0x4, offset = 0x4, fixed_abs, tag = 'smem constant byte address 0x4 - core index']
  #allocation1 [shape = 'u32[72,128]{1,0:T(1,128)}', space=vmem, size = 0x9000, scoped, tag = 'internal scratch']
  %s0 = inlined_call_operand.vmem [shape: f32[1,128], index: 0, kind: input, shape index: {}]
  %s1 = inlined_call_operand.vmem [shape: f32[1,128], index: 1, kind: input, shape index: {}]
  %s2 = inlined_call_operand.vmem [shape: f32[1,128], index: 2, kind: input, shape index: {}]
  %s3 = inlined_call_operand.vmem [shape: f32[1,128], index: 3, kind: output, shape index: {}]
  %s4 = sld [smem:[#allocation0]]
  $region22: #{vae_forward.25} parent=0
    _
  %s6 = ssub.s32 1, %s4
  %s7 = scalar_select 0, %s6, %s4
  // Predicated region
  $region2: #{vae_forward.25} parent=0 // pred_check
    _
  $region3: #{vae_forward.25} parent=0 // pred_check_branch
    %9 = sbr.rel (0) target = $region5
  $region4: #{vae_forward.25} parent=0 // pred_region
    _
  $region5: #{vae_forward.25} parent=0 // pred_fallthru
    _
  // Predicated region
  $region6: #{vae_forward.25} parent=0 // pred_check
    _
  $region7: #{vae_forward.25} parent=0 // pred_check_branch
    %11 = sbr.rel (0) target = $region9
  $region8: #{vae_forward.25} parent=0 // pred_region
    _
  $region9: #{vae_forward.25} parent=0 // pred_fallthru
    _
  // Predicated region
  $region10: #{vae_forward.25} parent=0 // pred_check
    _
  $region11: #{vae_forward.25} parent=0 // pred_check_branch
    %13 = sbr.rel (0) target = $region13
  $region12: #{vae_forward.25} parent=0 // pred_region
    _
  $region13: #{vae_forward.25} parent=0 // pred_fallthru
    _
  %v14 = vld [vmem:[%s0] sm:$0x1]
  %v15 = vld [vmem:[%s2] sm:$0x1]
  %v16 = vld [vmem:[%s1] sm:$0x1]
  %v17 = vmul.f32 %v16, 0.5
  %v18 = vmul.f32 %v17, 1.442695
  %v19 = vpow.pop %v18
  %v20 = vmul.f32 %v15, %v19
  %v21 = vadd.f32 %v14, %v20
  %22 = vst [vmem:[%s3] sm:$0x1] %v21
  // Predicated region
  $region14: #{vae_forward.25} parent=0 // pred_check
    _
  $region15: #{vae_forward.25} parent=0 // pred_check_branch
    %24 = sbr.rel (0) target = $region17
  $region16: #{vae_forward.25} parent=0 // pred_region
    _
  $region17: #{vae_forward.25} parent=0 // pred_fallthru
    _
  // Predicated region
  $region18: #{vae_forward.25} parent=0 // pred_check
    _
  $region19: #{vae_forward.25} parent=0 // pred_check_branch
    %26 = sbr.rel (0) target = $region21
  $region20: #{vae_forward.25} parent=0 // pred_region
    _
  $region21: #{vae_forward.25} parent=0 // pred_fallthru
    _

// kernel: vae_forward.26
$region0: #{vae_forward.26}
  #allocation0 [shape = 'u32[]', space=smem, size = 0x4, offset = 0x4, fixed_abs, tag = 'smem constant byte address 0x4 - core index']
  #allocation1 [shape = 'u32[72,128]{1,0:T(1,128)}', space=vmem, size = 0x9000, scoped, tag = 'internal scratch']
  %s0 = inlined_call_operand.vmem [shape: bf16[16,128], index: 0, kind: input, shape index: {}]
  %s1 = inlined_call_operand.hbm [shape: bf16[128,512], index: 1, kind: input, shape index: {}]
  %s2 = inlined_call_operand.hbm [shape: f32[1,512], index: 2, kind: input, shape index: {}]
  %s3 = inlined_call_operand.vmem [shape: f32[16,512], index: 3, kind: output, shape index: {}]
  %s4 = sld [smem:[#allocation0]]
  $region72: #{vae_forward.26} parent=0
    _
  %s6 = ssub.s32 1, %s4
  %s7 = scalar_select 0, %s6, %s4
  $region1: #{vae_forward.26} parent=0
    #allocation2 [shape = 'u8[131072]{0}', space=vmem, size = 0x20000, scoped, tag = 'input window, operand 1']
    #allocation3 [shape = 's32[2]{0}', space=sflag, size = 0x8, scoped, tag = 'scoped memory for vae_forward.26']
    #allocation4 [shape = 'u8[2048]{0}', space=vmem, size = 0x800, scoped, tag = 'input window, operand 2']
    #allocation5 [shape = 's32[2]{0}', space=sflag, size = 0x8, scoped, tag = 'scoped memory for vae_forward.26']
    #allocation6 [shape = 'u8[32768]{0}', space=vmem, size = 0x8000, scoped, tag = 'output window, operand 0']
    %8 = vsyncpa [#allocation3], 0
    %s9 = scalar_lea.sflag [#allocation3], 1
    %10 = vsyncpa %s9, 0
    %11 = vsyncpa [#allocation5], 0
    %s12 = scalar_lea.sflag [#allocation5], 1
    %13 = vsyncpa %s12, 0
    loop: start=0, step=1, limit=4
    $region2: #{vae_forward.26} parent=1 // loop_pre_header
      _
    $region3: #{vae_forward.26} parent=1 // loop_header
      %s15 = sphi 0, %s19
      %p16 = scmp.ge.s32.totalorder %s15, 4
      %s22 = sphi 0, %s34
      %s23 = sphi 0, %s30
      %s24 = sphi 0, %s22
      %s25 = sphi 0, %s23
      %s26 = sphi 0, %s24
      %s27 = sphi 0, %s25
      %s37 = sphi 0, %s39
      %s40 = sphi 0, %s37
      %s41 = sphi 0, %s40
      %s57 = sphi 0, %s41
      %s63 = sphi 0, %s65
      %s66 = sphi 0, %s63
      %s67 = sphi 0, %s66
      %s83 = sphi 0, %s67
      %s89 = sphi 0, %s91
      %s92 = sphi 0, %s89
      %s93 = sphi 0, %s92
      %s109 = sphi 0, %s93
      %s117 = sphi 0, %s119
      %s120 = sphi 0, %s117
      %s121 = sphi 0, %s120
      %s137 = sphi 0, %s121
    $region4: #{vae_forward.26} parent=1 // loop_header_branch
      %18 = sbr.rel (%p16) target = $region8
    $region5: #{vae_forward.26} parent=1 // loop_body
      %s20 = ssub.s32 %s15, 1
      %s21 = ssub.s32 %s15, 2
      %s28 = sadd.s32 1, %s23
      %p29 = scmp.ge.s32.totalorder %s28, 2
      %s30 = scalar_select %p29, 0, %s28
      %s31 = sadd.s32 1, %s22
      %s32 = scalar_select %p29, %s31, %s22
      %p33 = scmp.ge.s32.totalorder %s32, 1
      %s34 = scalar_select %p33, 0, %s32
      %s35 = ssub.s32 %s22, %s34
      %p36 = scmp.eq.s32.totalorder %s35, 0
      %s38 = sadd.s32 %s37, 1
      %s39 = scalar_select %p36, %s37, %s38
      %p42 = pneg %p36
      %p43 = scmp.eq.s32.totalorder %s15, 1
      %p44 = por %p42, %p43
      %p45 = scmp.ne.s32.totalorder %s37, %s40
      %p46 = scmp.eq.s32.totalorder %s15, 0
      %p47 = por %p45, %p46
      %p48 = scmp.ne.s32.totalorder %s37, %s40
      %p49 = scmp.eq.s32.totalorder %s20, 1
      %p50 = por %p48, %p49
      %p51 = scmp.ne.s32.totalorder %s40, %s41
      %p52 = scmp.eq.s32.totalorder %s20, 0
      %p53 = por %p51, %p52
      %p54 = scmp.ne.s32.totalorder %s40, %s41
      %p55 = scmp.eq.s32.totalorder %s21, 1
      %p56 = por %p54, %p55
      %p58 = scmp.ne.s32.totalorder %s41, %s57
      %p59 = scmp.eq.s32.totalorder %s21, 0
      %p60 = por %p58, %p59
      %s61 = ssub.s32 %s23, %s30
      %p62 = scmp.eq.s32.totalorder %s61, 0
      %s64 = sadd.s32 %s63, 1
      %s65 = scalar_select %p62, %s63, %s64
      %p68 = pneg %p62
      %p69 = scmp.eq.s32.totalorder %s15, 1
      %p70 = por %p68, %p69
      %p71 = scmp.ne.s32.totalorder %s63, %s66
      %p72 = scmp.eq.s32.totalorder %s15, 0
      %p73 = por %p71, %p72
      %p74 = scmp.ne.s32.totalorder %s63, %s66
      %p75 = scmp.eq.s32.totalorder %s20, 1
      %p76 = por %p74, %p75
      %p77 = scmp.ne.s32.totalorder %s66, %s67
      %p78 = scmp.eq.s32.totalorder %s20, 0
      %p79 = por %p77, %p78
      %p80 = scmp.ne.s32.totalorder %s66, %s67
      %p81 = scmp.eq.s32.totalorder %s21, 1
      %p82 = por %p80, %p81
      %p84 = scmp.ne.s32.totalorder %s67, %s83
      %p85 = scmp.eq.s32.totalorder %s21, 0
      %p86 = por %p84, %p85
      %s87 = ssub.s32 %s23, %s30
      %p88 = scmp.eq.s32.totalorder %s87, 0
      %s90 = sadd.s32 %s89, 1
      %s91 = scalar_select %p88, %s89, %s90
      %p94 = pneg %p88
      %p95 = scmp.eq.s32.totalorder %s15, 1
      %p96 = por %p94, %p95
      %p97 = scmp.ne.s32.totalorder %s89, %s92
      %p98 = scmp.eq.s32.totalorder %s15, 0
      %p99 = por %p97, %p98
      %p100 = scmp.ne.s32.totalorder %s89, %s92
      %p101 = scmp.eq.s32.totalorder %s20, 1
      %p102 = por %p100, %p101
      %p103 = scmp.ne.s32.totalorder %s92, %s93
      %p104 = scmp.eq.s32.totalorder %s20, 0
      %p105 = por %p103, %p104
      %p106 = scmp.ne.s32.totalorder %s92, %s93
      %p107 = scmp.eq.s32.totalorder %s21, 1
      %p108 = por %p106, %p107
      %p110 = scmp.ne.s32.totalorder %s93, %s109
      %p111 = scmp.eq.s32.totalorder %s21, 0
      %p112 = por %p110, %p111
      %s113 = ssub.s32 %s22, %s34
      %s114 = ssub.s32 %s23, %s30
      %s115 = sor.u32 %s113, %s114
      %p116 = scmp.eq.s32.totalorder %s115, 0
      %s118 = sadd.s32 %s117, 1
      %s119 = scalar_select %p116, %s117, %s118
      %p122 = pneg %p116
      %p123 = scmp.eq.s32.totalorder %s15, 1
      %p124 = por %p122, %p123
      %p125 = scmp.ne.s32.totalorder %s117, %s120
      %p126 = scmp.eq.s32.totalorder %s15, 0
      %p127 = por %p125, %p126
      %p128 = scmp.ne.s32.totalorder %s117, %s120
      %p129 = scmp.eq.s32.totalorder %s20, 1
      %p130 = por %p128, %p129
      %p131 = scmp.ne.s32.totalorder %s120, %s121
      %p132 = scmp.eq.s32.totalorder %s20, 0
      %p133 = por %p131, %p132
      %p134 = scmp.ne.s32.totalorder %s120, %s121
      %p135 = scmp.eq.s32.totalorder %s21, 1
      %p136 = por %p134, %p135
      %p138 = scmp.ne.s32.totalorder %s121, %s137
      %p139 = scmp.eq.s32.totalorder %s21, 0
      %p140 = por %p138, %p139
      %p141 = scmp.le.s32.totalorder 1, %s15
      %p142 = scmp.lt.s32.totalorder %s15, 3
      %p143 = pnand %p141, %p142
      %p144 = pneg %p143
      // Predicated region
      $region9: #{vae_forward.26} parent=5 // pred_check
        _
      $region10: #{vae_forward.26} parent=5 // pred_check_branch
        %146 = sbr.rel (%p143) target = $region12
      $region11: #{vae_forward.26} parent=5 // pred_region
        %s147 = ssub.s32 %s15, 1
        // Predicated region
        $region13: #{vae_forward.26} parent=11 // pred_check
          %p148 = pneg %p53
        $region14: #{vae_forward.26} parent=11 // pred_check_branch
          %150 = sbr.rel (%p148) target = $region16
        $region15: #{vae_forward.26} parent=11 // pred_region
          %s151 = smul.u32 2, %s24
          %p152 = scmp.lt.s32.totalorder %s151, 1
          %s153 = scalar_select %p152, %s151, 1
          %s154 = smul.addr %s153, 4
          %s155 = scalar_lea.vmem %s0, %s154
          %s156 = smul.u32 2, %s24
        $region16: #{vae_forward.26} parent=11 // pred_fallthru
          _
      $region12: #{vae_forward.26} parent=5 // pred_fallthru
        _
      %p157 = scmp.lt.s32.totalorder %s15, 2
      // Predicated region
      $region17: #{vae_forward.26} parent=5 // pred_check
        %p158 = pneg %p157
      $region18: #{vae_forward.26} parent=5 // pred_check_branch
        %160 = sbr.rel (%p158) target = $region20
      $region19: #{vae_forward.26} parent=5 // pred_region
        // Predicated region
        $region21: #{vae_forward.26} parent=19 // pred_check
          %p161 = pneg %p73
        $region22: #{vae_forward.26} parent=19 // pred_check_branch
          %163 = sbr.rel (%p161) target = $region24
        $region23: #{vae_forward.26} parent=19 // pred_region
          %s164 = sand.u32 %s63, 1
          %s165 = scalar_lea.sflag [#allocation3], %s164
          %s166 = sand.u32 %s63, 1
          %s167 = smul.addr %s166, 128
          %s168 = scalar_lea.vmem [#allocation2], %s167
          %s169 = smul.u32 2, %s23
          %171 = vsyncadd %s165, 0
          %s172 = smul.addr %s169, 4
          %s173 = scalar_lea.hbm %s1, %s172
          %s174 = sshll.u32 %s173, 4
          %s175 = int_to_ptr.hbm [resolvable:$true] %s174
          %s176 = sshll.u32 %s168, 4
          %s177 = int_to_ptr.vmem [resolvable:$true] %s176
          %182 = dma.hbm_to_vmem [thread:$0]  %s175, 2048, %s177, %s165, 256, 128, 8
        $region24: #{vae_forward.26} parent=19 // pred_fallthru
          _
        // Predicated region
        $region25: #{vae_forward.26} parent=19 // pred_check
          %p183 = pneg %p99
        $region26: #{vae_forward.26} parent=19 // pred_check_branch
          %185 = sbr.rel (%p183) target = $region28
        $region27: #{vae_forward.26} parent=19 // pred_region
          %s186 = sand.u32 %s89, 1
          %s187 = scalar_lea.sflag [#allocation5], %s186
          %s188 = sand.u32 %s89, 1
          %s189 = smul.addr %s188, 2
          %s190 = scalar_lea.vmem [#allocation4], %s189
          %s191 = smul.u32 2, %s23
          %193 = vsyncadd %s187, 0
          %s194 = scalar_lea.hbm %s2, %s191
          %s196 = sshll.u32 %s194, 4
          %s197 = int_to_ptr.hbm [resolvable:$true] %s196
          %s198 = sshll.u32 %s190, 4
          %s199 = int_to_ptr.vmem [resolvable:$true] %s198
          %201 = dma.hbm_to_vmem [thread:$0]  %s197, 32, %s199, %s187
        $region28: #{vae_forward.26} parent=19 // pred_fallthru
          _
      $region20: #{vae_forward.26} parent=5 // pred_fallthru
        _
      %p202 = scmp.le.s32.totalorder 1, %s15
      %p203 = scmp.lt.s32.totalorder %s15, 3
      %p204 = pnand %p202, %p203
      %p205 = pneg %p204
      // Predicated region
      $region29: #{vae_forward.26} parent=5 // pred_check
        _
      $region30: #{vae_forward.26} parent=5 // pred_check_branch
        %207 = sbr.rel (%p204) target = $region32
      $region31: #{vae_forward.26} parent=5 // pred_region
        %s208 = ssub.s32 %s15, 1
        %s209 = sand.u32 %s66, 1
        %s210 = scalar_lea.sflag [#allocation3], %s209
        %s211 = sand.u32 %s66, 1
        %s212 = smul.addr %s211, 128
        %s213 = scalar_lea.vmem [#allocation2], %s212
        // Predicated region
        $region33: #{vae_forward.26} parent=31 // pred_check
          %p214 = pneg %p79
        $region34: #{vae_forward.26} parent=31 // pred_check_branch
          %216 = sbr.rel (%p214) target = $region36
        $region35: #{vae_forward.26} parent=31 // pred_region
          %218 = dma.done %s210, 2048
        $region36: #{vae_forward.26} parent=31 // pred_fallthru
          _
        %s219 = sand.u32 %s92, 1
        %s220 = scalar_lea.sflag [#allocation5], %s219
        %s221 = sand.u32 %s92, 1
        %s222 = smul.addr %s221, 2
        %s223 = scalar_lea.vmem [#allocation4], %s222
        // Predicated region
        $region37: #{vae_forward.26} parent=31 // pred_check
          %p224 = pneg %p105
        $region38: #{vae_forward.26} parent=31 // pred_check_branch
          %226 = sbr.rel (%p224) target = $region40
        $region39: #{vae_forward.26} parent=31 // pred_region
          %228 = dma.done %s220, 32
        $region40: #{vae_forward.26} parent=31 // pred_fallthru
          _
        %s229 = smul.u32 2, %s24
        %p230 = scmp.lt.s32.totalorder %s229, 1
        %s231 = scalar_select %p230, %s229, 1
        %s232 = smul.addr %s231, 4
        %s233 = scalar_lea.vmem %s0, %s232
        %p234 = pneg %p53
        %p235 = pneg %p50
        %s236 = sand.u32 %s66, 1
        %s237 = scalar_lea.sflag [#allocation3], %s236
        %s238 = sand.u32 %s66, 1
        %s239 = smul.addr %s238, 128
        %s240 = scalar_lea.vmem [#allocation2], %s239
        %p241 = pneg %p79
        %p242 = pneg %p76
        %s243 = sand.u32 %s92, 1
        %s244 = scalar_lea.sflag [#allocation5], %s243
        %s245 = sand.u32 %s92, 1
        %s246 = smul.addr %s245, 2
        %s247 = scalar_lea.vmem [#allocation4], %s246
        %p248 = pneg %p105
        %p249 = pneg %p102
        %p250 = pneg %p133
        %p251 = pneg %p130
        %s252 = sand.u32 %s120, 1
        %s253 = sand.u32 %s120, 1
        %s254 = smul.addr %s253, 32
        %s255 = scalar_lea.vmem [#allocation6], %s254
        %s256 = smul.u32 2, %s24
        %p257 = scmp.lt.s32.totalorder %s256, 1
        %s258 = scalar_select %p257, %s256, 1
        %s259 = smul.addr %s258, 4
        %s260 = scalar_lea.vmem %s0, %s259
        %s261 = smul.u32 2, %s24
        %s262 = smul.u32 2, %s25
        %s263 = smul.u32 2, %s25
        %s264 = smul.u32 2, %s24
        %s265 = smul.u32 2, %s25
        %v266 = vld [vmem:[%s260] sm:$0xf]
        %v267 = vld [vmem:[%s260 + $0x4] sm:$0xf]
        %v268 = vld [vmem:[%s213] sm:$0xff]
        %v269 = vld [vmem:[%s213 + $0x8] sm:$0xff]
        %v270 = vld [vmem:[%s213 + $0x10] sm:$0xff]
        %v271 = vld [vmem:[%s213 + $0x18] sm:$0xff]
        %v272 = vld [vmem:[%s213 + $0x20] sm:$0xff]
        %v273 = vld [vmem:[%s213 + $0x28] sm:$0xff]
        %v274 = vld [vmem:[%s213 + $0x30] sm:$0xff]
        %v275 = vld [vmem:[%s213 + $0x38] sm:$0xff]
        %v276 = vld [vmem:[%s213 + $0x40] sm:$0xff]
        %v277 = vld [vmem:[%s213 + $0x48] sm:$0xff]
        %v278 = vld [vmem:[%s213 + $0x50] sm:$0xff]
        %v279 = vld [vmem:[%s213 + $0x58] sm:$0xff]
        %v280 = vld [vmem:[%s213 + $0x60] sm:$0xff]
        %v281 = vld [vmem:[%s213 + $0x68] sm:$0xff]
        %v282 = vld [vmem:[%s213 + $0x70] sm:$0xff]
        %v283 = vld [vmem:[%s213 + $0x78] sm:$0xff]
        %v284 = vld [vmem:[%s223] sm:$0x3]
        %v286 = vperm.slane %v284, 0
        %v287 = vperm.slane %v284, 1
        %v292 = vunpack.c.l.b16 %v266
        %v293 = vunpack.c.l.b16 %v267
        %v294 = vpack.c.b16 %v293, %v292
        %v312 = vunpack.c.l.b16 %v268
        %v313 = vunpack.c.h.b16 %v268
        %v314 = vunpack.c.l.b16 %v269
        %v315 = vunpack.c.h.b16 %v269
        %v316 = vunpack.c.l.b16 %v270
        %v317 = vunpack.c.h.b16 %v270
        %v318 = vunpack.c.l.b16 %v271
        %v319 = vunpack.c.h.b16 %v271
        %v320 = vunpack.c.l.b16 %v272
        %v321 = vunpack.c.h.b16 %v272
        %v322 = vunpack.c.l.b16 %v273
        %v323 = vunpack.c.h.b16 %v273
        %v324 = vunpack.c.l.b16 %v274
        %v325 = vunpack.c.h.b16 %v274
        %v326 = vunpack.c.l.b16 %v275
        %v327 = vunpack.c.h.b16 %v275
        %v328 = vunpack.c.l.b16 %v276
        %v329 = vunpack.c.h.b16 %v276
        %v330 = vunpack.c.l.b16 %v277
        %v331 = vunpack.c.h.b16 %v277
        %v332 = vunpack.c.l.b16 %v278
        %v333 = vunpack.c.h.b16 %v278
        %v334 = vunpack.c.l.b16 %v279
        %v335 = vunpack.c.h.b16 %v279
        %v336 = vunpack.c.l.b16 %v280
        %v337 = vunpack.c.h.b16 %v280
        %v338 = vunpack.c.l.b16 %v281
        %v339 = vunpack.c.h.b16 %v281
        %v340 = vunpack.c.l.b16 %v282
        %v341 = vunpack.c.h.b16 %v282
        %v342 = vunpack.c.l.b16 %v283
        %v343 = vunpack.c.h.b16 %v283
        %v344 = vpack.c.b16 %v314, %v312
        %v345 = vpack.c.b16 %v315, %v313
        %v346 = vpack.c.b16 %v318, %v316
        %v347 = vpack.c.b16 %v319, %v317
        %v348 = vpack.c.b16 %v322, %v320
        %v349 = vpack.c.b16 %v323, %v321
        %v350 = vpack.c.b16 %v326, %v324
        %v351 = vpack.c.b16 %v327, %v325
        %v352 = vpack.c.b16 %v330, %v328
        %v353 = vpack.c.b16 %v331, %v329
        %v354 = vpack.c.b16 %v334, %v332
        %v355 = vpack.c.b16 %v335, %v333
        %v356 = vpack.c.b16 %v338, %v336
        %v357 = vpack.c.b16 %v339, %v337
        %v358 = vpack.c.b16 %v342, %v340
        %v359 = vpack.c.b16 %v343, %v341
        %376 = vmatpush.bf16.msra.mxu0 %v358
        %377 = vmatpush.bf16.msra.mxu0 %v356
        %378 = vmatpush.bf16.msra.mxu0 %v354
        %379 = vmatpush.bf16.msra.mxu0 %v352
        %380 = vmatpush.bf16.msra.mxu0 %v350
        %381 = vmatpush.bf16.msra.mxu0 %v348
        %382 = vmatpush.bf16.msra.mxu0 %v346
        %383 = vmatpush.bf16.msra.mxu0 %v344
        %384 = vmatmul.bf16.gmra.mxu0 %v294
        %v385 = vpop.f32.mrf.mxu0
        %v386 = vadd.f32 %v286, %v385
        %v387 = vpop.f32.mrf.mxu0
        %v388 = vadd.f32 %v286, %v387
        %389 = vdwg.mxu0
        %390 = vmatpush.bf16.msra.mxu0 %v359
        %391 = vmatpush.bf16.msra.mxu0 %v357
        %392 = vmatpush.bf16.msra.mxu0 %v355
        %393 = vmatpush.bf16.msra.mxu0 %v353
        %394 = vmatpush.bf16.msra.mxu0 %v351
        %395 = vmatpush.bf16.msra.mxu0 %v349
        %396 = vmatpush.bf16.msra.mxu0 %v347
        %397 = vmatpush.bf16.msra.mxu0 %v345
        %398 = vmatmul.bf16.gmra.mxu0 %v294
        %v399 = vpop.f32.mrf.mxu0
        %v400 = vadd.f32 %v287, %v399
        %v401 = vpop.f32.mrf.mxu0
        %v402 = vadd.f32 %v287, %v401
        %403 = vdwg.mxu0
        %v404 = vmax.f32 %v386, 0.0
        %v405 = vmax.f32 %v400, 0.0
        %v406 = vmax.f32 %v388, 0.0
        %v407 = vmax.f32 %v402, 0.0
        %408 = vst [vmem:[%s255] sm:$0xff] %v404
        %409 = vst [vmem:[%s255 + $0x8] sm:$0xff] %v405
        %410 = vst [vmem:[%s255 + $0x10] sm:$0xff] %v406
        %411 = vst [vmem:[%s255 + $0x18] sm:$0xff] %v407
        %s412 = sand.u32 %s120, 1
        %s413 = sand.u32 %s120, 1
        %s414 = smul.addr %s413, 32
        %s415 = scalar_lea.vmem [#allocation6], %s414
        // Predicated region
        $region41: #{vae_forward.26} parent=31 // pred_check
          %p416 = pneg %p130
        $region42: #{vae_forward.26} parent=31 // pred_check_branch
          %418 = sbr.rel (%p416) target = $region44
        $region43: #{vae_forward.26} parent=31 // pred_region
          %s419 = smul.u32 2, %s24
          %s420 = smul.u32 2, %s25
          %s421 = smul.addr %s419, 4
          %s422 = sadd.s32 %s420, %s421
          %s423 = smul.addr %s422, 8
          %s424 = scalar_lea.vmem %s3, %s423
          // Predicated region
          $region45: #{vae_forward.26} parent=43 // pred_check
            _
          $region46: #{vae_forward.26} parent=43 // pred_check_branch
            %426 = sbr.rel (0) target = $region48
          $region47: #{vae_forward.26} parent=43 // pred_region
            // Predicated region
            $region49: #{vae_forward.26} parent=47 // pred_check
              _
            $region50: #{vae_forward.26} parent=47 // pred_check_branch
              %428 = sbr.rel (0) target = $region52
            $region51: #{vae_forward.26} parent=47 // pred_region
              loop: start=0, step=1, limit=1
              $region53: #{vae_forward.26} parent=51 // loop_pre_header
                _
              $region54: #{vae_forward.26} parent=51 // loop_header
                %s430 = sphi 0, %s434
                %p431 = scmp.ge.s32.totalorder %s430, 1
                %s435 = sphi %s415, %s415
                %s436 = sphi %s424, %s424
              $region55: #{vae_forward.26} parent=51 // loop_header_branch
                %433 = sbr.rel (%p431) target = $region59
              $region56: #{vae_forward.26} parent=51 // loop_body
                %v437 = vld [vmem:[%s435] sm:$0xff]
                %438 = vst [vmem:[%s436] sm:$0xff] %v437
                %v439 = vld [vmem:[%s435 + $0x8] sm:$0xff]
                %440 = vst [vmem:[%s436 + $0x8] sm:$0xff] %v439
                %v441 = vld [vmem:[%s435 + $0x10] sm:$0xff]
                %442 = vst [vmem:[%s436 + $0x20] sm:$0xff] %v441
                %v443 = vld [vmem:[%s435 + $0x18] sm:$0xff]
                %444 = vst [vmem:[%s436 + $0x28] sm:$0xff] %v443
              $region57: #{vae_forward.26} parent=51 // loop_footer
                %s434 = sadd.s32 1, %s430
              $region58: #{vae_forward.26} parent=51 // loop_footer_branch
                %429 = sbr.rel target = $region54
              $region59: #{vae_forward.26} parent=51 // loop_exit
                _
            $region52: #{vae_forward.26} parent=47 // pred_fallthru
              _
            // Predicated region
            $region60: #{vae_forward.26} parent=47 // pred_check
              _
            $region61: #{vae_forward.26} parent=47 // pred_check_branch
              %446 = sbr.rel target = $region63
            $region62: #{vae_forward.26} parent=47 // pred_region
              _
            $region63: #{vae_forward.26} parent=47 // pred_fallthru
              _
          $region48: #{vae_forward.26} parent=43 // pred_fallthru
            _
          %447 = vnop
        $region44: #{vae_forward.26} parent=31 // pred_fallthru
          _
      $region32: #{vae_forward.26} parent=5 // pred_fallthru
        _
      %p448 = scmp.le.s32.totalorder 2, %s15
      // Predicated region
      $region64: #{vae_forward.26} parent=5 // pred_check
        %p449 = pneg %p448
      $region65: #{vae_forward.26} parent=5 // pred_check_branch
        %451 = sbr.rel (%p449) target = $region67
      $region66: #{vae_forward.26} parent=5 // pred_region
        %s452 = ssub.s32 %s15, 2
        // Predicated region
        $region68: #{vae_forward.26} parent=66 // pred_check
          %p453 = pneg %p136
        $region69: #{vae_forward.26} parent=66 // pred_check_branch
          %455 = sbr.rel (%p453) target = $region71
        $region70: #{vae_forward.26} parent=66 // pred_region
          %s456 = sand.u32 %s121, 1
          %s457 = sand.u32 %s121, 1
          %s458 = smul.addr %s457, 32
          %s459 = scalar_lea.vmem [#allocation6], %s458
        $region71: #{vae_forward.26} parent=66 // pred_fallthru
          _
      $region67: #{vae_forward.26} parent=5 // pred_fallthru
        _
    $region6: #{vae_forward.26} parent=1 // loop_footer
      %s19 = sadd.s32 1, %s15
    $region7: #{vae_forward.26} parent=1 // loop_footer_branch
      %14 = sbr.rel target = $region3
    $region8: #{vae_forward.26} parent=1 // loop_exit
      _
    %460 = vsyncpa [#allocation3], 1
    %s461 = scalar_lea.sflag [#allocation3], 1
    %462 = vsyncpa %s461, 1
    %463 = vsyncpa [#allocation5], 1
    %s464 = scalar_lea.sflag [#allocation5], 1
    %465 = vsyncpa %s464, 1

// kernel: vae_forward.27
$region0: #{vae_forward.27}
  #allocation0 [shape = 'u32[]', space=smem, size = 0x4, offset = 0x4, fixed_abs, tag = 'smem constant byte address 0x4 - core index']
  #allocation1 [shape = 'u32[72,128]{1,0:T(1,128)}', space=vmem, size = 0x9000, scoped, tag = 'internal scratch']
  #allocation2 [shape = 'f32[16,256]{1,0:T(8,128)}', space=vmem, size = 0x4000, scoped, tag = 'scratch operand']
  %s0 = inlined_call_operand.vmem [shape: bf16[16,2048], index: 0, kind: input, shape index: {}]
  %s1 = inlined_call_operand.vmem [shape: bf16[2048,256], index: 1, kind: input, shape index: {}]
  %s2 = inlined_call_operand.vmem [shape: f32[1,256], index: 2, kind: input, shape index: {}]
  %s3 = inlined_call_operand.vmem [shape: f32[16,256], index: 3, kind: output, shape index: {}]
  %s4 = sld [smem:[#allocation0]]
  $region76: #{vae_forward.27} parent=0
    _
  %s6 = ssub.s32 1, %s4
  %s7 = scalar_select 0, %s6, %s4
  $region1: #{vae_forward.27} parent=0
    #allocation3 [shape = 'u8[32768]{0}', space=vmem, size = 0x8000, scoped, tag = 'input window, operand 0']
    loop: start=0, step=1, limit=6
    $region2: #{vae_forward.27} parent=1 // loop_pre_header
      _
    $region3: #{vae_forward.27} parent=1 // loop_header
      %s9 = sphi 0, %s13
      %p10 = scmp.ge.s32.totalorder %s9, 6
      %s16 = sphi 0, %s35
      %s17 = sphi 0, %s31
      %s18 = sphi 0, %s27
      %s19 = sphi 0, %s16
      %s20 = sphi 0, %s17
      %s21 = sphi 0, %s18
      %s22 = sphi 0, %s19
      %s23 = sphi 0, %s20
      %s24 = sphi 0, %s21
      %s40 = sphi 0, %s42
      %s43 = sphi 0, %s40
      %s44 = sphi 0, %s43
      %s60 = sphi 0, %s44
      %s68 = sphi 0, %s70
      %s71 = sphi 0, %s68
      %s72 = sphi 0, %s71
      %s88 = sphi 0, %s72
      %s94 = sphi 0, %s96
      %s97 = sphi 0, %s94
      %s98 = sphi 0, %s97
      %s114 = sphi 0, %s98
      %s122 = sphi 0, %s124
      %s125 = sphi 0, %s122
      %s126 = sphi 0, %s125
      %s142 = sphi 0, %s126
    $region4: #{vae_forward.27} parent=1 // loop_header_branch
      %12 = sbr.rel (%p10) target = $region8
    $region5: #{vae_forward.27} parent=1 // loop_body
      %s14 = ssub.s32 %s9, 1
      %s15 = ssub.s32 %s9, 2
      %s25 = sadd.s32 1, %s18
      %p26 = scmp.ge.s32.totalorder %s25, 4
      %s27 = scalar_select %p26, 0, %s25
      %s28 = sadd.s32 1, %s17
      %s29 = scalar_select %p26, %s28, %s17
      %p30 = scmp.ge.s32.totalorder %s29, 1
      %s31 = scalar_select %p30, 0, %s29
      %s32 = sadd.s32 1, %s16
      %s33 = scalar_select %p30, %s32, %s16
      %p34 = scmp.ge.s32.totalorder %s33, 1
      %s35 = scalar_select %p34, 0, %s33
      %s36 = ssub.s32 %s16, %s35
      %s37 = ssub.s32 %s18, %s27
      %s38 = sor.u32 %s36, %s37
      %p39 = scmp.eq.s32.totalorder %s38, 0
      %s41 = sadd.s32 %s40, 1
      %s42 = scalar_select %p39, %s40, %s41
      %p45 = pneg %p39
      %p46 = scmp.eq.s32.totalorder %s9, 3
      %p47 = por %p45, %p46
      %p48 = scmp.ne.s32.totalorder %s40, %s43
      %p49 = scmp.eq.s32.totalorder %s9, 0
      %p50 = por %p48, %p49
      %p51 = scmp.ne.s32.totalorder %s40, %s43
      %p52 = scmp.eq.s32.totalorder %s14, 3
      %p53 = por %p51, %p52
      %p54 = scmp.ne.s32.totalorder %s43, %s44
      %p55 = scmp.eq.s32.totalorder %s14, 0
      %p56 = por %p54, %p55
      %p57 = scmp.ne.s32.totalorder %s43, %s44
      %p58 = scmp.eq.s32.totalorder %s15, 3
      %p59 = por %p57, %p58
      %p61 = scmp.ne.s32.totalorder %s44, %s60
      %p62 = scmp.eq.s32.totalorder %s15, 0
      %p63 = por %p61, %p62
      %s64 = ssub.s32 %s18, %s27
      %s65 = ssub.s32 %s17, %s31
      %s66 = sor.u32 %s64, %s65
      %p67 = scmp.eq.s32.totalorder %s66, 0
      %s69 = sadd.s32 %s68, 1
      %s70 = scalar_select %p67, %s68, %s69
      %p73 = pneg %p67
      %p74 = scmp.eq.s32.totalorder %s9, 3
      %p75 = por %p73, %p74
      %p76 = scmp.ne.s32.totalorder %s68, %s71
      %p77 = scmp.eq.s32.totalorder %s9, 0
      %p78 = por %p76, %p77
      %p79 = scmp.ne.s32.totalorder %s68, %s71
      %p80 = scmp.eq.s32.totalorder %s14, 3
      %p81 = por %p79, %p80
      %p82 = scmp.ne.s32.totalorder %s71, %s72
      %p83 = scmp.eq.s32.totalorder %s14, 0
      %p84 = por %p82, %p83
      %p85 = scmp.ne.s32.totalorder %s71, %s72
      %p86 = scmp.eq.s32.totalorder %s15, 3
      %p87 = por %p85, %p86
      %p89 = scmp.ne.s32.totalorder %s72, %s88
      %p90 = scmp.eq.s32.totalorder %s15, 0
      %p91 = por %p89, %p90
      %s92 = ssub.s32 %s17, %s31
      %p93 = scmp.eq.s32.totalorder %s92, 0
      %s95 = sadd.s32 %s94, 1
      %s96 = scalar_select %p93, %s94, %s95
      %p99 = pneg %p93
      %p100 = scmp.eq.s32.totalorder %s9, 3
      %p101 = por %p99, %p100
      %p102 = scmp.ne.s32.totalorder %s94, %s97
      %p103 = scmp.eq.s32.totalorder %s9, 0
      %p104 = por %p102, %p103
      %p105 = scmp.ne.s32.totalorder %s94, %s97
      %p106 = scmp.eq.s32.totalorder %s14, 3
      %p107 = por %p105, %p106
      %p108 = scmp.ne.s32.totalorder %s97, %s98
      %p109 = scmp.eq.s32.totalorder %s14, 0
      %p110 = por %p108, %p109
      %p111 = scmp.ne.s32.totalorder %s97, %s98
      %p112 = scmp.eq.s32.totalorder %s15, 3
      %p113 = por %p111, %p112
      %p115 = scmp.ne.s32.totalorder %s98, %s114
      %p116 = scmp.eq.s32.totalorder %s15, 0
      %p117 = por %p115, %p116
      %s118 = ssub.s32 %s16, %s35
      %s119 = ssub.s32 %s17, %s31
      %s120 = sor.u32 %s118, %s119
      %p121 = scmp.eq.s32.totalorder %s120, 0
      %s123 = sadd.s32 %s122, 1
      %s124 = scalar_select %p121, %s122, %s123
      %p127 = pneg %p121
      %p128 = scmp.eq.s32.totalorder %s9, 3
      %p129 = por %p127, %p128
      %p130 = scmp.ne.s32.totalorder %s122, %s125
      %p131 = scmp.eq.s32.totalorder %s9, 0
      %p132 = por %p130, %p131
      %p133 = scmp.ne.s32.totalorder %s122, %s125
      %p134 = scmp.eq.s32.totalorder %s14, 3
      %p135 = por %p133, %p134
      %p136 = scmp.ne.s32.totalorder %s125, %s126
      %p137 = scmp.eq.s32.totalorder %s14, 0
      %p138 = por %p136, %p137
      %p139 = scmp.ne.s32.totalorder %s125, %s126
      %p140 = scmp.eq.s32.totalorder %s15, 3
      %p141 = por %p139, %p140
      %p143 = scmp.ne.s32.totalorder %s126, %s142
      %p144 = scmp.eq.s32.totalorder %s15, 0
      %p145 = por %p143, %p144
      %p146 = scmp.le.s32.totalorder 1, %s9
      %p147 = scmp.lt.s32.totalorder %s9, 5
      %p148 = pnand %p146, %p147
      %p149 = pneg %p148
      // Predicated region
      $region9: #{vae_forward.27} parent=5 // pred_check
        _
      $region10: #{vae_forward.27} parent=5 // pred_check_branch
        %151 = sbr.rel (%p148) target = $region12
      $region11: #{vae_forward.27} parent=5 // pred_region
        %s152 = ssub.s32 %s9, 1
        // Predicated region
        $region13: #{vae_forward.27} parent=11 // pred_check
          %p153 = pneg %p110
        $region14: #{vae_forward.27} parent=11 // pred_check_branch
          %155 = sbr.rel (%p153) target = $region16
        $region15: #{vae_forward.27} parent=11 // pred_region
          %s156 = smul.u32 2, %s20
          %p157 = scmp.lt.s32.totalorder %s156, 1
          %s158 = scalar_select %p157, %s156, 1
          %s159 = scalar_lea.vmem %s2, %s158
          %s160 = smul.u32 2, %s20
        $region16: #{vae_forward.27} parent=11 // pred_fallthru
          _
      $region12: #{vae_forward.27} parent=5 // pred_fallthru
        _
      %p161 = scmp.lt.s32.totalorder %s9, 4
      // Predicated region
      $region17: #{vae_forward.27} parent=5 // pred_check
        %p162 = pneg %p161
      $region18: #{vae_forward.27} parent=5 // pred_check_branch
        %164 = sbr.rel (%p162) target = $region20
      $region19: #{vae_forward.27} parent=5 // pred_region
        // Predicated region
        $region21: #{vae_forward.27} parent=19 // pred_check
          %p165 = pneg %p50
        $region22: #{vae_forward.27} parent=19 // pred_check_branch
          %167 = sbr.rel (%p165) target = $region24
        $region23: #{vae_forward.27} parent=19 // pred_region
          %s168 = sand.u32 %s40, 1
          %s169 = sand.u32 %s40, 1
          %s170 = smul.addr %s169, 32
          %s171 = scalar_lea.vmem [#allocation3], %s170
          %s172 = smul.u32 2, %s16
          %s173 = smul.u32 4, %s18
          %s174 = smul.addr %s172, 16
          %s175 = sadd.s32 %s173, %s174
          %s176 = smul.addr %s175, 4
          %s177 = scalar_lea.vmem %s0, %s176
          // Predicated region
          $region25: #{vae_forward.27} parent=23 // pred_check
            _
          $region26: #{vae_forward.27} parent=23 // pred_check_branch
            %179 = sbr.rel (0) target = $region28
          $region27: #{vae_forward.27} parent=23 // pred_region
            // Predicated region
            $region29: #{vae_forward.27} parent=27 // pred_check
              _
            $region30: #{vae_forward.27} parent=27 // pred_check_branch
              %181 = sbr.rel (0) target = $region32
            $region31: #{vae_forward.27} parent=27 // pred_region
              loop: start=0, step=1, limit=1
              $region33: #{vae_forward.27} parent=31 // loop_pre_header
                _
              $region34: #{vae_forward.27} parent=31 // loop_header
                %s183 = sphi 0, %s187
                %p184 = scmp.ge.s32.totalorder %s183, 1
                %s188 = sphi %s177, %s177
                %s189 = sphi %s171, %s171
              $region35: #{vae_forward.27} parent=31 // loop_header_branch
                %186 = sbr.rel (%p184) target = $region39
              $region36: #{vae_forward.27} parent=31 // loop_body
                %v190 = vld [vmem:[%s188] sm:$0xff]
                %191 = vst [vmem:[%s189] sm:$0xff] %v190
                %v192 = vld [vmem:[%s188 + $0x8] sm:$0xff]
                %193 = vst [vmem:[%s189 + $0x8] sm:$0xff] %v192
                %v194 = vld [vmem:[%s188 + $0x40] sm:$0xff]
                %195 = vst [vmem:[%s189 + $0x10] sm:$0xff] %v194
                %v196 = vld [vmem:[%s188 + $0x48] sm:$0xff]
                %197 = vst [vmem:[%s189 + $0x18] sm:$0xff] %v196
              $region37: #{vae_forward.27} parent=31 // loop_footer
                %s187 = sadd.s32 1, %s183
              $region38: #{vae_forward.27} parent=31 // loop_footer_branch
                %182 = sbr.rel target = $region34
              $region39: #{vae_forward.27} parent=31 // loop_exit
                _
            $region32: #{vae_forward.27} parent=27 // pred_fallthru
              _
            // Predicated region
            $region40: #{vae_forward.27} parent=27 // pred_check
              _
            $region41: #{vae_forward.27} parent=27 // pred_check_branch
              %199 = sbr.rel target = $region43
            $region42: #{vae_forward.27} parent=27 // pred_region
              _
            $region43: #{vae_forward.27} parent=27 // pred_fallthru
              _
          $region28: #{vae_forward.27} parent=23 // pred_fallthru
            _
          %200 = vnop
        $region24: #{vae_forward.27} parent=19 // pred_fallthru
          _
        // Predicated region
        $region44: #{vae_forward.27} parent=19 // pred_check
          %p201 = pneg %p78
        $region45: #{vae_forward.27} parent=19 // pred_check_branch
          %203 = sbr.rel (%p201) target = $region47
        $region46: #{vae_forward.27} parent=19 // pred_region
          %s204 = smul.u32 64, %s18
          %s205 = smul.u32 2, %s17
          %p206 = scmp.lt.s32.totalorder %s204, 255
          %s207 = scalar_select %p206, %s204, 255
          %p208 = scmp.lt.s32.totalorder %s205, 1
          %s209 = scalar_select %p208, %s205, 1
          %s210 = smul.addr %s207, 2
          %s211 = sadd.s32 %s209, %s210
          %s212 = smul.addr %s211, 4
          %s213 = scalar_lea.vmem %s1, %s212
          %s214 = smul.u32 64, %s18
          %s215 = smul.u32 2, %s17
        $region47: #{vae_forward.27} parent=19 // pred_fallthru
          _
      $region20: #{vae_forward.27} parent=5 // pred_fallthru
        _
      %p216 = scmp.le.s32.totalorder 1, %s9
      %p217 = scmp.lt.s32.totalorder %s9, 5
      %p218 = pnand %p216, %p217
      %p219 = pneg %p218
      // Predicated region
      $region48: #{vae_forward.27} parent=5 // pred_check
        _
      $region49: #{vae_forward.27} parent=5 // pred_check_branch
        %221 = sbr.rel (%p218) target = $region51
      $region50: #{vae_forward.27} parent=5 // pred_region
        %s222 = ssub.s32 %s9, 1
        %s223 = sand.u32 %s43, 1
        %s224 = sand.u32 %s43, 1
        %s225 = smul.addr %s224, 32
        %s226 = scalar_lea.vmem [#allocation3], %s225
        // Predicated region
        $region52: #{vae_forward.27} parent=50 // pred_check
          %p227 = pneg %p56
        $region53: #{vae_forward.27} parent=50 // pred_check_branch
          %229 = sbr.rel (%p227) target = $region55
        $region54: #{vae_forward.27} parent=50 // pred_region
          _
        $region55: #{vae_forward.27} parent=50 // pred_fallthru
          _
        %s230 = sand.u32 %s43, 1
        %s231 = sand.u32 %s43, 1
        %s232 = smul.addr %s231, 32
        %s233 = scalar_lea.vmem [#allocation3], %s232
        %p234 = pneg %p56
        %p235 = pneg %p53
        %s236 = smul.u32 64, %s21
        %s237 = smul.u32 2, %s20
        %p238 = scmp.lt.s32.totalorder %s236, 255
        %s239 = scalar_select %p238, %s236, 255
        %p240 = scmp.lt.s32.totalorder %s237, 1
        %s241 = scalar_select %p240, %s237, 1
        %s242 = smul.addr %s239, 2
        %s243 = sadd.s32 %s241, %s242
        %s244 = smul.addr %s243, 4
        %s245 = scalar_lea.vmem %s1, %s244
        %p246 = pneg %p84
        %p247 = pneg %p81
        %s248 = smul.u32 2, %s20
        %p249 = scmp.lt.s32.totalorder %s248, 1
        %s250 = scalar_select %p249, %s248, 1
        %s251 = scalar_lea.vmem %s2, %s250
        %p252 = pneg %p110
        %p253 = pneg %p107
        %p254 = pneg %p138
        %p255 = pneg %p135
        %s256 = smul.u32 2, %s19
        %s257 = smul.u32 2, %s20
        %p258 = scmp.lt.s32.totalorder %s256, 1
        %s259 = scalar_select %p258, %s256, 1
        %p260 = scmp.lt.s32.totalorder %s257, 1
        %s261 = scalar_select %p260, %s257, 1
        %s262 = smul.addr %s259, 2
        %s263 = sadd.s32 %s261, %s262
        %s264 = smul.addr %s263, 8
        %s265 = scalar_lea.vmem %s3, %s264
        %s266 = smul.u32 2, %s19
        %s267 = smul.u32 4, %s21
        %s268 = smul.u32 64, %s21
        %s269 = smul.u32 2, %s20
        %p270 = scmp.lt.s32.totalorder %s268, 255
        %s271 = scalar_select %p270, %s268, 255
        %p272 = scmp.lt.s32.totalorder %s269, 1
        %s273 = scalar_select %p272, %s269, 1
        %s274 = smul.addr %s271, 2
        %s275 = sadd.s32 %s273, %s274
        %s276 = smul.addr %s275, 4
        %s277 = scalar_lea.vmem %s1, %s276
        %s278 = smul.u32 64, %s21
        %s279 = smul.u32 2, %s20
        %s280 = smul.u32 2, %s20
        %p281 = scmp.lt.s32.totalorder %s280, 1
        %s282 = scalar_select %p281, %s280, 1
        %s283 = scalar_lea.vmem %s2, %s282
        %s284 = smul.u32 2, %s20
        %s285 = smul.u32 2, %s19
        %s286 = smul.u32 2, %s20
        %p287 = scmp.lt.s32.totalorder %s285, 1
        %s288 = scalar_select %p287, %s285, 1
        %p289 = scmp.lt.s32.totalorder %s286, 1
        %s290 = scalar_select %p289, %s286, 1
        %s291 = smul.addr %s288, 2
        %s292 = sadd.s32 %s290, %s291
        %s293 = smul.addr %s292, 8
        %s294 = scalar_lea.vmem %s3, %s293
        %s295 = smul.u32 2, %s19
        %s296 = smul.u32 2, %s20
        %p297 = scmp.eq.s32.totalorder %s21, 0
        // Predicated region
        $region56: #{vae_forward.27} parent=50 // pred_check
          %p298 = pneg %p297
        $region57: #{vae_forward.27} parent=50 // pred_check_branch
          %300 = sbr.rel (%p298) target = $region59
        $region58: #{vae_forward.27} parent=50 // pred_region
          %301 = vst [vmem:[#allocation2] sm:$0xff] 0.0
          %302 = vst [vmem:[#allocation2 + $0x8] sm:$0xff] 0.0
          %303 = vst [vmem:[#allocation2 + $0x10] sm:$0xff] 0.0
          %304 = vst [vmem:[#allocation2 + $0x18] sm:$0xff] 0.0
        $region59: #{vae_forward.27} parent=50 // pred_fallthru
          _
        %v305 = vld [vmem:[#allocation2] sm:$0xff]
        %v306 = vld [vmem:[#allocation2 + $0x8] sm:$0xff]
        %v307 = vld [vmem:[#allocation2 + $0x10] sm:$0xff]
        %v308 = vld [vmem:[#allocation2 + $0x18] sm:$0xff]
        %v309 = vld [vmem:[%s226] sm:$0xff]
        %v310 = vld [vmem:[%s226 + $0x8] sm:$0xff]
        %v311 = vld [vmem:[%s226 + $0x10] sm:$0xff]
        %v312 = vld [vmem:[%s226 + $0x18] sm:$0xff]
        %v313 = vld [vmem:[%s277] sm:$0xff]
        %v314 = vld [vmem:[%s277 + $0x8] sm:$0xff]
        %v315 = vld [vmem:[%s277 + $0x10] sm:$0xff]
        %v316 = vld [vmem:[%s277 + $0x18] sm:$0xff]
        %v317 = vld [vmem:[%s277 + $0x20] sm:$0xff]
        %v318 = vld [vmem:[%s277 + $0x28] sm:$0xff]
        %v319 = vld [vmem:[%s277 + $0x30] sm:$0xff]
        %v320 = vld [vmem:[%s277 + $0x38] sm:$0xff]
        %v321 = vld [vmem:[%s277 + $0x40] sm:$0xff]
        %v322 = vld [vmem:[%s277 + $0x48] sm:$0xff]
        %v323 = vld [vmem:[%s277 + $0x50] sm:$0xff]
        %v324 = vld [vmem:[%s277 + $0x58] sm:$0xff]
        %v325 = vld [vmem:[%s277 + $0x60] sm:$0xff]
        %v326 = vld [vmem:[%s277 + $0x68] sm:$0xff]
        %v327 = vld [vmem:[%s277 + $0x70] sm:$0xff]
        %v328 = vld [vmem:[%s277 + $0x78] sm:$0xff]
        %v329 = vld [vmem:[%s277 + $0x80] sm:$0xff]
        %v330 = vld [vmem:[%s277 + $0x88] sm:$0xff]
        %v331 = vld [vmem:[%s277 + $0x90] sm:$0xff]
        %v332 = vld [vmem:[%s277 + $0x98] sm:$0xff]
        %v333 = vld [vmem:[%s277 + $0xa0] sm:$0xff]
        %v334 = vld [vmem:[%s277 + $0xa8] sm:$0xff]
        %v335 = vld [vmem:[%s277 + $0xb0] sm:$0xff]
        %v336 = vld [vmem:[%s277 + $0xb8] sm:$0xff]
        %v337 = vld [vmem:[%s277 + $0xc0] sm:$0xff]
        %v338 = vld [vmem:[%s277 + $0xc8] sm:$0xff]
        %v339 = vld [vmem:[%s277 + $0xd0] sm:$0xff]
        %v340 = vld [vmem:[%s277 + $0xd8] sm:$0xff]
        %v341 = vld [vmem:[%s277 + $0xe0] sm:$0xff]
        %v342 = vld [vmem:[%s277 + $0xe8] sm:$0xff]
        %v343 = vld [vmem:[%s277 + $0xf0] sm:$0xff]
        %v344 = vld [vmem:[%s277 + $0xf8] sm:$0xff]
        %v345 = vld [vmem:[%s277 + $0x100] sm:$0xff]
        %v346 = vld [vmem:[%s277 + $0x108] sm:$0xff]
        %v347 = vld [vmem:[%s277 + $0x110] sm:$0xff]
        %v348 = vld [vmem:[%s277 + $0x118] sm:$0xff]
        %v349 = vld [vmem:[%s277 + $0x120] sm:$0xff]
        %v350 = vld [vmem:[%s277 + $0x128] sm:$0xff]
        %v351 = vld [vmem:[%s277 + $0x130] sm:$0xff]
        %v352 = vld [vmem:[%s277 + $0x138] sm:$0xff]
        %v353 = vld [vmem:[%s277 + $0x140] sm:$0xff]
        %v354 = vld [vmem:[%s277 + $0x148] sm:$0xff]
        %v355 = vld [vmem:[%s277 + $0x150] sm:$0xff]
        %v356 = vld [vmem:[%s277 + $0x158] sm:$0xff]
        %v357 = vld [vmem:[%s277 + $0x160] sm:$0xff]
        %v358 = vld [vmem:[%s277 + $0x168] sm:$0xff]
        %v359 = vld [vmem:[%s277 + $0x170] sm:$0xff]
        %v360 = vld [vmem:[%s277 + $0x178] sm:$0xff]
        %v361 = vld [vmem:[%s277 + $0x180] sm:$0xff]
        %v362 = vld [vmem:[%s277 + $0x188] sm:$0xff]
        %v363 = vld [vmem:[%s277 + $0x190] sm:$0xff]
        %v364 = vld [vmem:[%s277 + $0x198] sm:$0xff]
        %v365 = vld [vmem:[%s277 + $0x1a0] sm:$0xff]
        %v366 = vld [vmem:[%s277 + $0x1a8] sm:$0xff]
        %v367 = vld [vmem:[%s277 + $0x1b0] sm:$0xff]
        %v368 = vld [vmem:[%s277 + $0x1b8] sm:$0xff]
        %v369 = vld [vmem:[%s277 + $0x1c0] sm:$0xff]
        %v370 = vld [vmem:[%s277 + $0x1c8] sm:$0xff]
        %v371 = vld [vmem:[%s277 + $0x1d0] sm:$0xff]
        %v372 = vld [vmem:[%s277 + $0x1d8] sm:$0xff]
        %v373 = vld [vmem:[%s277 + $0x1e0] sm:$0xff]
        %v374 = vld [vmem:[%s277 + $0x1e8] sm:$0xff]
        %v375 = vld [vmem:[%s277 + $0x1f0] sm:$0xff]
        %v376 = vld [vmem:[%s277 + $0x1f8] sm:$0xff]
        %v381 = vunpack.c.l.b16 %v309
        %v382 = vunpack.c.h.b16 %v309
        %v383 = vunpack.c.l.b16 %v310
        %v384 = vunpack.c.h.b16 %v310
        %v385 = vunpack.c.l.b16 %v311
        %v386 = vunpack.c.h.b16 %v311
        %v387 = vunpack.c.l.b16 %v312
        %v388 = vunpack.c.h.b16 %v312
        %v389 = vpack.c.b16 %v385, %v381
        %v390 = vpack.c.b16 %v386, %v382
        %v391 = vpack.c.b16 %v387, %v383
        %v392 = vpack.c.b16 %v388, %v384
        %v461 = vunpack.c.l.b16 %v313
        %v462 = vunpack.c.h.b16 %v313
        %v463 = vunpack.c.l.b16 %v314
        %v464 = vunpack.c.h.b16 %v314
        %v465 = vunpack.c.l.b16 %v315
        %v466 = vunpack.c.h.b16 %v315
        %v467 = vunpack.c.l.b16 %v316
        %v468 = vunpack.c.h.b16 %v316
        %v469 = vunpack.c.l.b16 %v317
        %v470 = vunpack.c.h.b16 %v317
        %v471 = vunpack.c.l.b16 %v318
        %v472 = vunpack.c.h.b16 %v318
        %v473 = vunpack.c.l.b16 %v319
        %v474 = vunpack.c.h.b16 %v319
        %v475 = vunpack.c.l.b16 %v320
        %v476 = vunpack.c.h.b16 %v320
        %v477 = vunpack.c.l.b16 %v321
        %v478 = vunpack.c.h.b16 %v321
        %v479 = vunpack.c.l.b16 %v322
        %v480 = vunpack.c.h.b16 %v322
        %v481 = vunpack.c.l.b16 %v323
        %v482 = vunpack.c.h.b16 %v323
        %v483 = vunpack.c.l.b16 %v324
        %v484 = vunpack.c.h.b16 %v324
        %v485 = vunpack.c.l.b16 %v325
        %v486 = vunpack.c.h.b16 %v325
        %v487 = vunpack.c.l.b16 %v326
        %v488 = vunpack.c.h.b16 %v326
        %v489 = vunpack.c.l.b16 %v327
        %v490 = vunpack.c.h.b16 %v327
        %v491 = vunpack.c.l.b16 %v328
        %v492 = vunpack.c.h.b16 %v328
        %v493 = vunpack.c.l.b16 %v329
        %v494 = vunpack.c.h.b16 %v329
        %v495 = vunpack.c.l.b16 %v330
        %v496 = vunpack.c.h.b16 %v330
        %v497 = vunpack.c.l.b16 %v331
        %v498 = vunpack.c.h.b16 %v331
        %v499 = vunpack.c.l.b16 %v332
        %v500 = vunpack.c.h.b16 %v332
        %v501 = vunpack.c.l.b16 %v333
        %v502 = vunpack.c.h.b16 %v333
        %v503 = vunpack.c.l.b16 %v334
        %v504 = vunpack.c.h.b16 %v334
        %v505 = vunpack.c.l.b16 %v335
        %v506 = vunpack.c.h.b16 %v335
        %v507 = vunpack.c.l.b16 %v336
        %v508 = vunpack.c.h.b16 %v336
        %v509 = vunpack.c.l.b16 %v337
        %v510 = vunpack.c.h.b16 %v337
        %v511 = vunpack.c.l.b16 %v338
        %v512 = vunpack.c.h.b16 %v338
        %v513 = vunpack.c.l.b16 %v339
        %v514 = vunpack.c.h.b16 %v339
        %v515 = vunpack.c.l.b16 %v340
        %v516 = vunpack.c.h.b16 %v340
        %v517 = vunpack.c.l.b16 %v341
        %v518 = vunpack.c.h.b16 %v341
        %v519 = vunpack.c.l.b16 %v342
        %v520 = vunpack.c.h.b16 %v342
        %v521 = vunpack.c.l.b16 %v343
        %v522 = vunpack.c.h.b16 %v343
        %v523 = vunpack.c.l.b16 %v344
        %v524 = vunpack.c.h.b16 %v344
        %v525 = vunpack.c.l.b16 %v345
        %v526 = vunpack.c.h.b16 %v345
        %v527 = vunpack.c.l.b16 %v346
        %v528 = vunpack.c.h.b16 %v346
        %v529 = vunpack.c.l.b16 %v347
        %v530 = vunpack.c.h.b16 %v347
        %v531 = vunpack.c.l.b16 %v348
        %v532 = vunpack.c.h.b16 %v348
        %v533 = vunpack.c.l.b16 %v349
        %v534 = vunpack.c.h.b16 %v349
        %v535 = vunpack.c.l.b16 %v350
        %v536 = vunpack.c.h.b16 %v350
        %v537 = vunpack.c.l.b16 %v351
        %v538 = vunpack.c.h.b16 %v351
        %v539 = vunpack.c.l.b16 %v352
        %v540 = vunpack.c.h.b16 %v352
        %v541 = vunpack.c.l.b16 %v353
        %v542 = vunpack.c.h.b16 %v353
        %v543 = vunpack.c.l.b16 %v354
        %v544 = vunpack.c.h.b16 %v354
        %v545 = vunpack.c.l.b16 %v355
        %v546 = vunpack.c.h.b16 %v355
        %v547 = vunpack.c.l.b16 %v356
        %v548 = vunpack.c.h.b16 %v356
        %v549 = vunpack.c.l.b16 %v357
        %v550 = vunpack.c.h.b16 %v357
        %v551 = vunpack.c.l.b16 %v358
        %v552 = vunpack.c.h.b16 %v358
        %v553 = vunpack.c.l.b16 %v359
        %v554 = vunpack.c.h.b16 %v359
        %v555 = vunpack.c.l.b16 %v360
        %v556 = vunpack.c.h.b16 %v360
        %v557 = vunpack.c.l.b16 %v361
        %v558 = vunpack.c.h.b16 %v361
        %v559 = vunpack.c.l.b16 %v362
        %v560 = vunpack.c.h.b16 %v362
        %v561 = vunpack.c.l.b16 %v363
        %v562 = vunpack.c.h.b16 %v363
        %v563 = vunpack.c.l.b16 %v364
        %v564 = vunpack.c.h.b16 %v364
        %v565 = vunpack.c.l.b16 %v365
        %v566 = vunpack.c.h.b16 %v365
        %v567 = vunpack.c.l.b16 %v366
        %v568 = vunpack.c.h.b16 %v366
        %v569 = vunpack.c.l.b16 %v367
        %v570 = vunpack.c.h.b16 %v367
        %v571 = vunpack.c.l.b16 %v368
        %v572 = vunpack.c.h.b16 %v368
        %v573 = vunpack.c.l.b16 %v369
        %v574 = vunpack.c.h.b16 %v369
        %v575 = vunpack.c.l.b16 %v370
        %v576 = vunpack.c.h.b16 %v370
        %v577 = vunpack.c.l.b16 %v371
        %v578 = vunpack.c.h.b16 %v371
        %v579 = vunpack.c.l.b16 %v372
        %v580 = vunpack.c.h.b16 %v372
        %v581 = vunpack.c.l.b16 %v373
        %v582 = vunpack.c.h.b16 %v373
        %v583 = vunpack.c.l.b16 %v374
        %v584 = vunpack.c.h.b16 %v374
        %v585 = vunpack.c.l.b16 %v375
        %v586 = vunpack.c.h.b16 %v375
        %v587 = vunpack.c.l.b16 %v376
        %v588 = vunpack.c.h.b16 %v376
        %v589 = vpack.c.b16 %v463, %v461
        %v590 = vpack.c.b16 %v464, %v462
        %v591 = vpack.c.b16 %v467, %v465
        %v592 = vpack.c.b16 %v468, %v466
        %v593 = vpack.c.b16 %v471, %v469
        %v594 = vpack.c.b16 %v472, %v470
        %v595 = vpack.c.b16 %v475, %v473
        %v596 = vpack.c.b16 %v476, %v474
        %v597 = vpack.c.b16 %v479, %v477
        %v598 = vpack.c.b16 %v480, %v478
        %v599 = vpack.c.b16 %v483, %v481
        %v600 = vpack.c.b16 %v484, %v482
        %v601 = vpack.c.b16 %v487, %v485
        %v602 = vpack.c.b16 %v488, %v486
        %v603 = vpack.c.b16 %v491, %v489
        %v604 = vpack.c.b16 %v492, %v490
        %v605 = vpack.c.b16 %v495, %v493
        %v606 = vpack.c.b16 %v496, %v494
        %v607 = vpack.c.b16 %v499, %v497
        %v608 = vpack.c.b16 %v500, %v498
        %v609 = vpack.c.b16 %v503, %v501
        %v610 = vpack.c.b16 %v504, %v502
        %v611 = vpack.c.b16 %v507, %v505
        %v612 = vpack.c.b16 %v508, %v506
        %v613 = vpack.c.b16 %v511, %v509
        %v614 = vpack.c.b16 %v512, %v510
        %v615 = vpack.c.b16 %v515, %v513
        %v616 = vpack.c.b16 %v516, %v514
        %v617 = vpack.c.b16 %v519, %v517
        %v618 = vpack.c.b16 %v520, %v518
        %v619 = vpack.c.b16 %v523, %v521
        %v620 = vpack.c.b16 %v524, %v522
        %v621 = vpack.c.b16 %v527, %v525
        %v622 = vpack.c.b16 %v528, %v526
        %v623 = vpack.c.b16 %v531, %v529
        %v624 = vpack.c.b16 %v532, %v530
        %v625 = vpack.c.b16 %v535, %v533
        %v626 = vpack.c.b16 %v536, %v534
        %v627 = vpack.c.b16 %v539, %v537
        %v628 = vpack.c.b16 %v540, %v538
        %v629 = vpack.c.b16 %v543, %v541
        %v630 = vpack.c.b16 %v544, %v542
        %v631 = vpack.c.b16 %v547, %v545
        %v632 = vpack.c.b16 %v548, %v546
        %v633 = vpack.c.b16 %v551, %v549
        %v634 = vpack.c.b16 %v552, %v550
        %v635 = vpack.c.b16 %v555, %v553
        %v636 = vpack.c.b16 %v556, %v554
        %v637 = vpack.c.b16 %v559, %v557
        %v638 = vpack.c.b16 %v560, %v558
        %v639 = vpack.c.b16 %v563, %v561
        %v640 = vpack.c.b16 %v564, %v562
        %v641 = vpack.c.b16 %v567, %v565
        %v642 = vpack.c.b16 %v568, %v566
        %v643 = vpack.c.b16 %v571, %v569
        %v644 = vpack.c.b16 %v572, %v570
        %v645 = vpack.c.b16 %v575, %v573
        %v646 = vpack.c.b16 %v576, %v574
        %v647 = vpack.c.b16 %v579, %v577
        %v648 = vpack.c.b16 %v580, %v578
        %v649 = vpack.c.b16 %v583, %v581
        %v650 = vpack.c.b16 %v584, %v582
        %v651 = vpack.c.b16 %v587, %v585
        %v652 = vpack.c.b16 %v588, %v586
        %717 = vmatpush.bf16.msra.mxu0 %v603
        %718 = vmatpush.bf16.msra.mxu0 %v601
        %719 = vmatpush.bf16.msra.mxu0 %v599
        %720 = vmatpush.bf16.msra.mxu0 %v597
        %721 = vmatpush.bf16.msra.mxu0 %v595
        %722 = vmatpush.bf16.msra.mxu0 %v593
        %723 = vmatpush.bf16.msra.mxu0 %v591
        %724 = vmatpush.bf16.msra.mxu0 %v589
        %725 = vmatmul.bf16.gmra.mxu0 %v389
        %v726 = vpop.f32.mrf.mxu0
        %v727 = vadd.f32 0.0, %v726
        %v728 = vpop.f32.mrf.mxu0
        %v729 = vadd.f32 0.0, %v728
        %730 = vdwg.mxu0
        %731 = vmatpush.bf16.msra.mxu0 %v619
        %732 = vmatpush.bf16.msra.mxu0 %v617
        %733 = vmatpush.bf16.msra.mxu0 %v615
        %734 = vmatpush.bf16.msra.mxu0 %v613
        %735 = vmatpush.bf16.msra.mxu0 %v611
        %736 = vmatpush.bf16.msra.mxu0 %v609
        %737 = vmatpush.bf16.msra.mxu0 %v607
        %738 = vmatpush.bf16.msra.mxu0 %v605
        %739 = vmatmul.bf16.gmra.mxu0 %v390
        %v740 = vpop.f32.mrf.mxu0
        %v741 = vadd.f32 %v727, %v740
        %v742 = vpop.f32.mrf.mxu0
        %v743 = vadd.f32 %v729, %v742
        %744 = vdwg.mxu0
        %745 = vmatpush.bf16.msra.mxu0 %v635
        %746 = vmatpush.bf16.msra.mxu0 %v633
        %747 = vmatpush.bf16.msra.mxu0 %v631
        %748 = vmatpush.bf16.msra.mxu0 %v629
        %749 = vmatpush.bf16.msra.mxu0 %v627
        %750 = vmatpush.bf16.msra.mxu0 %v625
        %751 = vmatpush.bf16.msra.mxu0 %v623
        %752 = vmatpush.bf16.msra.mxu0 %v621
        %753 = vmatmul.bf16.gmra.mxu0 %v391
        %v754 = vpop.f32.mrf.mxu0
        %v755 = vadd.f32 %v741, %v754
        %v756 = vpop.f32.mrf.mxu0
        %v757 = vadd.f32 %v743, %v756
        %758 = vdwg.mxu0
        %759 = vmatpush.bf16.msra.mxu0 %v651
        %760 = vmatpush.bf16.msra.mxu0 %v649
        %761 = vmatpush.bf16.msra.mxu0 %v647
        %762 = vmatpush.bf16.msra.mxu0 %v645
        %763 = vmatpush.bf16.msra.mxu0 %v643
        %764 = vmatpush.bf16.msra.mxu0 %v641
        %765 = vmatpush.bf16.msra.mxu0 %v639
        %766 = vmatpush.bf16.msra.mxu0 %v637
        %767 = vmatmul.bf16.gmra.mxu0 %v392
        %v768 = vpop.f32.mrf.mxu0
        %v769 = vadd.f32 %v755, %v768
        %v770 = vpop.f32.mrf.mxu0
        %v771 = vadd.f32 %v757, %v770
        %772 = vdwg.mxu0
        %773 = vmatpush.bf16.msra.mxu0 %v604
        %774 = vmatpush.bf16.msra.mxu0 %v602
        %775 = vmatpush.bf16.msra.mxu0 %v600
        %776 = vmatpush.bf16.msra.mxu0 %v598
        %777 = vmatpush.bf16.msra.mxu0 %v596
        %778 = vmatpush.bf16.msra.mxu0 %v594
        %779 = vmatpush.bf16.msra.mxu0 %v592
        %780 = vmatpush.bf16.msra.mxu0 %v590
        %781 = vmatmul.bf16.gmra.mxu0 %v389
        %v782 = vpop.f32.mrf.mxu0
        %v783 = vadd.f32 0.0, %v782
        %v784 = vpop.f32.mrf.mxu0
        %v785 = vadd.f32 0.0, %v784
        %786 = vdwg.mxu0
        %787 = vmatpush.bf16.msra.mxu0 %v620
        %788 = vmatpush.bf16.msra.mxu0 %v618
        %789 = vmatpush.bf16.msra.mxu0 %v616
        %790 = vmatpush.bf16.msra.mxu0 %v614
        %791 = vmatpush.bf16.msra.mxu0 %v612
        %792 = vmatpush.bf16.msra.mxu0 %v610
        %793 = vmatpush.bf16.msra.mxu0 %v608
        %794 = vmatpush.bf16.msra.mxu0 %v606
        %795 = vmatmul.bf16.gmra.mxu0 %v390
        %v796 = vpop.f32.mrf.mxu0
        %v797 = vadd.f32 %v783, %v796
        %v798 = vpop.f32.mrf.mxu0
        %v799 = vadd.f32 %v785, %v798
        %800 = vdwg.mxu0
        %801 = vmatpush.bf16.msra.mxu0 %v636
        %802 = vmatpush.bf16.msra.mxu0 %v634
        %803 = vmatpush.bf16.msra.mxu0 %v632
        %804 = vmatpush.bf16.msra.mxu0 %v630
        %805 = vmatpush.bf16.msra.mxu0 %v628
        %806 = vmatpush.bf16.msra.mxu0 %v626
        %807 = vmatpush.bf16.msra.mxu0 %v624
        %808 = vmatpush.bf16.msra.mxu0 %v622
        %809 = vmatmul.bf16.gmra.mxu0 %v391
        %v810 = vpop.f32.mrf.mxu0
        %v811 = vadd.f32 %v797, %v810
        %v812 = vpop.f32.mrf.mxu0
        %v813 = vadd.f32 %v799, %v812
        %814 = vdwg.mxu0
        %815 = vmatpush.bf16.msra.mxu0 %v652
        %816 = vmatpush.bf16.msra.mxu0 %v650
        %817 = vmatpush.bf16.msra.mxu0 %v648
        %818 = vmatpush.bf16.msra.mxu0 %v646
        %819 = vmatpush.bf16.msra.mxu0 %v644
        %820 = vmatpush.bf16.msra.mxu0 %v642
        %821 = vmatpush.bf16.msra.mxu0 %v640
        %822 = vmatpush.bf16.msra.mxu0 %v638
        %823 = vmatmul.bf16.gmra.mxu0 %v392
        %v824 = vpop.f32.mrf.mxu0
        %v825 = vadd.f32 %v811, %v824
        %v826 = vpop.f32.mrf.mxu0
        %v827 = vadd.f32 %v813, %v826
        %828 = vdwg.mxu0
        %v829 = vadd.f32 %v305, %v769
        %v830 = vadd.f32 %v306, %v825
        %v831 = vadd.f32 %v307, %v771
        %v832 = vadd.f32 %v308, %v827
        %833 = vst [vmem:[#allocation2] sm:$0xff] %v829
        %834 = vst [vmem:[#allocation2 + $0x8] sm:$0xff] %v830
        %835 = vst [vmem:[#allocation2 + $0x10] sm:$0xff] %v831
        %836 = vst [vmem:[#allocation2 + $0x18] sm:$0xff] %v832
        %p837 = scmp.eq.s32.totalorder %s21, 3
        // Predicated region
        $region60: #{vae_forward.27} parent=50 // pred_check
          %p838 = pneg %p837
        $region61: #{vae_forward.27} parent=50 // pred_check_branch
          %840 = sbr.rel (%p838) target = $region63
        $region62: #{vae_forward.27} parent=50 // pred_region
          %v841 = vld [vmem:[#allocation2] sm:$0xff]
          %v842 = vld [vmem:[#allocation2 + $0x8] sm:$0xff]
          %v843 = vld [vmem:[#allocation2 + $0x10] sm:$0xff]
          %v844 = vld [vmem:[#allocation2 + $0x18] sm:$0xff]
          %v845 = vld [vmem:[%s283] sm:$0x3]
          %v847 = vperm.slane %v845, 0
          %v848 = vperm.slane %v845, 1
          %v851 = vadd.f32 %v841, %v847
          %v852 = vadd.f32 %v842, %v848
          %v853 = vadd.f32 %v843, %v847
          %v854 = vadd.f32 %v844, %v848
          %v855 = vmax.f32 %v851, 0.0
          %v856 = vmax.f32 %v852, 0.0
          %v857 = vmax.f32 %v853, 0.0
          %v858 = vmax.f32 %v854, 0.0
          %859 = vst [vmem:[%s294] sm:$0xff] %v855
          %860 = vst [vmem:[%s294 + $0x8] sm:$0xff] %v856
          %861 = vst [vmem:[%s294 + $0x10] sm:$0xff] %v857
          %862 = vst [vmem:[%s294 + $0x18] sm:$0xff] %v858
        $region63: #{vae_forward.27} parent=50 // pred_fallthru
          _
        %s863 = smul.u32 2, %s19
        %s864 = smul.u32 2, %s20
        %p865 = scmp.lt.s32.totalorder %s863, 1
        %s866 = scalar_select %p865, %s863, 1
        %p867 = scmp.lt.s32.totalorder %s864, 1
        %s868 = scalar_select %p867, %s864, 1
        %s869 = smul.addr %s866, 2
        %s870 = sadd.s32 %s868, %s869
        %s871 = smul.addr %s870, 8
        %s872 = scalar_lea.vmem %s3, %s871
        // Predicated region
        $region64: #{vae_forward.27} parent=50 // pred_check
          %p873 = pneg %p135
        $region65: #{vae_forward.27} parent=50 // pred_check_branch
          %875 = sbr.rel (%p873) target = $region67
        $region66: #{vae_forward.27} parent=50 // pred_region
          %s876 = smul.u32 2, %s19
          %s877 = smul.u32 2, %s20
        $region67: #{vae_forward.27} parent=50 // pred_fallthru
          _
        // Predicated region
        $region68: #{vae_forward.27} parent=50 // pred_check
          %p878 = pneg %p135
        $region69: #{vae_forward.27} parent=50 // pred_check_branch
          %880 = sbr.rel (%p878) target = $region71
        $region70: #{vae_forward.27} parent=50 // pred_region
          %s881 = smul.u32 2, %s19
          %s882 = smul.u32 2, %s20
          %p883 = scmp.lt.s32.totalorder %s881, 1
          %s884 = scalar_select %p883, %s881, 1
          %p885 = scmp.lt.s32.totalorder %s882, 1
          %s886 = scalar_select %p885, %s882, 1
          %s887 = smul.addr %s884, 2
          %s888 = sadd.s32 %s886, %s887
          %s889 = smul.addr %s888, 8
          %s890 = scalar_lea.vmem %s3, %s889
        $region71: #{vae_forward.27} parent=50 // pred_fallthru
          _
      $region51: #{vae_forward.27} parent=5 // pred_fallthru
        _
      %p891 = scmp.le.s32.totalorder 2, %s9
      // Predicated region
      $region72: #{vae_forward.27} parent=5 // pred_check
        %p892 = pneg %p891
      $region73: #{vae_forward.27} parent=5 // pred_check_branch
        %894 = sbr.rel (%p892) target = $region75
      $region74: #{vae_forward.27} parent=5 // pred_region
        %s895 = ssub.s32 %s9, 2
      $region75: #{vae_forward.27} parent=5 // pred_fallthru
        _
    $region6: #{vae_forward.27} parent=1 // loop_footer
      %s13 = sadd.s32 1, %s9
    $region7: #{vae_forward.27} parent=1 // loop_footer_branch
      %8 = sbr.rel target = $region3
    $region8: #{vae_forward.27} parent=1 // loop_exit
      _

// kernel: vae_forward.31
$region0: #{vae_forward.31}
  #allocation0 [shape = 'u32[]', space=smem, size = 0x4, offset = 0x4, fixed_abs, tag = 'smem constant byte address 0x4 - core index']
  #allocation1 [shape = 'u32[72,128]{1,0:T(1,128)}', space=vmem, size = 0x9000, scoped, tag = 'internal scratch']
  %s0 = inlined_call_operand.vmem [shape: bf16[32,1024], index: 0, kind: input, shape index: {}]
  %s1 = inlined_call_operand.vmem [shape: bf16[1024,128], index: 1, kind: input, shape index: {}]
  %s2 = inlined_call_operand.vmem [shape: f32[1,128], index: 2, kind: input, shape index: {}]
  %s3 = inlined_call_operand.vmem [shape: f32[32,128], index: 3, kind: output, shape index: {}]
  %s4 = sld [smem:[#allocation0]]
  $region22: #{vae_forward.31} parent=0
    _
  %s6 = ssub.s32 1, %s4
  %s7 = scalar_select 0, %s6, %s4
  // Predicated region
  $region2: #{vae_forward.31} parent=0 // pred_check
    _
  $region3: #{vae_forward.31} parent=0 // pred_check_branch
    %9 = sbr.rel (0) target = $region5
  $region4: #{vae_forward.31} parent=0 // pred_region
    _
  $region5: #{vae_forward.31} parent=0 // pred_fallthru
    _
  // Predicated region
  $region6: #{vae_forward.31} parent=0 // pred_check
    _
  $region7: #{vae_forward.31} parent=0 // pred_check_branch
    %11 = sbr.rel (0) target = $region9
  $region8: #{vae_forward.31} parent=0 // pred_region
    _
  $region9: #{vae_forward.31} parent=0 // pred_fallthru
    _
  // Predicated region
  $region10: #{vae_forward.31} parent=0 // pred_check
    _
  $region11: #{vae_forward.31} parent=0 // pred_check_branch
    %13 = sbr.rel (0) target = $region13
  $region12: #{vae_forward.31} parent=0 // pred_region
    _
  $region13: #{vae_forward.31} parent=0 // pred_fallthru
    _
  %v14 = vld [vmem:[%s0] sm:$0xff]
  %v15 = vld [vmem:[%s0 + $0x8] sm:$0xff]
  %v16 = vld [vmem:[%s0 + $0x10] sm:$0xff]
  %v17 = vld [vmem:[%s0 + $0x18] sm:$0xff]
  %v18 = vld [vmem:[%s0 + $0x20] sm:$0xff]
  %v19 = vld [vmem:[%s0 + $0x28] sm:$0xff]
  %v20 = vld [vmem:[%s0 + $0x30] sm:$0xff]
  %v21 = vld [vmem:[%s0 + $0x38] sm:$0xff]
  %v22 = vld [vmem:[%s0 + $0x40] sm:$0xff]
  %v23 = vld [vmem:[%s0 + $0x48] sm:$0xff]
  %v24 = vld [vmem:[%s0 + $0x50] sm:$0xff]
  %v25 = vld [vmem:[%s0 + $0x58] sm:$0xff]
  %v26 = vld [vmem:[%s0 + $0x60] sm:$0xff]
  %v27 = vld [vmem:[%s0 + $0x68] sm:$0xff]
  %v28 = vld [vmem:[%s0 + $0x70] sm:$0xff]
  %v29 = vld [vmem:[%s0 + $0x78] sm:$0xff]
  %v30 = vld [vmem:[%s1] sm:$0xf]
  %v31 = vld [vmem:[%s1 + $0x4] sm:$0xf]
  %v32 = vld [vmem:[%s1 + $0x8] sm:$0xf]
  %v33 = vld [vmem:[%s1 + $0xc] sm:$0xf]
  %v34 = vld [vmem:[%s1 + $0x10] sm:$0xf]
  %v35 = vld [vmem:[%s1 + $0x14] sm:$0xf]
  %v36 = vld [vmem:[%s1 + $0x18] sm:$0xf]
  %v37 = vld [vmem:[%s1 + $0x1c] sm:$0xf]
  %v38 = vld [vmem:[%s1 + $0x20] sm:$0xf]
  %v39 = vld [vmem:[%s1 + $0x24] sm:$0xf]
  %v40 = vld [vmem:[%s1 + $0x28] sm:$0xf]
  %v41 = vld [vmem:[%s1 + $0x2c] sm:$0xf]
  %v42 = vld [vmem:[%s1 + $0x30] sm:$0xf]
  %v43 = vld [vmem:[%s1 + $0x34] sm:$0xf]
  %v44 = vld [vmem:[%s1 + $0x38] sm:$0xf]
  %v45 = vld [vmem:[%s1 + $0x3c] sm:$0xf]
  %v46 = vld [vmem:[%s1 + $0x40] sm:$0xf]
  %v47 = vld [vmem:[%s1 + $0x44] sm:$0xf]
  %v48 = vld [vmem:[%s1 + $0x48] sm:$0xf]
  %v49 = vld [vmem:[%s1 + $0x4c] sm:$0xf]
  %v50 = vld [vmem:[%s1 + $0x50] sm:$0xf]
  %v51 = vld [vmem:[%s1 + $0x54] sm:$0xf]
  %v52 = vld [vmem:[%s1 + $0x58] sm:$0xf]
  %v53 = vld [vmem:[%s1 + $0x5c] sm:$0xf]
  %v54 = vld [vmem:[%s1 + $0x60] sm:$0xf]
  %v55 = vld [vmem:[%s1 + $0x64] sm:$0xf]
  %v56 = vld [vmem:[%s1 + $0x68] sm:$0xf]
  %v57 = vld [vmem:[%s1 + $0x6c] sm:$0xf]
  %v58 = vld [vmem:[%s1 + $0x70] sm:$0xf]
  %v59 = vld [vmem:[%s1 + $0x74] sm:$0xf]
  %v60 = vld [vmem:[%s1 + $0x78] sm:$0xf]
  %v61 = vld [vmem:[%s1 + $0x7c] sm:$0xf]
  %v62 = vld [vmem:[%s1 + $0x80] sm:$0xf]
  %v63 = vld [vmem:[%s1 + $0x84] sm:$0xf]
  %v64 = vld [vmem:[%s1 + $0x88] sm:$0xf]
  %v65 = vld [vmem:[%s1 + $0x8c] sm:$0xf]
  %v66 = vld [vmem:[%s1 + $0x90] sm:$0xf]
  %v67 = vld [vmem:[%s1 + $0x94] sm:$0xf]
  %v68 = vld [vmem:[%s1 + $0x98] sm:$0xf]
  %v69 = vld [vmem:[%s1 + $0x9c] sm:$0xf]
  %v70 = vld [vmem:[%s1 + $0xa0] sm:$0xf]
  %v71 = vld [vmem:[%s1 + $0xa4] sm:$0xf]
  %v72 = vld [vmem:[%s1 + $0xa8] sm:$0xf]
  %v73 = vld [vmem:[%s1 + $0xac] sm:$0xf]
  %v74 = vld [vmem:[%s1 + $0xb0] sm:$0xf]
  %v75 = vld [vmem:[%s1 + $0xb4] sm:$0xf]
  %v76 = vld [vmem:[%s1 + $0xb8] sm:$0xf]
  %v77 = vld [vmem:[%s1 + $0xbc] sm:$0xf]
  %v78 = vld [vmem:[%s1 + $0xc0] sm:$0xf]
  %v79 = vld [vmem:[%s1 + $0xc4] sm:$0xf]
  %v80 = vld [vmem:[%s1 + $0xc8] sm:$0xf]
  %v81 = vld [vmem:[%s1 + $0xcc] sm:$0xf]
  %v82 = vld [vmem:[%s1 + $0xd0] sm:$0xf]
  %v83 = vld [vmem:[%s1 + $0xd4] sm:$0xf]
  %v84 = vld [vmem:[%s1 + $0xd8] sm:$0xf]
  %v85 = vld [vmem:[%s1 + $0xdc] sm:$0xf]
  %v86 = vld [vmem:[%s1 + $0xe0] sm:$0xf]
  %v87 = vld [vmem:[%s1 + $0xe4] sm:$0xf]
  %v88 = vld [vmem:[%s1 + $0xe8] sm:$0xf]
  %v89 = vld [vmem:[%s1 + $0xec] sm:$0xf]
  %v90 = vld [vmem:[%s1 + $0xf0] sm:$0xf]
  %v91 = vld [vmem:[%s1 + $0xf4] sm:$0xf]
  %v92 = vld [vmem:[%s1 + $0xf8] sm:$0xf]
  %v93 = vld [vmem:[%s1 + $0xfc] sm:$0xf]
  %v94 = vld [vmem:[%s1 + $0x100] sm:$0xf]
  %v95 = vld [vmem:[%s1 + $0x104] sm:$0xf]
  %v96 = vld [vmem:[%s1 + $0x108] sm:$0xf]
  %v97 = vld [vmem:[%s1 + $0x10c] sm:$0xf]
  %v98 = vld [vmem:[%s1 + $0x110] sm:$0xf]
  %v99 = vld [vmem:[%s1 + $0x114] sm:$0xf]
  %v100 = vld [vmem:[%s1 + $0x118] sm:$0xf]
  %v101 = vld [vmem:[%s1 + $0x11c] sm:$0xf]
  %v102 = vld [vmem:[%s1 + $0x120] sm:$0xf]
  %v103 = vld [vmem:[%s1 + $0x124] sm:$0xf]
  %v104 = vld [vmem:[%s1 + $0x128] sm:$0xf]
  %v105 = vld [vmem:[%s1 + $0x12c] sm:$0xf]
  %v106 = vld [vmem:[%s1 + $0x130] sm:$0xf]
  %v107 = vld [vmem:[%s1 + $0x134] sm:$0xf]
  %v108 = vld [vmem:[%s1 + $0x138] sm:$0xf]
  %v109 = vld [vmem:[%s1 + $0x13c] sm:$0xf]
  %v110 = vld [vmem:[%s1 + $0x140] sm:$0xf]
  %v111 = vld [vmem:[%s1 + $0x144] sm:$0xf]
  %v112 = vld [vmem:[%s1 + $0x148] sm:$0xf]
  %v113 = vld [vmem:[%s1 + $0x14c] sm:$0xf]
  %v114 = vld [vmem:[%s1 + $0x150] sm:$0xf]
  %v115 = vld [vmem:[%s1 + $0x154] sm:$0xf]
  %v116 = vld [vmem:[%s1 + $0x158] sm:$0xf]
  %v117 = vld [vmem:[%s1 + $0x15c] sm:$0xf]
  %v118 = vld [vmem:[%s1 + $0x160] sm:$0xf]
  %v119 = vld [vmem:[%s1 + $0x164] sm:$0xf]
  %v120 = vld [vmem:[%s1 + $0x168] sm:$0xf]
  %v121 = vld [vmem:[%s1 + $0x16c] sm:$0xf]
  %v122 = vld [vmem:[%s1 + $0x170] sm:$0xf]
  %v123 = vld [vmem:[%s1 + $0x174] sm:$0xf]
  %v124 = vld [vmem:[%s1 + $0x178] sm:$0xf]
  %v125 = vld [vmem:[%s1 + $0x17c] sm:$0xf]
  %v126 = vld [vmem:[%s1 + $0x180] sm:$0xf]
  %v127 = vld [vmem:[%s1 + $0x184] sm:$0xf]
  %v128 = vld [vmem:[%s1 + $0x188] sm:$0xf]
  %v129 = vld [vmem:[%s1 + $0x18c] sm:$0xf]
  %v130 = vld [vmem:[%s1 + $0x190] sm:$0xf]
  %v131 = vld [vmem:[%s1 + $0x194] sm:$0xf]
  %v132 = vld [vmem:[%s1 + $0x198] sm:$0xf]
  %v133 = vld [vmem:[%s1 + $0x19c] sm:$0xf]
  %v134 = vld [vmem:[%s1 + $0x1a0] sm:$0xf]
  %v135 = vld [vmem:[%s1 + $0x1a4] sm:$0xf]
  %v136 = vld [vmem:[%s1 + $0x1a8] sm:$0xf]
  %v137 = vld [vmem:[%s1 + $0x1ac] sm:$0xf]
  %v138 = vld [vmem:[%s1 + $0x1b0] sm:$0xf]
  %v139 = vld [vmem:[%s1 + $0x1b4] sm:$0xf]
  %v140 = vld [vmem:[%s1 + $0x1b8] sm:$0xf]
  %v141 = vld [vmem:[%s1 + $0x1bc] sm:$0xf]
  %v142 = vld [vmem:[%s1 + $0x1c0] sm:$0xf]
  %v143 = vld [vmem:[%s1 + $0x1c4] sm:$0xf]
  %v144 = vld [vmem:[%s1 + $0x1c8] sm:$0xf]
  %v145 = vld [vmem:[%s1 + $0x1cc] sm:$0xf]
  %v146 = vld [vmem:[%s1 + $0x1d0] sm:$0xf]
  %v147 = vld [vmem:[%s1 + $0x1d4] sm:$0xf]
  %v148 = vld [vmem:[%s1 + $0x1d8] sm:$0xf]
  %v149 = vld [vmem:[%s1 + $0x1dc] sm:$0xf]
  %v150 = vld [vmem:[%s1 + $0x1e0] sm:$0xf]
  %v151 = vld [vmem:[%s1 + $0x1e4] sm:$0xf]
  %v152 = vld [vmem:[%s1 + $0x1e8] sm:$0xf]
  %v153 = vld [vmem:[%s1 + $0x1ec] sm:$0xf]
  %v154 = vld [vmem:[%s1 + $0x1f0] sm:$0xf]
  %v155 = vld [vmem:[%s1 + $0x1f4] sm:$0xf]
  %v156 = vld [vmem:[%s1 + $0x1f8] sm:$0xf]
  %v157 = vld [vmem:[%s1 + $0x1fc] sm:$0xf]
  %v158 = vld [vmem:[%s2] sm:$0x1]
  %v160 = vperm.slane %v158, 0
  %v178 = vunpack.c.l.b16 %v14
  %v179 = vunpack.c.h.b16 %v14
  %v180 = vunpack.c.l.b16 %v15
  %v181 = vunpack.c.h.b16 %v15
  %v182 = vunpack.c.l.b16 %v16
  %v183 = vunpack.c.h.b16 %v16
  %v184 = vunpack.c.l.b16 %v17
  %v185 = vunpack.c.h.b16 %v17
  %v186 = vunpack.c.l.b16 %v18
  %v187 = vunpack.c.h.b16 %v18
  %v188 = vunpack.c.l.b16 %v19
  %v189 = vunpack.c.h.b16 %v19
  %v190 = vunpack.c.l.b16 %v20
  %v191 = vunpack.c.h.b16 %v20
  %v192 = vunpack.c.l.b16 %v21
  %v193 = vunpack.c.h.b16 %v21
  %v194 = vunpack.c.l.b16 %v22
  %v195 = vunpack.c.h.b16 %v22
  %v196 = vunpack.c.l.b16 %v23
  %v197 = vunpack.c.h.b16 %v23
  %v198 = vunpack.c.l.b16 %v24
  %v199 = vunpack.c.h.b16 %v24
  %v200 = vunpack.c.l.b16 %v25
  %v201 = vunpack.c.h.b16 %v25
  %v202 = vunpack.c.l.b16 %v26
  %v203 = vunpack.c.h.b16 %v26
  %v204 = vunpack.c.l.b16 %v27
  %v205 = vunpack.c.h.b16 %v27
  %v206 = vunpack.c.l.b16 %v28
  %v207 = vunpack.c.h.b16 %v28
  %v208 = vunpack.c.l.b16 %v29
  %v209 = vunpack.c.h.b16 %v29
  %v210 = vpack.c.b16 %v186, %v178
  %v211 = vpack.c.b16 %v187, %v179
  %v212 = vpack.c.b16 %v188, %v180
  %v213 = vpack.c.b16 %v189, %v181
  %v214 = vpack.c.b16 %v190, %v182
  %v215 = vpack.c.b16 %v191, %v183
  %v216 = vpack.c.b16 %v192, %v184
  %v217 = vpack.c.b16 %v193, %v185
  %v218 = vpack.c.b16 %v202, %v194
  %v219 = vpack.c.b16 %v203, %v195
  %v220 = vpack.c.b16 %v204, %v196
  %v221 = vpack.c.b16 %v205, %v197
  %v222 = vpack.c.b16 %v206, %v198
  %v223 = vpack.c.b16 %v207, %v199
  %v224 = vpack.c.b16 %v208, %v200
  %v225 = vpack.c.b16 %v209, %v201
  %v370 = vunpack.c.l.b16 %v30
  %v371 = vunpack.c.l.b16 %v31
  %v372 = vunpack.c.l.b16 %v32
  %v373 = vunpack.c.l.b16 %v33
  %v374 = vunpack.c.l.b16 %v34
  %v375 = vunpack.c.l.b16 %v35
  %v376 = vunpack.c.l.b16 %v36
  %v377 = vunpack.c.l.b16 %v37
  %v378 = vunpack.c.l.b16 %v38
  %v379 = vunpack.c.l.b16 %v39
  %v380 = vunpack.c.l.b16 %v40
  %v381 = vunpack.c.l.b16 %v41
  %v382 = vunpack.c.l.b16 %v42
  %v383 = vunpack.c.l.b16 %v43
  %v384 = vunpack.c.l.b16 %v44
  %v385 = vunpack.c.l.b16 %v45
  %v386 = vunpack.c.l.b16 %v46
  %v387 = vunpack.c.l.b16 %v47
  %v388 = vunpack.c.l.b16 %v48
  %v389 = vunpack.c.l.b16 %v49
  %v390 = vunpack.c.l.b16 %v50
  %v391 = vunpack.c.l.b16 %v51
  %v392 = vunpack.c.l.b16 %v52
  %v393 = vunpack.c.l.b16 %v53
  %v394 = vunpack.c.l.b16 %v54
  %v395 = vunpack.c.l.b16 %v55
  %v396 = vunpack.c.l.b16 %v56
  %v397 = vunpack.c.l.b16 %v57
  %v398 = vunpack.c.l.b16 %v58
  %v399 = vunpack.c.l.b16 %v59
  %v400 = vunpack.c.l.b16 %v60
  %v401 = vunpack.c.l.b16 %v61
  %v402 = vunpack.c.l.b16 %v62
  %v403 = vunpack.c.l.b16 %v63
  %v404 = vunpack.c.l.b16 %v64
  %v405 = vunpack.c.l.b16 %v65
  %v406 = vunpack.c.l.b16 %v66
  %v407 = vunpack.c.l.b16 %v67
  %v408 = vunpack.c.l.b16 %v68
  %v409 = vunpack.c.l.b16 %v69
  %v410 = vunpack.c.l.b16 %v70
  %v411 = vunpack.c.l.b16 %v71
  %v412 = vunpack.c.l.b16 %v72
  %v413 = vunpack.c.l.b16 %v73
  %v414 = vunpack.c.l.b16 %v74
  %v415 = vunpack.c.l.b16 %v75
  %v416 = vunpack.c.l.b16 %v76
  %v417 = vunpack.c.l.b16 %v77
  %v418 = vunpack.c.l.b16 %v78
  %v419 = vunpack.c.l.b16 %v79
  %v420 = vunpack.c.l.b16 %v80
  %v421 = vunpack.c.l.b16 %v81
  %v422 = vunpack.c.l.b16 %v82
  %v423 = vunpack.c.l.b16 %v83
  %v424 = vunpack.c.l.b16 %v84
  %v425 = vunpack.c.l.b16 %v85
  %v426 = vunpack.c.l.b16 %v86
  %v427 = vunpack.c.l.b16 %v87
  %v428 = vunpack.c.l.b16 %v88
  %v429 = vunpack.c.l.b16 %v89
  %v430 = vunpack.c.l.b16 %v90
  %v431 = vunpack.c.l.b16 %v91
  %v432 = vunpack.c.l.b16 %v92
  %v433 = vunpack.c.l.b16 %v93
  %v434 = vunpack.c.l.b16 %v94
  %v435 = vunpack.c.l.b16 %v95
  %v436 = vunpack.c.l.b16 %v96
  %v437 = vunpack.c.l.b16 %v97
  %v438 = vunpack.c.l.b16 %v98
  %v439 = vunpack.c.l.b16 %v99
  %v440 = vunpack.c.l.b16 %v100
  %v441 = vunpack.c.l.b16 %v101
  %v442 = vunpack.c.l.b16 %v102
  %v443 = vunpack.c.l.b16 %v103
  %v444 = vunpack.c.l.b16 %v104
  %v445 = vunpack.c.l.b16 %v105
  %v446 = vunpack.c.l.b16 %v106
  %v447 = vunpack.c.l.b16 %v107
  %v448 = vunpack.c.l.b16 %v108
  %v449 = vunpack.c.l.b16 %v109
  %v450 = vunpack.c.l.b16 %v110
  %v451 = vunpack.c.l.b16 %v111
  %v452 = vunpack.c.l.b16 %v112
  %v453 = vunpack.c.l.b16 %v113
  %v454 = vunpack.c.l.b16 %v114
  %v455 = vunpack.c.l.b16 %v115
  %v456 = vunpack.c.l.b16 %v116
  %v457 = vunpack.c.l.b16 %v117
  %v458 = vunpack.c.l.b16 %v118
  %v459 = vunpack.c.l.b16 %v119
  %v460 = vunpack.c.l.b16 %v120
  %v461 = vunpack.c.l.b16 %v121
  %v462 = vunpack.c.l.b16 %v122
  %v463 = vunpack.c.l.b16 %v123
  %v464 = vunpack.c.l.b16 %v124
  %v465 = vunpack.c.l.b16 %v125
  %v466 = vunpack.c.l.b16 %v126
  %v467 = vunpack.c.l.b16 %v127
  %v468 = vunpack.c.l.b16 %v128
  %v469 = vunpack.c.l.b16 %v129
  %v470 = vunpack.c.l.b16 %v130
  %v471 = vunpack.c.l.b16 %v131
  %v472 = vunpack.c.l.b16 %v132
  %v473 = vunpack.c.l.b16 %v133
  %v474 = vunpack.c.l.b16 %v134
  %v475 = vunpack.c.l.b16 %v135
  %v476 = vunpack.c.l.b16 %v136
  %v477 = vunpack.c.l.b16 %v137
  %v478 = vunpack.c.l.b16 %v138
  %v479 = vunpack.c.l.b16 %v139
  %v480 = vunpack.c.l.b16 %v140
  %v481 = vunpack.c.l.b16 %v141
  %v482 = vunpack.c.l.b16 %v142
  %v483 = vunpack.c.l.b16 %v143
  %v484 = vunpack.c.l.b16 %v144
  %v485 = vunpack.c.l.b16 %v145
  %v486 = vunpack.c.l.b16 %v146
  %v487 = vunpack.c.l.b16 %v147
  %v488 = vunpack.c.l.b16 %v148
  %v489 = vunpack.c.l.b16 %v149
  %v490 = vunpack.c.l.b16 %v150
  %v491 = vunpack.c.l.b16 %v151
  %v492 = vunpack.c.l.b16 %v152
  %v493 = vunpack.c.l.b16 %v153
  %v494 = vunpack.c.l.b16 %v154
  %v495 = vunpack.c.l.b16 %v155
  %v496 = vunpack.c.l.b16 %v156
  %v497 = vunpack.c.l.b16 %v157
  %v498 = vpack.c.b16 %v371, %v370
  %v499 = vpack.c.b16 %v373, %v372
  %v500 = vpack.c.b16 %v375, %v374
  %v501 = vpack.c.b16 %v377, %v376
  %v502 = vpack.c.b16 %v379, %v378
  %v503 = vpack.c.b16 %v381, %v380
  %v504 = vpack.c.b16 %v383, %v382
  %v505 = vpack.c.b16 %v385, %v384
  %v506 = vpack.c.b16 %v387, %v386
  %v507 = vpack.c.b16 %v389, %v388
  %v508 = vpack.c.b16 %v391, %v390
  %v509 = vpack.c.b16 %v393, %v392
  %v510 = vpack.c.b16 %v395, %v394
  %v511 = vpack.c.b16 %v397, %v396
  %v512 = vpack.c.b16 %v399, %v398
  %v513 = vpack.c.b16 %v401, %v400
  %v514 = vpack.c.b16 %v403, %v402
  %v515 = vpack.c.b16 %v405, %v404
  %v516 = vpack.c.b16 %v407, %v406
  %v517 = vpack.c.b16 %v409, %v408
  %v518 = vpack.c.b16 %v411, %v410
  %v519 = vpack.c.b16 %v413, %v412
  %v520 = vpack.c.b16 %v415, %v414
  %v521 = vpack.c.b16 %v417, %v416
  %v522 = vpack.c.b16 %v419, %v418
  %v523 = vpack.c.b16 %v421, %v420
  %v524 = vpack.c.b16 %v423, %v422
  %v525 = vpack.c.b16 %v425, %v424
  %v526 = vpack.c.b16 %v427, %v426
  %v527 = vpack.c.b16 %v429, %v428
  %v528 = vpack.c.b16 %v431, %v430
  %v529 = vpack.c.b16 %v433, %v432
  %v530 = vpack.c.b16 %v435, %v434
  %v531 = vpack.c.b16 %v437, %v436
  %v532 = vpack.c.b16 %v439, %v438
  %v533 = vpack.c.b16 %v441, %v440
  %v534 = vpack.c.b16 %v443, %v442
  %v535 = vpack.c.b16 %v445, %v444
  %v536 = vpack.c.b16 %v447, %v446
  %v537 = vpack.c.b16 %v449, %v448
  %v538 = vpack.c.b16 %v451, %v450
  %v539 = vpack.c.b16 %v453, %v452
  %v540 = vpack.c.b16 %v455, %v454
  %v541 = vpack.c.b16 %v457, %v456
  %v542 = vpack.c.b16 %v459, %v458
  %v543 = vpack.c.b16 %v461, %v460
  %v544 = vpack.c.b16 %v463, %v462
  %v545 = vpack.c.b16 %v465, %v464
  %v546 = vpack.c.b16 %v467, %v466
  %v547 = vpack.c.b16 %v469, %v468
  %v548 = vpack.c.b16 %v471, %v470
  %v549 = vpack.c.b16 %v473, %v472
  %v550 = vpack.c.b16 %v475, %v474
  %v551 = vpack.c.b16 %v477, %v476
  %v552 = vpack.c.b16 %v479, %v478
  %v553 = vpack.c.b16 %v481, %v480
  %v554 = vpack.c.b16 %v483, %v482
  %v555 = vpack.c.b16 %v485, %v484
  %v556 = vpack.c.b16 %v487, %v486
  %v557 = vpack.c.b16 %v489, %v488
  %v558 = vpack.c.b16 %v491, %v490
  %v559 = vpack.c.b16 %v493, %v492
  %v560 = vpack.c.b16 %v495, %v494
  %v561 = vpack.c.b16 %v497, %v496
  %626 = vmatpush.bf16.msra.mxu0 %v505
  %627 = vmatpush.bf16.msra.mxu0 %v504
  %628 = vmatpush.bf16.msra.mxu0 %v503
  %629 = vmatpush.bf16.msra.mxu0 %v502
  %630 = vmatpush.bf16.msra.mxu0 %v501
  %631 = vmatpush.bf16.msra.mxu0 %v500
  %632 = vmatpush.bf16.msra.mxu0 %v499
  %633 = vmatpush.bf16.msra.mxu0 %v498
  %634 = vmatmul.bf16.gmra.mxu0 %v210
  %v635 = vpop.f32.mrf.mxu0
  %v636 = vadd.f32 %v160, %v635
  %v637 = vpop.f32.mrf.mxu0
  %v638 = vadd.f32 %v160, %v637
  %639 = vmatmul.bf16.gmra.mxu0 %v218
  %v640 = vpop.f32.mrf.mxu0
  %v641 = vadd.f32 %v160, %v640
  %v642 = vpop.f32.mrf.mxu0
  %v643 = vadd.f32 %v160, %v642
  %644 = vdwg.mxu0
  %645 = vmatpush.bf16.msra.mxu0 %v513
  %646 = vmatpush.bf16.msra.mxu0 %v512
  %647 = vmatpush.bf16.msra.mxu0 %v511
  %648 = vmatpush.bf16.msra.mxu0 %v510
  %649 = vmatpush.bf16.msra.mxu0 %v509
  %650 = vmatpush.bf16.msra.mxu0 %v508
  %651 = vmatpush.bf16.msra.mxu0 %v507
  %652 = vmatpush.bf16.msra.mxu0 %v506
  %653 = vmatmul.bf16.gmra.mxu0 %v211
  %v654 = vpop.f32.mrf.mxu0
  %v655 = vadd.f32 %v636, %v654
  %v656 = vpop.f32.mrf.mxu0
  %v657 = vadd.f32 %v638, %v656
  %658 = vmatmul.bf16.gmra.mxu0 %v219
  %v659 = vpop.f32.mrf.mxu0
  %v660 = vadd.f32 %v641, %v659
  %v661 = vpop.f32.mrf.mxu0
  %v662 = vadd.f32 %v643, %v661
  %663 = vdwg.mxu0
  %664 = vmatpush.bf16.msra.mxu0 %v521
  %665 = vmatpush.bf16.msra.mxu0 %v520
  %666 = vmatpush.bf16.msra.mxu0 %v519
  %667 = vmatpush.bf16.msra.mxu0 %v518
  %668 = vmatpush.bf16.msra.mxu0 %v517
  %669 = vmatpush.bf16.msra.mxu0 %v516
  %670 = vmatpush.bf16.msra.mxu0 %v515
  %671 = vmatpush.bf16.msra.mxu0 %v514
  %672 = vmatmul.bf16.gmra.mxu0 %v212
  %v673 = vpop.f32.mrf.mxu0
  %v674 = vadd.f32 %v655, %v673
  %v675 = vpop.f32.mrf.mxu0
  %v676 = vadd.f32 %v657, %v675
  %677 = vmatmul.bf16.gmra.mxu0 %v220
  %v678 = vpop.f32.mrf.mxu0
  %v679 = vadd.f32 %v660, %v678
  %v680 = vpop.f32.mrf.mxu0
  %v681 = vadd.f32 %v662, %v680
  %682 = vdwg.mxu0
  %683 = vmatpush.bf16.msra.mxu0 %v529
  %684 = vmatpush.bf16.msra.mxu0 %v528
  %685 = vmatpush.bf16.msra.mxu0 %v527
  %686 = vmatpush.bf16.msra.mxu0 %v526
  %687 = vmatpush.bf16.msra.mxu0 %v525
  %688 = vmatpush.bf16.msra.mxu0 %v524
  %689 = vmatpush.bf16.msra.mxu0 %v523
  %690 = vmatpush.bf16.msra.mxu0 %v522
  %691 = vmatmul.bf16.gmra.mxu0 %v213
  %v692 = vpop.f32.mrf.mxu0
  %v693 = vadd.f32 %v674, %v692
  %v694 = vpop.f32.mrf.mxu0
  %v695 = vadd.f32 %v676, %v694
  %696 = vmatmul.bf16.gmra.mxu0 %v221
  %v697 = vpop.f32.mrf.mxu0
  %v698 = vadd.f32 %v679, %v697
  %v699 = vpop.f32.mrf.mxu0
  %v700 = vadd.f32 %v681, %v699
  %701 = vdwg.mxu0
  %702 = vmatpush.bf16.msra.mxu0 %v537
  %703 = vmatpush.bf16.msra.mxu0 %v536
  %704 = vmatpush.bf16.msra.mxu0 %v535
  %705 = vmatpush.bf16.msra.mxu0 %v534
  %706 = vmatpush.bf16.msra.mxu0 %v533
  %707 = vmatpush.bf16.msra.mxu0 %v532
  %708 = vmatpush.bf16.msra.mxu0 %v531
  %709 = vmatpush.bf16.msra.mxu0 %v530
  %710 = vmatmul.bf16.gmra.mxu0 %v214
  %v711 = vpop.f32.mrf.mxu0
  %v712 = vadd.f32 %v693, %v711
  %v713 = vpop.f32.mrf.mxu0
  %v714 = vadd.f32 %v695, %v713
  %715 = vmatmul.bf16.gmra.mxu0 %v222
  %v716 = vpop.f32.mrf.mxu0
  %v717 = vadd.f32 %v698, %v716
  %v718 = vpop.f32.mrf.mxu0
  %v719 = vadd.f32 %v700, %v718
  %720 = vdwg.mxu0
  %721 = vmatpush.bf16.msra.mxu0 %v545
  %722 = vmatpush.bf16.msra.mxu0 %v544
  %723 = vmatpush.bf16.msra.mxu0 %v543
  %724 = vmatpush.bf16.msra.mxu0 %v542
  %725 = vmatpush.bf16.msra.mxu0 %v541
  %726 = vmatpush.bf16.msra.mxu0 %v540
  %727 = vmatpush.bf16.msra.mxu0 %v539
  %728 = vmatpush.bf16.msra.mxu0 %v538
  %729 = vmatmul.bf16.gmra.mxu0 %v215
  %v730 = vpop.f32.mrf.mxu0
  %v731 = vadd.f32 %v712, %v730
  %v732 = vpop.f32.mrf.mxu0
  %v733 = vadd.f32 %v714, %v732
  %734 = vmatmul.bf16.gmra.mxu0 %v223
  %v735 = vpop.f32.mrf.mxu0
  %v736 = vadd.f32 %v717, %v735
  %v737 = vpop.f32.mrf.mxu0
  %v738 = vadd.f32 %v719, %v737
  %739 = vdwg.mxu0
  %740 = vmatpush.bf16.msra.mxu0 %v553
  %741 = vmatpush.bf16.msra.mxu0 %v552
  %742 = vmatpush.bf16.msra.mxu0 %v551
  %743 = vmatpush.bf16.msra.mxu0 %v550
  %744 = vmatpush.bf16.msra.mxu0 %v549
  %745 = vmatpush.bf16.msra.mxu0 %v548
  %746 = vmatpush.bf16.msra.mxu0 %v547
  %747 = vmatpush.bf16.msra.mxu0 %v546
  %748 = vmatmul.bf16.gmra.mxu0 %v216
  %v749 = vpop.f32.mrf.mxu0
  %v750 = vadd.f32 %v731, %v749
  %v751 = vpop.f32.mrf.mxu0
  %v752 = vadd.f32 %v733, %v751
  %753 = vmatmul.bf16.gmra.mxu0 %v224
  %v754 = vpop.f32.mrf.mxu0
  %v755 = vadd.f32 %v736, %v754
  %v756 = vpop.f32.mrf.mxu0
  %v757 = vadd.f32 %v738, %v756
  %758 = vdwg.mxu0
  %759 = vmatpush.bf16.msra.mxu0 %v561
  %760 = vmatpush.bf16.msra.mxu0 %v560
  %761 = vmatpush.bf16.msra.mxu0 %v559
  %762 = vmatpush.bf16.msra.mxu0 %v558
  %763 = vmatpush.bf16.msra.mxu0 %v557
  %764 = vmatpush.bf16.msra.mxu0 %v556
  %765 = vmatpush.bf16.msra.mxu0 %v555
  %766 = vmatpush.bf16.msra.mxu0 %v554
  %767 = vmatmul.bf16.gmra.mxu0 %v217
  %v768 = vpop.f32.mrf.mxu0
  %v769 = vadd.f32 %v750, %v768
  %v770 = vpop.f32.mrf.mxu0
  %v771 = vadd.f32 %v752, %v770
  %772 = vmatmul.bf16.gmra.mxu0 %v225
  %v773 = vpop.f32.mrf.mxu0
  %v774 = vadd.f32 %v755, %v773
  %v775 = vpop.f32.mrf.mxu0
  %v776 = vadd.f32 %v757, %v775
  %777 = vdwg.mxu0
  %v778 = vmax.f32 %v769, 0.0
  %v779 = vmax.f32 %v771, 0.0
  %v780 = vmax.f32 %v774, 0.0
  %v781 = vmax.f32 %v776, 0.0
  %782 = vst [vmem:[%s3] sm:$0xff] %v778
  %783 = vst [vmem:[%s3 + $0x8] sm:$0xff] %v779
  %784 = vst [vmem:[%s3 + $0x10] sm:$0xff] %v780
  %785 = vst [vmem:[%s3 + $0x18] sm:$0xff] %v781
  // Predicated region
  $region14: #{vae_forward.31} parent=0 // pred_check
    _
  $region15: #{vae_forward.31} parent=0 // pred_check_branch
    %787 = sbr.rel (0) target = $region17
  $region16: #{vae_forward.31} parent=0 // pred_region
    _
  $region17: #{vae_forward.31} parent=0 // pred_fallthru
    _
  // Predicated region
  $region18: #{vae_forward.31} parent=0 // pred_check
    _
  $region19: #{vae_forward.31} parent=0 // pred_check_branch
    %789 = sbr.rel (0) target = $region21
  $region20: #{vae_forward.31} parent=0 // pred_region
    _
  $region21: #{vae_forward.31} parent=0 // pred_fallthru
    _

// kernel: vae_forward.35
$region0: #{vae_forward.35}
  #allocation0 [shape = 'u32[]', space=smem, size = 0x4, offset = 0x4, fixed_abs, tag = 'smem constant byte address 0x4 - core index']
  #allocation1 [shape = 'u32[72,128]{1,0:T(1,128)}', space=vmem, size = 0x9000, scoped, tag = 'internal scratch']
  %s0 = inlined_call_operand.vmem [shape: bf16[128,512], index: 0, kind: input, shape index: {}]
  %s1 = inlined_call_operand.vmem [shape: bf16[512,128], index: 1, kind: input, shape index: {}]
  %s2 = inlined_call_operand.vmem [shape: f32[1,128], index: 2, kind: input, shape index: {}]
  %s3 = inlined_call_operand.vmem [shape: f32[128,128], index: 3, kind: output, shape index: {}]
  %s4 = sld [smem:[#allocation0]]
  $region22: #{vae_forward.35} parent=0
    _
  %s6 = ssub.s32 1, %s4
  %s7 = scalar_select 0, %s6, %s4
  // Predicated region
  $region2: #{vae_forward.35} parent=0 // pred_check
    _
  $region3: #{vae_forward.35} parent=0 // pred_check_branch
    %9 = sbr.rel (0) target = $region5
  $region4: #{vae_forward.35} parent=0 // pred_region
    _
  $region5: #{vae_forward.35} parent=0 // pred_fallthru
    _
  // Predicated region
  $region6: #{vae_forward.35} parent=0 // pred_check
    _
  $region7: #{vae_forward.35} parent=0 // pred_check_branch
    %11 = sbr.rel (0) target = $region9
  $region8: #{vae_forward.35} parent=0 // pred_region
    _
  $region9: #{vae_forward.35} parent=0 // pred_fallthru
    _
  // Predicated region
  $region10: #{vae_forward.35} parent=0 // pred_check
    _
  $region11: #{vae_forward.35} parent=0 // pred_check_branch
    %13 = sbr.rel (0) target = $region13
  $region12: #{vae_forward.35} parent=0 // pred_region
    _
  $region13: #{vae_forward.35} parent=0 // pred_fallthru
    _
  %v14 = vld [vmem:[%s0] sm:$0xff]
  %v15 = vld [vmem:[%s0 + $0x8] sm:$0xff]
  %v16 = vld [vmem:[%s0 + $0x10] sm:$0xff]
  %v17 = vld [vmem:[%s0 + $0x18] sm:$0xff]
  %v18 = vld [vmem:[%s0 + $0x20] sm:$0xff]
  %v19 = vld [vmem:[%s0 + $0x28] sm:$0xff]
  %v20 = vld [vmem:[%s0 + $0x30] sm:$0xff]
  %v21 = vld [vmem:[%s0 + $0x38] sm:$0xff]
  %v22 = vld [vmem:[%s0 + $0x40] sm:$0xff]
  %v23 = vld [vmem:[%s0 + $0x48] sm:$0xff]
  %v24 = vld [vmem:[%s0 + $0x50] sm:$0xff]
  %v25 = vld [vmem:[%s0 + $0x58] sm:$0xff]
  %v26 = vld [vmem:[%s0 + $0x60] sm:$0xff]
  %v27 = vld [vmem:[%s0 + $0x68] sm:$0xff]
  %v28 = vld [vmem:[%s0 + $0x70] sm:$0xff]
  %v29 = vld [vmem:[%s0 + $0x78] sm:$0xff]
  %v30 = vld [vmem:[%s0 + $0x80] sm:$0xff]
  %v31 = vld [vmem:[%s0 + $0x88] sm:$0xff]
  %v32 = vld [vmem:[%s0 + $0x90] sm:$0xff]
  %v33 = vld [vmem:[%s0 + $0x98] sm:$0xff]
  %v34 = vld [vmem:[%s0 + $0xa0] sm:$0xff]
  %v35 = vld [vmem:[%s0 + $0xa8] sm:$0xff]
  %v36 = vld [vmem:[%s0 + $0xb0] sm:$0xff]
  %v37 = vld [vmem:[%s0 + $0xb8] sm:$0xff]
  %v38 = vld [vmem:[%s0 + $0xc0] sm:$0xff]
  %v39 = vld [vmem:[%s0 + $0xc8] sm:$0xff]
  %v40 = vld [vmem:[%s0 + $0xd0] sm:$0xff]
  %v41 = vld [vmem:[%s0 + $0xd8] sm:$0xff]
  %v42 = vld [vmem:[%s0 + $0xe0] sm:$0xff]
  %v43 = vld [vmem:[%s0 + $0xe8] sm:$0xff]
  %v44 = vld [vmem:[%s0 + $0xf0] sm:$0xff]
  %v45 = vld [vmem:[%s0 + $0xf8] sm:$0xff]
  %v46 = vld [vmem:[%s1] sm:$0xf]
  %v47 = vld [vmem:[%s1 + $0x4] sm:$0xf]
  %v48 = vld [vmem:[%s1 + $0x8] sm:$0xf]
  %v49 = vld [vmem:[%s1 + $0xc] sm:$0xf]
  %v50 = vld [vmem:[%s1 + $0x10] sm:$0xf]
  %v51 = vld [vmem:[%s1 + $0x14] sm:$0xf]
  %v52 = vld [vmem:[%s1 + $0x18] sm:$0xf]
  %v53 = vld [vmem:[%s1 + $0x1c] sm:$0xf]
  %v54 = vld [vmem:[%s1 + $0x20] sm:$0xf]
  %v55 = vld [vmem:[%s1 + $0x24] sm:$0xf]
  %v56 = vld [vmem:[%s1 + $0x28] sm:$0xf]
  %v57 = vld [vmem:[%s1 + $0x2c] sm:$0xf]
  %v58 = vld [vmem:[%s1 + $0x30] sm:$0xf]
  %v59 = vld [vmem:[%s1 + $0x34] sm:$0xf]
  %v60 = vld [vmem:[%s1 + $0x38] sm:$0xf]
  %v61 = vld [vmem:[%s1 + $0x3c] sm:$0xf]
  %v62 = vld [vmem:[%s1 + $0x40] sm:$0xf]
  %v63 = vld [vmem:[%s1 + $0x44] sm:$0xf]
  %v64 = vld [vmem:[%s1 + $0x48] sm:$0xf]
  %v65 = vld [vmem:[%s1 + $0x4c] sm:$0xf]
  %v66 = vld [vmem:[%s1 + $0x50] sm:$0xf]
  %v67 = vld [vmem:[%s1 + $0x54] sm:$0xf]
  %v68 = vld [vmem:[%s1 + $0x58] sm:$0xf]
  %v69 = vld [vmem:[%s1 + $0x5c] sm:$0xf]
  %v70 = vld [vmem:[%s1 + $0x60] sm:$0xf]
  %v71 = vld [vmem:[%s1 + $0x64] sm:$0xf]
  %v72 = vld [vmem:[%s1 + $0x68] sm:$0xf]
  %v73 = vld [vmem:[%s1 + $0x6c] sm:$0xf]
  %v74 = vld [vmem:[%s1 + $0x70] sm:$0xf]
  %v75 = vld [vmem:[%s1 + $0x74] sm:$0xf]
  %v76 = vld [vmem:[%s1 + $0x78] sm:$0xf]
  %v77 = vld [vmem:[%s1 + $0x7c] sm:$0xf]
  %v78 = vld [vmem:[%s1 + $0x80] sm:$0xf]
  %v79 = vld [vmem:[%s1 + $0x84] sm:$0xf]
  %v80 = vld [vmem:[%s1 + $0x88] sm:$0xf]
  %v81 = vld [vmem:[%s1 + $0x8c] sm:$0xf]
  %v82 = vld [vmem:[%s1 + $0x90] sm:$0xf]
  %v83 = vld [vmem:[%s1 + $0x94] sm:$0xf]
  %v84 = vld [vmem:[%s1 + $0x98] sm:$0xf]
  %v85 = vld [vmem:[%s1 + $0x9c] sm:$0xf]
  %v86 = vld [vmem:[%s1 + $0xa0] sm:$0xf]
  %v87 = vld [vmem:[%s1 + $0xa4] sm:$0xf]
  %v88 = vld [vmem:[%s1 + $0xa8] sm:$0xf]
  %v89 = vld [vmem:[%s1 + $0xac] sm:$0xf]
  %v90 = vld [vmem:[%s1 + $0xb0] sm:$0xf]
  %v91 = vld [vmem:[%s1 + $0xb4] sm:$0xf]
  %v92 = vld [vmem:[%s1 + $0xb8] sm:$0xf]
  %v93 = vld [vmem:[%s1 + $0xbc] sm:$0xf]
  %v94 = vld [vmem:[%s1 + $0xc0] sm:$0xf]
  %v95 = vld [vmem:[%s1 + $0xc4] sm:$0xf]
  %v96 = vld [vmem:[%s1 + $0xc8] sm:$0xf]
  %v97 = vld [vmem:[%s1 + $0xcc] sm:$0xf]
  %v98 = vld [vmem:[%s1 + $0xd0] sm:$0xf]
  %v99 = vld [vmem:[%s1 + $0xd4] sm:$0xf]
  %v100 = vld [vmem:[%s1 + $0xd8] sm:$0xf]
  %v101 = vld [vmem:[%s1 + $0xdc] sm:$0xf]
  %v102 = vld [vmem:[%s1 + $0xe0] sm:$0xf]
  %v103 = vld [vmem:[%s1 + $0xe4] sm:$0xf]
  %v104 = vld [vmem:[%s1 + $0xe8] sm:$0xf]
  %v105 = vld [vmem:[%s1 + $0xec] sm:$0xf]
  %v106 = vld [vmem:[%s1 + $0xf0] sm:$0xf]
  %v107 = vld [vmem:[%s1 + $0xf4] sm:$0xf]
  %v108 = vld [vmem:[%s1 + $0xf8] sm:$0xf]
  %v109 = vld [vmem:[%s1 + $0xfc] sm:$0xf]
  %v110 = vld [vmem:[%s2] sm:$0x1]
  %v112 = vperm.slane %v110, 0
  %v146 = vunpack.c.l.b16 %v14
  %v147 = vunpack.c.h.b16 %v14
  %v148 = vunpack.c.l.b16 %v15
  %v149 = vunpack.c.h.b16 %v15
  %v150 = vunpack.c.l.b16 %v16
  %v151 = vunpack.c.h.b16 %v16
  %v152 = vunpack.c.l.b16 %v17
  %v153 = vunpack.c.h.b16 %v17
  %v154 = vunpack.c.l.b16 %v18
  %v155 = vunpack.c.h.b16 %v18
  %v156 = vunpack.c.l.b16 %v19
  %v157 = vunpack.c.h.b16 %v19
  %v158 = vunpack.c.l.b16 %v20
  %v159 = vunpack.c.h.b16 %v20
  %v160 = vunpack.c.l.b16 %v21
  %v161 = vunpack.c.h.b16 %v21
  %v162 = vunpack.c.l.b16 %v22
  %v163 = vunpack.c.h.b16 %v22
  %v164 = vunpack.c.l.b16 %v23
  %v165 = vunpack.c.h.b16 %v23
  %v166 = vunpack.c.l.b16 %v24
  %v167 = vunpack.c.h.b16 %v24
  %v168 = vunpack.c.l.b16 %v25
  %v169 = vunpack.c.h.b16 %v25
  %v170 = vunpack.c.l.b16 %v26
  %v171 = vunpack.c.h.b16 %v26
  %v172 = vunpack.c.l.b16 %v27
  %v173 = vunpack.c.h.b16 %v27
  %v174 = vunpack.c.l.b16 %v28
  %v175 = vunpack.c.h.b16 %v28
  %v176 = vunpack.c.l.b16 %v29
  %v177 = vunpack.c.h.b16 %v29
  %v178 = vunpack.c.l.b16 %v30
  %v179 = vunpack.c.h.b16 %v30
  %v180 = vunpack.c.l.b16 %v31
  %v181 = vunpack.c.h.b16 %v31
  %v182 = vunpack.c.l.b16 %v32
  %v183 = vunpack.c.h.b16 %v32
  %v184 = vunpack.c.l.b16 %v33
  %v185 = vunpack.c.h.b16 %v33
  %v186 = vunpack.c.l.b16 %v34
  %v187 = vunpack.c.h.b16 %v34
  %v188 = vunpack.c.l.b16 %v35
  %v189 = vunpack.c.h.b16 %v35
  %v190 = vunpack.c.l.b16 %v36
  %v191 = vunpack.c.h.b16 %v36
  %v192 = vunpack.c.l.b16 %v37
  %v193 = vunpack.c.h.b16 %v37
  %v194 = vunpack.c.l.b16 %v38
  %v195 = vunpack.c.h.b16 %v38
  %v196 = vunpack.c.l.b16 %v39
  %v197 = vunpack.c.h.b16 %v39
  %v198 = vunpack.c.l.b16 %v40
  %v199 = vunpack.c.h.b16 %v40
  %v200 = vunpack.c.l.b16 %v41
  %v201 = vunpack.c.h.b16 %v41
  %v202 = vunpack.c.l.b16 %v42
  %v203 = vunpack.c.h.b16 %v42
  %v204 = vunpack.c.l.b16 %v43
  %v205 = vunpack.c.h.b16 %v43
  %v206 = vunpack.c.l.b16 %v44
  %v207 = vunpack.c.h.b16 %v44
  %v208 = vunpack.c.l.b16 %v45
  %v209 = vunpack.c.h.b16 %v45
  %v210 = vpack.c.b16 %v150, %v146
  %v211 = vpack.c.b16 %v151, %v147
  %v212 = vpack.c.b16 %v152, %v148
  %v213 = vpack.c.b16 %v153, %v149
  %v214 = vpack.c.b16 %v158, %v154
  %v215 = vpack.c.b16 %v159, %v155
  %v216 = vpack.c.b16 %v160, %v156
  %v217 = vpack.c.b16 %v161, %v157
  %v218 = vpack.c.b16 %v166, %v162
  %v219 = vpack.c.b16 %v167, %v163
  %v220 = vpack.c.b16 %v168, %v164
  %v221 = vpack.c.b16 %v169, %v165
  %v222 = vpack.c.b16 %v174, %v170
  %v223 = vpack.c.b16 %v175, %v171
  %v224 = vpack.c.b16 %v176, %v172
  %v225 = vpack.c.b16 %v177, %v173
  %v226 = vpack.c.b16 %v182, %v178
  %v227 = vpack.c.b16 %v183, %v179
  %v228 = vpack.c.b16 %v184, %v180
  %v229 = vpack.c.b16 %v185, %v181
  %v230 = vpack.c.b16 %v190, %v186
  %v231 = vpack.c.b16 %v191, %v187
  %v232 = vpack.c.b16 %v192, %v188
  %v233 = vpack.c.b16 %v193, %v189
  %v234 = vpack.c.b16 %v198, %v194
  %v235 = vpack.c.b16 %v199, %v195
  %v236 = vpack.c.b16 %v200, %v196
  %v237 = vpack.c.b16 %v201, %v197
  %v238 = vpack.c.b16 %v206, %v202
  %v239 = vpack.c.b16 %v207, %v203
  %v240 = vpack.c.b16 %v208, %v204
  %v241 = vpack.c.b16 %v209, %v205
  %v338 = vunpack.c.l.b16 %v46
  %v339 = vunpack.c.l.b16 %v47
  %v340 = vunpack.c.l.b16 %v48
  %v341 = vunpack.c.l.b16 %v49
  %v342 = vunpack.c.l.b16 %v50
  %v343 = vunpack.c.l.b16 %v51
  %v344 = vunpack.c.l.b16 %v52
  %v345 = vunpack.c.l.b16 %v53
  %v346 = vunpack.c.l.b16 %v54
  %v347 = vunpack.c.l.b16 %v55
  %v348 = vunpack.c.l.b16 %v56
  %v349 = vunpack.c.l.b16 %v57
  %v350 = vunpack.c.l.b16 %v58
  %v351 = vunpack.c.l.b16 %v59
  %v352 = vunpack.c.l.b16 %v60
  %v353 = vunpack.c.l.b16 %v61
  %v354 = vunpack.c.l.b16 %v62
  %v355 = vunpack.c.l.b16 %v63
  %v356 = vunpack.c.l.b16 %v64
  %v357 = vunpack.c.l.b16 %v65
  %v358 = vunpack.c.l.b16 %v66
  %v359 = vunpack.c.l.b16 %v67
  %v360 = vunpack.c.l.b16 %v68
  %v361 = vunpack.c.l.b16 %v69
  %v362 = vunpack.c.l.b16 %v70
  %v363 = vunpack.c.l.b16 %v71
  %v364 = vunpack.c.l.b16 %v72
  %v365 = vunpack.c.l.b16 %v73
  %v366 = vunpack.c.l.b16 %v74
  %v367 = vunpack.c.l.b16 %v75
  %v368 = vunpack.c.l.b16 %v76
  %v369 = vunpack.c.l.b16 %v77
  %v370 = vunpack.c.l.b16 %v78
  %v371 = vunpack.c.l.b16 %v79
  %v372 = vunpack.c.l.b16 %v80
  %v373 = vunpack.c.l.b16 %v81
  %v374 = vunpack.c.l.b16 %v82
  %v375 = vunpack.c.l.b16 %v83
  %v376 = vunpack.c.l.b16 %v84
  %v377 = vunpack.c.l.b16 %v85
  %v378 = vunpack.c.l.b16 %v86
  %v379 = vunpack.c.l.b16 %v87
  %v380 = vunpack.c.l.b16 %v88
  %v381 = vunpack.c.l.b16 %v89
  %v382 = vunpack.c.l.b16 %v90
  %v383 = vunpack.c.l.b16 %v91
  %v384 = vunpack.c.l.b16 %v92
  %v385 = vunpack.c.l.b16 %v93
  %v386 = vunpack.c.l.b16 %v94
  %v387 = vunpack.c.l.b16 %v95
  %v388 = vunpack.c.l.b16 %v96
  %v389 = vunpack.c.l.b16 %v97
  %v390 = vunpack.c.l.b16 %v98
  %v391 = vunpack.c.l.b16 %v99
  %v392 = vunpack.c.l.b16 %v100
  %v393 = vunpack.c.l.b16 %v101
  %v394 = vunpack.c.l.b16 %v102
  %v395 = vunpack.c.l.b16 %v103
  %v396 = vunpack.c.l.b16 %v104
  %v397 = vunpack.c.l.b16 %v105
  %v398 = vunpack.c.l.b16 %v106
  %v399 = vunpack.c.l.b16 %v107
  %v400 = vunpack.c.l.b16 %v108
  %v401 = vunpack.c.l.b16 %v109
  %v402 = vpack.c.b16 %v339, %v338
  %v403 = vpack.c.b16 %v341, %v340
  %v404 = vpack.c.b16 %v343, %v342
  %v405 = vpack.c.b16 %v345, %v344
  %v406 = vpack.c.b16 %v347, %v346
  %v407 = vpack.c.b16 %v349, %v348
  %v408 = vpack.c.b16 %v351, %v350
  %v409 = vpack.c.b16 %v353, %v352
  %v410 = vpack.c.b16 %v355, %v354
  %v411 = vpack.c.b16 %v357, %v356
  %v412 = vpack.c.b16 %v359, %v358
  %v413 = vpack.c.b16 %v361, %v360
  %v414 = vpack.c.b16 %v363, %v362
  %v415 = vpack.c.b16 %v365, %v364
  %v416 = vpack.c.b16 %v367, %v366
  %v417 = vpack.c.b16 %v369, %v368
  %v418 = vpack.c.b16 %v371, %v370
  %v419 = vpack.c.b16 %v373, %v372
  %v420 = vpack.c.b16 %v375, %v374
  %v421 = vpack.c.b16 %v377, %v376
  %v422 = vpack.c.b16 %v379, %v378
  %v423 = vpack.c.b16 %v381, %v380
  %v424 = vpack.c.b16 %v383, %v382
  %v425 = vpack.c.b16 %v385, %v384
  %v426 = vpack.c.b16 %v387, %v386
  %v427 = vpack.c.b16 %v389, %v388
  %v428 = vpack.c.b16 %v391, %v390
  %v429 = vpack.c.b16 %v393, %v392
  %v430 = vpack.c.b16 %v395, %v394
  %v431 = vpack.c.b16 %v397, %v396
  %v432 = vpack.c.b16 %v399, %v398
  %v433 = vpack.c.b16 %v401, %v400
  %466 = vmatpush.bf16.msra.mxu0 %v409
  %467 = vmatpush.bf16.msra.mxu0 %v408
  %468 = vmatpush.bf16.msra.mxu0 %v407
  %469 = vmatpush.bf16.msra.mxu0 %v406
  %470 = vmatpush.bf16.msra.mxu0 %v405
  %471 = vmatpush.bf16.msra.mxu0 %v404
  %472 = vmatpush.bf16.msra.mxu0 %v403
  %473 = vmatpush.bf16.msra.mxu0 %v402
  %474 = vmatmul.bf16.gmra.mxu0 %v210
  %v475 = vpop.f32.mrf.mxu0
  %v476 = vadd.f32 %v112, %v475
  %v477 = vpop.f32.mrf.mxu0
  %v478 = vadd.f32 %v112, %v477
  %479 = vmatmul.bf16.gmra.mxu0 %v214
  %v480 = vpop.f32.mrf.mxu0
  %v481 = vadd.f32 %v112, %v480
  %v482 = vpop.f32.mrf.mxu0
  %v483 = vadd.f32 %v112, %v482
  %484 = vmatmul.bf16.gmra.mxu0 %v218
  %v485 = vpop.f32.mrf.mxu0
  %v486 = vadd.f32 %v112, %v485
  %v487 = vpop.f32.mrf.mxu0
  %v488 = vadd.f32 %v112, %v487
  %489 = vmatmul.bf16.gmra.mxu0 %v222
  %v490 = vpop.f32.mrf.mxu0
  %v491 = vadd.f32 %v112, %v490
  %v492 = vpop.f32.mrf.mxu0
  %v493 = vadd.f32 %v112, %v492
  %494 = vmatmul.bf16.gmra.mxu0 %v226
  %v495 = vpop.f32.mrf.mxu0
  %v496 = vadd.f32 %v112, %v495
  %v497 = vpop.f32.mrf.mxu0
  %v498 = vadd.f32 %v112, %v497
  %499 = vmatmul.bf16.gmra.mxu0 %v230
  %v500 = vpop.f32.mrf.mxu0
  %v501 = vadd.f32 %v112, %v500
  %v502 = vpop.f32.mrf.mxu0
  %v503 = vadd.f32 %v112, %v502
  %504 = vmatmul.bf16.gmra.mxu0 %v234
  %v505 = vpop.f32.mrf.mxu0
  %v506 = vadd.f32 %v112, %v505
  %v507 = vpop.f32.mrf.mxu0
  %v508 = vadd.f32 %v112, %v507
  %509 = vmatmul.bf16.gmra.mxu0 %v238
  %v510 = vpop.f32.mrf.mxu0
  %v511 = vadd.f32 %v112, %v510
  %v512 = vpop.f32.mrf.mxu0
  %v513 = vadd.f32 %v112, %v512
  %514 = vdwg.mxu0
  %515 = vmatpush.bf16.msra.mxu0 %v417
  %516 = vmatpush.bf16.msra.mxu0 %v416
  %517 = vmatpush.bf16.msra.mxu0 %v415
  %518 = vmatpush.bf16.msra.mxu0 %v414
  %519 = vmatpush.bf16.msra.mxu0 %v413
  %520 = vmatpush.bf16.msra.mxu0 %v412
  %521 = vmatpush.bf16.msra.mxu0 %v411
  %522 = vmatpush.bf16.msra.mxu0 %v410
  %523 = vmatmul.bf16.gmra.mxu0 %v211
  %v524 = vpop.f32.mrf.mxu0
  %v525 = vadd.f32 %v476, %v524
  %v526 = vpop.f32.mrf.mxu0
  %v527 = vadd.f32 %v478, %v526
  %528 = vmatmul.bf16.gmra.mxu0 %v215
  %v529 = vpop.f32.mrf.mxu0
  %v530 = vadd.f32 %v481, %v529
  %v531 = vpop.f32.mrf.mxu0
  %v532 = vadd.f32 %v483, %v531
  %533 = vmatmul.bf16.gmra.mxu0 %v219
  %v534 = vpop.f32.mrf.mxu0
  %v535 = vadd.f32 %v486, %v534
  %v536 = vpop.f32.mrf.mxu0
  %v537 = vadd.f32 %v488, %v536
  %538 = vmatmul.bf16.gmra.mxu0 %v223
  %v539 = vpop.f32.mrf.mxu0
  %v540 = vadd.f32 %v491, %v539
  %v541 = vpop.f32.mrf.mxu0
  %v542 = vadd.f32 %v493, %v541
  %543 = vmatmul.bf16.gmra.mxu0 %v227
  %v544 = vpop.f32.mrf.mxu0
  %v545 = vadd.f32 %v496, %v544
  %v546 = vpop.f32.mrf.mxu0
  %v547 = vadd.f32 %v498, %v546
  %548 = vmatmul.bf16.gmra.mxu0 %v231
  %v549 = vpop.f32.mrf.mxu0
  %v550 = vadd.f32 %v501, %v549
  %v551 = vpop.f32.mrf.mxu0
  %v552 = vadd.f32 %v503, %v551
  %553 = vmatmul.bf16.gmra.mxu0 %v235
  %v554 = vpop.f32.mrf.mxu0
  %v555 = vadd.f32 %v506, %v554
  %v556 = vpop.f32.mrf.mxu0
  %v557 = vadd.f32 %v508, %v556
  %558 = vmatmul.bf16.gmra.mxu0 %v239
  %v559 = vpop.f32.mrf.mxu0
  %v560 = vadd.f32 %v511, %v559
  %v561 = vpop.f32.mrf.mxu0
  %v562 = vadd.f32 %v513, %v561
  %563 = vdwg.mxu0
  %564 = vmatpush.bf16.msra.mxu0 %v425
  %565 = vmatpush.bf16.msra.mxu0 %v424
  %566 = vmatpush.bf16.msra.mxu0 %v423
  %567 = vmatpush.bf16.msra.mxu0 %v422
  %568 = vmatpush.bf16.msra.mxu0 %v421
  %569 = vmatpush.bf16.msra.mxu0 %v420
  %570 = vmatpush.bf16.msra.mxu0 %v419
  %571 = vmatpush.bf16.msra.mxu0 %v418
  %572 = vmatmul.bf16.gmra.mxu0 %v212
  %v573 = vpop.f32.mrf.mxu0
  %v574 = vadd.f32 %v525, %v573
  %v575 = vpop.f32.mrf.mxu0
  %v576 = vadd.f32 %v527, %v575
  %577 = vmatmul.bf16.gmra.mxu0 %v216
  %v578 = vpop.f32.mrf.mxu0
  %v579 = vadd.f32 %v530, %v578
  %v580 = vpop.f32.mrf.mxu0
  %v581 = vadd.f32 %v532, %v580
  %582 = vmatmul.bf16.gmra.mxu0 %v220
  %v583 = vpop.f32.mrf.mxu0
  %v584 = vadd.f32 %v535, %v583
  %v585 = vpop.f32.mrf.mxu0
  %v586 = vadd.f32 %v537, %v585
  %587 = vmatmul.bf16.gmra.mxu0 %v224
  %v588 = vpop.f32.mrf.mxu0
  %v589 = vadd.f32 %v540, %v588
  %v590 = vpop.f32.mrf.mxu0
  %v591 = vadd.f32 %v542, %v590
  %592 = vmatmul.bf16.gmra.mxu0 %v228
  %v593 = vpop.f32.mrf.mxu0
  %v594 = vadd.f32 %v545, %v593
  %v595 = vpop.f32.mrf.mxu0
  %v596 = vadd.f32 %v547, %v595
  %597 = vmatmul.bf16.gmra.mxu0 %v232
  %v598 = vpop.f32.mrf.mxu0
  %v599 = vadd.f32 %v550, %v598
  %v600 = vpop.f32.mrf.mxu0
  %v601 = vadd.f32 %v552, %v600
  %602 = vmatmul.bf16.gmra.mxu0 %v236
  %v603 = vpop.f32.mrf.mxu0
  %v604 = vadd.f32 %v555, %v603
  %v605 = vpop.f32.mrf.mxu0
  %v606 = vadd.f32 %v557, %v605
  %607 = vmatmul.bf16.gmra.mxu0 %v240
  %v608 = vpop.f32.mrf.mxu0
  %v609 = vadd.f32 %v560, %v608
  %v610 = vpop.f32.mrf.mxu0
  %v611 = vadd.f32 %v562, %v610
  %612 = vdwg.mxu0
  %613 = vmatpush.bf16.msra.mxu0 %v433
  %614 = vmatpush.bf16.msra.mxu0 %v432
  %615 = vmatpush.bf16.msra.mxu0 %v431
  %616 = vmatpush.bf16.msra.mxu0 %v430
  %617 = vmatpush.bf16.msra.mxu0 %v429
  %618 = vmatpush.bf16.msra.mxu0 %v428
  %619 = vmatpush.bf16.msra.mxu0 %v427
  %620 = vmatpush.bf16.msra.mxu0 %v426
  %621 = vmatmul.bf16.gmra.mxu0 %v213
  %v622 = vpop.f32.mrf.mxu0
  %v623 = vadd.f32 %v574, %v622
  %v624 = vpop.f32.mrf.mxu0
  %v625 = vadd.f32 %v576, %v624
  %626 = vmatmul.bf16.gmra.mxu0 %v217
  %v627 = vpop.f32.mrf.mxu0
  %v628 = vadd.f32 %v579, %v627
  %v629 = vpop.f32.mrf.mxu0
  %v630 = vadd.f32 %v581, %v629
  %631 = vmatmul.bf16.gmra.mxu0 %v221
  %v632 = vpop.f32.mrf.mxu0
  %v633 = vadd.f32 %v584, %v632
  %v634 = vpop.f32.mrf.mxu0
  %v635 = vadd.f32 %v586, %v634
  %636 = vmatmul.bf16.gmra.mxu0 %v225
  %v637 = vpop.f32.mrf.mxu0
  %v638 = vadd.f32 %v589, %v637
  %v639 = vpop.f32.mrf.mxu0
  %v640 = vadd.f32 %v591, %v639
  %641 = vmatmul.bf16.gmra.mxu0 %v229
  %v642 = vpop.f32.mrf.mxu0
  %v643 = vadd.f32 %v594, %v642
  %v644 = vpop.f32.mrf.mxu0
  %v645 = vadd.f32 %v596, %v644
  %646 = vmatmul.bf16.gmra.mxu0 %v233
  %v647 = vpop.f32.mrf.mxu0
  %v648 = vadd.f32 %v599, %v647
  %v649 = vpop.f32.mrf.mxu0
  %v650 = vadd.f32 %v601, %v649
  %651 = vmatmul.bf16.gmra.mxu0 %v237
  %v652 = vpop.f32.mrf.mxu0
  %v653 = vadd.f32 %v604, %v652
  %v654 = vpop.f32.mrf.mxu0
  %v655 = vadd.f32 %v606, %v654
  %656 = vmatmul.bf16.gmra.mxu0 %v241
  %v657 = vpop.f32.mrf.mxu0
  %v658 = vadd.f32 %v609, %v657
  %v659 = vpop.f32.mrf.mxu0
  %v660 = vadd.f32 %v611, %v659
  %661 = vdwg.mxu0
  %v662 = vmax.f32 %v623, 0.0
  %v663 = vmax.f32 %v625, 0.0
  %v664 = vmax.f32 %v628, 0.0
  %v665 = vmax.f32 %v630, 0.0
  %v666 = vmax.f32 %v633, 0.0
  %v667 = vmax.f32 %v635, 0.0
  %v668 = vmax.f32 %v638, 0.0
  %v669 = vmax.f32 %v640, 0.0
  %v670 = vmax.f32 %v643, 0.0
  %v671 = vmax.f32 %v645, 0.0
  %v672 = vmax.f32 %v648, 0.0
  %v673 = vmax.f32 %v650, 0.0
  %v674 = vmax.f32 %v653, 0.0
  %v675 = vmax.f32 %v655, 0.0
  %v676 = vmax.f32 %v658, 0.0
  %v677 = vmax.f32 %v660, 0.0
  %678 = vst [vmem:[%s3] sm:$0xff] %v662
  %679 = vst [vmem:[%s3 + $0x8] sm:$0xff] %v663
  %680 = vst [vmem:[%s3 + $0x10] sm:$0xff] %v664
  %681 = vst [vmem:[%s3 + $0x18] sm:$0xff] %v665
  %682 = vst [vmem:[%s3 + $0x20] sm:$0xff] %v666
  %683 = vst [vmem:[%s3 + $0x28] sm:$0xff] %v667
  %684 = vst [vmem:[%s3 + $0x30] sm:$0xff] %v668
  %685 = vst [vmem:[%s3 + $0x38] sm:$0xff] %v669
  %686 = vst [vmem:[%s3 + $0x40] sm:$0xff] %v670
  %687 = vst [vmem:[%s3 + $0x48] sm:$0xff] %v671
  %688 = vst [vmem:[%s3 + $0x50] sm:$0xff] %v672
  %689 = vst [vmem:[%s3 + $0x58] sm:$0xff] %v673
  %690 = vst [vmem:[%s3 + $0x60] sm:$0xff] %v674
  %691 = vst [vmem:[%s3 + $0x68] sm:$0xff] %v675
  %692 = vst [vmem:[%s3 + $0x70] sm:$0xff] %v676
  %693 = vst [vmem:[%s3 + $0x78] sm:$0xff] %v677
  // Predicated region
  $region14: #{vae_forward.35} parent=0 // pred_check
    _
  $region15: #{vae_forward.35} parent=0 // pred_check_branch
    %695 = sbr.rel (0) target = $region17
  $region16: #{vae_forward.35} parent=0 // pred_region
    _
  $region17: #{vae_forward.35} parent=0 // pred_fallthru
    _
  // Predicated region
  $region18: #{vae_forward.35} parent=0 // pred_check
    _
  $region19: #{vae_forward.35} parent=0 // pred_check_branch
    %697 = sbr.rel (0) target = $region21
  $region20: #{vae_forward.35} parent=0 // pred_region
    _
  $region21: #{vae_forward.35} parent=0 // pred_fallthru
    _

// kernel: vae_forward.39
$region0: #{vae_forward.39}
  #allocation0 [shape = 'u32[]', space=smem, size = 0x4, offset = 0x4, fixed_abs, tag = 'smem constant byte address 0x4 - core index']
  #allocation1 [shape = 'u32[72,128]{1,0:T(1,128)}', space=vmem, size = 0x9000, scoped, tag = 'internal scratch']
  %s0 = inlined_call_operand.vmem [shape: bf16[512,640], index: 0, kind: input, shape index: {}]
  %s1 = inlined_call_operand.vmem [shape: bf16[640,128], index: 1, kind: input, shape index: {}]
  %s2 = inlined_call_operand.vmem [shape: f32[1,128], index: 2, kind: input, shape index: {}]
  %s3 = inlined_call_operand.vmem [shape: f32[512,128], index: 3, kind: output, shape index: {}]
  %s4 = sld [smem:[#allocation0]]
  $region22: #{vae_forward.39} parent=0
    _
  %s6 = ssub.s32 1, %s4
  %s7 = scalar_select 0, %s6, %s4
  // Predicated region
  $region2: #{vae_forward.39} parent=0 // pred_check
    _
  $region3: #{vae_forward.39} parent=0 // pred_check_branch
    %9 = sbr.rel (0) target = $region5
  $region4: #{vae_forward.39} parent=0 // pred_region
    _
  $region5: #{vae_forward.39} parent=0 // pred_fallthru
    _
  // Predicated region
  $region6: #{vae_forward.39} parent=0 // pred_check
    _
  $region7: #{vae_forward.39} parent=0 // pred_check_branch
    %11 = sbr.rel (0) target = $region9
  $region8: #{vae_forward.39} parent=0 // pred_region
    _
  $region9: #{vae_forward.39} parent=0 // pred_fallthru
    _
  // Predicated region
  $region10: #{vae_forward.39} parent=0 // pred_check
    _
  $region11: #{vae_forward.39} parent=0 // pred_check_branch
    %13 = sbr.rel (0) target = $region13
  $region12: #{vae_forward.39} parent=0 // pred_region
    _
  $region13: #{vae_forward.39} parent=0 // pred_fallthru
    _
  %v14 = vld [vmem:[%s0] sm:$0xff]
  %v15 = vld [vmem:[%s0 + $0x8] sm:$0xff]
  %v16 = vld [vmem:[%s0 + $0x10] sm:$0xf]
  %v17 = vld [vmem:[%s0 + $0x14] sm:$0xff]
  %v18 = vld [vmem:[%s0 + $0x1c] sm:$0xff]
  %v19 = vld [vmem:[%s0 + $0x24] sm:$0xf]
  %v20 = vld [vmem:[%s0 + $0x28] sm:$0xff]
  %v21 = vld [vmem:[%s0 + $0x30] sm:$0xff]
  %v22 = vld [vmem:[%s0 + $0x38] sm:$0xf]
  %v23 = vld [vmem:[%s0 + $0x3c] sm:$0xff]
  %v24 = vld [vmem:[%s0 + $0x44] sm:$0xff]
  %v25 = vld [vmem:[%s0 + $0x4c] sm:$0xf]
  %v26 = vld [vmem:[%s0 + $0x50] sm:$0xff]
  %v27 = vld [vmem:[%s0 + $0x58] sm:$0xff]
  %v28 = vld [vmem:[%s0 + $0x60] sm:$0xf]
  %v29 = vld [vmem:[%s0 + $0x64] sm:$0xff]
  %v30 = vld [vmem:[%s0 + $0x6c] sm:$0xff]
  %v31 = vld [vmem:[%s0 + $0x74] sm:$0xf]
  %v32 = vld [vmem:[%s0 + $0x78] sm:$0xff]
  %v33 = vld [vmem:[%s0 + $0x80] sm:$0xff]
  %v34 = vld [vmem:[%s0 + $0x88] sm:$0xf]
  %v35 = vld [vmem:[%s0 + $0x8c] sm:$0xff]
  %v36 = vld [vmem:[%s0 + $0x94] sm:$0xff]
  %v37 = vld [vmem:[%s0 + $0x9c] sm:$0xf]
  %v38 = vld [vmem:[%s0 + $0xa0] sm:$0xff]
  %v39 = vld [vmem:[%s0 + $0xa8] sm:$0xff]
  %v40 = vld [vmem:[%s0 + $0xb0] sm:$0xf]
  %v41 = vld [vmem:[%s0 + $0xb4] sm:$0xff]
  %v42 = vld [vmem:[%s0 + $0xbc] sm:$0xff]
  %v43 = vld [vmem:[%s0 + $0xc4] sm:$0xf]
  %v44 = vld [vmem:[%s0 + $0xc8] sm:$0xff]
  %v45 = vld [vmem:[%s0 + $0xd0] sm:$0xff]
  %v46 = vld [vmem:[%s0 + $0xd8] sm:$0xf]
  %v47 = vld [vmem:[%s0 + $0xdc] sm:$0xff]
  %v48 = vld [vmem:[%s0 + $0xe4] sm:$0xff]
  %v49 = vld [vmem:[%s0 + $0xec] sm:$0xf]
  %v50 = vld [vmem:[%s0 + $0xf0] sm:$0xff]
  %v51 = vld [vmem:[%s0 + $0xf8] sm:$0xff]
  %v52 = vld [vmem:[%s0 + $0x100] sm:$0xf]
  %v53 = vld [vmem:[%s0 + $0x104] sm:$0xff]
  %v54 = vld [vmem:[%s0 + $0x10c] sm:$0xff]
  %v55 = vld [vmem:[%s0 + $0x114] sm:$0xf]
  %v56 = vld [vmem:[%s0 + $0x118] sm:$0xff]
  %v57 = vld [vmem:[%s0 + $0x120] sm:$0xff]
  %v58 = vld [vmem:[%s0 + $0x128] sm:$0xf]
  %v59 = vld [vmem:[%s0 + $0x12c] sm:$0xff]
  %v60 = vld [vmem:[%s0 + $0x134] sm:$0xff]
  %v61 = vld [vmem:[%s0 + $0x13c] sm:$0xf]
  %v62 = vld [vmem:[%s0 + $0x140] sm:$0xff]
  %v63 = vld [vmem:[%s0 + $0x148] sm:$0xff]
  %v64 = vld [vmem:[%s0 + $0x150] sm:$0xf]
  %v65 = vld [vmem:[%s0 + $0x154] sm:$0xff]
  %v66 = vld [vmem:[%s0 + $0x15c] sm:$0xff]
  %v67 = vld [vmem:[%s0 + $0x164] sm:$0xf]
  %v68 = vld [vmem:[%s0 + $0x168] sm:$0xff]
  %v69 = vld [vmem:[%s0 + $0x170] sm:$0xff]
  %v70 = vld [vmem:[%s0 + $0x178] sm:$0xf]
  %v71 = vld [vmem:[%s0 + $0x17c] sm:$0xff]
  %v72 = vld [vmem:[%s0 + $0x184] sm:$0xff]
  %v73 = vld [vmem:[%s0 + $0x18c] sm:$0xf]
  %v74 = vld [vmem:[%s0 + $0x190] sm:$0xff]
  %v75 = vld [vmem:[%s0 + $0x198] sm:$0xff]
  %v76 = vld [vmem:[%s0 + $0x1a0] sm:$0xf]
  %v77 = vld [vmem:[%s0 + $0x1a4] sm:$0xff]
  %v78 = vld [vmem:[%s0 + $0x1ac] sm:$0xff]
  %v79 = vld [vmem:[%s0 + $0x1b4] sm:$0xf]
  %v80 = vld [vmem:[%s0 + $0x1b8] sm:$0xff]
  %v81 = vld [vmem:[%s0 + $0x1c0] sm:$0xff]
  %v82 = vld [vmem:[%s0 + $0x1c8] sm:$0xf]
  %v83 = vld [vmem:[%s0 + $0x1cc] sm:$0xff]
  %v84 = vld [vmem:[%s0 + $0x1d4] sm:$0xff]
  %v85 = vld [vmem:[%s0 + $0x1dc] sm:$0xf]
  %v86 = vld [vmem:[%s0 + $0x1e0] sm:$0xff]
  %v87 = vld [vmem:[%s0 + $0x1e8] sm:$0xff]
  %v88 = vld [vmem:[%s0 + $0x1f0] sm:$0xf]
  %v89 = vld [vmem:[%s0 + $0x1f4] sm:$0xff]
  %v90 = vld [vmem:[%s0 + $0x1fc] sm:$0xff]
  %v91 = vld [vmem:[%s0 + $0x204] sm:$0xf]
  %v92 = vld [vmem:[%s0 + $0x208] sm:$0xff]
  %v93 = vld [vmem:[%s0 + $0x210] sm:$0xff]
  %v94 = vld [vmem:[%s0 + $0x218] sm:$0xf]
  %v95 = vld [vmem:[%s0 + $0x21c] sm:$0xff]
  %v96 = vld [vmem:[%s0 + $0x224] sm:$0xff]
  %v97 = vld [vmem:[%s0 + $0x22c] sm:$0xf]
  %v98 = vld [vmem:[%s0 + $0x230] sm:$0xff]
  %v99 = vld [vmem:[%s0 + $0x238] sm:$0xff]
  %v100 = vld [vmem:[%s0 + $0x240] sm:$0xf]
  %v101 = vld [vmem:[%s0 + $0x244] sm:$0xff]
  %v102 = vld [vmem:[%s0 + $0x24c] sm:$0xff]
  %v103 = vld [vmem:[%s0 + $0x254] sm:$0xf]
  %v104 = vld [vmem:[%s0 + $0x258] sm:$0xff]
  %v105 = vld [vmem:[%s0 + $0x260] sm:$0xff]
  %v106 = vld [vmem:[%s0 + $0x268] sm:$0xf]
  %v107 = vld [vmem:[%s0 + $0x26c] sm:$0xff]
  %v108 = vld [vmem:[%s0 + $0x274] sm:$0xff]
  %v109 = vld [vmem:[%s0 + $0x27c] sm:$0xf]
  %v110 = vld [vmem:[%s0 + $0x280] sm:$0xff]
  %v111 = vld [vmem:[%s0 + $0x288] sm:$0xff]
  %v112 = vld [vmem:[%s0 + $0x290] sm:$0xf]
  %v113 = vld [vmem:[%s0 + $0x294] sm:$0xff]
  %v114 = vld [vmem:[%s0 + $0x29c] sm:$0xff]
  %v115 = vld [vmem:[%s0 + $0x2a4] sm:$0xf]
  %v116 = vld [vmem:[%s0 + $0x2a8] sm:$0xff]
  %v117 = vld [vmem:[%s0 + $0x2b0] sm:$0xff]
  %v118 = vld [vmem:[%s0 + $0x2b8] sm:$0xf]
  %v119 = vld [vmem:[%s0 + $0x2bc] sm:$0xff]
  %v120 = vld [vmem:[%s0 + $0x2c4] sm:$0xff]
  %v121 = vld [vmem:[%s0 + $0x2cc] sm:$0xf]
  %v122 = vld [vmem:[%s0 + $0x2d0] sm:$0xff]
  %v123 = vld [vmem:[%s0 + $0x2d8] sm:$0xff]
  %v124 = vld [vmem:[%s0 + $0x2e0] sm:$0xf]
  %v125 = vld [vmem:[%s0 + $0x2e4] sm:$0xff]
  %v126 = vld [vmem:[%s0 + $0x2ec] sm:$0xff]
  %v127 = vld [vmem:[%s0 + $0x2f4] sm:$0xf]
  %v128 = vld [vmem:[%s0 + $0x2f8] sm:$0xff]
  %v129 = vld [vmem:[%s0 + $0x300] sm:$0xff]
  %v130 = vld [vmem:[%s0 + $0x308] sm:$0xf]
  %v131 = vld [vmem:[%s0 + $0x30c] sm:$0xff]
  %v132 = vld [vmem:[%s0 + $0x314] sm:$0xff]
  %v133 = vld [vmem:[%s0 + $0x31c] sm:$0xf]
  %v134 = vld [vmem:[%s0 + $0x320] sm:$0xff]
  %v135 = vld [vmem:[%s0 + $0x328] sm:$0xff]
  %v136 = vld [vmem:[%s0 + $0x330] sm:$0xf]
  %v137 = vld [vmem:[%s0 + $0x334] sm:$0xff]
  %v138 = vld [vmem:[%s0 + $0x33c] sm:$0xff]
  %v139 = vld [vmem:[%s0 + $0x344] sm:$0xf]
  %v140 = vld [vmem:[%s0 + $0x348] sm:$0xff]
  %v141 = vld [vmem:[%s0 + $0x350] sm:$0xff]
  %v142 = vld [vmem:[%s0 + $0x358] sm:$0xf]
  %v143 = vld [vmem:[%s0 + $0x35c] sm:$0xff]
  %v144 = vld [vmem:[%s0 + $0x364] sm:$0xff]
  %v145 = vld [vmem:[%s0 + $0x36c] sm:$0xf]
  %v146 = vld [vmem:[%s0 + $0x370] sm:$0xff]
  %v147 = vld [vmem:[%s0 + $0x378] sm:$0xff]
  %v148 = vld [vmem:[%s0 + $0x380] sm:$0xf]
  %v149 = vld [vmem:[%s0 + $0x384] sm:$0xff]
  %v150 = vld [vmem:[%s0 + $0x38c] sm:$0xff]
  %v151 = vld [vmem:[%s0 + $0x394] sm:$0xf]
  %v152 = vld [vmem:[%s0 + $0x398] sm:$0xff]
  %v153 = vld [vmem:[%s0 + $0x3a0] sm:$0xff]
  %v154 = vld [vmem:[%s0 + $0x3a8] sm:$0xf]
  %v155 = vld [vmem:[%s0 + $0x3ac] sm:$0xff]
  %v156 = vld [vmem:[%s0 + $0x3b4] sm:$0xff]
  %v157 = vld [vmem:[%s0 + $0x3bc] sm:$0xf]
  %v158 = vld [vmem:[%s0 + $0x3c0] sm:$0xff]
  %v159 = vld [vmem:[%s0 + $0x3c8] sm:$0xff]
  %v160 = vld [vmem:[%s0 + $0x3d0] sm:$0xf]
  %v161 = vld [vmem:[%s0 + $0x3d4] sm:$0xff]
  %v162 = vld [vmem:[%s0 + $0x3dc] sm:$0xff]
  %v163 = vld [vmem:[%s0 + $0x3e4] sm:$0xf]
  %v164 = vld [vmem:[%s0 + $0x3e8] sm:$0xff]
  %v165 = vld [vmem:[%s0 + $0x3f0] sm:$0xff]
  %v166 = vld [vmem:[%s0 + $0x3f8] sm:$0xf]
  %v167 = vld [vmem:[%s0 + $0x3fc] sm:$0xff]
  %v168 = vld [vmem:[%s0 + $0x404] sm:$0xff]
  %v169 = vld [vmem:[%s0 + $0x40c] sm:$0xf]
  %v170 = vld [vmem:[%s0 + $0x410] sm:$0xff]
  %v171 = vld [vmem:[%s0 + $0x418] sm:$0xff]
  %v172 = vld [vmem:[%s0 + $0x420] sm:$0xf]
  %v173 = vld [vmem:[%s0 + $0x424] sm:$0xff]
  %v174 = vld [vmem:[%s0 + $0x42c] sm:$0xff]
  %v175 = vld [vmem:[%s0 + $0x434] sm:$0xf]
  %v176 = vld [vmem:[%s0 + $0x438] sm:$0xff]
  %v177 = vld [vmem:[%s0 + $0x440] sm:$0xff]
  %v178 = vld [vmem:[%s0 + $0x448] sm:$0xf]
  %v179 = vld [vmem:[%s0 + $0x44c] sm:$0xff]
  %v180 = vld [vmem:[%s0 + $0x454] sm:$0xff]
  %v181 = vld [vmem:[%s0 + $0x45c] sm:$0xf]
  %v182 = vld [vmem:[%s0 + $0x460] sm:$0xff]
  %v183 = vld [vmem:[%s0 + $0x468] sm:$0xff]
  %v184 = vld [vmem:[%s0 + $0x470] sm:$0xf]
  %v185 = vld [vmem:[%s0 + $0x474] sm:$0xff]
  %v186 = vld [vmem:[%s0 + $0x47c] sm:$0xff]
  %v187 = vld [vmem:[%s0 + $0x484] sm:$0xf]
  %v188 = vld [vmem:[%s0 + $0x488] sm:$0xff]
  %v189 = vld [vmem:[%s0 + $0x490] sm:$0xff]
  %v190 = vld [vmem:[%s0 + $0x498] sm:$0xf]
  %v191 = vld [vmem:[%s0 + $0x49c] sm:$0xff]
  %v192 = vld [vmem:[%s0 + $0x4a4] sm:$0xff]
  %v193 = vld [vmem:[%s0 + $0x4ac] sm:$0xf]
  %v194 = vld [vmem:[%s0 + $0x4b0] sm:$0xff]
  %v195 = vld [vmem:[%s0 + $0x4b8] sm:$0xff]
  %v196 = vld [vmem:[%s0 + $0x4c0] sm:$0xf]
  %v197 = vld [vmem:[%s0 + $0x4c4] sm:$0xff]
  %v198 = vld [vmem:[%s0 + $0x4cc] sm:$0xff]
  %v199 = vld [vmem:[%s0 + $0x4d4] sm:$0xf]
  %v200 = vld [vmem:[%s0 + $0x4d8] sm:$0xff]
  %v201 = vld [vmem:[%s0 + $0x4e0] sm:$0xff]
  %v202 = vld [vmem:[%s0 + $0x4e8] sm:$0xf]
  %v203 = vld [vmem:[%s0 + $0x4ec] sm:$0xff]
  %v204 = vld [vmem:[%s0 + $0x4f4] sm:$0xff]
  %v205 = vld [vmem:[%s0 + $0x4fc] sm:$0xf]
  %v206 = vld [vmem:[%s1] sm:$0xf]
  %v207 = vld [vmem:[%s1 + $0x4] sm:$0xf]
  %v208 = vld [vmem:[%s1 + $0x8] sm:$0xf]
  %v209 = vld [vmem:[%s1 + $0xc] sm:$0xf]
  %v210 = vld [vmem:[%s1 + $0x10] sm:$0xf]
  %v211 = vld [vmem:[%s1 + $0x14] sm:$0xf]
  %v212 = vld [vmem:[%s1 + $0x18] sm:$0xf]
  %v213 = vld [vmem:[%s1 + $0x1c] sm:$0xf]
  %v214 = vld [vmem:[%s1 + $0x20] sm:$0xf]
  %v215 = vld [vmem:[%s1 + $0x24] sm:$0xf]
  %v216 = vld [vmem:[%s1 + $0x28] sm:$0xf]
  %v217 = vld [vmem:[%s1 + $0x2c] sm:$0xf]
  %v218 = vld [vmem:[%s1 + $0x30] sm:$0xf]
  %v219 = vld [vmem:[%s1 + $0x34] sm:$0xf]
  %v220 = vld [vmem:[%s1 + $0x38] sm:$0xf]
  %v221 = vld [vmem:[%s1 + $0x3c] sm:$0xf]
  %v222 = vld [vmem:[%s1 + $0x40] sm:$0xf]
  %v223 = vld [vmem:[%s1 + $0x44] sm:$0xf]
  %v224 = vld [vmem:[%s1 + $0x48] sm:$0xf]
  %v225 = vld [vmem:[%s1 + $0x4c] sm:$0xf]
  %v226 = vld [vmem:[%s1 + $0x50] sm:$0xf]
  %v227 = vld [vmem:[%s1 + $0x54] sm:$0xf]
  %v228 = vld [vmem:[%s1 + $0x58] sm:$0xf]
  %v229 = vld [vmem:[%s1 + $0x5c] sm:$0xf]
  %v230 = vld [vmem:[%s1 + $0x60] sm:$0xf]
  %v231 = vld [vmem:[%s1 + $0x64] sm:$0xf]
  %v232 = vld [vmem:[%s1 + $0x68] sm:$0xf]
  %v233 = vld [vmem:[%s1 + $0x6c] sm:$0xf]
  %v234 = vld [vmem:[%s1 + $0x70] sm:$0xf]
  %v235 = vld [vmem:[%s1 + $0x74] sm:$0xf]
  %v236 = vld [vmem:[%s1 + $0x78] sm:$0xf]
  %v237 = vld [vmem:[%s1 + $0x7c] sm:$0xf]
  %v238 = vld [vmem:[%s1 + $0x80] sm:$0xf]
  %v239 = vld [vmem:[%s1 + $0x84] sm:$0xf]
  %v240 = vld [vmem:[%s1 + $0x88] sm:$0xf]
  %v241 = vld [vmem:[%s1 + $0x8c] sm:$0xf]
  %v242 = vld [vmem:[%s1 + $0x90] sm:$0xf]
  %v243 = vld [vmem:[%s1 + $0x94] sm:$0xf]
  %v244 = vld [vmem:[%s1 + $0x98] sm:$0xf]
  %v245 = vld [vmem:[%s1 + $0x9c] sm:$0xf]
  %v246 = vld [vmem:[%s1 + $0xa0] sm:$0xf]
  %v247 = vld [vmem:[%s1 + $0xa4] sm:$0xf]
  %v248 = vld [vmem:[%s1 + $0xa8] sm:$0xf]
  %v249 = vld [vmem:[%s1 + $0xac] sm:$0xf]
  %v250 = vld [vmem:[%s1 + $0xb0] sm:$0xf]
  %v251 = vld [vmem:[%s1 + $0xb4] sm:$0xf]
  %v252 = vld [vmem:[%s1 + $0xb8] sm:$0xf]
  %v253 = vld [vmem:[%s1 + $0xbc] sm:$0xf]
  %v254 = vld [vmem:[%s1 + $0xc0] sm:$0xf]
  %v255 = vld [vmem:[%s1 + $0xc4] sm:$0xf]
  %v256 = vld [vmem:[%s1 + $0xc8] sm:$0xf]
  %v257 = vld [vmem:[%s1 + $0xcc] sm:$0xf]
  %v258 = vld [vmem:[%s1 + $0xd0] sm:$0xf]
  %v259 = vld [vmem:[%s1 + $0xd4] sm:$0xf]
  %v260 = vld [vmem:[%s1 + $0xd8] sm:$0xf]
  %v261 = vld [vmem:[%s1 + $0xdc] sm:$0xf]
  %v262 = vld [vmem:[%s1 + $0xe0] sm:$0xf]
  %v263 = vld [vmem:[%s1 + $0xe4] sm:$0xf]
  %v264 = vld [vmem:[%s1 + $0xe8] sm:$0xf]
  %v265 = vld [vmem:[%s1 + $0xec] sm:$0xf]
  %v266 = vld [vmem:[%s1 + $0xf0] sm:$0xf]
  %v267 = vld [vmem:[%s1 + $0xf4] sm:$0xf]
  %v268 = vld [vmem:[%s1 + $0xf8] sm:$0xf]
  %v269 = vld [vmem:[%s1 + $0xfc] sm:$0xf]
  %v270 = vld [vmem:[%s1 + $0x100] sm:$0xf]
  %v271 = vld [vmem:[%s1 + $0x104] sm:$0xf]
  %v272 = vld [vmem:[%s1 + $0x108] sm:$0xf]
  %v273 = vld [vmem:[%s1 + $0x10c] sm:$0xf]
  %v274 = vld [vmem:[%s1 + $0x110] sm:$0xf]
  %v275 = vld [vmem:[%s1 + $0x114] sm:$0xf]
  %v276 = vld [vmem:[%s1 + $0x118] sm:$0xf]
  %v277 = vld [vmem:[%s1 + $0x11c] sm:$0xf]
  %v278 = vld [vmem:[%s1 + $0x120] sm:$0xf]
  %v279 = vld [vmem:[%s1 + $0x124] sm:$0xf]
  %v280 = vld [vmem:[%s1 + $0x128] sm:$0xf]
  %v281 = vld [vmem:[%s1 + $0x12c] sm:$0xf]
  %v282 = vld [vmem:[%s1 + $0x130] sm:$0xf]
  %v283 = vld [vmem:[%s1 + $0x134] sm:$0xf]
  %v284 = vld [vmem:[%s1 + $0x138] sm:$0xf]
  %v285 = vld [vmem:[%s1 + $0x13c] sm:$0xf]
  %v286 = vld [vmem:[%s2] sm:$0x1]
  %v288 = vperm.slane %v286, 0
  %v482 = vunpack.c.l.b16 %v14
  %v483 = vunpack.c.h.b16 %v14
  %v484 = vunpack.c.l.b16 %v15
  %v485 = vunpack.c.h.b16 %v15
  %v486 = vunpack.c.l.b16 %v16
  %v487 = vunpack.c.l.b16 %v17
  %v488 = vunpack.c.h.b16 %v17
  %v489 = vunpack.c.l.b16 %v18
  %v490 = vunpack.c.h.b16 %v18
  %v491 = vunpack.c.l.b16 %v19
  %v492 = vunpack.c.l.b16 %v20
  %v493 = vunpack.c.h.b16 %v20
  %v494 = vunpack.c.l.b16 %v21
  %v495 = vunpack.c.h.b16 %v21
  %v496 = vunpack.c.l.b16 %v22
  %v497 = vunpack.c.l.b16 %v23
  %v498 = vunpack.c.h.b16 %v23
  %v499 = vunpack.c.l.b16 %v24
  %v500 = vunpack.c.h.b16 %v24
  %v501 = vunpack.c.l.b16 %v25
  %v502 = vunpack.c.l.b16 %v26
  %v503 = vunpack.c.h.b16 %v26
  %v504 = vunpack.c.l.b16 %v27
  %v505 = vunpack.c.h.b16 %v27
  %v506 = vunpack.c.l.b16 %v28
  %v507 = vunpack.c.l.b16 %v29
  %v508 = vunpack.c.h.b16 %v29
  %v509 = vunpack.c.l.b16 %v30
  %v510 = vunpack.c.h.b16 %v30
  %v511 = vunpack.c.l.b16 %v31
  %v512 = vunpack.c.l.b16 %v32
  %v513 = vunpack.c.h.b16 %v32
  %v514 = vunpack.c.l.b16 %v33
  %v515 = vunpack.c.h.b16 %v33
  %v516 = vunpack.c.l.b16 %v34
  %v517 = vunpack.c.l.b16 %v35
  %v518 = vunpack.c.h.b16 %v35
  %v519 = vunpack.c.l.b16 %v36
  %v520 = vunpack.c.h.b16 %v36
  %v521 = vunpack.c.l.b16 %v37
  %v522 = vunpack.c.l.b16 %v38
  %v523 = vunpack.c.h.b16 %v38
  %v524 = vunpack.c.l.b16 %v39
  %v525 = vunpack.c.h.b16 %v39
  %v526 = vunpack.c.l.b16 %v40
  %v527 = vunpack.c.l.b16 %v41
  %v528 = vunpack.c.h.b16 %v41
  %v529 = vunpack.c.l.b16 %v42
  %v530 = vunpack.c.h.b16 %v42
  %v531 = vunpack.c.l.b16 %v43
  %v532 = vunpack.c.l.b16 %v44
  %v533 = vunpack.c.h.b16 %v44
  %v534 = vunpack.c.l.b16 %v45
  %v535 = vunpack.c.h.b16 %v45
  %v536 = vunpack.c.l.b16 %v46
  %v537 = vunpack.c.l.b16 %v47
  %v538 = vunpack.c.h.b16 %v47
  %v539 = vunpack.c.l.b16 %v48
  %v540 = vunpack.c.h.b16 %v48
  %v541 = vunpack.c.l.b16 %v49
  %v542 = vunpack.c.l.b16 %v50
  %v543 = vunpack.c.h.b16 %v50
  %v544 = vunpack.c.l.b16 %v51
  %v545 = vunpack.c.h.b16 %v51
  %v546 = vunpack.c.l.b16 %v52
  %v547 = vunpack.c.l.b16 %v53
  %v548 = vunpack.c.h.b16 %v53
  %v549 = vunpack.c.l.b16 %v54
  %v550 = vunpack.c.h.b16 %v54
  %v551 = vunpack.c.l.b16 %v55
  %v552 = vunpack.c.l.b16 %v56
  %v553 = vunpack.c.h.b16 %v56
  %v554 = vunpack.c.l.b16 %v57
  %v555 = vunpack.c.h.b16 %v57
  %v556 = vunpack.c.l.b16 %v58
  %v557 = vunpack.c.l.b16 %v59
  %v558 = vunpack.c.h.b16 %v59
  %v559 = vunpack.c.l.b16 %v60
  %v560 = vunpack.c.h.b16 %v60
  %v561 = vunpack.c.l.b16 %v61
  %v562 = vunpack.c.l.b16 %v62
  %v563 = vunpack.c.h.b16 %v62
  %v564 = vunpack.c.l.b16 %v63
  %v565 = vunpack.c.h.b16 %v63
  %v566 = vunpack.c.l.b16 %v64
  %v567 = vunpack.c.l.b16 %v65
  %v568 = vunpack.c.h.b16 %v65
  %v569 = vunpack.c.l.b16 %v66
  %v570 = vunpack.c.h.b16 %v66
  %v571 = vunpack.c.l.b16 %v67
  %v572 = vunpack.c.l.b16 %v68
  %v573 = vunpack.c.h.b16 %v68
  %v574 = vunpack.c.l.b16 %v69
  %v575 = vunpack.c.h.b16 %v69
  %v576 = vunpack.c.l.b16 %v70
  %v577 = vunpack.c.l.b16 %v71
  %v578 = vunpack.c.h.b16 %v71
  %v579 = vunpack.c.l.b16 %v72
  %v580 = vunpack.c.h.b16 %v72
  %v581 = vunpack.c.l.b16 %v73
  %v582 = vunpack.c.l.b16 %v74
  %v583 = vunpack.c.h.b16 %v74
  %v584 = vunpack.c.l.b16 %v75
  %v585 = vunpack.c.h.b16 %v75
  %v586 = vunpack.c.l.b16 %v76
  %v587 = vunpack.c.l.b16 %v77
  %v588 = vunpack.c.h.b16 %v77
  %v589 = vunpack.c.l.b16 %v78
  %v590 = vunpack.c.h.b16 %v78
  %v591 = vunpack.c.l.b16 %v79
  %v592 = vunpack.c.l.b16 %v80
  %v593 = vunpack.c.h.b16 %v80
  %v594 = vunpack.c.l.b16 %v81
  %v595 = vunpack.c.h.b16 %v81
  %v596 = vunpack.c.l.b16 %v82
  %v597 = vunpack.c.l.b16 %v83
  %v598 = vunpack.c.h.b16 %v83
  %v599 = vunpack.c.l.b16 %v84
  %v600 = vunpack.c.h.b16 %v84
  %v601 = vunpack.c.l.b16 %v85
  %v602 = vunpack.c.l.b16 %v86
  %v603 = vunpack.c.h.b16 %v86
  %v604 = vunpack.c.l.b16 %v87
  %v605 = vunpack.c.h.b16 %v87
  %v606 = vunpack.c.l.b16 %v88
  %v607 = vunpack.c.l.b16 %v89
  %v608 = vunpack.c.h.b16 %v89
  %v609 = vunpack.c.l.b16 %v90
  %v610 = vunpack.c.h.b16 %v90
  %v611 = vunpack.c.l.b16 %v91
  %v612 = vunpack.c.l.b16 %v92
  %v613 = vunpack.c.h.b16 %v92
  %v614 = vunpack.c.l.b16 %v93
  %v615 = vunpack.c.h.b16 %v93
  %v616 = vunpack.c.l.b16 %v94
  %v617 = vunpack.c.l.b16 %v95
  %v618 = vunpack.c.h.b16 %v95
  %v619 = vunpack.c.l.b16 %v96
  %v620 = vunpack.c.h.b16 %v96
  %v621 = vunpack.c.l.b16 %v97
  %v622 = vunpack.c.l.b16 %v98
  %v623 = vunpack.c.h.b16 %v98
  %v624 = vunpack.c.l.b16 %v99
  %v625 = vunpack.c.h.b16 %v99
  %v626 = vunpack.c.l.b16 %v100
  %v627 = vunpack.c.l.b16 %v101
  %v628 = vunpack.c.h.b16 %v101
  %v629 = vunpack.c.l.b16 %v102
  %v630 = vunpack.c.h.b16 %v102
  %v631 = vunpack.c.l.b16 %v103
  %v632 = vunpack.c.l.b16 %v104
  %v633 = vunpack.c.h.b16 %v104
  %v634 = vunpack.c.l.b16 %v105
  %v635 = vunpack.c.h.b16 %v105
  %v636 = vunpack.c.l.b16 %v106
  %v637 = vunpack.c.l.b16 %v107
  %v638 = vunpack.c.h.b16 %v107
  %v639 = vunpack.c.l.b16 %v108
  %v640 = vunpack.c.h.b16 %v108
  %v641 = vunpack.c.l.b16 %v109
  %v642 = vunpack.c.l.b16 %v110
  %v643 = vunpack.c.h.b16 %v110
  %v644 = vunpack.c.l.b16 %v111
  %v645 = vunpack.c.h.b16 %v111
  %v646 = vunpack.c.l.b16 %v112
  %v647 = vunpack.c.l.b16 %v113
  %v648 = vunpack.c.h.b16 %v113
  %v649 = vunpack.c.l.b16 %v114
  %v650 = vunpack.c.h.b16 %v114
  %v651 = vunpack.c.l.b16 %v115
  %v652 = vunpack.c.l.b16 %v116
  %v653 = vunpack.c.h.b16 %v116
  %v654 = vunpack.c.l.b16 %v117
  %v655 = vunpack.c.h.b16 %v117
  %v656 = vunpack.c.l.b16 %v118
  %v657 = vunpack.c.l.b16 %v119
  %v658 = vunpack.c.h.b16 %v119
  %v659 = vunpack.c.l.b16 %v120
  %v660 = vunpack.c.h.b16 %v120
  %v661 = vunpack.c.l.b16 %v121
  %v662 = vunpack.c.l.b16 %v122
  %v663 = vunpack.c.h.b16 %v122
  %v664 = vunpack.c.l.b16 %v123
  %v665 = vunpack.c.h.b16 %v123
  %v666 = vunpack.c.l.b16 %v124
  %v667 = vunpack.c.l.b16 %v125
  %v668 = vunpack.c.h.b16 %v125
  %v669 = vunpack.c.l.b16 %v126
  %v670 = vunpack.c.h.b16 %v126
  %v671 = vunpack.c.l.b16 %v127
  %v672 = vunpack.c.l.b16 %v128
  %v673 = vunpack.c.h.b16 %v128
  %v674 = vunpack.c.l.b16 %v129
  %v675 = vunpack.c.h.b16 %v129
  %v676 = vunpack.c.l.b16 %v130
  %v677 = vunpack.c.l.b16 %v131
  %v678 = vunpack.c.h.b16 %v131
  %v679 = vunpack.c.l.b16 %v132
  %v680 = vunpack.c.h.b16 %v132
  %v681 = vunpack.c.l.b16 %v133
  %v682 = vunpack.c.l.b16 %v134
  %v683 = vunpack.c.h.b16 %v134
  %v684 = vunpack.c.l.b16 %v135
  %v685 = vunpack.c.h.b16 %v135
  %v686 = vunpack.c.l.b16 %v136
  %v687 = vunpack.c.l.b16 %v137
  %v688 = vunpack.c.h.b16 %v137
  %v689 = vunpack.c.l.b16 %v138
  %v690 = vunpack.c.h.b16 %v138
  %v691 = vunpack.c.l.b16 %v139
  %v692 = vunpack.c.l.b16 %v140
  %v693 = vunpack.c.h.b16 %v140
  %v694 = vunpack.c.l.b16 %v141
  %v695 = vunpack.c.h.b16 %v141
  %v696 = vunpack.c.l.b16 %v142
  %v697 = vunpack.c.l.b16 %v143
  %v698 = vunpack.c.h.b16 %v143
  %v699 = vunpack.c.l.b16 %v144
  %v700 = vunpack.c.h.b16 %v144
  %v701 = vunpack.c.l.b16 %v145
  %v702 = vunpack.c.l.b16 %v146
  %v703 = vunpack.c.h.b16 %v146
  %v704 = vunpack.c.l.b16 %v147
  %v705 = vunpack.c.h.b16 %v147
  %v706 = vunpack.c.l.b16 %v148
  %v707 = vunpack.c.l.b16 %v149
  %v708 = vunpack.c.h.b16 %v149
  %v709 = vunpack.c.l.b16 %v150
  %v710 = vunpack.c.h.b16 %v150
  %v711 = vunpack.c.l.b16 %v151
  %v712 = vunpack.c.l.b16 %v152
  %v713 = vunpack.c.h.b16 %v152
  %v714 = vunpack.c.l.b16 %v153
  %v715 = vunpack.c.h.b16 %v153
  %v716 = vunpack.c.l.b16 %v154
  %v717 = vunpack.c.l.b16 %v155
  %v718 = vunpack.c.h.b16 %v155
  %v719 = vunpack.c.l.b16 %v156
  %v720 = vunpack.c.h.b16 %v156
  %v721 = vunpack.c.l.b16 %v157
  %v722 = vunpack.c.l.b16 %v158
  %v723 = vunpack.c.h.b16 %v158
  %v724 = vunpack.c.l.b16 %v159
  %v725 = vunpack.c.h.b16 %v159
  %v726 = vunpack.c.l.b16 %v160
  %v727 = vunpack.c.l.b16 %v161
  %v728 = vunpack.c.h.b16 %v161
  %v729 = vunpack.c.l.b16 %v162
  %v730 = vunpack.c.h.b16 %v162
  %v731 = vunpack.c.l.b16 %v163
  %v732 = vunpack.c.l.b16 %v164
  %v733 = vunpack.c.h.b16 %v164
  %v734 = vunpack.c.l.b16 %v165
  %v735 = vunpack.c.h.b16 %v165
  %v736 = vunpack.c.l.b16 %v166
  %v737 = vunpack.c.l.b16 %v167
  %v738 = vunpack.c.h.b16 %v167
  %v739 = vunpack.c.l.b16 %v168
  %v740 = vunpack.c.h.b16 %v168
  %v741 = vunpack.c.l.b16 %v169
  %v742 = vunpack.c.l.b16 %v170
  %v743 = vunpack.c.h.b16 %v170
  %v744 = vunpack.c.l.b16 %v171
  %v745 = vunpack.c.h.b16 %v171
  %v746 = vunpack.c.l.b16 %v172
  %v747 = vunpack.c.l.b16 %v173
  %v748 = vunpack.c.h.b16 %v173
  %v749 = vunpack.c.l.b16 %v174
  %v750 = vunpack.c.h.b16 %v174
  %v751 = vunpack.c.l.b16 %v175
  %v752 = vunpack.c.l.b16 %v176
  %v753 = vunpack.c.h.b16 %v176
  %v754 = vunpack.c.l.b16 %v177
  %v755 = vunpack.c.h.b16 %v177
  %v756 = vunpack.c.l.b16 %v178
  %v757 = vunpack.c.l.b16 %v179
  %v758 = vunpack.c.h.b16 %v179
  %v759 = vunpack.c.l.b16 %v180
  %v760 = vunpack.c.h.b16 %v180
  %v761 = vunpack.c.l.b16 %v181
  %v762 = vunpack.c.l.b16 %v182
  %v763 = vunpack.c.h.b16 %v182
  %v764 = vunpack.c.l.b16 %v183
  %v765 = vunpack.c.h.b16 %v183
  %v766 = vunpack.c.l.b16 %v184
  %v767 = vunpack.c.l.b16 %v185
  %v768 = vunpack.c.h.b16 %v185
  %v769 = vunpack.c.l.b16 %v186
  %v770 = vunpack.c.h.b16 %v186
  %v771 = vunpack.c.l.b16 %v187
  %v772 = vunpack.c.l.b16 %v188
  %v773 = vunpack.c.h.b16 %v188
  %v774 = vunpack.c.l.b16 %v189
  %v775 = vunpack.c.h.b16 %v189
  %v776 = vunpack.c.l.b16 %v190
  %v777 = vunpack.c.l.b16 %v191
  %v778 = vunpack.c.h.b16 %v191
  %v779 = vunpack.c.l.b16 %v192
  %v780 = vunpack.c.h.b16 %v192
  %v781 = vunpack.c.l.b16 %v193
  %v782 = vunpack.c.l.b16 %v194
  %v783 = vunpack.c.h.b16 %v194
  %v784 = vunpack.c.l.b16 %v195
  %v785 = vunpack.c.h.b16 %v195
  %v786 = vunpack.c.l.b16 %v196
  %v787 = vunpack.c.l.b16 %v197
  %v788 = vunpack.c.h.b16 %v197
  %v789 = vunpack.c.l.b16 %v198
  %v790 = vunpack.c.h.b16 %v198
  %v791 = vunpack.c.l.b16 %v199
  %v792 = vunpack.c.l.b16 %v200
  %v793 = vunpack.c.h.b16 %v200
  %v794 = vunpack.c.l.b16 %v201
  %v795 = vunpack.c.h.b16 %v201
  %v796 = vunpack.c.l.b16 %v202
  %v797 = vunpack.c.l.b16 %v203
  %v798 = vunpack.c.h.b16 %v203
  %v799 = vunpack.c.l.b16 %v204
  %v800 = vunpack.c.h.b16 %v204
  %v801 = vunpack.c.l.b16 %v205
  %v802 = vpack.c.b16 %v487, %v482
  %v803 = vpack.c.b16 %v488, %v483
  %v804 = vpack.c.b16 %v489, %v484
  %v805 = vpack.c.b16 %v490, %v485
  %v806 = vpack.c.b16 %v491, %v486
  %v807 = vpack.c.b16 %v497, %v492
  %v808 = vpack.c.b16 %v498, %v493
  %v809 = vpack.c.b16 %v499, %v494
  %v810 = vpack.c.b16 %v500, %v495
  %v811 = vpack.c.b16 %v501, %v496
  %v812 = vpack.c.b16 %v507, %v502
  %v813 = vpack.c.b16 %v508, %v503
  %v814 = vpack.c.b16 %v509, %v504
  %v815 = vpack.c.b16 %v510, %v505
  %v816 = vpack.c.b16 %v511, %v506
  %v817 = vpack.c.b16 %v517, %v512
  %v818 = vpack.c.b16 %v518, %v513
  %v819 = vpack.c.b16 %v519, %v514
  %v820 = vpack.c.b16 %v520, %v515
  %v821 = vpack.c.b16 %v521, %v516
  %v822 = vpack.c.b16 %v527, %v522
  %v823 = vpack.c.b16 %v528, %v523
  %v824 = vpack.c.b16 %v529, %v524
  %v825 = vpack.c.b16 %v530, %v525
  %v826 = vpack.c.b16 %v531, %v526
  %v827 = vpack.c.b16 %v537, %v532
  %v828 = vpack.c.b16 %v538, %v533
  %v829 = vpack.c.b16 %v539, %v534
  %v830 = vpack.c.b16 %v540, %v535
  %v831 = vpack.c.b16 %v541, %v536
  %v832 = vpack.c.b16 %v547, %v542
  %v833 = vpack.c.b16 %v548, %v543
  %v834 = vpack.c.b16 %v549, %v544
  %v835 = vpack.c.b16 %v550, %v545
  %v836 = vpack.c.b16 %v551, %v546
  %v837 = vpack.c.b16 %v557, %v552
  %v838 = vpack.c.b16 %v558, %v553
  %v839 = vpack.c.b16 %v559, %v554
  %v840 = vpack.c.b16 %v560, %v555
  %v841 = vpack.c.b16 %v561, %v556
  %v842 = vpack.c.b16 %v567, %v562
  %v843 = vpack.c.b16 %v568, %v563
  %v844 = vpack.c.b16 %v569, %v564
  %v845 = vpack.c.b16 %v570, %v565
  %v846 = vpack.c.b16 %v571, %v566
  %v847 = vpack.c.b16 %v577, %v572
  %v848 = vpack.c.b16 %v578, %v573
  %v849 = vpack.c.b16 %v579, %v574
  %v850 = vpack.c.b16 %v580, %v575
  %v851 = vpack.c.b16 %v581, %v576
  %v852 = vpack.c.b16 %v587, %v582
  %v853 = vpack.c.b16 %v588, %v583
  %v854 = vpack.c.b16 %v589, %v584
  %v855 = vpack.c.b16 %v590, %v585
  %v856 = vpack.c.b16 %v591, %v586
  %v857 = vpack.c.b16 %v597, %v592
  %v858 = vpack.c.b16 %v598, %v593
  %v859 = vpack.c.b16 %v599, %v594
  %v860 = vpack.c.b16 %v600, %v595
  %v861 = vpack.c.b16 %v601, %v596
  %v862 = vpack.c.b16 %v607, %v602
  %v863 = vpack.c.b16 %v608, %v603
  %v864 = vpack.c.b16 %v609, %v604
  %v865 = vpack.c.b16 %v610, %v605
  %v866 = vpack.c.b16 %v611, %v606
  %v867 = vpack.c.b16 %v617, %v612
  %v868 = vpack.c.b16 %v618, %v613
  %v869 = vpack.c.b16 %v619, %v614
  %v870 = vpack.c.b16 %v620, %v615
  %v871 = vpack.c.b16 %v621, %v616
  %v872 = vpack.c.b16 %v627, %v622
  %v873 = vpack.c.b16 %v628, %v623
  %v874 = vpack.c.b16 %v629, %v624
  %v875 = vpack.c.b16 %v630, %v625
  %v876 = vpack.c.b16 %v631, %v626
  %v877 = vpack.c.b16 %v637, %v632
  %v878 = vpack.c.b16 %v638, %v633
  %v879 = vpack.c.b16 %v639, %v634
  %v880 = vpack.c.b16 %v640, %v635
  %v881 = vpack.c.b16 %v641, %v636
  %v882 = vpack.c.b16 %v647, %v642
  %v883 = vpack.c.b16 %v648, %v643
  %v884 = vpack.c.b16 %v649, %v644
  %v885 = vpack.c.b16 %v650, %v645
  %v886 = vpack.c.b16 %v651, %v646
  %v887 = vpack.c.b16 %v657, %v652
  %v888 = vpack.c.b16 %v658, %v653
  %v889 = vpack.c.b16 %v659, %v654
  %v890 = vpack.c.b16 %v660, %v655
  %v891 = vpack.c.b16 %v661, %v656
  %v892 = vpack.c.b16 %v667, %v662
  %v893 = vpack.c.b16 %v668, %v663
  %v894 = vpack.c.b16 %v669, %v664
  %v895 = vpack.c.b16 %v670, %v665
  %v896 = vpack.c.b16 %v671, %v666
  %v897 = vpack.c.b16 %v677, %v672
  %v898 = vpack.c.b16 %v678, %v673
  %v899 = vpack.c.b16 %v679, %v674
  %v900 = vpack.c.b16 %v680, %v675
  %v901 = vpack.c.b16 %v681, %v676
  %v902 = vpack.c.b16 %v687, %v682
  %v903 = vpack.c.b16 %v688, %v683
  %v904 = vpack.c.b16 %v689, %v684
  %v905 = vpack.c.b16 %v690, %v685
  %v906 = vpack.c.b16 %v691, %v686
  %v907 = vpack.c.b16 %v697, %v692
  %v908 = vpack.c.b16 %v698, %v693
  %v909 = vpack.c.b16 %v699, %v694
  %v910 = vpack.c.b16 %v700, %v695
  %v911 = vpack.c.b16 %v701, %v696
  %v912 = vpack.c.b16 %v707, %v702
  %v913 = vpack.c.b16 %v708, %v703
  %v914 = vpack.c.b16 %v709, %v704
  %v915 = vpack.c.b16 %v710, %v705
  %v916 = vpack.c.b16 %v711, %v706
  %v917 = vpack.c.b16 %v717, %v712
  %v918 = vpack.c.b16 %v718, %v713
  %v919 = vpack.c.b16 %v719, %v714
  %v920 = vpack.c.b16 %v720, %v715
  %v921 = vpack.c.b16 %v721, %v716
  %v922 = vpack.c.b16 %v727, %v722
  %v923 = vpack.c.b16 %v728, %v723
  %v924 = vpack.c.b16 %v729, %v724
  %v925 = vpack.c.b16 %v730, %v725
  %v926 = vpack.c.b16 %v731, %v726
  %v927 = vpack.c.b16 %v737, %v732
  %v928 = vpack.c.b16 %v738, %v733
  %v929 = vpack.c.b16 %v739, %v734
  %v930 = vpack.c.b16 %v740, %v735
  %v931 = vpack.c.b16 %v741, %v736
  %v932 = vpack.c.b16 %v747, %v742
  %v933 = vpack.c.b16 %v748, %v743
  %v934 = vpack.c.b16 %v749, %v744
  %v935 = vpack.c.b16 %v750, %v745
  %v936 = vpack.c.b16 %v751, %v746
  %v937 = vpack.c.b16 %v757, %v752
  %v938 = vpack.c.b16 %v758, %v753
  %v939 = vpack.c.b16 %v759, %v754
  %v940 = vpack.c.b16 %v760, %v755
  %v941 = vpack.c.b16 %v761, %v756
  %v942 = vpack.c.b16 %v767, %v762
  %v943 = vpack.c.b16 %v768, %v763
  %v944 = vpack.c.b16 %v769, %v764
  %v945 = vpack.c.b16 %v770, %v765
  %v946 = vpack.c.b16 %v771, %v766
  %v947 = vpack.c.b16 %v777, %v772
  %v948 = vpack.c.b16 %v778, %v773
  %v949 = vpack.c.b16 %v779, %v774
  %v950 = vpack.c.b16 %v780, %v775
  %v951 = vpack.c.b16 %v781, %v776
  %v952 = vpack.c.b16 %v787, %v782
  %v953 = vpack.c.b16 %v788, %v783
  %v954 = vpack.c.b16 %v789, %v784
  %v955 = vpack.c.b16 %v790, %v785
  %v956 = vpack.c.b16 %v791, %v786
  %v957 = vpack.c.b16 %v797, %v792
  %v958 = vpack.c.b16 %v798, %v793
  %v959 = vpack.c.b16 %v799, %v794
  %v960 = vpack.c.b16 %v800, %v795
  %v961 = vpack.c.b16 %v801, %v796
  %v1202 = vunpack.c.l.b16 %v206
  %v1203 = vunpack.c.l.b16 %v207
  %v1204 = vunpack.c.l.b16 %v208
  %v1205 = vunpack.c.l.b16 %v209
  %v1206 = vunpack.c.l.b16 %v210
  %v1207 = vunpack.c.l.b16 %v211
  %v1208 = vunpack.c.l.b16 %v212
  %v1209 = vunpack.c.l.b16 %v213
  %v1210 = vunpack.c.l.b16 %v214
  %v1211 = vunpack.c.l.b16 %v215
  %v1212 = vunpack.c.l.b16 %v216
  %v1213 = vunpack.c.l.b16 %v217
  %v1214 = vunpack.c.l.b16 %v218
  %v1215 = vunpack.c.l.b16 %v219
  %v1216 = vunpack.c.l.b16 %v220
  %v1217 = vunpack.c.l.b16 %v221
  %v1218 = vunpack.c.l.b16 %v222
  %v1219 = vunpack.c.l.b16 %v223
  %v1220 = vunpack.c.l.b16 %v224
  %v1221 = vunpack.c.l.b16 %v225
  %v1222 = vunpack.c.l.b16 %v226
  %v1223 = vunpack.c.l.b16 %v227
  %v1224 = vunpack.c.l.b16 %v228
  %v1225 = vunpack.c.l.b16 %v229
  %v1226 = vunpack.c.l.b16 %v230
  %v1227 = vunpack.c.l.b16 %v231
  %v1228 = vunpack.c.l.b16 %v232
  %v1229 = vunpack.c.l.b16 %v233
  %v1230 = vunpack.c.l.b16 %v234
  %v1231 = vunpack.c.l.b16 %v235
  %v1232 = vunpack.c.l.b16 %v236
  %v1233 = vunpack.c.l.b16 %v237
  %v1234 = vunpack.c.l.b16 %v238
  %v1235 = vunpack.c.l.b16 %v239
  %v1236 = vunpack.c.l.b16 %v240
  %v1237 = vunpack.c.l.b16 %v241
  %v1238 = vunpack.c.l.b16 %v242
  %v1239 = vunpack.c.l.b16 %v243
  %v1240 = vunpack.c.l.b16 %v244
  %v1241 = vunpack.c.l.b16 %v245
  %v1242 = vunpack.c.l.b16 %v246
  %v1243 = vunpack.c.l.b16 %v247
  %v1244 = vunpack.c.l.b16 %v248
  %v1245 = vunpack.c.l.b16 %v249
  %v1246 = vunpack.c.l.b16 %v250
  %v1247 = vunpack.c.l.b16 %v251
  %v1248 = vunpack.c.l.b16 %v252
  %v1249 = vunpack.c.l.b16 %v253
  %v1250 = vunpack.c.l.b16 %v254
  %v1251 = vunpack.c.l.b16 %v255
  %v1252 = vunpack.c.l.b16 %v256
  %v1253 = vunpack.c.l.b16 %v257
  %v1254 = vunpack.c.l.b16 %v258
  %v1255 = vunpack.c.l.b16 %v259
  %v1256 = vunpack.c.l.b16 %v260
  %v1257 = vunpack.c.l.b16 %v261
  %v1258 = vunpack.c.l.b16 %v262
  %v1259 = vunpack.c.l.b16 %v263
  %v1260 = vunpack.c.l.b16 %v264
  %v1261 = vunpack.c.l.b16 %v265
  %v1262 = vunpack.c.l.b16 %v266
  %v1263 = vunpack.c.l.b16 %v267
  %v1264 = vunpack.c.l.b16 %v268
  %v1265 = vunpack.c.l.b16 %v269
  %v1266 = vunpack.c.l.b16 %v270
  %v1267 = vunpack.c.l.b16 %v271
  %v1268 = vunpack.c.l.b16 %v272
  %v1269 = vunpack.c.l.b16 %v273
  %v1270 = vunpack.c.l.b16 %v274
  %v1271 = vunpack.c.l.b16 %v275
  %v1272 = vunpack.c.l.b16 %v276
  %v1273 = vunpack.c.l.b16 %v277
  %v1274 = vunpack.c.l.b16 %v278
  %v1275 = vunpack.c.l.b16 %v279
  %v1276 = vunpack.c.l.b16 %v280
  %v1277 = vunpack.c.l.b16 %v281
  %v1278 = vunpack.c.l.b16 %v282
  %v1279 = vunpack.c.l.b16 %v283
  %v1280 = vunpack.c.l.b16 %v284
  %v1281 = vunpack.c.l.b16 %v285
  %v1282 = vpack.c.b16 %v1203, %v1202
  %v1283 = vpack.c.b16 %v1205, %v1204
  %v1284 = vpack.c.b16 %v1207, %v1206
  %v1285 = vpack.c.b16 %v1209, %v1208
  %v1286 = vpack.c.b16 %v1211, %v1210
  %v1287 = vpack.c.b16 %v1213, %v1212
  %v1288 = vpack.c.b16 %v1215, %v1214
  %v1289 = vpack.c.b16 %v1217, %v1216
  %v1290 = vpack.c.b16 %v1219, %v1218
  %v1291 = vpack.c.b16 %v1221, %v1220
  %v1292 = vpack.c.b16 %v1223, %v1222
  %v1293 = vpack.c.b16 %v1225, %v1224
  %v1294 = vpack.c.b16 %v1227, %v1226
  %v1295 = vpack.c.b16 %v1229, %v1228
  %v1296 = vpack.c.b16 %v1231, %v1230
  %v1297 = vpack.c.b16 %v1233, %v1232
  %v1298 = vpack.c.b16 %v1235, %v1234
  %v1299 = vpack.c.b16 %v1237, %v1236
  %v1300 = vpack.c.b16 %v1239, %v1238
  %v1301 = vpack.c.b16 %v1241, %v1240
  %v1302 = vpack.c.b16 %v1243, %v1242
  %v1303 = vpack.c.b16 %v1245, %v1244
  %v1304 = vpack.c.b16 %v1247, %v1246
  %v1305 = vpack.c.b16 %v1249, %v1248
  %v1306 = vpack.c.b16 %v1251, %v1250
  %v1307 = vpack.c.b16 %v1253, %v1252
  %v1308 = vpack.c.b16 %v1255, %v1254
  %v1309 = vpack.c.b16 %v1257, %v1256
  %v1310 = vpack.c.b16 %v1259, %v1258
  %v1311 = vpack.c.b16 %v1261, %v1260
  %v1312 = vpack.c.b16 %v1263, %v1262
  %v1313 = vpack.c.b16 %v1265, %v1264
  %v1314 = vpack.c.b16 %v1267, %v1266
  %v1315 = vpack.c.b16 %v1269, %v1268
  %v1316 = vpack.c.b16 %v1271, %v1270
  %v1317 = vpack.c.b16 %v1273, %v1272
  %v1318 = vpack.c.b16 %v1275, %v1274
  %v1319 = vpack.c.b16 %v1277, %v1276
  %v1320 = vpack.c.b16 %v1279, %v1278
  %v1321 = vpack.c.b16 %v1281, %v1280
  %1362 = vmatpush.bf16.msra.mxu0 %v1289
  %1363 = vmatpush.bf16.msra.mxu0 %v1288
  %1364 = vmatpush.bf16.msra.mxu0 %v1287
  %1365 = vmatpush.bf16.msra.mxu0 %v1286
  %1366 = vmatpush.bf16.msra.mxu0 %v1285
  %1367 = vmatpush.bf16.msra.mxu0 %v1284
  %1368 = vmatpush.bf16.msra.mxu0 %v1283
  %1369 = vmatpush.bf16.msra.mxu0 %v1282
  %1370 = vmatmul.bf16.gmra.mxu0 %v802
  %v1371 = vpop.f32.mrf.mxu0
  %v1372 = vadd.f32 %v288, %v1371
  %v1373 = vpop.f32.mrf.mxu0
  %v1374 = vadd.f32 %v288, %v1373
  %1375 = vmatmul.bf16.gmra.mxu0 %v807
  %v1376 = vpop.f32.mrf.mxu0
  %v1377 = vadd.f32 %v288, %v1376
  %v1378 = vpop.f32.mrf.mxu0
  %v1379 = vadd.f32 %v288, %v1378
  %1380 = vmatmul.bf16.gmra.mxu0 %v812
  %v1381 = vpop.f32.mrf.mxu0
  %v1382 = vadd.f32 %v288, %v1381
  %v1383 = vpop.f32.mrf.mxu0
  %v1384 = vadd.f32 %v288, %v1383
  %1385 = vmatmul.bf16.gmra.mxu0 %v817
  %v1386 = vpop.f32.mrf.mxu0
  %v1387 = vadd.f32 %v288, %v1386
  %v1388 = vpop.f32.mrf.mxu0
  %v1389 = vadd.f32 %v288, %v1388
  %1390 = vmatmul.bf16.gmra.mxu0 %v822
  %v1391 = vpop.f32.mrf.mxu0
  %v1392 = vadd.f32 %v288, %v1391
  %v1393 = vpop.f32.mrf.mxu0
  %v1394 = vadd.f32 %v288, %v1393
  %1395 = vmatmul.bf16.gmra.mxu0 %v827
  %v1396 = vpop.f32.mrf.mxu0
  %v1397 = vadd.f32 %v288, %v1396
  %v1398 = vpop.f32.mrf.mxu0
  %v1399 = vadd.f32 %v288, %v1398
  %1400 = vmatmul.bf16.gmra.mxu0 %v832
  %v1401 = vpop.f32.mrf.mxu0
  %v1402 = vadd.f32 %v288, %v1401
  %v1403 = vpop.f32.mrf.mxu0
  %v1404 = vadd.f32 %v288, %v1403
  %1405 = vmatmul.bf16.gmra.mxu0 %v837
  %v1406 = vpop.f32.mrf.mxu0
  %v1407 = vadd.f32 %v288, %v1406
  %v1408 = vpop.f32.mrf.mxu0
  %v1409 = vadd.f32 %v288, %v1408
  %1410 = vmatmul.bf16.gmra.mxu0 %v842
  %v1411 = vpop.f32.mrf.mxu0
  %v1412 = vadd.f32 %v288, %v1411
  %v1413 = vpop.f32.mrf.mxu0
  %v1414 = vadd.f32 %v288, %v1413
  %1415 = vmatmul.bf16.gmra.mxu0 %v847
  %v1416 = vpop.f32.mrf.mxu0
  %v1417 = vadd.f32 %v288, %v1416
  %v1418 = vpop.f32.mrf.mxu0
  %v1419 = vadd.f32 %v288, %v1418
  %1420 = vmatmul.bf16.gmra.mxu0 %v852
  %v1421 = vpop.f32.mrf.mxu0
  %v1422 = vadd.f32 %v288, %v1421
  %v1423 = vpop.f32.mrf.mxu0
  %v1424 = vadd.f32 %v288, %v1423
  %1425 = vmatmul.bf16.gmra.mxu0 %v857
  %v1426 = vpop.f32.mrf.mxu0
  %v1427 = vadd.f32 %v288, %v1426
  %v1428 = vpop.f32.mrf.mxu0
  %v1429 = vadd.f32 %v288, %v1428
  %1430 = vmatmul.bf16.gmra.mxu0 %v862
  %v1431 = vpop.f32.mrf.mxu0
  %v1432 = vadd.f32 %v288, %v1431
  %v1433 = vpop.f32.mrf.mxu0
  %v1434 = vadd.f32 %v288, %v1433
  %1435 = vmatmul.bf16.gmra.mxu0 %v867
  %v1436 = vpop.f32.mrf.mxu0
  %v1437 = vadd.f32 %v288, %v1436
  %v1438 = vpop.f32.mrf.mxu0
  %v1439 = vadd.f32 %v288, %v1438
  %1440 = vmatmul.bf16.gmra.mxu0 %v872
  %v1441 = vpop.f32.mrf.mxu0
  %v1442 = vadd.f32 %v288, %v1441
  %v1443 = vpop.f32.mrf.mxu0
  %v1444 = vadd.f32 %v288, %v1443
  %1445 = vmatmul.bf16.gmra.mxu0 %v877
  %v1446 = vpop.f32.mrf.mxu0
  %v1447 = vadd.f32 %v288, %v1446
  %v1448 = vpop.f32.mrf.mxu0
  %v1449 = vadd.f32 %v288, %v1448
  %1450 = vmatmul.bf16.gmra.mxu0 %v882
  %v1451 = vpop.f32.mrf.mxu0
  %v1452 = vadd.f32 %v288, %v1451
  %v1453 = vpop.f32.mrf.mxu0
  %v1454 = vadd.f32 %v288, %v1453
  %1455 = vmatmul.bf16.gmra.mxu0 %v887
  %v1456 = vpop.f32.mrf.mxu0
  %v1457 = vadd.f32 %v288, %v1456
  %v1458 = vpop.f32.mrf.mxu0
  %v1459 = vadd.f32 %v288, %v1458
  %1460 = vmatmul.bf16.gmra.mxu0 %v892
  %v1461 = vpop.f32.mrf.mxu0
  %v1462 = vadd.f32 %v288, %v1461
  %v1463 = vpop.f32.mrf.mxu0
  %v1464 = vadd.f32 %v288, %v1463
  %1465 = vmatmul.bf16.gmra.mxu0 %v897
  %v1466 = vpop.f32.mrf.mxu0
  %v1467 = vadd.f32 %v288, %v1466
  %v1468 = vpop.f32.mrf.mxu0
  %v1469 = vadd.f32 %v288, %v1468
  %1470 = vmatmul.bf16.gmra.mxu0 %v902
  %v1471 = vpop.f32.mrf.mxu0
  %v1472 = vadd.f32 %v288, %v1471
  %v1473 = vpop.f32.mrf.mxu0
  %v1474 = vadd.f32 %v288, %v1473
  %1475 = vmatmul.bf16.gmra.mxu0 %v907
  %v1476 = vpop.f32.mrf.mxu0
  %v1477 = vadd.f32 %v288, %v1476
  %v1478 = vpop.f32.mrf.mxu0
  %v1479 = vadd.f32 %v288, %v1478
  %1480 = vmatmul.bf16.gmra.mxu0 %v912
  %v1481 = vpop.f32.mrf.mxu0
  %v1482 = vadd.f32 %v288, %v1481
  %v1483 = vpop.f32.mrf.mxu0
  %v1484 = vadd.f32 %v288, %v1483
  %1485 = vmatmul.bf16.gmra.mxu0 %v917
  %v1486 = vpop.f32.mrf.mxu0
  %v1487 = vadd.f32 %v288, %v1486
  %v1488 = vpop.f32.mrf.mxu0
  %v1489 = vadd.f32 %v288, %v1488
  %1490 = vmatmul.bf16.gmra.mxu0 %v922
  %v1491 = vpop.f32.mrf.mxu0
  %v1492 = vadd.f32 %v288, %v1491
  %v1493 = vpop.f32.mrf.mxu0
  %v1494 = vadd.f32 %v288, %v1493
  %1495 = vmatmul.bf16.gmra.mxu0 %v927
  %v1496 = vpop.f32.mrf.mxu0
  %v1497 = vadd.f32 %v288, %v1496
  %v1498 = vpop.f32.mrf.mxu0
  %v1499 = vadd.f32 %v288, %v1498
  %1500 = vmatmul.bf16.gmra.mxu0 %v932
  %v1501 = vpop.f32.mrf.mxu0
  %v1502 = vadd.f32 %v288, %v1501
  %v1503 = vpop.f32.mrf.mxu0
  %v1504 = vadd.f32 %v288, %v1503
  %1505 = vmatmul.bf16.gmra.mxu0 %v937
  %v1506 = vpop.f32.mrf.mxu0
  %v1507 = vadd.f32 %v288, %v1506
  %v1508 = vpop.f32.mrf.mxu0
  %v1509 = vadd.f32 %v288, %v1508
  %1510 = vmatmul.bf16.gmra.mxu0 %v942
  %v1511 = vpop.f32.mrf.mxu0
  %v1512 = vadd.f32 %v288, %v1511
  %v1513 = vpop.f32.mrf.mxu0
  %v1514 = vadd.f32 %v288, %v1513
  %1515 = vmatmul.bf16.gmra.mxu0 %v947
  %v1516 = vpop.f32.mrf.mxu0
  %v1517 = vadd.f32 %v288, %v1516
  %v1518 = vpop.f32.mrf.mxu0
  %v1519 = vadd.f32 %v288, %v1518
  %1520 = vmatmul.bf16.gmra.mxu0 %v952
  %v1521 = vpop.f32.mrf.mxu0
  %v1522 = vadd.f32 %v288, %v1521
  %v1523 = vpop.f32.mrf.mxu0
  %v1524 = vadd.f32 %v288, %v1523
  %1525 = vmatmul.bf16.gmra.mxu0 %v957
  %v1526 = vpop.f32.mrf.mxu0
  %v1527 = vadd.f32 %v288, %v1526
  %v1528 = vpop.f32.mrf.mxu0
  %v1529 = vadd.f32 %v288, %v1528
  %1530 = vdwg.mxu0
  %1531 = vmatpush.bf16.msra.mxu0 %v1297
  %1532 = vmatpush.bf16.msra.mxu0 %v1296
  %1533 = vmatpush.bf16.msra.mxu0 %v1295
  %1534 = vmatpush.bf16.msra.mxu0 %v1294
  %1535 = vmatpush.bf16.msra.mxu0 %v1293
  %1536 = vmatpush.bf16.msra.mxu0 %v1292
  %1537 = vmatpush.bf16.msra.mxu0 %v1291
  %1538 = vmatpush.bf16.msra.mxu0 %v1290
  %1539 = vmatmul.bf16.gmra.mxu0 %v803
  %v1540 = vpop.f32.mrf.mxu0
  %v1541 = vadd.f32 %v1372, %v1540
  %v1542 = vpop.f32.mrf.mxu0
  %v1543 = vadd.f32 %v1374, %v1542
  %1544 = vmatmul.bf16.gmra.mxu0 %v808
  %v1545 = vpop.f32.mrf.mxu0
  %v1546 = vadd.f32 %v1377, %v1545
  %v1547 = vpop.f32.mrf.mxu0
  %v1548 = vadd.f32 %v1379, %v1547
  %1549 = vmatmul.bf16.gmra.mxu0 %v813
  %v1550 = vpop.f32.mrf.mxu0
  %v1551 = vadd.f32 %v1382, %v1550
  %v1552 = vpop.f32.mrf.mxu0
  %v1553 = vadd.f32 %v1384, %v1552
  %1554 = vmatmul.bf16.gmra.mxu0 %v818
  %v1555 = vpop.f32.mrf.mxu0
  %v1556 = vadd.f32 %v1387, %v1555
  %v1557 = vpop.f32.mrf.mxu0
  %v1558 = vadd.f32 %v1389, %v1557
  %1559 = vmatmul.bf16.gmra.mxu0 %v823
  %v1560 = vpop.f32.mrf.mxu0
  %v1561 = vadd.f32 %v1392, %v1560
  %v1562 = vpop.f32.mrf.mxu0
  %v1563 = vadd.f32 %v1394, %v1562
  %1564 = vmatmul.bf16.gmra.mxu0 %v828
  %v1565 = vpop.f32.mrf.mxu0
  %v1566 = vadd.f32 %v1397, %v1565
  %v1567 = vpop.f32.mrf.mxu0
  %v1568 = vadd.f32 %v1399, %v1567
  %1569 = vmatmul.bf16.gmra.mxu0 %v833
  %v1570 = vpop.f32.mrf.mxu0
  %v1571 = vadd.f32 %v1402, %v1570
  %v1572 = vpop.f32.mrf.mxu0
  %v1573 = vadd.f32 %v1404, %v1572
  %1574 = vmatmul.bf16.gmra.mxu0 %v838
  %v1575 = vpop.f32.mrf.mxu0
  %v1576 = vadd.f32 %v1407, %v1575
  %v1577 = vpop.f32.mrf.mxu0
  %v1578 = vadd.f32 %v1409, %v1577
  %1579 = vmatmul.bf16.gmra.mxu0 %v843
  %v1580 = vpop.f32.mrf.mxu0
  %v1581 = vadd.f32 %v1412, %v1580
  %v1582 = vpop.f32.mrf.mxu0
  %v1583 = vadd.f32 %v1414, %v1582
  %1584 = vmatmul.bf16.gmra.mxu0 %v848
  %v1585 = vpop.f32.mrf.mxu0
  %v1586 = vadd.f32 %v1417, %v1585
  %v1587 = vpop.f32.mrf.mxu0
  %v1588 = vadd.f32 %v1419, %v1587
  %1589 = vmatmul.bf16.gmra.mxu0 %v853
  %v1590 = vpop.f32.mrf.mxu0
  %v1591 = vadd.f32 %v1422, %v1590
  %v1592 = vpop.f32.mrf.mxu0
  %v1593 = vadd.f32 %v1424, %v1592
  %1594 = vmatmul.bf16.gmra.mxu0 %v858
  %v1595 = vpop.f32.mrf.mxu0
  %v1596 = vadd.f32 %v1427, %v1595
  %v1597 = vpop.f32.mrf.mxu0
  %v1598 = vadd.f32 %v1429, %v1597
  %1599 = vmatmul.bf16.gmra.mxu0 %v863
  %v1600 = vpop.f32.mrf.mxu0
  %v1601 = vadd.f32 %v1432, %v1600
  %v1602 = vpop.f32.mrf.mxu0
  %v1603 = vadd.f32 %v1434, %v1602
  %1604 = vmatmul.bf16.gmra.mxu0 %v868
  %v1605 = vpop.f32.mrf.mxu0
  %v1606 = vadd.f32 %v1437, %v1605
  %v1607 = vpop.f32.mrf.mxu0
  %v1608 = vadd.f32 %v1439, %v1607
  %1609 = vmatmul.bf16.gmra.mxu0 %v873
  %v1610 = vpop.f32.mrf.mxu0
  %v1611 = vadd.f32 %v1442, %v1610
  %v1612 = vpop.f32.mrf.mxu0
  %v1613 = vadd.f32 %v1444, %v1612
  %1614 = vmatmul.bf16.gmra.mxu0 %v878
  %v1615 = vpop.f32.mrf.mxu0
  %v1616 = vadd.f32 %v1447, %v1615
  %v1617 = vpop.f32.mrf.mxu0
  %v1618 = vadd.f32 %v1449, %v1617
  %1619 = vmatmul.bf16.gmra.mxu0 %v883
  %v1620 = vpop.f32.mrf.mxu0
  %v1621 = vadd.f32 %v1452, %v1620
  %v1622 = vpop.f32.mrf.mxu0
  %v1623 = vadd.f32 %v1454, %v1622
  %1624 = vmatmul.bf16.gmra.mxu0 %v888
  %v1625 = vpop.f32.mrf.mxu0
  %v1626 = vadd.f32 %v1457, %v1625
  %v1627 = vpop.f32.mrf.mxu0
  %v1628 = vadd.f32 %v1459, %v1627
  %1629 = vmatmul.bf16.gmra.mxu0 %v893
  %v1630 = vpop.f32.mrf.mxu0
  %v1631 = vadd.f32 %v1462, %v1630
  %v1632 = vpop.f32.mrf.mxu0
  %v1633 = vadd.f32 %v1464, %v1632
  %1634 = vmatmul.bf16.gmra.mxu0 %v898
  %v1635 = vpop.f32.mrf.mxu0
  %v1636 = vadd.f32 %v1467, %v1635
  %v1637 = vpop.f32.mrf.mxu0
  %v1638 = vadd.f32 %v1469, %v1637
  %1639 = vmatmul.bf16.gmra.mxu0 %v903
  %v1640 = vpop.f32.mrf.mxu0
  %v1641 = vadd.f32 %v1472, %v1640
  %v1642 = vpop.f32.mrf.mxu0
  %v1643 = vadd.f32 %v1474, %v1642
  %1644 = vmatmul.bf16.gmra.mxu0 %v908
  %v1645 = vpop.f32.mrf.mxu0
  %v1646 = vadd.f32 %v1477, %v1645
  %v1647 = vpop.f32.mrf.mxu0
  %v1648 = vadd.f32 %v1479, %v1647
  %1649 = vmatmul.bf16.gmra.mxu0 %v913
  %v1650 = vpop.f32.mrf.mxu0
  %v1651 = vadd.f32 %v1482, %v1650
  %v1652 = vpop.f32.mrf.mxu0
  %v1653 = vadd.f32 %v1484, %v1652
  %1654 = vmatmul.bf16.gmra.mxu0 %v918
  %v1655 = vpop.f32.mrf.mxu0
  %v1656 = vadd.f32 %v1487, %v1655
  %v1657 = vpop.f32.mrf.mxu0
  %v1658 = vadd.f32 %v1489, %v1657
  %1659 = vmatmul.bf16.gmra.mxu0 %v923
  %v1660 = vpop.f32.mrf.mxu0
  %v1661 = vadd.f32 %v1492, %v1660
  %v1662 = vpop.f32.mrf.mxu0
  %v1663 = vadd.f32 %v1494, %v1662
  %1664 = vmatmul.bf16.gmra.mxu0 %v928
  %v1665 = vpop.f32.mrf.mxu0
  %v1666 = vadd.f32 %v1497, %v1665
  %v1667 = vpop.f32.mrf.mxu0
  %v1668 = vadd.f32 %v1499, %v1667
  %1669 = vmatmul.bf16.gmra.mxu0 %v933
  %v1670 = vpop.f32.mrf.mxu0
  %v1671 = vadd.f32 %v1502, %v1670
  %v1672 = vpop.f32.mrf.mxu0
  %v1673 = vadd.f32 %v1504, %v1672
  %1674 = vmatmul.bf16.gmra.mxu0 %v938
  %v1675 = vpop.f32.mrf.mxu0
  %v1676 = vadd.f32 %v1507, %v1675
  %v1677 = vpop.f32.mrf.mxu0
  %v1678 = vadd.f32 %v1509, %v1677
  %1679 = vmatmul.bf16.gmra.mxu0 %v943
  %v1680 = vpop.f32.mrf.mxu0
  %v1681 = vadd.f32 %v1512, %v1680
  %v1682 = vpop.f32.mrf.mxu0
  %v1683 = vadd.f32 %v1514, %v1682
  %1684 = vmatmul.bf16.gmra.mxu0 %v948
  %v1685 = vpop.f32.mrf.mxu0
  %v1686 = vadd.f32 %v1517, %v1685
  %v1687 = vpop.f32.mrf.mxu0
  %v1688 = vadd.f32 %v1519, %v1687
  %1689 = vmatmul.bf16.gmra.mxu0 %v953
  %v1690 = vpop.f32.mrf.mxu0
  %v1691 = vadd.f32 %v1522, %v1690
  %v1692 = vpop.f32.mrf.mxu0
  %v1693 = vadd.f32 %v1524, %v1692
  %1694 = vmatmul.bf16.gmra.mxu0 %v958
  %v1695 = vpop.f32.mrf.mxu0
  %v1696 = vadd.f32 %v1527, %v1695
  %v1697 = vpop.f32.mrf.mxu0
  %v1698 = vadd.f32 %v1529, %v1697
  %1699 = vdwg.mxu0
  %1700 = vmatpush.bf16.msra.mxu0 %v1305
  %1701 = vmatpush.bf16.msra.mxu0 %v1304
  %1702 = vmatpush.bf16.msra.mxu0 %v1303
  %1703 = vmatpush.bf16.msra.mxu0 %v1302
  %1704 = vmatpush.bf16.msra.mxu0 %v1301
  %1705 = vmatpush.bf16.msra.mxu0 %v1300
  %1706 = vmatpush.bf16.msra.mxu0 %v1299
  %1707 = vmatpush.bf16.msra.mxu0 %v1298
  %1708 = vmatmul.bf16.gmra.mxu0 %v804
  %v1709 = vpop.f32.mrf.mxu0
  %v1710 = vadd.f32 %v1541, %v1709
  %v1711 = vpop.f32.mrf.mxu0
  %v1712 = vadd.f32 %v1543, %v1711
  %1713 = vmatmul.bf16.gmra.mxu0 %v809
  %v1714 = vpop.f32.mrf.mxu0
  %v1715 = vadd.f32 %v1546, %v1714
  %v1716 = vpop.f32.mrf.mxu0
  %v1717 = vadd.f32 %v1548, %v1716
  %1718 = vmatmul.bf16.gmra.mxu0 %v814
  %v1719 = vpop.f32.mrf.mxu0
  %v1720 = vadd.f32 %v1551, %v1719
  %v1721 = vpop.f32.mrf.mxu0
  %v1722 = vadd.f32 %v1553, %v1721
  %1723 = vmatmul.bf16.gmra.mxu0 %v819
  %v1724 = vpop.f32.mrf.mxu0
  %v1725 = vadd.f32 %v1556, %v1724
  %v1726 = vpop.f32.mrf.mxu0
  %v1727 = vadd.f32 %v1558, %v1726
  %1728 = vmatmul.bf16.gmra.mxu0 %v824
  %v1729 = vpop.f32.mrf.mxu0
  %v1730 = vadd.f32 %v1561, %v1729
  %v1731 = vpop.f32.mrf.mxu0
  %v1732 = vadd.f32 %v1563, %v1731
  %1733 = vmatmul.bf16.gmra.mxu0 %v829
  %v1734 = vpop.f32.mrf.mxu0
  %v1735 = vadd.f32 %v1566, %v1734
  %v1736 = vpop.f32.mrf.mxu0
  %v1737 = vadd.f32 %v1568, %v1736
  %1738 = vmatmul.bf16.gmra.mxu0 %v834
  %v1739 = vpop.f32.mrf.mxu0
  %v1740 = vadd.f32 %v1571, %v1739
  %v1741 = vpop.f32.mrf.mxu0
  %v1742 = vadd.f32 %v1573, %v1741
  %1743 = vmatmul.bf16.gmra.mxu0 %v839
  %v1744 = vpop.f32.mrf.mxu0
  %v1745 = vadd.f32 %v1576, %v1744
  %v1746 = vpop.f32.mrf.mxu0
  %v1747 = vadd.f32 %v1578, %v1746
  %1748 = vmatmul.bf16.gmra.mxu0 %v844
  %v1749 = vpop.f32.mrf.mxu0
  %v1750 = vadd.f32 %v1581, %v1749
  %v1751 = vpop.f32.mrf.mxu0
  %v1752 = vadd.f32 %v1583, %v1751
  %1753 = vmatmul.bf16.gmra.mxu0 %v849
  %v1754 = vpop.f32.mrf.mxu0
  %v1755 = vadd.f32 %v1586, %v1754
  %v1756 = vpop.f32.mrf.mxu0
  %v1757 = vadd.f32 %v1588, %v1756
  %1758 = vmatmul.bf16.gmra.mxu0 %v854
  %v1759 = vpop.f32.mrf.mxu0
  %v1760 = vadd.f32 %v1591, %v1759
  %v1761 = vpop.f32.mrf.mxu0
  %v1762 = vadd.f32 %v1593, %v1761
  %1763 = vmatmul.bf16.gmra.mxu0 %v859
  %v1764 = vpop.f32.mrf.mxu0
  %v1765 = vadd.f32 %v1596, %v1764
  %v1766 = vpop.f32.mrf.mxu0
  %v1767 = vadd.f32 %v1598, %v1766
  %1768 = vmatmul.bf16.gmra.mxu0 %v864
  %v1769 = vpop.f32.mrf.mxu0
  %v1770 = vadd.f32 %v1601, %v1769
  %v1771 = vpop.f32.mrf.mxu0
  %v1772 = vadd.f32 %v1603, %v1771
  %1773 = vmatmul.bf16.gmra.mxu0 %v869
  %v1774 = vpop.f32.mrf.mxu0
  %v1775 = vadd.f32 %v1606, %v1774
  %v1776 = vpop.f32.mrf.mxu0
  %v1777 = vadd.f32 %v1608, %v1776
  %1778 = vmatmul.bf16.gmra.mxu0 %v874
  %v1779 = vpop.f32.mrf.mxu0
  %v1780 = vadd.f32 %v1611, %v1779
  %v1781 = vpop.f32.mrf.mxu0
  %v1782 = vadd.f32 %v1613, %v1781
  %1783 = vmatmul.bf16.gmra.mxu0 %v879
  %v1784 = vpop.f32.mrf.mxu0
  %v1785 = vadd.f32 %v1616, %v1784
  %v1786 = vpop.f32.mrf.mxu0
  %v1787 = vadd.f32 %v1618, %v1786
  %1788 = vmatmul.bf16.gmra.mxu0 %v884
  %v1789 = vpop.f32.mrf.mxu0
  %v1790 = vadd.f32 %v1621, %v1789
  %v1791 = vpop.f32.mrf.mxu0
  %v1792 = vadd.f32 %v1623, %v1791
  %1793 = vmatmul.bf16.gmra.mxu0 %v889
  %v1794 = vpop.f32.mrf.mxu0
  %v1795 = vadd.f32 %v1626, %v1794
  %v1796 = vpop.f32.mrf.mxu0
  %v1797 = vadd.f32 %v1628, %v1796
  %1798 = vmatmul.bf16.gmra.mxu0 %v894
  %v1799 = vpop.f32.mrf.mxu0
  %v1800 = vadd.f32 %v1631, %v1799
  %v1801 = vpop.f32.mrf.mxu0
  %v1802 = vadd.f32 %v1633, %v1801
  %1803 = vmatmul.bf16.gmra.mxu0 %v899
  %v1804 = vpop.f32.mrf.mxu0
  %v1805 = vadd.f32 %v1636, %v1804
  %v1806 = vpop.f32.mrf.mxu0
  %v1807 = vadd.f32 %v1638, %v1806
  %1808 = vmatmul.bf16.gmra.mxu0 %v904
  %v1809 = vpop.f32.mrf.mxu0
  %v1810 = vadd.f32 %v1641, %v1809
  %v1811 = vpop.f32.mrf.mxu0
  %v1812 = vadd.f32 %v1643, %v1811
  %1813 = vmatmul.bf16.gmra.mxu0 %v909
  %v1814 = vpop.f32.mrf.mxu0
  %v1815 = vadd.f32 %v1646, %v1814
  %v1816 = vpop.f32.mrf.mxu0
  %v1817 = vadd.f32 %v1648, %v1816
  %1818 = vmatmul.bf16.gmra.mxu0 %v914
  %v1819 = vpop.f32.mrf.mxu0
  %v1820 = vadd.f32 %v1651, %v1819
  %v1821 = vpop.f32.mrf.mxu0
  %v1822 = vadd.f32 %v1653, %v1821
  %1823 = vmatmul.bf16.gmra.mxu0 %v919
  %v1824 = vpop.f32.mrf.mxu0
  %v1825 = vadd.f32 %v1656, %v1824
  %v1826 = vpop.f32.mrf.mxu0
  %v1827 = vadd.f32 %v1658, %v1826
  %1828 = vmatmul.bf16.gmra.mxu0 %v924
  %v1829 = vpop.f32.mrf.mxu0
  %v1830 = vadd.f32 %v1661, %v1829
  %v1831 = vpop.f32.mrf.mxu0
  %v1832 = vadd.f32 %v1663, %v1831
  %1833 = vmatmul.bf16.gmra.mxu0 %v929
  %v1834 = vpop.f32.mrf.mxu0
  %v1835 = vadd.f32 %v1666, %v1834
  %v1836 = vpop.f32.mrf.mxu0
  %v1837 = vadd.f32 %v1668, %v1836
  %1838 = vmatmul.bf16.gmra.mxu0 %v934
  %v1839 = vpop.f32.mrf.mxu0
  %v1840 = vadd.f32 %v1671, %v1839
  %v1841 = vpop.f32.mrf.mxu0
  %v1842 = vadd.f32 %v1673, %v1841
  %1843 = vmatmul.bf16.gmra.mxu0 %v939
  %v1844 = vpop.f32.mrf.mxu0
  %v1845 = vadd.f32 %v1676, %v1844
  %v1846 = vpop.f32.mrf.mxu0
  %v1847 = vadd.f32 %v1678, %v1846
  %1848 = vmatmul.bf16.gmra.mxu0 %v944
  %v1849 = vpop.f32.mrf.mxu0
  %v1850 = vadd.f32 %v1681, %v1849
  %v1851 = vpop.f32.mrf.mxu0
  %v1852 = vadd.f32 %v1683, %v1851
  %1853 = vmatmul.bf16.gmra.mxu0 %v949
  %v1854 = vpop.f32.mrf.mxu0
  %v1855 = vadd.f32 %v1686, %v1854
  %v1856 = vpop.f32.mrf.mxu0
  %v1857 = vadd.f32 %v1688, %v1856
  %1858 = vmatmul.bf16.gmra.mxu0 %v954
  %v1859 = vpop.f32.mrf.mxu0
  %v1860 = vadd.f32 %v1691, %v1859
  %v1861 = vpop.f32.mrf.mxu0
  %v1862 = vadd.f32 %v1693, %v1861
  %1863 = vmatmul.bf16.gmra.mxu0 %v959
  %v1864 = vpop.f32.mrf.mxu0
  %v1865 = vadd.f32 %v1696, %v1864
  %v1866 = vpop.f32.mrf.mxu0
  %v1867 = vadd.f32 %v1698, %v1866
  %1868 = vdwg.mxu0
  %1869 = vmatpush.bf16.msra.mxu0 %v1313
  %1870 = vmatpush.bf16.msra.mxu0 %v1312
  %1871 = vmatpush.bf16.msra.mxu0 %v1311
  %1872 = vmatpush.bf16.msra.mxu0 %v1310
  %1873 = vmatpush.bf16.msra.mxu0 %v1309
  %1874 = vmatpush.bf16.msra.mxu0 %v1308
  %1875 = vmatpush.bf16.msra.mxu0 %v1307
  %1876 = vmatpush.bf16.msra.mxu0 %v1306
  %1877 = vmatmul.bf16.gmra.mxu0 %v805
  %v1878 = vpop.f32.mrf.mxu0
  %v1879 = vadd.f32 %v1710, %v1878
  %v1880 = vpop.f32.mrf.mxu0
  %v1881 = vadd.f32 %v1712, %v1880
  %1882 = vmatmul.bf16.gmra.mxu0 %v810
  %v1883 = vpop.f32.mrf.mxu0
  %v1884 = vadd.f32 %v1715, %v1883
  %v1885 = vpop.f32.mrf.mxu0
  %v1886 = vadd.f32 %v1717, %v1885
  %1887 = vmatmul.bf16.gmra.mxu0 %v815
  %v1888 = vpop.f32.mrf.mxu0
  %v1889 = vadd.f32 %v1720, %v1888
  %v1890 = vpop.f32.mrf.mxu0
  %v1891 = vadd.f32 %v1722, %v1890
  %1892 = vmatmul.bf16.gmra.mxu0 %v820
  %v1893 = vpop.f32.mrf.mxu0
  %v1894 = vadd.f32 %v1725, %v1893
  %v1895 = vpop.f32.mrf.mxu0
  %v1896 = vadd.f32 %v1727, %v1895
  %1897 = vmatmul.bf16.gmra.mxu0 %v825
  %v1898 = vpop.f32.mrf.mxu0
  %v1899 = vadd.f32 %v1730, %v1898
  %v1900 = vpop.f32.mrf.mxu0
  %v1901 = vadd.f32 %v1732, %v1900
  %1902 = vmatmul.bf16.gmra.mxu0 %v830
  %v1903 = vpop.f32.mrf.mxu0
  %v1904 = vadd.f32 %v1735, %v1903
  %v1905 = vpop.f32.mrf.mxu0
  %v1906 = vadd.f32 %v1737, %v1905
  %1907 = vmatmul.bf16.gmra.mxu0 %v835
  %v1908 = vpop.f32.mrf.mxu0
  %v1909 = vadd.f32 %v1740, %v1908
  %v1910 = vpop.f32.mrf.mxu0
  %v1911 = vadd.f32 %v1742, %v1910
  %1912 = vmatmul.bf16.gmra.mxu0 %v840
  %v1913 = vpop.f32.mrf.mxu0
  %v1914 = vadd.f32 %v1745, %v1913
  %v1915 = vpop.f32.mrf.mxu0
  %v1916 = vadd.f32 %v1747, %v1915
  %1917 = vmatmul.bf16.gmra.mxu0 %v845
  %v1918 = vpop.f32.mrf.mxu0
  %v1919 = vadd.f32 %v1750, %v1918
  %v1920 = vpop.f32.mrf.mxu0
  %v1921 = vadd.f32 %v1752, %v1920
  %1922 = vmatmul.bf16.gmra.mxu0 %v850
  %v1923 = vpop.f32.mrf.mxu0
  %v1924 = vadd.f32 %v1755, %v1923
  %v1925 = vpop.f32.mrf.mxu0
  %v1926 = vadd.f32 %v1757, %v1925
  %1927 = vmatmul.bf16.gmra.mxu0 %v855
  %v1928 = vpop.f32.mrf.mxu0
  %v1929 = vadd.f32 %v1760, %v1928
  %v1930 = vpop.f32.mrf.mxu0
  %v1931 = vadd.f32 %v1762, %v1930
  %1932 = vmatmul.bf16.gmra.mxu0 %v860
  %v1933 = vpop.f32.mrf.mxu0
  %v1934 = vadd.f32 %v1765, %v1933
  %v1935 = vpop.f32.mrf.mxu0
  %v1936 = vadd.f32 %v1767, %v1935
  %1937 = vmatmul.bf16.gmra.mxu0 %v865
  %v1938 = vpop.f32.mrf.mxu0
  %v1939 = vadd.f32 %v1770, %v1938
  %v1940 = vpop.f32.mrf.mxu0
  %v1941 = vadd.f32 %v1772, %v1940
  %1942 = vmatmul.bf16.gmra.mxu0 %v870
  %v1943 = vpop.f32.mrf.mxu0
  %v1944 = vadd.f32 %v1775, %v1943
  %v1945 = vpop.f32.mrf.mxu0
  %v1946 = vadd.f32 %v1777, %v1945
  %1947 = vmatmul.bf16.gmra.mxu0 %v875
  %v1948 = vpop.f32.mrf.mxu0
  %v1949 = vadd.f32 %v1780, %v1948
  %v1950 = vpop.f32.mrf.mxu0
  %v1951 = vadd.f32 %v1782, %v1950
  %1952 = vmatmul.bf16.gmra.mxu0 %v880
  %v1953 = vpop.f32.mrf.mxu0
  %v1954 = vadd.f32 %v1785, %v1953
  %v1955 = vpop.f32.mrf.mxu0
  %v1956 = vadd.f32 %v1787, %v1955
  %1957 = vmatmul.bf16.gmra.mxu0 %v885
  %v1958 = vpop.f32.mrf.mxu0
  %v1959 = vadd.f32 %v1790, %v1958
  %v1960 = vpop.f32.mrf.mxu0
  %v1961 = vadd.f32 %v1792, %v1960
  %1962 = vmatmul.bf16.gmra.mxu0 %v890
  %v1963 = vpop.f32.mrf.mxu0
  %v1964 = vadd.f32 %v1795, %v1963
  %v1965 = vpop.f32.mrf.mxu0
  %v1966 = vadd.f32 %v1797, %v1965
  %1967 = vmatmul.bf16.gmra.mxu0 %v895
  %v1968 = vpop.f32.mrf.mxu0
  %v1969 = vadd.f32 %v1800, %v1968
  %v1970 = vpop.f32.mrf.mxu0
  %v1971 = vadd.f32 %v1802, %v1970
  %1972 = vmatmul.bf16.gmra.mxu0 %v900
  %v1973 = vpop.f32.mrf.mxu0
  %v1974 = vadd.f32 %v1805, %v1973
  %v1975 = vpop.f32.mrf.mxu0
  %v1976 = vadd.f32 %v1807, %v1975
  %1977 = vmatmul.bf16.gmra.mxu0 %v905
  %v1978 = vpop.f32.mrf.mxu0
  %v1979 = vadd.f32 %v1810, %v1978
  %v1980 = vpop.f32.mrf.mxu0
  %v1981 = vadd.f32 %v1812, %v1980
  %1982 = vmatmul.bf16.gmra.mxu0 %v910
  %v1983 = vpop.f32.mrf.mxu0
  %v1984 = vadd.f32 %v1815, %v1983
  %v1985 = vpop.f32.mrf.mxu0
  %v1986 = vadd.f32 %v1817, %v1985
  %1987 = vmatmul.bf16.gmra.mxu0 %v915
  %v1988 = vpop.f32.mrf.mxu0
  %v1989 = vadd.f32 %v1820, %v1988
  %v1990 = vpop.f32.mrf.mxu0
  %v1991 = vadd.f32 %v1822, %v1990
  %1992 = vmatmul.bf16.gmra.mxu0 %v920
  %v1993 = vpop.f32.mrf.mxu0
  %v1994 = vadd.f32 %v1825, %v1993
  %v1995 = vpop.f32.mrf.mxu0
  %v1996 = vadd.f32 %v1827, %v1995
  %1997 = vmatmul.bf16.gmra.mxu0 %v925
  %v1998 = vpop.f32.mrf.mxu0
  %v1999 = vadd.f32 %v1830, %v1998
  %v2000 = vpop.f32.mrf.mxu0
  %v2001 = vadd.f32 %v1832, %v2000
  %2002 = vmatmul.bf16.gmra.mxu0 %v930
  %v2003 = vpop.f32.mrf.mxu0
  %v2004 = vadd.f32 %v1835, %v2003
  %v2005 = vpop.f32.mrf.mxu0
  %v2006 = vadd.f32 %v1837, %v2005
  %2007 = vmatmul.bf16.gmra.mxu0 %v935
  %v2008 = vpop.f32.mrf.mxu0
  %v2009 = vadd.f32 %v1840, %v2008
  %v2010 = vpop.f32.mrf.mxu0
  %v2011 = vadd.f32 %v1842, %v2010
  %2012 = vmatmul.bf16.gmra.mxu0 %v940
  %v2013 = vpop.f32.mrf.mxu0
  %v2014 = vadd.f32 %v1845, %v2013
  %v2015 = vpop.f32.mrf.mxu0
  %v2016 = vadd.f32 %v1847, %v2015
  %2017 = vmatmul.bf16.gmra.mxu0 %v945
  %v2018 = vpop.f32.mrf.mxu0
  %v2019 = vadd.f32 %v1850, %v2018
  %v2020 = vpop.f32.mrf.mxu0
  %v2021 = vadd.f32 %v1852, %v2020
  %2022 = vmatmul.bf16.gmra.mxu0 %v950
  %v2023 = vpop.f32.mrf.mxu0
  %v2024 = vadd.f32 %v1855, %v2023
  %v2025 = vpop.f32.mrf.mxu0
  %v2026 = vadd.f32 %v1857, %v2025
  %2027 = vmatmul.bf16.gmra.mxu0 %v955
  %v2028 = vpop.f32.mrf.mxu0
  %v2029 = vadd.f32 %v1860, %v2028
  %v2030 = vpop.f32.mrf.mxu0
  %v2031 = vadd.f32 %v1862, %v2030
  %2032 = vmatmul.bf16.gmra.mxu0 %v960
  %v2033 = vpop.f32.mrf.mxu0
  %v2034 = vadd.f32 %v1865, %v2033
  %v2035 = vpop.f32.mrf.mxu0
  %v2036 = vadd.f32 %v1867, %v2035
  %2037 = vdwg.mxu0
  %2038 = vmatpush.bf16.msra.mxu0 %v1321
  %2039 = vmatpush.bf16.msra.mxu0 %v1320
  %2040 = vmatpush.bf16.msra.mxu0 %v1319
  %2041 = vmatpush.bf16.msra.mxu0 %v1318
  %2042 = vmatpush.bf16.msra.mxu0 %v1317
  %2043 = vmatpush.bf16.msra.mxu0 %v1316
  %2044 = vmatpush.bf16.msra.mxu0 %v1315
  %2045 = vmatpush.bf16.msra.mxu0 %v1314
  %2046 = vmatmul.bf16.gmra.mxu0 %v806
  %v2047 = vpop.f32.mrf.mxu0
  %v2048 = vadd.f32 %v1879, %v2047
  %v2049 = vpop.f32.mrf.mxu0
  %v2050 = vadd.f32 %v1881, %v2049
  %2051 = vmatmul.bf16.gmra.mxu0 %v811
  %v2052 = vpop.f32.mrf.mxu0
  %v2053 = vadd.f32 %v1884, %v2052
  %v2054 = vpop.f32.mrf.mxu0
  %v2055 = vadd.f32 %v1886, %v2054
  %2056 = vmatmul.bf16.gmra.mxu0 %v816
  %v2057 = vpop.f32.mrf.mxu0
  %v2058 = vadd.f32 %v1889, %v2057
  %v2059 = vpop.f32.mrf.mxu0
  %v2060 = vadd.f32 %v1891, %v2059
  %2061 = vmatmul.bf16.gmra.mxu0 %v821
  %v2062 = vpop.f32.mrf.mxu0
  %v2063 = vadd.f32 %v1894, %v2062
  %v2064 = vpop.f32.mrf.mxu0
  %v2065 = vadd.f32 %v1896, %v2064
  %2066 = vmatmul.bf16.gmra.mxu0 %v826
  %v2067 = vpop.f32.mrf.mxu0
  %v2068 = vadd.f32 %v1899, %v2067
  %v2069 = vpop.f32.mrf.mxu0
  %v2070 = vadd.f32 %v1901, %v2069
  %2071 = vmatmul.bf16.gmra.mxu0 %v831
  %v2072 = vpop.f32.mrf.mxu0
  %v2073 = vadd.f32 %v1904, %v2072
  %v2074 = vpop.f32.mrf.mxu0
  %v2075 = vadd.f32 %v1906, %v2074
  %2076 = vmatmul.bf16.gmra.mxu0 %v836
  %v2077 = vpop.f32.mrf.mxu0
  %v2078 = vadd.f32 %v1909, %v2077
  %v2079 = vpop.f32.mrf.mxu0
  %v2080 = vadd.f32 %v1911, %v2079
  %2081 = vmatmul.bf16.gmra.mxu0 %v841
  %v2082 = vpop.f32.mrf.mxu0
  %v2083 = vadd.f32 %v1914, %v2082
  %v2084 = vpop.f32.mrf.mxu0
  %v2085 = vadd.f32 %v1916, %v2084
  %2086 = vmatmul.bf16.gmra.mxu0 %v846
  %v2087 = vpop.f32.mrf.mxu0
  %v2088 = vadd.f32 %v1919, %v2087
  %v2089 = vpop.f32.mrf.mxu0
  %v2090 = vadd.f32 %v1921, %v2089
  %2091 = vmatmul.bf16.gmra.mxu0 %v851
  %v2092 = vpop.f32.mrf.mxu0
  %v2093 = vadd.f32 %v1924, %v2092
  %v2094 = vpop.f32.mrf.mxu0
  %v2095 = vadd.f32 %v1926, %v2094
  %2096 = vmatmul.bf16.gmra.mxu0 %v856
  %v2097 = vpop.f32.mrf.mxu0
  %v2098 = vadd.f32 %v1929, %v2097
  %v2099 = vpop.f32.mrf.mxu0
  %v2100 = vadd.f32 %v1931, %v2099
  %2101 = vmatmul.bf16.gmra.mxu0 %v861
  %v2102 = vpop.f32.mrf.mxu0
  %v2103 = vadd.f32 %v1934, %v2102
  %v2104 = vpop.f32.mrf.mxu0
  %v2105 = vadd.f32 %v1936, %v2104
  %2106 = vmatmul.bf16.gmra.mxu0 %v866
  %v2107 = vpop.f32.mrf.mxu0
  %v2108 = vadd.f32 %v1939, %v2107
  %v2109 = vpop.f32.mrf.mxu0
  %v2110 = vadd.f32 %v1941, %v2109
  %2111 = vmatmul.bf16.gmra.mxu0 %v871
  %v2112 = vpop.f32.mrf.mxu0
  %v2113 = vadd.f32 %v1944, %v2112
  %v2114 = vpop.f32.mrf.mxu0
  %v2115 = vadd.f32 %v1946, %v2114
  %2116 = vmatmul.bf16.gmra.mxu0 %v876
  %v2117 = vpop.f32.mrf.mxu0
  %v2118 = vadd.f32 %v1949, %v2117
  %v2119 = vpop.f32.mrf.mxu0
  %v2120 = vadd.f32 %v1951, %v2119
  %2121 = vmatmul.bf16.gmra.mxu0 %v881
  %v2122 = vpop.f32.mrf.mxu0
  %v2123 = vadd.f32 %v1954, %v2122
  %v2124 = vpop.f32.mrf.mxu0
  %v2125 = vadd.f32 %v1956, %v2124
  %2126 = vmatmul.bf16.gmra.mxu0 %v886
  %v2127 = vpop.f32.mrf.mxu0
  %v2128 = vadd.f32 %v1959, %v2127
  %v2129 = vpop.f32.mrf.mxu0
  %v2130 = vadd.f32 %v1961, %v2129
  %2131 = vmatmul.bf16.gmra.mxu0 %v891
  %v2132 = vpop.f32.mrf.mxu0
  %v2133 = vadd.f32 %v1964, %v2132
  %v2134 = vpop.f32.mrf.mxu0
  %v2135 = vadd.f32 %v1966, %v2134
  %2136 = vmatmul.bf16.gmra.mxu0 %v896
  %v2137 = vpop.f32.mrf.mxu0
  %v2138 = vadd.f32 %v1969, %v2137
  %v2139 = vpop.f32.mrf.mxu0
  %v2140 = vadd.f32 %v1971, %v2139
  %2141 = vmatmul.bf16.gmra.mxu0 %v901
  %v2142 = vpop.f32.mrf.mxu0
  %v2143 = vadd.f32 %v1974, %v2142
  %v2144 = vpop.f32.mrf.mxu0
  %v2145 = vadd.f32 %v1976, %v2144
  %2146 = vmatmul.bf16.gmra.mxu0 %v906
  %v2147 = vpop.f32.mrf.mxu0
  %v2148 = vadd.f32 %v1979, %v2147
  %v2149 = vpop.f32.mrf.mxu0
  %v2150 = vadd.f32 %v1981, %v2149
  %2151 = vmatmul.bf16.gmra.mxu0 %v911
  %v2152 = vpop.f32.mrf.mxu0
  %v2153 = vadd.f32 %v1984, %v2152
  %v2154 = vpop.f32.mrf.mxu0
  %v2155 = vadd.f32 %v1986, %v2154
  %2156 = vmatmul.bf16.gmra.mxu0 %v916
  %v2157 = vpop.f32.mrf.mxu0
  %v2158 = vadd.f32 %v1989, %v2157
  %v2159 = vpop.f32.mrf.mxu0
  %v2160 = vadd.f32 %v1991, %v2159
  %2161 = vmatmul.bf16.gmra.mxu0 %v921
  %v2162 = vpop.f32.mrf.mxu0
  %v2163 = vadd.f32 %v1994, %v2162
  %v2164 = vpop.f32.mrf.mxu0
  %v2165 = vadd.f32 %v1996, %v2164
  %2166 = vmatmul.bf16.gmra.mxu0 %v926
  %v2167 = vpop.f32.mrf.mxu0
  %v2168 = vadd.f32 %v1999, %v2167
  %v2169 = vpop.f32.mrf.mxu0
  %v2170 = vadd.f32 %v2001, %v2169
  %2171 = vmatmul.bf16.gmra.mxu0 %v931
  %v2172 = vpop.f32.mrf.mxu0
  %v2173 = vadd.f32 %v2004, %v2172
  %v2174 = vpop.f32.mrf.mxu0
  %v2175 = vadd.f32 %v2006, %v2174
  %2176 = vmatmul.bf16.gmra.mxu0 %v936
  %v2177 = vpop.f32.mrf.mxu0
  %v2178 = vadd.f32 %v2009, %v2177
  %v2179 = vpop.f32.mrf.mxu0
  %v2180 = vadd.f32 %v2011, %v2179
  %2181 = vmatmul.bf16.gmra.mxu0 %v941
  %v2182 = vpop.f32.mrf.mxu0
  %v2183 = vadd.f32 %v2014, %v2182
  %v2184 = vpop.f32.mrf.mxu0
  %v2185 = vadd.f32 %v2016, %v2184
  %2186 = vmatmul.bf16.gmra.mxu0 %v946
  %v2187 = vpop.f32.mrf.mxu0
  %v2188 = vadd.f32 %v2019, %v2187
  %v2189 = vpop.f32.mrf.mxu0
  %v2190 = vadd.f32 %v2021, %v2189
  %2191 = vmatmul.bf16.gmra.mxu0 %v951
  %v2192 = vpop.f32.mrf.mxu0
  %v2193 = vadd.f32 %v2024, %v2192
  %v2194 = vpop.f32.mrf.mxu0
  %v2195 = vadd.f32 %v2026, %v2194
  %2196 = vmatmul.bf16.gmra.mxu0 %v956
  %v2197 = vpop.f32.mrf.mxu0
  %v2198 = vadd.f32 %v2029, %v2197
  %v2199 = vpop.f32.mrf.mxu0
  %v2200 = vadd.f32 %v2031, %v2199
  %2201 = vmatmul.bf16.gmra.mxu0 %v961
  %v2202 = vpop.f32.mrf.mxu0
  %v2203 = vadd.f32 %v2034, %v2202
  %v2204 = vpop.f32.mrf.mxu0
  %v2205 = vadd.f32 %v2036, %v2204
  %2206 = vdwg.mxu0
  %v2207 = vtanh.pop %v2048
  %v2208 = vtanh.pop %v2050
  %v2209 = vtanh.pop %v2053
  %v2210 = vtanh.pop %v2055
  %v2211 = vtanh.pop %v2058
  %v2212 = vtanh.pop %v2060
  %v2213 = vtanh.pop %v2063
  %v2214 = vtanh.pop %v2065
  %v2215 = vtanh.pop %v2068
  %v2216 = vtanh.pop %v2070
  %v2217 = vtanh.pop %v2073
  %v2218 = vtanh.pop %v2075
  %v2219 = vtanh.pop %v2078
  %v2220 = vtanh.pop %v2080
  %v2221 = vtanh.pop %v2083
  %v2222 = vtanh.pop %v2085
  %v2223 = vtanh.pop %v2088
  %v2224 = vtanh.pop %v2090
  %v2225 = vtanh.pop %v2093
  %v2226 = vtanh.pop %v2095
  %v2227 = vtanh.pop %v2098
  %v2228 = vtanh.pop %v2100
  %v2229 = vtanh.pop %v2103
  %v2230 = vtanh.pop %v2105
  %v2231 = vtanh.pop %v2108
  %v2232 = vtanh.pop %v2110
  %v2233 = vtanh.pop %v2113
  %v2234 = vtanh.pop %v2115
  %v2235 = vtanh.pop %v2118
  %v2236 = vtanh.pop %v2120
  %v2237 = vtanh.pop %v2123
  %v2238 = vtanh.pop %v2125
  %v2239 = vtanh.pop %v2128
  %v2240 = vtanh.pop %v2130
  %v2241 = vtanh.pop %v2133
  %v2242 = vtanh.pop %v2135
  %v2243 = vtanh.pop %v2138
  %v2244 = vtanh.pop %v2140
  %v2245 = vtanh.pop %v2143
  %v2246 = vtanh.pop %v2145
  %v2247 = vtanh.pop %v2148
  %v2248 = vtanh.pop %v2150
  %v2249 = vtanh.pop %v2153
  %v2250 = vtanh.pop %v2155
  %v2251 = vtanh.pop %v2158
  %v2252 = vtanh.pop %v2160
  %v2253 = vtanh.pop %v2163
  %v2254 = vtanh.pop %v2165
  %v2255 = vtanh.pop %v2168
  %v2256 = vtanh.pop %v2170
  %v2257 = vtanh.pop %v2173
  %v2258 = vtanh.pop %v2175
  %v2259 = vtanh.pop %v2178
  %v2260 = vtanh.pop %v2180
  %v2261 = vtanh.pop %v2183
  %v2262 = vtanh.pop %v2185
  %v2263 = vtanh.pop %v2188
  %v2264 = vtanh.pop %v2190
  %v2265 = vtanh.pop %v2193
  %v2266 = vtanh.pop %v2195
  %v2267 = vtanh.pop %v2198
  %v2268 = vtanh.pop %v2200
  %v2269 = vtanh.pop %v2203
  %v2270 = vtanh.pop %v2205
  %2271 = vst [vmem:[%s3] sm:$0xff] %v2207
  %2272 = vst [vmem:[%s3 + $0x8] sm:$0xff] %v2208
  %2273 = vst [vmem:[%s3 + $0x10] sm:$0xff] %v2209
  %2274 = vst [vmem:[%s3 + $0x18] sm:$0xff] %v2210
  %2275 = vst [vmem:[%s3 + $0x20] sm:$0xff] %v2211
  %2276 = vst [vmem:[%s3 + $0x28] sm:$0xff] %v2212
  %2277 = vst [vmem:[%s3 + $0x30] sm:$0xff] %v2213
  %2278 = vst [vmem:[%s3 + $0x38] sm:$0xff] %v2214
  %2279 = vst [vmem:[%s3 + $0x40] sm:$0xff] %v2215
  %2280 = vst [vmem:[%s3 + $0x48] sm:$0xff] %v2216
  %2281 = vst [vmem:[%s3 + $0x50] sm:$0xff] %v2217
  %2282 = vst [vmem:[%s3 + $0x58] sm:$0xff] %v2218
  %2283 = vst [vmem:[%s3 + $0x60] sm:$0xff] %v2219
  %2284 = vst [vmem:[%s3 + $0x68] sm:$0xff] %v2220
  %2285 = vst [vmem:[%s3 + $0x70] sm:$0xff] %v2221
  %2286 = vst [vmem:[%s3 + $0x78] sm:$0xff] %v2222
  %2287 = vst [vmem:[%s3 + $0x80] sm:$0xff] %v2223
  %2288 = vst [vmem:[%s3 + $0x88] sm:$0xff] %v2224
  %2289 = vst [vmem:[%s3 + $0x90] sm:$0xff] %v2225
  %2290 = vst [vmem:[%s3 + $0x98] sm:$0xff] %v2226
  %2291 = vst [vmem:[%s3 + $0xa0] sm:$0xff] %v2227
  %2292 = vst [vmem:[%s3 + $0xa8] sm:$0xff] %v2228
  %2293 = vst [vmem:[%s3 + $0xb0] sm:$0xff] %v2229
  %2294 = vst [vmem:[%s3 + $0xb8] sm:$0xff] %v2230
  %2295 = vst [vmem:[%s3 + $0xc0] sm:$0xff] %v2231
  %2296 = vst [vmem:[%s3 + $0xc8] sm:$0xff] %v2232
  %2297 = vst [vmem:[%s3 + $0xd0] sm:$0xff] %v2233
  %2298 = vst [vmem:[%s3 + $0xd8] sm:$0xff] %v2234
  %2299 = vst [vmem:[%s3 + $0xe0] sm:$0xff] %v2235
  %2300 = vst [vmem:[%s3 + $0xe8] sm:$0xff] %v2236
  %2301 = vst [vmem:[%s3 + $0xf0] sm:$0xff] %v2237
  %2302 = vst [vmem:[%s3 + $0xf8] sm:$0xff] %v2238
  %2303 = vst [vmem:[%s3 + $0x100] sm:$0xff] %v2239
  %2304 = vst [vmem:[%s3 + $0x108] sm:$0xff] %v2240
  %2305 = vst [vmem:[%s3 + $0x110] sm:$0xff] %v2241
  %2306 = vst [vmem:[%s3 + $0x118] sm:$0xff] %v2242
  %2307 = vst [vmem:[%s3 + $0x120] sm:$0xff] %v2243
  %2308 = vst [vmem:[%s3 + $0x128] sm:$0xff] %v2244
  %2309 = vst [vmem:[%s3 + $0x130] sm:$0xff] %v2245
  %2310 = vst [vmem:[%s3 + $0x138] sm:$0xff] %v2246
  %2311 = vst [vmem:[%s3 + $0x140] sm:$0xff] %v2247
  %2312 = vst [vmem:[%s3 + $0x148] sm:$0xff] %v2248
  %2313 = vst [vmem:[%s3 + $0x150] sm:$0xff] %v2249
  %2314 = vst [vmem:[%s3 + $0x158] sm:$0xff] %v2250
  %2315 = vst [vmem:[%s3 + $0x160] sm:$0xff] %v2251
  %2316 = vst [vmem:[%s3 + $0x168] sm:$0xff] %v2252
  %2317 = vst [vmem:[%s3 + $0x170] sm:$0xff] %v2253
  %2318 = vst [vmem:[%s3 + $0x178] sm:$0xff] %v2254
  %2319 = vst [vmem:[%s3 + $0x180] sm:$0xff] %v2255
  %2320 = vst [vmem:[%s3 + $0x188] sm:$0xff] %v2256
  %2321 = vst [vmem:[%s3 + $0x190] sm:$0xff] %v2257
  %2322 = vst [vmem:[%s3 + $0x198] sm:$0xff] %v2258
  %2323 = vst [vmem:[%s3 + $0x1a0] sm:$0xff] %v2259
  %2324 = vst [vmem:[%s3 + $0x1a8] sm:$0xff] %v2260
  %2325 = vst [vmem:[%s3 + $0x1b0] sm:$0xff] %v2261
  %2326 = vst [vmem:[%s3 + $0x1b8] sm:$0xff] %v2262
  %2327 = vst [vmem:[%s3 + $0x1c0] sm:$0xff] %v2263
  %2328 = vst [vmem:[%s3 + $0x1c8] sm:$0xff] %v2264
  %2329 = vst [vmem:[%s3 + $0x1d0] sm:$0xff] %v2265
  %2330 = vst [vmem:[%s3 + $0x1d8] sm:$0xff] %v2266
  %2331 = vst [vmem:[%s3 + $0x1e0] sm:$0xff] %v2267
  %2332 = vst [vmem:[%s3 + $0x1e8] sm:$0xff] %v2268
  %2333 = vst [vmem:[%s3 + $0x1f0] sm:$0xff] %v2269
  %2334 = vst [vmem:[%s3 + $0x1f8] sm:$0xff] %v2270
  // Predicated region
  $region14: #{vae_forward.39} parent=0 // pred_check
    _
  $region15: #{vae_forward.39} parent=0 // pred_check_branch
    %2336 = sbr.rel (0) target = $region17
  $region16: #{vae_forward.39} parent=0 // pred_region
    _
  $region17: #{vae_forward.39} parent=0 // pred_fallthru
    _
  // Predicated region
  $region18: #{vae_forward.39} parent=0 // pred_check
    _
  $region19: #{vae_forward.39} parent=0 // pred_check_branch
    %2338 = sbr.rel (0) target = $region21
  $region20: #{vae_forward.39} parent=0 // pred_region
    _
  $region21: #{vae_forward.39} parent=0 // pred_fallthru
    _

</llo_original>
